<compile_context>
chip_gen: v7x
topology: tpu7x:2x2x1
jax: 0.10.0
libtpu: 0.0.40
codegen_flags: <defaults>
</compile_context>

<pallas_src>
import math

import jax
import jax.numpy as jnp
from jax.experimental import pallas as pl
from jax.experimental.pallas import tpu as pltpu

MODS = ['BPSK', 'DQPSK', 'GFSK', 'GMSK', 'OQPSK', 'PAM4', 'PAM8', 'PSK8',
        'QAM16', 'QAM64', 'QPSK']
CLASS_NUM = len(MODS)  # 11

PAD = 8  # top padding rows of the activation buffers (keeps big stores aligned)


# ----------------------------------------------------------------------------
# Fused kernel: 7x(conv3 -> maxpool2 -> BN -> ReLU) -> fc1 -> fc2 -> fc3 -> softmax
# ----------------------------------------------------------------------------
def vgg_fused_kernel(x_ref, cw_ref, scale_ref, shift_ref,
                     w1_ref, b1_ref, w2_ref, b2_ref, w3_ref, b3_ref,
                     o_ref, buf_a, buf_b):
    f32, bf16 = jnp.float32, jnp.bfloat16
    L1 = x_ref.shape[1]              # 1024
    cin0 = x_ref.shape[2]            # 2
    n_conv = cw_ref.shape[0]         # 7
    C = cw_ref.shape[3]              # 64

    # Stage this batch item's input: buffer row PAD+i holds x[i]; rows PAD-1
    # and PAD+L are the conv 'same' padding and must be zero.  Layer 1's
    # weight is zero-padded in Cin, so zeroing the whole buffer once also
    # makes the unused channel columns 2..63 harmless.
    buf_a[...] = jnp.zeros(buf_a.shape, f32)
    buf_a[pl.ds(PAD, L1), pl.ds(0, cin0)] = x_ref[0]
    buf_b[pl.ds(0, PAD), :] = jnp.zeros((PAD, C), f32)     # top pad rows

    bufs = (buf_a, buf_b)
    zero_row = jnp.zeros((1, C), f32)
    L, src = L1, 0
    for l in range(n_conv):
        in_buf, out_buf = bufs[src], bufs[1 - src]
        L_out = L // 2
        # Conv: y[t] = sum_k p[t+k] @ W_k with p the zero-padded input
        # (p[j] sits at buffer row PAD-1+j).  Even / odd output positions are
        # accumulated separately so MaxPool1d(2) is a single jnp.maximum.
        taps = [in_buf[pl.ds(PAD - 1 + j, L_out, 2), :].astype(bf16)
                for j in range(4)]                          # taps[j] = p[2t+j]
        w = [cw_ref[l, k] for k in range(3)]                # (C, C) bf16
        even = (jnp.dot(taps[0], w[0], preferred_element_type=f32)
                + jnp.dot(taps[1], w[1], preferred_element_type=f32)
                + jnp.dot(taps[2], w[2], preferred_element_type=f32))
        odd = (jnp.dot(taps[1], w[0], preferred_element_type=f32)
               + jnp.dot(taps[2], w[1], preferred_element_type=f32)
               + jnp.dot(taps[3], w[2], preferred_element_type=f32))
        pooled = jnp.maximum(even, odd)                     # (L_out, C) f32
        # Folded eval-mode BatchNorm (conv bias folded into shift) + ReLU.
        y = pooled * scale_ref[pl.ds(l, 1), :] + shift_ref[pl.ds(l, 1), :]
        y = jnp.maximum(y, 0.0)
        out_buf[pl.ds(PAD, L_out), :] = y                   # aligned store
        out_buf[pl.ds(PAD + L_out, 1), :] = zero_row        # bottom pad row
        L, src = L_out, 1 - src

    # FC head.  Final conv activation sits in bufs[src] rows PAD..PAD+L-1
    # (L == 8), length-major; fc1's weight rows were permuted at init so this
    # contraction equals torch's channel-major flatten + Linear.
    act = bufs[src][pl.ds(PAD, L), :]                       # (8, C) f32
    h = b1_ref[...]                                         # (1, 128) f32
    for t in range(L):
        h = h + jnp.dot(act[t:t + 1, :].astype(bf16), w1_ref[t],
                        preferred_element_type=f32)
    h = jnp.maximum(h, 0.0)
    h = jnp.maximum(
        jnp.dot(h.astype(bf16), w2_ref[...], preferred_element_type=f32)
        + b2_ref[...], 0.0)
    logits = (jnp.dot(h.astype(bf16), w3_ref[...], preferred_element_type=f32)
              + b3_ref[...])                                # (1, CLASS_NUM)
    m = jnp.max(logits, axis=-1, keepdims=True)
    e = jnp.exp(logits - m)
    inv = pl.reciprocal(jnp.sum(e, axis=-1, keepdims=True), approx=True)
    o_ref[0] = (e * inv).astype(o_ref.dtype)


# ----------------------------------------------------------------------------
# Full forward (matches VGGNet.forward)
# ----------------------------------------------------------------------------
def vggnet_forward(x, params):
    cw, scale, shift, w1, b1, w2, b2, w3, b3 = params
    B = x.shape[0]
    x = x.reshape(B, 2, -1)                     # torch: (B, 2, L)
    x = jnp.transpose(x, (0, 2, 1))             # channels-last (B, L, 2), tiny
    _, L1, cin0 = x.shape
    n_conv, _, _, C = cw.shape
    assert L1 % (2 ** n_conv) == 0
    assert w1.shape[0] == L1 // (2 ** n_conv)   # fc1 expects the flatten size

    def resident(a):  # whole array, same block every grid step (stays in VMEM)
        zeros = (0,) * a.ndim
        return pl.BlockSpec(a.shape, lambda b, z=zeros: z)

    out = pl.pallas_call(
        vgg_fused_kernel,
        out_shape=jax.ShapeDtypeStruct((B, 1, CLASS_NUM), jnp.float32),
        grid=(B,),
        in_specs=[
            pl.BlockSpec((1, L1, cin0), lambda b: (b, 0, 0)),
            resident(cw), resident(scale), resident(shift),
            resident(w1), resident(b1), resident(w2), resident(b2),
            resident(w3), resident(b3),
        ],
        out_specs=pl.BlockSpec((1, 1, CLASS_NUM), lambda b: (b, 0, 0)),
        scratch_shapes=[
            pltpu.VMEM((L1 + 2 * PAD, C), jnp.float32),       # ping buffer
            pltpu.VMEM((L1 // 2 + 2 * PAD, C), jnp.float32),  # pong buffer
        ],
        compiler_params=pltpu.CompilerParams(
            dimension_semantics=("parallel",)),   # v7x: one batch item / core
    )(x, cw, scale, shift, w1, b1, w2, b2, w3, b3)
    return out.reshape(B, CLASS_NUM)


# ----------------------------------------------------------------------------
# Parameters (deterministic, torch-like uniform init; BN folded, eval mode)
# ----------------------------------------------------------------------------
def init_params(key):
    eps = 1e-5
    C, n_conv, L_final = 64, 7, 8
    cins = [2] + [C] * (n_conv - 1)
    keys = jax.random.split(key, 2 * n_conv + 2 * 3)
    ki = 0

    cw, scales, shifts = [], [], []
    for cin in cins:
        bound = 1.0 / math.sqrt(cin * 3)
        w = jax.random.uniform(keys[ki], (3, cin, C), jnp.float32,
                               -bound, bound); ki += 1
        b = jax.random.uniform(keys[ki], (1, C), jnp.float32,
                               -bound, bound); ki += 1
        if cin < C:
            # zero-pad Cin so every layer shares one (3, C, C) weight slab
            w = jnp.pad(w, ((0, 0), (0, C - cin), (0, 0)))
        gamma = jnp.ones((1, C), jnp.float32)
        beta = jnp.zeros((1, C), jnp.float32)
        rmean = jnp.zeros((1, C), jnp.float32)
        rvar = jnp.ones((1, C), jnp.float32)
        scale = gamma / jnp.sqrt(rvar + eps)
        # conv bias commutes with the length-wise max-pool -> fold into shift
        shift = beta - rmean * scale + scale * b
        cw.append(w); scales.append(scale[0]); shifts.append(shift[0])
    cw = jnp.stack(cw).astype(jnp.bfloat16)        # (7, 3, 64, 64)
    scale = jnp.stack(scales)                      # (7, 64) f32
    shift = jnp.stack(shifts)                      # (7, 64) f32

    # fc1: generated in the torch layout (row index = channel-major feature
    # c*8 + t), then reordered once so the kernel consumes the length-major
    # activation directly (no flatten/transpose at runtime).
    fin1 = C * L_final
    bound = 1.0 / math.sqrt(fin1)
    w1 = jax.random.uniform(keys[ki], (fin1, 128), jnp.float32,
                            -bound, bound); ki += 1
    b1 = jax.random.uniform(keys[ki], (1, 128), jnp.float32,
                            -bound, bound); ki += 1
    w1 = w1.reshape(C, L_final, 128).transpose(1, 0, 2)     # (8, 64, 128)

    bound = 1.0 / math.sqrt(128)
    w2 = jax.random.uniform(keys[ki], (128, 128), jnp.float32,
                            -bound, bound); ki += 1
    b2 = jax.random.uniform(keys[ki], (1, 128), jnp.float32,
                            -bound, bound); ki += 1
    w3 = jax.random.uniform(keys[ki], (128, CLASS_NUM), jnp.float32,
                            -bound, bound); ki += 1
    b3 = jax.random.uniform(keys[ki], (1, CLASS_NUM), jnp.float32,
                            -bound, bound); ki += 1

    return (cw, scale, shift,
            w1.astype(jnp.bfloat16), b1,
            w2.astype(jnp.bfloat16), b2,
            w3.astype(jnp.bfloat16), b3)


if __name__ == "__main__":
    key = jax.random.PRNGKey(0)
    pkey, xkey = jax.random.split(key)
    params = init_params(pkey)

    # fc1 expects 64*8 features => input length L must be 1024 (7 pools of 2).
    B, L = 2, 1024
    x = jax.random.normal(xkey, (B, 2 * L), dtype=jnp.float32)

    fwd = jax.jit(lambda inp: vggnet_forward(inp, params))
    out = jax.block_until_ready(fwd(x))

    assert out.shape == (B, CLASS_NUM), out.shape
    assert bool(jnp.all(jnp.isfinite(out)))
    # softmax rows sum to ~1 (approx EUP reciprocal in the epilogue)
    assert bool(jnp.all(jnp.abs(jnp.sum(out, axis=1) - 1.0) < 5e-3))
    print("KERNEL_OK")
</pallas_src>

<mosaic_0001>
module attributes {stable_mosaic.version = 11 : i64} {
  func.func @vgg_fused_kernel(%arg0: i32, %arg1: memref<1x1024x2xf32, #tpu.memory_space<vmem>>, %arg2: memref<7x3x64x64xbf16, #tpu.memory_space<vmem>>, %arg3: memref<7x64xf32, #tpu.memory_space<vmem>>, %arg4: memref<7x64xf32, #tpu.memory_space<vmem>>, %arg5: memref<8x64x128xbf16, #tpu.memory_space<vmem>>, %arg6: memref<1x128xf32, #tpu.memory_space<vmem>>, %arg7: memref<128x128xbf16, #tpu.memory_space<vmem>>, %arg8: memref<1x128xf32, #tpu.memory_space<vmem>>, %arg9: memref<128x11xbf16, #tpu.memory_space<vmem>>, %arg10: memref<1x11xf32, #tpu.memory_space<vmem>>, %arg11: memref<1x1x11xf32, #tpu.memory_space<vmem>>, %arg12: memref<1040x64xf32, #tpu.memory_space<vmem>>, %arg13: memref<528x64xf32, #tpu.memory_space<vmem>>) attributes {dimension_semantics = [#tpu.dimension_semantics<parallel>], iteration_bounds = array<i64: 2>, scalar_prefetch = 0 : i64, scratch_operands = 2 : i64, tpu.core_type = #tpu.core_type<tc>, window_params = [{transform_indices = @transform_0, window_bounds = array<i64: 1, 1024, 2>}, {pipeline_mode = #tpu.pipeline_mode<synchronous>, transform_indices = @transform_1, window_bounds = array<i64: 7, 3, 64, 64>}, {pipeline_mode = #tpu.pipeline_mode<synchronous>, transform_indices = @transform_2, window_bounds = array<i64: 7, 64>}, {pipeline_mode = #tpu.pipeline_mode<synchronous>, transform_indices = @transform_3, window_bounds = array<i64: 7, 64>}, {pipeline_mode = #tpu.pipeline_mode<synchronous>, transform_indices = @transform_4, window_bounds = array<i64: 8, 64, 128>}, {pipeline_mode = #tpu.pipeline_mode<synchronous>, transform_indices = @transform_5, window_bounds = array<i64: 1, 128>}, {pipeline_mode = #tpu.pipeline_mode<synchronous>, transform_indices = @transform_6, window_bounds = array<i64: 128, 128>}, {pipeline_mode = #tpu.pipeline_mode<synchronous>, transform_indices = @transform_7, window_bounds = array<i64: 1, 128>}, {pipeline_mode = #tpu.pipeline_mode<synchronous>, transform_indices = @transform_8, window_bounds = array<i64: 128, 11>}, {pipeline_mode = #tpu.pipeline_mode<synchronous>, transform_indices = @transform_9, window_bounds = array<i64: 1, 11>}, {transform_indices = @transform_10, window_bounds = array<i64: 1, 1, 11>}]} {
    %cst = arith.constant 0.000000e+00 : f32
    %0 = vector.broadcast %cst : f32 to vector<1040x64xf32>
    %c0 = arith.constant 0 : index
    %c0_0 = arith.constant 0 : index
    %1 = vector.load %arg12[%c0, %c0_0] : memref<1040x64xf32, #tpu.memory_space<vmem>>, vector<1040x64xf32>
    tpu.vector_store %arg12[%c0, %c0_0], %0 {strides = array<i32>} : memref<1040x64xf32, #tpu.memory_space<vmem>>, vector<1040x64xf32>,
    %c0_1 = arith.constant 0 : index
    %c0_2 = arith.constant 0 : index
    %c0_3 = arith.constant 0 : index
    %2 = vector.load %arg1[%c0_1, %c0_2, %c0_3] : memref<1x1024x2xf32, #tpu.memory_space<vmem>>, vector<1x1024x2xf32>
    %3 = vector.shape_cast %2 : vector<1x1024x2xf32> to vector<1024x2xf32>
    %c8 = arith.constant 8 : index
    %c0_4 = arith.constant 0 : index
    %4 = vector.load %arg12[%c8, %c0_4] : memref<1040x64xf32, #tpu.memory_space<vmem>>, vector<1024x2xf32>
    tpu.vector_store %arg12[%c8, %c0_4], %3 {strides = array<i32>} : memref<1040x64xf32, #tpu.memory_space<vmem>>, vector<1024x2xf32>,
    %cst_5 = arith.constant 0.000000e+00 : f32
    %5 = vector.broadcast %cst_5 : f32 to vector<8x64xf32>
    %c0_6 = arith.constant 0 : index
    %c0_7 = arith.constant 0 : index
    %6 = vector.load %arg13[%c0_6, %c0_7] : memref<528x64xf32, #tpu.memory_space<vmem>>, vector<8x64xf32>
    tpu.vector_store %arg13[%c0_6, %c0_7], %5 {strides = array<i32>} : memref<528x64xf32, #tpu.memory_space<vmem>>, vector<8x64xf32>,
    %cst_8 = arith.constant 0.000000e+00 : f32
    %7 = vector.broadcast %cst_8 : f32 to vector<1x64xf32>
    %c7 = arith.constant 7 : index
    %c0_9 = arith.constant 0 : index
    %8 = tpu.strided_load %arg12[%c7, %c0_9] {strides = array<i32: 2, 1>} : memref<1040x64xf32, #tpu.memory_space<vmem>>, vector<512x64xf32>
    %9 = arith.truncf %8 : vector<512x64xf32> to vector<512x64xbf16>
    %c8_10 = arith.constant 8 : index
    %c0_11 = arith.constant 0 : index
    %10 = tpu.strided_load %arg12[%c8_10, %c0_11] {strides = array<i32: 2, 1>} : memref<1040x64xf32, #tpu.memory_space<vmem>>, vector<512x64xf32>
    %11 = arith.truncf %10 : vector<512x64xf32> to vector<512x64xbf16>
    %c9 = arith.constant 9 : index
    %c0_12 = arith.constant 0 : index
    %12 = tpu.strided_load %arg12[%c9, %c0_12] {strides = array<i32: 2, 1>} : memref<1040x64xf32, #tpu.memory_space<vmem>>, vector<512x64xf32>
    %13 = arith.truncf %12 : vector<512x64xf32> to vector<512x64xbf16>
    %c10 = arith.constant 10 : index
    %c0_13 = arith.constant 0 : index
    %14 = tpu.strided_load %arg12[%c10, %c0_13] {strides = array<i32: 2, 1>} : memref<1040x64xf32, #tpu.memory_space<vmem>>, vector<512x64xf32>
    %15 = arith.truncf %14 : vector<512x64xf32> to vector<512x64xbf16>
    %c0_14 = arith.constant 0 : index
    %c0_15 = arith.constant 0 : index
    %c0_16 = arith.constant 0 : index
    %c0_17 = arith.constant 0 : index
    %16 = vector.load %arg2[%c0_14, %c0_15, %c0_16, %c0_17] : memref<7x3x64x64xbf16, #tpu.memory_space<vmem>>, vector<1x1x64x64xbf16>
    %17 = vector.shape_cast %16 : vector<1x1x64x64xbf16> to vector<64x64xbf16>
    %c0_18 = arith.constant 0 : index
    %c1 = arith.constant 1 : index
    %c0_19 = arith.constant 0 : index
    %c0_20 = arith.constant 0 : index
    %18 = vector.load %arg2[%c0_18, %c1, %c0_19, %c0_20] : memref<7x3x64x64xbf16, #tpu.memory_space<vmem>>, vector<1x1x64x64xbf16>
    %19 = vector.shape_cast %18 : vector<1x1x64x64xbf16> to vector<64x64xbf16>
    %c0_21 = arith.constant 0 : index
    %c2 = arith.constant 2 : index
    %c0_22 = arith.constant 0 : index
    %c0_23 = arith.constant 0 : index
    %20 = vector.load %arg2[%c0_21, %c2, %c0_22, %c0_23] : memref<7x3x64x64xbf16, #tpu.memory_space<vmem>>, vector<1x1x64x64xbf16>
    %21 = vector.shape_cast %20 : vector<1x1x64x64xbf16> to vector<64x64xbf16>
    %cst_24 = arith.constant dense<0.000000e+00> : vector<512x64xf32>
    %22 = tpu.matmul %9, %17, %cst_24 {dimension_numbers = #tpu.dot_dimension_numbers<[1], [0], [0], [1], [0, 0, 1, 1], [], []>} : vector<512x64xbf16>, vector<64x64xbf16>, vector<512x64xf32> -> vector<512x64xf32>
    %cst_25 = arith.constant dense<0.000000e+00> : vector<512x64xf32>
    %23 = tpu.matmul %11, %19, %cst_25 {dimension_numbers = #tpu.dot_dimension_numbers<[1], [0], [0], [1], [0, 0, 1, 1], [], []>} : vector<512x64xbf16>, vector<64x64xbf16>, vector<512x64xf32> -> vector<512x64xf32>
    %24 = arith.addf %22, %23 : vector<512x64xf32>
    %cst_26 = arith.constant dense<0.000000e+00> : vector<512x64xf32>
    %25 = tpu.matmul %13, %21, %cst_26 {dimension_numbers = #tpu.dot_dimension_numbers<[1], [0], [0], [1], [0, 0, 1, 1], [], []>} : vector<512x64xbf16>, vector<64x64xbf16>, vector<512x64xf32> -> vector<512x64xf32>
    %26 = arith.addf %24, %25 : vector<512x64xf32>
    %cst_27 = arith.constant dense<0.000000e+00> : vector<512x64xf32>
    %27 = tpu.matmul %11, %17, %cst_27 {dimension_numbers = #tpu.dot_dimension_numbers<[1], [0], [0], [1], [0, 0, 1, 1], [], []>} : vector<512x64xbf16>, vector<64x64xbf16>, vector<512x64xf32> -> vector<512x64xf32>
    %cst_28 = arith.constant dense<0.000000e+00> : vector<512x64xf32>
    %28 = tpu.matmul %13, %19, %cst_28 {dimension_numbers = #tpu.dot_dimension_numbers<[1], [0], [0], [1], [0, 0, 1, 1], [], []>} : vector<512x64xbf16>, vector<64x64xbf16>, vector<512x64xf32> -> vector<512x64xf32>
    %29 = arith.addf %27, %28 : vector<512x64xf32>
    %cst_29 = arith.constant dense<0.000000e+00> : vector<512x64xf32>
    %30 = tpu.matmul %15, %21, %cst_29 {dimension_numbers = #tpu.dot_dimension_numbers<[1], [0], [0], [1], [0, 0, 1, 1], [], []>} : vector<512x64xbf16>, vector<64x64xbf16>, vector<512x64xf32> -> vector<512x64xf32>
    %31 = arith.addf %29, %30 : vector<512x64xf32>
    %32 = arith.maximumf %26, %31 : vector<512x64xf32>
    %c0_30 = arith.constant 0 : index
    %c0_31 = arith.constant 0 : index
    %33 = vector.load %arg3[%c0_30, %c0_31] : memref<7x64xf32, #tpu.memory_space<vmem>>, vector<1x64xf32>
    %34 = vector.broadcast %33 : vector<1x64xf32> to vector<512x64xf32>
    %35 = arith.mulf %32, %34 : vector<512x64xf32>
    %c0_32 = arith.constant 0 : index
    %c0_33 = arith.constant 0 : index
    %36 = vector.load %arg4[%c0_32, %c0_33] : memref<7x64xf32, #tpu.memory_space<vmem>>, vector<1x64xf32>
    %37 = vector.broadcast %36 : vector<1x64xf32> to vector<512x64xf32>
    %38 = arith.addf %35, %37 : vector<512x64xf32>
    %cst_34 = arith.constant 0.000000e+00 : f32
    %39 = vector.broadcast %cst_34 : f32 to vector<512x64xf32>
    %40 = arith.maximumf %38, %39 : vector<512x64xf32>
    %c8_35 = arith.constant 8 : index
    %c0_36 = arith.constant 0 : index
    %41 = vector.load %arg13[%c8_35, %c0_36] : memref<528x64xf32, #tpu.memory_space<vmem>>, vector<512x64xf32>
    tpu.vector_store %arg13[%c8_35, %c0_36], %40 {strides = array<i32>} : memref<528x64xf32, #tpu.memory_space<vmem>>, vector<512x64xf32>,
    %c520 = arith.constant 520 : index
    %c0_37 = arith.constant 0 : index
    %42 = vector.load %arg13[%c520, %c0_37] : memref<528x64xf32, #tpu.memory_space<vmem>>, vector<1x64xf32>
    tpu.vector_store %arg13[%c520, %c0_37], %7 {strides = array<i32>} : memref<528x64xf32, #tpu.memory_space<vmem>>, vector<1x64xf32>,
    %c7_38 = arith.constant 7 : index
    %c0_39 = arith.constant 0 : index
    %43 = tpu.strided_load %arg13[%c7_38, %c0_39] {strides = array<i32: 2, 1>} : memref<528x64xf32, #tpu.memory_space<vmem>>, vector<256x64xf32>
    %44 = arith.truncf %43 : vector<256x64xf32> to vector<256x64xbf16>
    %c8_40 = arith.constant 8 : index
    %c0_41 = arith.constant 0 : index
    %45 = tpu.strided_load %arg13[%c8_40, %c0_41] {strides = array<i32: 2, 1>} : memref<528x64xf32, #tpu.memory_space<vmem>>, vector<256x64xf32>
    %46 = arith.truncf %45 : vector<256x64xf32> to vector<256x64xbf16>
    %c9_42 = arith.constant 9 : index
    %c0_43 = arith.constant 0 : index
    %47 = tpu.strided_load %arg13[%c9_42, %c0_43] {strides = array<i32: 2, 1>} : memref<528x64xf32, #tpu.memory_space<vmem>>, vector<256x64xf32>
    %48 = arith.truncf %47 : vector<256x64xf32> to vector<256x64xbf16>
    %c10_44 = arith.constant 10 : index
    %c0_45 = arith.constant 0 : index
    %49 = tpu.strided_load %arg13[%c10_44, %c0_45] {strides = array<i32: 2, 1>} : memref<528x64xf32, #tpu.memory_space<vmem>>, vector<256x64xf32>
    %50 = arith.truncf %49 : vector<256x64xf32> to vector<256x64xbf16>
    %c1_46 = arith.constant 1 : index
    %c0_47 = arith.constant 0 : index
    %c0_48 = arith.constant 0 : index
    %c0_49 = arith.constant 0 : index
    %51 = vector.load %arg2[%c1_46, %c0_47, %c0_48, %c0_49] : memref<7x3x64x64xbf16, #tpu.memory_space<vmem>>, vector<1x1x64x64xbf16>
    %52 = vector.shape_cast %51 : vector<1x1x64x64xbf16> to vector<64x64xbf16>
    %c1_50 = arith.constant 1 : index
    %c1_51 = arith.constant 1 : index
    %c0_52 = arith.constant 0 : index
    %c0_53 = arith.constant 0 : index
    %53 = vector.load %arg2[%c1_50, %c1_51, %c0_52, %c0_53] : memref<7x3x64x64xbf16, #tpu.memory_space<vmem>>, vector<1x1x64x64xbf16>
    %54 = vector.shape_cast %53 : vector<1x1x64x64xbf16> to vector<64x64xbf16>
    %c1_54 = arith.constant 1 : index
    %c2_55 = arith.constant 2 : index
    %c0_56 = arith.constant 0 : index
    %c0_57 = arith.constant 0 : index
    %55 = vector.load %arg2[%c1_54, %c2_55, %c0_56, %c0_57] : memref<7x3x64x64xbf16, #tpu.memory_space<vmem>>, vector<1x1x64x64xbf16>
    %56 = vector.shape_cast %55 : vector<1x1x64x64xbf16> to vector<64x64xbf16>
    %cst_58 = arith.constant dense<0.000000e+00> : vector<256x64xf32>
    %57 = tpu.matmul %44, %52, %cst_58 {dimension_numbers = #tpu.dot_dimension_numbers<[1], [0], [0], [1], [0, 0, 1, 1], [], []>} : vector<256x64xbf16>, vector<64x64xbf16>, vector<256x64xf32> -> vector<256x64xf32>
    %cst_59 = arith.constant dense<0.000000e+00> : vector<256x64xf32>
    %58 = tpu.matmul %46, %54, %cst_59 {dimension_numbers = #tpu.dot_dimension_numbers<[1], [0], [0], [1], [0, 0, 1, 1], [], []>} : vector<256x64xbf16>, vector<64x64xbf16>, vector<256x64xf32> -> vector<256x64xf32>
    %59 = arith.addf %57, %58 : vector<256x64xf32>
    %cst_60 = arith.constant dense<0.000000e+00> : vector<256x64xf32>
    %60 = tpu.matmul %48, %56, %cst_60 {dimension_numbers = #tpu.dot_dimension_numbers<[1], [0], [0], [1], [0, 0, 1, 1], [], []>} : vector<256x64xbf16>, vector<64x64xbf16>, vector<256x64xf32> -> vector<256x64xf32>
    %61 = arith.addf %59, %60 : vector<256x64xf32>
    %cst_61 = arith.constant dense<0.000000e+00> : vector<256x64xf32>
    %62 = tpu.matmul %46, %52, %cst_61 {dimension_numbers = #tpu.dot_dimension_numbers<[1], [0], [0], [1], [0, 0, 1, 1], [], []>} : vector<256x64xbf16>, vector<64x64xbf16>, vector<256x64xf32> -> vector<256x64xf32>
    %cst_62 = arith.constant dense<0.000000e+00> : vector<256x64xf32>
    %63 = tpu.matmul %48, %54, %cst_62 {dimension_numbers = #tpu.dot_dimension_numbers<[1], [0], [0], [1], [0, 0, 1, 1], [], []>} : vector<256x64xbf16>, vector<64x64xbf16>, vector<256x64xf32> -> vector<256x64xf32>
    %64 = arith.addf %62, %63 : vector<256x64xf32>
    %cst_63 = arith.constant dense<0.000000e+00> : vector<256x64xf32>
    %65 = tpu.matmul %50, %56, %cst_63 {dimension_numbers = #tpu.dot_dimension_numbers<[1], [0], [0], [1], [0, 0, 1, 1], [], []>} : vector<256x64xbf16>, vector<64x64xbf16>, vector<256x64xf32> -> vector<256x64xf32>
    %66 = arith.addf %64, %65 : vector<256x64xf32>
    %67 = arith.maximumf %61, %66 : vector<256x64xf32>
    %c1_64 = arith.constant 1 : index
    %c0_65 = arith.constant 0 : index
    %68 = vector.load %arg3[%c1_64, %c0_65] : memref<7x64xf32, #tpu.memory_space<vmem>>, vector<1x64xf32>
    %69 = vector.broadcast %68 : vector<1x64xf32> to vector<256x64xf32>
    %70 = arith.mulf %67, %69 : vector<256x64xf32>
    %c1_66 = arith.constant 1 : index
    %c0_67 = arith.constant 0 : index
    %71 = vector.load %arg4[%c1_66, %c0_67] : memref<7x64xf32, #tpu.memory_space<vmem>>, vector<1x64xf32>
    %72 = vector.broadcast %71 : vector<1x64xf32> to vector<256x64xf32>
    %73 = arith.addf %70, %72 : vector<256x64xf32>
    %cst_68 = arith.constant 0.000000e+00 : f32
    %74 = vector.broadcast %cst_68 : f32 to vector<256x64xf32>
    %75 = arith.maximumf %73, %74 : vector<256x64xf32>
    %c8_69 = arith.constant 8 : index
    %c0_70 = arith.constant 0 : index
    %76 = vector.load %arg12[%c8_69, %c0_70] : memref<1040x64xf32, #tpu.memory_space<vmem>>, vector<256x64xf32>
    tpu.vector_store %arg12[%c8_69, %c0_70], %75 {strides = array<i32>} : memref<1040x64xf32, #tpu.memory_space<vmem>>, vector<256x64xf32>,
    %c264 = arith.constant 264 : index
    %c0_71 = arith.constant 0 : index
    %77 = vector.load %arg12[%c264, %c0_71] : memref<1040x64xf32, #tpu.memory_space<vmem>>, vector<1x64xf32>
    tpu.vector_store %arg12[%c264, %c0_71], %7 {strides = array<i32>} : memref<1040x64xf32, #tpu.memory_space<vmem>>, vector<1x64xf32>,
    %c7_72 = arith.constant 7 : index
    %c0_73 = arith.constant 0 : index
    %78 = tpu.strided_load %arg12[%c7_72, %c0_73] {strides = array<i32: 2, 1>} : memref<1040x64xf32, #tpu.memory_space<vmem>>, vector<128x64xf32>
    %79 = arith.truncf %78 : vector<128x64xf32> to vector<128x64xbf16>
    %c8_74 = arith.constant 8 : index
    %c0_75 = arith.constant 0 : index
    %80 = tpu.strided_load %arg12[%c8_74, %c0_75] {strides = array<i32: 2, 1>} : memref<1040x64xf32, #tpu.memory_space<vmem>>, vector<128x64xf32>
    %81 = arith.truncf %80 : vector<128x64xf32> to vector<128x64xbf16>
    %c9_76 = arith.constant 9 : index
    %c0_77 = arith.constant 0 : index
    %82 = tpu.strided_load %arg12[%c9_76, %c0_77] {strides = array<i32: 2, 1>} : memref<1040x64xf32, #tpu.memory_space<vmem>>, vector<128x64xf32>
    %83 = arith.truncf %82 : vector<128x64xf32> to vector<128x64xbf16>
    %c10_78 = arith.constant 10 : index
    %c0_79 = arith.constant 0 : index
    %84 = tpu.strided_load %arg12[%c10_78, %c0_79] {strides = array<i32: 2, 1>} : memref<1040x64xf32, #tpu.memory_space<vmem>>, vector<128x64xf32>
    %85 = arith.truncf %84 : vector<128x64xf32> to vector<128x64xbf16>
    %c2_80 = arith.constant 2 : index
    %c0_81 = arith.constant 0 : index
    %c0_82 = arith.constant 0 : index
    %c0_83 = arith.constant 0 : index
    %86 = vector.load %arg2[%c2_80, %c0_81, %c0_82, %c0_83] : memref<7x3x64x64xbf16, #tpu.memory_space<vmem>>, vector<1x1x64x64xbf16>
    %87 = vector.shape_cast %86 : vector<1x1x64x64xbf16> to vector<64x64xbf16>
    %c2_84 = arith.constant 2 : index
    %c1_85 = arith.constant 1 : index
    %c0_86 = arith.constant 0 : index
    %c0_87 = arith.constant 0 : index
    %88 = vector.load %arg2[%c2_84, %c1_85, %c0_86, %c0_87] : memref<7x3x64x64xbf16, #tpu.memory_space<vmem>>, vector<1x1x64x64xbf16>
    %89 = vector.shape_cast %88 : vector<1x1x64x64xbf16> to vector<64x64xbf16>
    %c2_88 = arith.constant 2 : index
    %c2_89 = arith.constant 2 : index
    %c0_90 = arith.constant 0 : index
    %c0_91 = arith.constant 0 : index
    %90 = vector.load %arg2[%c2_88, %c2_89, %c0_90, %c0_91] : memref<7x3x64x64xbf16, #tpu.memory_space<vmem>>, vector<1x1x64x64xbf16>
    %91 = vector.shape_cast %90 : vector<1x1x64x64xbf16> to vector<64x64xbf16>
    %cst_92 = arith.constant dense<0.000000e+00> : vector<128x64xf32>
    %92 = tpu.matmul %79, %87, %cst_92 {dimension_numbers = #tpu.dot_dimension_numbers<[1], [0], [0], [1], [0, 0, 1, 1], [], []>} : vector<128x64xbf16>, vector<64x64xbf16>, vector<128x64xf32> -> vector<128x64xf32>
    %cst_93 = arith.constant dense<0.000000e+00> : vector<128x64xf32>
    %93 = tpu.matmul %81, %89, %cst_93 {dimension_numbers = #tpu.dot_dimension_numbers<[1], [0], [0], [1], [0, 0, 1, 1], [], []>} : vector<128x64xbf16>, vector<64x64xbf16>, vector<128x64xf32> -> vector<128x64xf32>
    %94 = arith.addf %92, %93 : vector<128x64xf32>
    %cst_94 = arith.constant dense<0.000000e+00> : vector<128x64xf32>
    %95 = tpu.matmul %83, %91, %cst_94 {dimension_numbers = #tpu.dot_dimension_numbers<[1], [0], [0], [1], [0, 0, 1, 1], [], []>} : vector<128x64xbf16>, vector<64x64xbf16>, vector<128x64xf32> -> vector<128x64xf32>
    %96 = arith.addf %94, %95 : vector<128x64xf32>
    %cst_95 = arith.constant dense<0.000000e+00> : vector<128x64xf32>
    %97 = tpu.matmul %81, %87, %cst_95 {dimension_numbers = #tpu.dot_dimension_numbers<[1], [0], [0], [1], [0, 0, 1, 1], [], []>} : vector<128x64xbf16>, vector<64x64xbf16>, vector<128x64xf32> -> vector<128x64xf32>
    %cst_96 = arith.constant dense<0.000000e+00> : vector<128x64xf32>
    %98 = tpu.matmul %83, %89, %cst_96 {dimension_numbers = #tpu.dot_dimension_numbers<[1], [0], [0], [1], [0, 0, 1, 1], [], []>} : vector<128x64xbf16>, vector<64x64xbf16>, vector<128x64xf32> -> vector<128x64xf32>
    %99 = arith.addf %97, %98 : vector<128x64xf32>
    %cst_97 = arith.constant dense<0.000000e+00> : vector<128x64xf32>
    %100 = tpu.matmul %85, %91, %cst_97 {dimension_numbers = #tpu.dot_dimension_numbers<[1], [0], [0], [1], [0, 0, 1, 1], [], []>} : vector<128x64xbf16>, vector<64x64xbf16>, vector<128x64xf32> -> vector<128x64xf32>
    %101 = arith.addf %99, %100 : vector<128x64xf32>
    %102 = arith.maximumf %96, %101 : vector<128x64xf32>
    %c2_98 = arith.constant 2 : index
    %c0_99 = arith.constant 0 : index
    %103 = vector.load %arg3[%c2_98, %c0_99] : memref<7x64xf32, #tpu.memory_space<vmem>>, vector<1x64xf32>
    %104 = vector.broadcast %103 : vector<1x64xf32> to vector<128x64xf32>
    %105 = arith.mulf %102, %104 : vector<128x64xf32>
    %c2_100 = arith.constant 2 : index
    %c0_101 = arith.constant 0 : index
    %106 = vector.load %arg4[%c2_100, %c0_101] : memref<7x64xf32, #tpu.memory_space<vmem>>, vector<1x64xf32>
    %107 = vector.broadcast %106 : vector<1x64xf32> to vector<128x64xf32>
    %108 = arith.addf %105, %107 : vector<128x64xf32>
    %cst_102 = arith.constant 0.000000e+00 : f32
    %109 = vector.broadcast %cst_102 : f32 to vector<128x64xf32>
    %110 = arith.maximumf %108, %109 : vector<128x64xf32>
    %c8_103 = arith.constant 8 : index
    %c0_104 = arith.constant 0 : index
    %111 = vector.load %arg13[%c8_103, %c0_104] : memref<528x64xf32, #tpu.memory_space<vmem>>, vector<128x64xf32>
    tpu.vector_store %arg13[%c8_103, %c0_104], %110 {strides = array<i32>} : memref<528x64xf32, #tpu.memory_space<vmem>>, vector<128x64xf32>,
    %c136 = arith.constant 136 : index
    %c0_105 = arith.constant 0 : index
    %112 = vector.load %arg13[%c136, %c0_105] : memref<528x64xf32, #tpu.memory_space<vmem>>, vector<1x64xf32>
    tpu.vector_store %arg13[%c136, %c0_105], %7 {strides = array<i32>} : memref<528x64xf32, #tpu.memory_space<vmem>>, vector<1x64xf32>,
    %c7_106 = arith.constant 7 : index
    %c0_107 = arith.constant 0 : index
    %113 = tpu.strided_load %arg13[%c7_106, %c0_107] {strides = array<i32: 2, 1>} : memref<528x64xf32, #tpu.memory_space<vmem>>, vector<64x64xf32>
    %114 = arith.truncf %113 : vector<64x64xf32> to vector<64x64xbf16>
    %c8_108 = arith.constant 8 : index
    %c0_109 = arith.constant 0 : index
    %115 = tpu.strided_load %arg13[%c8_108, %c0_109] {strides = array<i32: 2, 1>} : memref<528x64xf32, #tpu.memory_space<vmem>>, vector<64x64xf32>
    %116 = arith.truncf %115 : vector<64x64xf32> to vector<64x64xbf16>
    %c9_110 = arith.constant 9 : index
    %c0_111 = arith.constant 0 : index
    %117 = tpu.strided_load %arg13[%c9_110, %c0_111] {strides = array<i32: 2, 1>} : memref<528x64xf32, #tpu.memory_space<vmem>>, vector<64x64xf32>
    %118 = arith.truncf %117 : vector<64x64xf32> to vector<64x64xbf16>
    %c10_112 = arith.constant 10 : index
    %c0_113 = arith.constant 0 : index
    %119 = tpu.strided_load %arg13[%c10_112, %c0_113] {strides = array<i32: 2, 1>} : memref<528x64xf32, #tpu.memory_space<vmem>>, vector<64x64xf32>
    %120 = arith.truncf %119 : vector<64x64xf32> to vector<64x64xbf16>
    %c3 = arith.constant 3 : index
    %c0_114 = arith.constant 0 : index
    %c0_115 = arith.constant 0 : index
    %c0_116 = arith.constant 0 : index
    %121 = vector.load %arg2[%c3, %c0_114, %c0_115, %c0_116] : memref<7x3x64x64xbf16, #tpu.memory_space<vmem>>, vector<1x1x64x64xbf16>
    %122 = vector.shape_cast %121 : vector<1x1x64x64xbf16> to vector<64x64xbf16>
    %c3_117 = arith.constant 3 : index
    %c1_118 = arith.constant 1 : index
    %c0_119 = arith.constant 0 : index
    %c0_120 = arith.constant 0 : index
    %123 = vector.load %arg2[%c3_117, %c1_118, %c0_119, %c0_120] : memref<7x3x64x64xbf16, #tpu.memory_space<vmem>>, vector<1x1x64x64xbf16>
    %124 = vector.shape_cast %123 : vector<1x1x64x64xbf16> to vector<64x64xbf16>
    %c3_121 = arith.constant 3 : index
    %c2_122 = arith.constant 2 : index
    %c0_123 = arith.constant 0 : index
    %c0_124 = arith.constant 0 : index
    %125 = vector.load %arg2[%c3_121, %c2_122, %c0_123, %c0_124] : memref<7x3x64x64xbf16, #tpu.memory_space<vmem>>, vector<1x1x64x64xbf16>
    %126 = vector.shape_cast %125 : vector<1x1x64x64xbf16> to vector<64x64xbf16>
    %cst_125 = arith.constant dense<0.000000e+00> : vector<64x64xf32>
    %127 = tpu.matmul %114, %122, %cst_125 {dimension_numbers = #tpu.dot_dimension_numbers<[1], [0], [0], [1], [0, 0, 1, 1], [], []>} : vector<64x64xbf16>, vector<64x64xbf16>, vector<64x64xf32> -> vector<64x64xf32>
    %cst_126 = arith.constant dense<0.000000e+00> : vector<64x64xf32>
    %128 = tpu.matmul %116, %124, %cst_126 {dimension_numbers = #tpu.dot_dimension_numbers<[1], [0], [0], [1], [0, 0, 1, 1], [], []>} : vector<64x64xbf16>, vector<64x64xbf16>, vector<64x64xf32> -> vector<64x64xf32>
    %129 = arith.addf %127, %128 : vector<64x64xf32>
    %cst_127 = arith.constant dense<0.000000e+00> : vector<64x64xf32>
    %130 = tpu.matmul %118, %126, %cst_127 {dimension_numbers = #tpu.dot_dimension_numbers<[1], [0], [0], [1], [0, 0, 1, 1], [], []>} : vector<64x64xbf16>, vector<64x64xbf16>, vector<64x64xf32> -> vector<64x64xf32>
    %131 = arith.addf %129, %130 : vector<64x64xf32>
    %cst_128 = arith.constant dense<0.000000e+00> : vector<64x64xf32>
    %132 = tpu.matmul %116, %122, %cst_128 {dimension_numbers = #tpu.dot_dimension_numbers<[1], [0], [0], [1], [0, 0, 1, 1], [], []>} : vector<64x64xbf16>, vector<64x64xbf16>, vector<64x64xf32> -> vector<64x64xf32>
    %cst_129 = arith.constant dense<0.000000e+00> : vector<64x64xf32>
    %133 = tpu.matmul %118, %124, %cst_129 {dimension_numbers = #tpu.dot_dimension_numbers<[1], [0], [0], [1], [0, 0, 1, 1], [], []>} : vector<64x64xbf16>, vector<64x64xbf16>, vector<64x64xf32> -> vector<64x64xf32>
    %134 = arith.addf %132, %133 : vector<64x64xf32>
    %cst_130 = arith.constant dense<0.000000e+00> : vector<64x64xf32>
    %135 = tpu.matmul %120, %126, %cst_130 {dimension_numbers = #tpu.dot_dimension_numbers<[1], [0], [0], [1], [0, 0, 1, 1], [], []>} : vector<64x64xbf16>, vector<64x64xbf16>, vector<64x64xf32> -> vector<64x64xf32>
    %136 = arith.addf %134, %135 : vector<64x64xf32>
    %137 = arith.maximumf %131, %136 : vector<64x64xf32>
    %c3_131 = arith.constant 3 : index
    %c0_132 = arith.constant 0 : index
    %138 = vector.load %arg3[%c3_131, %c0_132] : memref<7x64xf32, #tpu.memory_space<vmem>>, vector<1x64xf32>
    %139 = vector.broadcast %138 : vector<1x64xf32> to vector<64x64xf32>
    %140 = arith.mulf %137, %139 : vector<64x64xf32>
    %c3_133 = arith.constant 3 : index
    %c0_134 = arith.constant 0 : index
    %141 = vector.load %arg4[%c3_133, %c0_134] : memref<7x64xf32, #tpu.memory_space<vmem>>, vector<1x64xf32>
    %142 = vector.broadcast %141 : vector<1x64xf32> to vector<64x64xf32>
    %143 = arith.addf %140, %142 : vector<64x64xf32>
    %cst_135 = arith.constant 0.000000e+00 : f32
    %144 = vector.broadcast %cst_135 : f32 to vector<64x64xf32>
    %145 = arith.maximumf %143, %144 : vector<64x64xf32>
    %c8_136 = arith.constant 8 : index
    %c0_137 = arith.constant 0 : index
    %146 = vector.load %arg12[%c8_136, %c0_137] : memref<1040x64xf32, #tpu.memory_space<vmem>>, vector<64x64xf32>
    tpu.vector_store %arg12[%c8_136, %c0_137], %145 {strides = array<i32>} : memref<1040x64xf32, #tpu.memory_space<vmem>>, vector<64x64xf32>,
    %c72 = arith.constant 72 : index
    %c0_138 = arith.constant 0 : index
    %147 = vector.load %arg12[%c72, %c0_138] : memref<1040x64xf32, #tpu.memory_space<vmem>>, vector<1x64xf32>
    tpu.vector_store %arg12[%c72, %c0_138], %7 {strides = array<i32>} : memref<1040x64xf32, #tpu.memory_space<vmem>>, vector<1x64xf32>,
    %c7_139 = arith.constant 7 : index
    %c0_140 = arith.constant 0 : index
    %148 = tpu.strided_load %arg12[%c7_139, %c0_140] {strides = array<i32: 2, 1>} : memref<1040x64xf32, #tpu.memory_space<vmem>>, vector<32x64xf32>
    %149 = arith.truncf %148 : vector<32x64xf32> to vector<32x64xbf16>
    %c8_141 = arith.constant 8 : index
    %c0_142 = arith.constant 0 : index
    %150 = tpu.strided_load %arg12[%c8_141, %c0_142] {strides = array<i32: 2, 1>} : memref<1040x64xf32, #tpu.memory_space<vmem>>, vector<32x64xf32>
    %151 = arith.truncf %150 : vector<32x64xf32> to vector<32x64xbf16>
    %c9_143 = arith.constant 9 : index
    %c0_144 = arith.constant 0 : index
    %152 = tpu.strided_load %arg12[%c9_143, %c0_144] {strides = array<i32: 2, 1>} : memref<1040x64xf32, #tpu.memory_space<vmem>>, vector<32x64xf32>
    %153 = arith.truncf %152 : vector<32x64xf32> to vector<32x64xbf16>
    %c10_145 = arith.constant 10 : index
    %c0_146 = arith.constant 0 : index
    %154 = tpu.strided_load %arg12[%c10_145, %c0_146] {strides = array<i32: 2, 1>} : memref<1040x64xf32, #tpu.memory_space<vmem>>, vector<32x64xf32>
    %155 = arith.truncf %154 : vector<32x64xf32> to vector<32x64xbf16>
    %c4 = arith.constant 4 : index
    %c0_147 = arith.constant 0 : index
    %c0_148 = arith.constant 0 : index
    %c0_149 = arith.constant 0 : index
    %156 = vector.load %arg2[%c4, %c0_147, %c0_148, %c0_149] : memref<7x3x64x64xbf16, #tpu.memory_space<vmem>>, vector<1x1x64x64xbf16>
    %157 = vector.shape_cast %156 : vector<1x1x64x64xbf16> to vector<64x64xbf16>
    %c4_150 = arith.constant 4 : index
    %c1_151 = arith.constant 1 : index
    %c0_152 = arith.constant 0 : index
    %c0_153 = arith.constant 0 : index
    %158 = vector.load %arg2[%c4_150, %c1_151, %c0_152, %c0_153] : memref<7x3x64x64xbf16, #tpu.memory_space<vmem>>, vector<1x1x64x64xbf16>
    %159 = vector.shape_cast %158 : vector<1x1x64x64xbf16> to vector<64x64xbf16>
    %c4_154 = arith.constant 4 : index
    %c2_155 = arith.constant 2 : index
    %c0_156 = arith.constant 0 : index
    %c0_157 = arith.constant 0 : index
    %160 = vector.load %arg2[%c4_154, %c2_155, %c0_156, %c0_157] : memref<7x3x64x64xbf16, #tpu.memory_space<vmem>>, vector<1x1x64x64xbf16>
    %161 = vector.shape_cast %160 : vector<1x1x64x64xbf16> to vector<64x64xbf16>
    %cst_158 = arith.constant dense<0.000000e+00> : vector<32x64xf32>
    %162 = tpu.matmul %149, %157, %cst_158 {dimension_numbers = #tpu.dot_dimension_numbers<[1], [0], [0], [1], [0, 0, 1, 1], [], []>} : vector<32x64xbf16>, vector<64x64xbf16>, vector<32x64xf32> -> vector<32x64xf32>
    %cst_159 = arith.constant dense<0.000000e+00> : vector<32x64xf32>
    %163 = tpu.matmul %151, %159, %cst_159 {dimension_numbers = #tpu.dot_dimension_numbers<[1], [0], [0], [1], [0, 0, 1, 1], [], []>} : vector<32x64xbf16>, vector<64x64xbf16>, vector<32x64xf32> -> vector<32x64xf32>
    %164 = arith.addf %162, %163 : vector<32x64xf32>
    %cst_160 = arith.constant dense<0.000000e+00> : vector<32x64xf32>
    %165 = tpu.matmul %153, %161, %cst_160 {dimension_numbers = #tpu.dot_dimension_numbers<[1], [0], [0], [1], [0, 0, 1, 1], [], []>} : vector<32x64xbf16>, vector<64x64xbf16>, vector<32x64xf32> -> vector<32x64xf32>
    %166 = arith.addf %164, %165 : vector<32x64xf32>
    %cst_161 = arith.constant dense<0.000000e+00> : vector<32x64xf32>
    %167 = tpu.matmul %151, %157, %cst_161 {dimension_numbers = #tpu.dot_dimension_numbers<[1], [0], [0], [1], [0, 0, 1, 1], [], []>} : vector<32x64xbf16>, vector<64x64xbf16>, vector<32x64xf32> -> vector<32x64xf32>
    %cst_162 = arith.constant dense<0.000000e+00> : vector<32x64xf32>
    %168 = tpu.matmul %153, %159, %cst_162 {dimension_numbers = #tpu.dot_dimension_numbers<[1], [0], [0], [1], [0, 0, 1, 1], [], []>} : vector<32x64xbf16>, vector<64x64xbf16>, vector<32x64xf32> -> vector<32x64xf32>
    %169 = arith.addf %167, %168 : vector<32x64xf32>
    %cst_163 = arith.constant dense<0.000000e+00> : vector<32x64xf32>
    %170 = tpu.matmul %155, %161, %cst_163 {dimension_numbers = #tpu.dot_dimension_numbers<[1], [0], [0], [1], [0, 0, 1, 1], [], []>} : vector<32x64xbf16>, vector<64x64xbf16>, vector<32x64xf32> -> vector<32x64xf32>
    %171 = arith.addf %169, %170 : vector<32x64xf32>
    %172 = arith.maximumf %166, %171 : vector<32x64xf32>
    %c4_164 = arith.constant 4 : index
    %c0_165 = arith.constant 0 : index
    %173 = vector.load %arg3[%c4_164, %c0_165] : memref<7x64xf32, #tpu.memory_space<vmem>>, vector<1x64xf32>
    %174 = vector.broadcast %173 : vector<1x64xf32> to vector<32x64xf32>
    %175 = arith.mulf %172, %174 : vector<32x64xf32>
    %c4_166 = arith.constant 4 : index
    %c0_167 = arith.constant 0 : index
    %176 = vector.load %arg4[%c4_166, %c0_167] : memref<7x64xf32, #tpu.memory_space<vmem>>, vector<1x64xf32>
    %177 = vector.broadcast %176 : vector<1x64xf32> to vector<32x64xf32>
    %178 = arith.addf %175, %177 : vector<32x64xf32>
    %cst_168 = arith.constant 0.000000e+00 : f32
    %179 = vector.broadcast %cst_168 : f32 to vector<32x64xf32>
    %180 = arith.maximumf %178, %179 : vector<32x64xf32>
    %c8_169 = arith.constant 8 : index
    %c0_170 = arith.constant 0 : index
    %181 = vector.load %arg13[%c8_169, %c0_170] : memref<528x64xf32, #tpu.memory_space<vmem>>, vector<32x64xf32>
    tpu.vector_store %arg13[%c8_169, %c0_170], %180 {strides = array<i32>} : memref<528x64xf32, #tpu.memory_space<vmem>>, vector<32x64xf32>,
    %c40 = arith.constant 40 : index
    %c0_171 = arith.constant 0 : index
    %182 = vector.load %arg13[%c40, %c0_171] : memref<528x64xf32, #tpu.memory_space<vmem>>, vector<1x64xf32>
    tpu.vector_store %arg13[%c40, %c0_171], %7 {strides = array<i32>} : memref<528x64xf32, #tpu.memory_space<vmem>>, vector<1x64xf32>,
    %c7_172 = arith.constant 7 : index
    %c0_173 = arith.constant 0 : index
    %183 = tpu.strided_load %arg13[%c7_172, %c0_173] {strides = array<i32: 2, 1>} : memref<528x64xf32, #tpu.memory_space<vmem>>, vector<16x64xf32>
    %184 = arith.truncf %183 : vector<16x64xf32> to vector<16x64xbf16>
    %c8_174 = arith.constant 8 : index
    %c0_175 = arith.constant 0 : index
    %185 = tpu.strided_load %arg13[%c8_174, %c0_175] {strides = array<i32: 2, 1>} : memref<528x64xf32, #tpu.memory_space<vmem>>, vector<16x64xf32>
    %186 = arith.truncf %185 : vector<16x64xf32> to vector<16x64xbf16>
    %c9_176 = arith.constant 9 : index
    %c0_177 = arith.constant 0 : index
    %187 = tpu.strided_load %arg13[%c9_176, %c0_177] {strides = array<i32: 2, 1>} : memref<528x64xf32, #tpu.memory_space<vmem>>, vector<16x64xf32>
    %188 = arith.truncf %187 : vector<16x64xf32> to vector<16x64xbf16>
    %c10_178 = arith.constant 10 : index
    %c0_179 = arith.constant 0 : index
    %189 = tpu.strided_load %arg13[%c10_178, %c0_179] {strides = array<i32: 2, 1>} : memref<528x64xf32, #tpu.memory_space<vmem>>, vector<16x64xf32>
    %190 = arith.truncf %189 : vector<16x64xf32> to vector<16x64xbf16>
    %c5 = arith.constant 5 : index
    %c0_180 = arith.constant 0 : index
    %c0_181 = arith.constant 0 : index
    %c0_182 = arith.constant 0 : index
    %191 = vector.load %arg2[%c5, %c0_180, %c0_181, %c0_182] : memref<7x3x64x64xbf16, #tpu.memory_space<vmem>>, vector<1x1x64x64xbf16>
    %192 = vector.shape_cast %191 : vector<1x1x64x64xbf16> to vector<64x64xbf16>
    %c5_183 = arith.constant 5 : index
    %c1_184 = arith.constant 1 : index
    %c0_185 = arith.constant 0 : index
    %c0_186 = arith.constant 0 : index
    %193 = vector.load %arg2[%c5_183, %c1_184, %c0_185, %c0_186] : memref<7x3x64x64xbf16, #tpu.memory_space<vmem>>, vector<1x1x64x64xbf16>
    %194 = vector.shape_cast %193 : vector<1x1x64x64xbf16> to vector<64x64xbf16>
    %c5_187 = arith.constant 5 : index
    %c2_188 = arith.constant 2 : index
    %c0_189 = arith.constant 0 : index
    %c0_190 = arith.constant 0 : index
    %195 = vector.load %arg2[%c5_187, %c2_188, %c0_189, %c0_190] : memref<7x3x64x64xbf16, #tpu.memory_space<vmem>>, vector<1x1x64x64xbf16>
    %196 = vector.shape_cast %195 : vector<1x1x64x64xbf16> to vector<64x64xbf16>
    %cst_191 = arith.constant dense<0.000000e+00> : vector<16x64xf32>
    %197 = tpu.matmul %184, %192, %cst_191 {dimension_numbers = #tpu.dot_dimension_numbers<[1], [0], [0], [1], [0, 0, 1, 1], [], []>} : vector<16x64xbf16>, vector<64x64xbf16>, vector<16x64xf32> -> vector<16x64xf32>
    %cst_192 = arith.constant dense<0.000000e+00> : vector<16x64xf32>
    %198 = tpu.matmul %186, %194, %cst_192 {dimension_numbers = #tpu.dot_dimension_numbers<[1], [0], [0], [1], [0, 0, 1, 1], [], []>} : vector<16x64xbf16>, vector<64x64xbf16>, vector<16x64xf32> -> vector<16x64xf32>
    %199 = arith.addf %197, %198 : vector<16x64xf32>
    %cst_193 = arith.constant dense<0.000000e+00> : vector<16x64xf32>
    %200 = tpu.matmul %188, %196, %cst_193 {dimension_numbers = #tpu.dot_dimension_numbers<[1], [0], [0], [1], [0, 0, 1, 1], [], []>} : vector<16x64xbf16>, vector<64x64xbf16>, vector<16x64xf32> -> vector<16x64xf32>
    %201 = arith.addf %199, %200 : vector<16x64xf32>
    %cst_194 = arith.constant dense<0.000000e+00> : vector<16x64xf32>
    %202 = tpu.matmul %186, %192, %cst_194 {dimension_numbers = #tpu.dot_dimension_numbers<[1], [0], [0], [1], [0, 0, 1, 1], [], []>} : vector<16x64xbf16>, vector<64x64xbf16>, vector<16x64xf32> -> vector<16x64xf32>
    %cst_195 = arith.constant dense<0.000000e+00> : vector<16x64xf32>
    %203 = tpu.matmul %188, %194, %cst_195 {dimension_numbers = #tpu.dot_dimension_numbers<[1], [0], [0], [1], [0, 0, 1, 1], [], []>} : vector<16x64xbf16>, vector<64x64xbf16>, vector<16x64xf32> -> vector<16x64xf32>
    %204 = arith.addf %202, %203 : vector<16x64xf32>
    %cst_196 = arith.constant dense<0.000000e+00> : vector<16x64xf32>
    %205 = tpu.matmul %190, %196, %cst_196 {dimension_numbers = #tpu.dot_dimension_numbers<[1], [0], [0], [1], [0, 0, 1, 1], [], []>} : vector<16x64xbf16>, vector<64x64xbf16>, vector<16x64xf32> -> vector<16x64xf32>
    %206 = arith.addf %204, %205 : vector<16x64xf32>
    %207 = arith.maximumf %201, %206 : vector<16x64xf32>
    %c5_197 = arith.constant 5 : index
    %c0_198 = arith.constant 0 : index
    %208 = vector.load %arg3[%c5_197, %c0_198] : memref<7x64xf32, #tpu.memory_space<vmem>>, vector<1x64xf32>
    %209 = vector.broadcast %208 : vector<1x64xf32> to vector<16x64xf32>
    %210 = arith.mulf %207, %209 : vector<16x64xf32>
    %c5_199 = arith.constant 5 : index
    %c0_200 = arith.constant 0 : index
    %211 = vector.load %arg4[%c5_199, %c0_200] : memref<7x64xf32, #tpu.memory_space<vmem>>, vector<1x64xf32>
    %212 = vector.broadcast %211 : vector<1x64xf32> to vector<16x64xf32>
    %213 = arith.addf %210, %212 : vector<16x64xf32>
    %cst_201 = arith.constant 0.000000e+00 : f32
    %214 = vector.broadcast %cst_201 : f32 to vector<16x64xf32>
    %215 = arith.maximumf %213, %214 : vector<16x64xf32>
    %c8_202 = arith.constant 8 : index
    %c0_203 = arith.constant 0 : index
    %216 = vector.load %arg12[%c8_202, %c0_203] : memref<1040x64xf32, #tpu.memory_space<vmem>>, vector<16x64xf32>
    tpu.vector_store %arg12[%c8_202, %c0_203], %215 {strides = array<i32>} : memref<1040x64xf32, #tpu.memory_space<vmem>>, vector<16x64xf32>,
    %c24 = arith.constant 24 : index
    %c0_204 = arith.constant 0 : index
    %217 = vector.load %arg12[%c24, %c0_204] : memref<1040x64xf32, #tpu.memory_space<vmem>>, vector<1x64xf32>
    tpu.vector_store %arg12[%c24, %c0_204], %7 {strides = array<i32>} : memref<1040x64xf32, #tpu.memory_space<vmem>>, vector<1x64xf32>,
    %c7_205 = arith.constant 7 : index
    %c0_206 = arith.constant 0 : index
    %218 = tpu.strided_load %arg12[%c7_205, %c0_206] {strides = array<i32: 2, 1>} : memref<1040x64xf32, #tpu.memory_space<vmem>>, vector<8x64xf32>
    %219 = arith.truncf %218 : vector<8x64xf32> to vector<8x64xbf16>
    %c8_207 = arith.constant 8 : index
    %c0_208 = arith.constant 0 : index
    %220 = tpu.strided_load %arg12[%c8_207, %c0_208] {strides = array<i32: 2, 1>} : memref<1040x64xf32, #tpu.memory_space<vmem>>, vector<8x64xf32>
    %221 = arith.truncf %220 : vector<8x64xf32> to vector<8x64xbf16>
    %c9_209 = arith.constant 9 : index
    %c0_210 = arith.constant 0 : index
    %222 = tpu.strided_load %arg12[%c9_209, %c0_210] {strides = array<i32: 2, 1>} : memref<1040x64xf32, #tpu.memory_space<vmem>>, vector<8x64xf32>
    %223 = arith.truncf %222 : vector<8x64xf32> to vector<8x64xbf16>
    %c10_211 = arith.constant 10 : index
    %c0_212 = arith.constant 0 : index
    %224 = tpu.strided_load %arg12[%c10_211, %c0_212] {strides = array<i32: 2, 1>} : memref<1040x64xf32, #tpu.memory_space<vmem>>, vector<8x64xf32>
    %225 = arith.truncf %224 : vector<8x64xf32> to vector<8x64xbf16>
    %c6 = arith.constant 6 : index
    %c0_213 = arith.constant 0 : index
    %c0_214 = arith.constant 0 : index
    %c0_215 = arith.constant 0 : index
    %226 = vector.load %arg2[%c6, %c0_213, %c0_214, %c0_215] : memref<7x3x64x64xbf16, #tpu.memory_space<vmem>>, vector<1x1x64x64xbf16>
    %227 = vector.shape_cast %226 : vector<1x1x64x64xbf16> to vector<64x64xbf16>
    %c6_216 = arith.constant 6 : index
    %c1_217 = arith.constant 1 : index
    %c0_218 = arith.constant 0 : index
    %c0_219 = arith.constant 0 : index
    %228 = vector.load %arg2[%c6_216, %c1_217, %c0_218, %c0_219] : memref<7x3x64x64xbf16, #tpu.memory_space<vmem>>, vector<1x1x64x64xbf16>
    %229 = vector.shape_cast %228 : vector<1x1x64x64xbf16> to vector<64x64xbf16>
    %c6_220 = arith.constant 6 : index
    %c2_221 = arith.constant 2 : index
    %c0_222 = arith.constant 0 : index
    %c0_223 = arith.constant 0 : index
    %230 = vector.load %arg2[%c6_220, %c2_221, %c0_222, %c0_223] : memref<7x3x64x64xbf16, #tpu.memory_space<vmem>>, vector<1x1x64x64xbf16>
    %231 = vector.shape_cast %230 : vector<1x1x64x64xbf16> to vector<64x64xbf16>
    %cst_224 = arith.constant dense<0.000000e+00> : vector<8x64xf32>
    %232 = tpu.matmul %219, %227, %cst_224 {dimension_numbers = #tpu.dot_dimension_numbers<[1], [0], [0], [1], [0, 0, 1, 1], [], []>} : vector<8x64xbf16>, vector<64x64xbf16>, vector<8x64xf32> -> vector<8x64xf32>
    %cst_225 = arith.constant dense<0.000000e+00> : vector<8x64xf32>
    %233 = tpu.matmul %221, %229, %cst_225 {dimension_numbers = #tpu.dot_dimension_numbers<[1], [0], [0], [1], [0, 0, 1, 1], [], []>} : vector<8x64xbf16>, vector<64x64xbf16>, vector<8x64xf32> -> vector<8x64xf32>
    %234 = arith.addf %232, %233 : vector<8x64xf32>
    %cst_226 = arith.constant dense<0.000000e+00> : vector<8x64xf32>
    %235 = tpu.matmul %223, %231, %cst_226 {dimension_numbers = #tpu.dot_dimension_numbers<[1], [0], [0], [1], [0, 0, 1, 1], [], []>} : vector<8x64xbf16>, vector<64x64xbf16>, vector<8x64xf32> -> vector<8x64xf32>
    %236 = arith.addf %234, %235 : vector<8x64xf32>
    %cst_227 = arith.constant dense<0.000000e+00> : vector<8x64xf32>
    %237 = tpu.matmul %221, %227, %cst_227 {dimension_numbers = #tpu.dot_dimension_numbers<[1], [0], [0], [1], [0, 0, 1, 1], [], []>} : vector<8x64xbf16>, vector<64x64xbf16>, vector<8x64xf32> -> vector<8x64xf32>
    %cst_228 = arith.constant dense<0.000000e+00> : vector<8x64xf32>
    %238 = tpu.matmul %223, %229, %cst_228 {dimension_numbers = #tpu.dot_dimension_numbers<[1], [0], [0], [1], [0, 0, 1, 1], [], []>} : vector<8x64xbf16>, vector<64x64xbf16>, vector<8x64xf32> -> vector<8x64xf32>
    %239 = arith.addf %237, %238 : vector<8x64xf32>
    %cst_229 = arith.constant dense<0.000000e+00> : vector<8x64xf32>
    %240 = tpu.matmul %225, %231, %cst_229 {dimension_numbers = #tpu.dot_dimension_numbers<[1], [0], [0], [1], [0, 0, 1, 1], [], []>} : vector<8x64xbf16>, vector<64x64xbf16>, vector<8x64xf32> -> vector<8x64xf32>
    %241 = arith.addf %239, %240 : vector<8x64xf32>
    %242 = arith.maximumf %236, %241 : vector<8x64xf32>
    %c6_230 = arith.constant 6 : index
    %c0_231 = arith.constant 0 : index
    %243 = vector.load %arg3[%c6_230, %c0_231] : memref<7x64xf32, #tpu.memory_space<vmem>>, vector<1x64xf32>
    %244 = vector.broadcast %243 : vector<1x64xf32> to vector<8x64xf32>
    %245 = arith.mulf %242, %244 : vector<8x64xf32>
    %c6_232 = arith.constant 6 : index
    %c0_233 = arith.constant 0 : index
    %246 = vector.load %arg4[%c6_232, %c0_233] : memref<7x64xf32, #tpu.memory_space<vmem>>, vector<1x64xf32>
    %247 = vector.broadcast %246 : vector<1x64xf32> to vector<8x64xf32>
    %248 = arith.addf %245, %247 : vector<8x64xf32>
    %cst_234 = arith.constant 0.000000e+00 : f32
    %249 = vector.broadcast %cst_234 : f32 to vector<8x64xf32>
    %250 = arith.maximumf %248, %249 : vector<8x64xf32>
    %c8_235 = arith.constant 8 : index
    %c0_236 = arith.constant 0 : index
    %251 = vector.load %arg13[%c8_235, %c0_236] : memref<528x64xf32, #tpu.memory_space<vmem>>, vector<8x64xf32>
    tpu.vector_store %arg13[%c8_235, %c0_236], %250 {strides = array<i32>} : memref<528x64xf32, #tpu.memory_space<vmem>>, vector<8x64xf32>,
    %c16 = arith.constant 16 : index
    %c0_237 = arith.constant 0 : index
    %252 = vector.load %arg13[%c16, %c0_237] : memref<528x64xf32, #tpu.memory_space<vmem>>, vector<1x64xf32>
    tpu.vector_store %arg13[%c16, %c0_237], %7 {strides = array<i32>} : memref<528x64xf32, #tpu.memory_space<vmem>>, vector<1x64xf32>,
    %c8_238 = arith.constant 8 : index
    %c0_239 = arith.constant 0 : index
    %253 = vector.load %arg13[%c8_238, %c0_239] : memref<528x64xf32, #tpu.memory_space<vmem>>, vector<8x64xf32>
    %c0_240 = arith.constant 0 : index
    %c0_241 = arith.constant 0 : index
    %254 = vector.load %arg6[%c0_240, %c0_241] : memref<1x128xf32, #tpu.memory_space<vmem>>, vector<1x128xf32>
    %255 = vector.extract_strided_slice %253 {offsets = [0, 0], sizes = [1, 64], strides = [1, 1]} : vector<8x64xf32> to vector<1x64xf32>
    %256 = arith.truncf %255 : vector<1x64xf32> to vector<1x64xbf16>
    %c0_242 = arith.constant 0 : index
    %c0_243 = arith.constant 0 : index
    %c0_244 = arith.constant 0 : index
    %257 = vector.load %arg5[%c0_242, %c0_243, %c0_244] : memref<8x64x128xbf16, #tpu.memory_space<vmem>>, vector<1x64x128xbf16>
    %258 = vector.shape_cast %257 : vector<1x64x128xbf16> to vector<64x128xbf16>
    %cst_245 = arith.constant dense<0.000000e+00> : vector<1x128xf32>
    %259 = tpu.matmul %256, %258, %cst_245 {dimension_numbers = #tpu.dot_dimension_numbers<[1], [0], [0], [1], [0, 0, 1, 1], [], []>} : vector<1x64xbf16>, vector<64x128xbf16>, vector<1x128xf32> -> vector<1x128xf32>
    %260 = arith.addf %254, %259 : vector<1x128xf32>
    %261 = vector.extract_strided_slice %253 {offsets = [1, 0], sizes = [1, 64], strides = [1, 1]} : vector<8x64xf32> to vector<1x64xf32>
    %262 = arith.truncf %261 : vector<1x64xf32> to vector<1x64xbf16>
    %c1_246 = arith.constant 1 : index
    %c0_247 = arith.constant 0 : index
    %c0_248 = arith.constant 0 : index
    %263 = vector.load %arg5[%c1_246, %c0_247, %c0_248] : memref<8x64x128xbf16, #tpu.memory_space<vmem>>, vector<1x64x128xbf16>
    %264 = vector.shape_cast %263 : vector<1x64x128xbf16> to vector<64x128xbf16>
    %cst_249 = arith.constant dense<0.000000e+00> : vector<1x128xf32>
    %265 = tpu.matmul %262, %264, %cst_249 {dimension_numbers = #tpu.dot_dimension_numbers<[1], [0], [0], [1], [0, 0, 1, 1], [], []>} : vector<1x64xbf16>, vector<64x128xbf16>, vector<1x128xf32> -> vector<1x128xf32>
    %266 = arith.addf %260, %265 : vector<1x128xf32>
    %267 = vector.extract_strided_slice %253 {offsets = [2, 0], sizes = [1, 64], strides = [1, 1]} : vector<8x64xf32> to vector<1x64xf32>
    %268 = arith.truncf %267 : vector<1x64xf32> to vector<1x64xbf16>
    %c2_250 = arith.constant 2 : index
    %c0_251 = arith.constant 0 : index
    %c0_252 = arith.constant 0 : index
    %269 = vector.load %arg5[%c2_250, %c0_251, %c0_252] : memref<8x64x128xbf16, #tpu.memory_space<vmem>>, vector<1x64x128xbf16>
    %270 = vector.shape_cast %269 : vector<1x64x128xbf16> to vector<64x128xbf16>
    %cst_253 = arith.constant dense<0.000000e+00> : vector<1x128xf32>
    %271 = tpu.matmul %268, %270, %cst_253 {dimension_numbers = #tpu.dot_dimension_numbers<[1], [0], [0], [1], [0, 0, 1, 1], [], []>} : vector<1x64xbf16>, vector<64x128xbf16>, vector<1x128xf32> -> vector<1x128xf32>
    %272 = arith.addf %266, %271 : vector<1x128xf32>
    %273 = vector.extract_strided_slice %253 {offsets = [3, 0], sizes = [1, 64], strides = [1, 1]} : vector<8x64xf32> to vector<1x64xf32>
    %274 = arith.truncf %273 : vector<1x64xf32> to vector<1x64xbf16>
    %c3_254 = arith.constant 3 : index
    %c0_255 = arith.constant 0 : index
    %c0_256 = arith.constant 0 : index
    %275 = vector.load %arg5[%c3_254, %c0_255, %c0_256] : memref<8x64x128xbf16, #tpu.memory_space<vmem>>, vector<1x64x128xbf16>
    %276 = vector.shape_cast %275 : vector<1x64x128xbf16> to vector<64x128xbf16>
    %cst_257 = arith.constant dense<0.000000e+00> : vector<1x128xf32>
    %277 = tpu.matmul %274, %276, %cst_257 {dimension_numbers = #tpu.dot_dimension_numbers<[1], [0], [0], [1], [0, 0, 1, 1], [], []>} : vector<1x64xbf16>, vector<64x128xbf16>, vector<1x128xf32> -> vector<1x128xf32>
    %278 = arith.addf %272, %277 : vector<1x128xf32>
    %279 = vector.extract_strided_slice %253 {offsets = [4, 0], sizes = [1, 64], strides = [1, 1]} : vector<8x64xf32> to vector<1x64xf32>
    %280 = arith.truncf %279 : vector<1x64xf32> to vector<1x64xbf16>
    %c4_258 = arith.constant 4 : index
    %c0_259 = arith.constant 0 : index
    %c0_260 = arith.constant 0 : index
    %281 = vector.load %arg5[%c4_258, %c0_259, %c0_260] : memref<8x64x128xbf16, #tpu.memory_space<vmem>>, vector<1x64x128xbf16>
    %282 = vector.shape_cast %281 : vector<1x64x128xbf16> to vector<64x128xbf16>
    %cst_261 = arith.constant dense<0.000000e+00> : vector<1x128xf32>
    %283 = tpu.matmul %280, %282, %cst_261 {dimension_numbers = #tpu.dot_dimension_numbers<[1], [0], [0], [1], [0, 0, 1, 1], [], []>} : vector<1x64xbf16>, vector<64x128xbf16>, vector<1x128xf32> -> vector<1x128xf32>
    %284 = arith.addf %278, %283 : vector<1x128xf32>
    %285 = vector.extract_strided_slice %253 {offsets = [5, 0], sizes = [1, 64], strides = [1, 1]} : vector<8x64xf32> to vector<1x64xf32>
    %286 = arith.truncf %285 : vector<1x64xf32> to vector<1x64xbf16>
    %c5_262 = arith.constant 5 : index
    %c0_263 = arith.constant 0 : index
    %c0_264 = arith.constant 0 : index
    %287 = vector.load %arg5[%c5_262, %c0_263, %c0_264] : memref<8x64x128xbf16, #tpu.memory_space<vmem>>, vector<1x64x128xbf16>
    %288 = vector.shape_cast %287 : vector<1x64x128xbf16> to vector<64x128xbf16>
    %cst_265 = arith.constant dense<0.000000e+00> : vector<1x128xf32>
    %289 = tpu.matmul %286, %288, %cst_265 {dimension_numbers = #tpu.dot_dimension_numbers<[1], [0], [0], [1], [0, 0, 1, 1], [], []>} : vector<1x64xbf16>, vector<64x128xbf16>, vector<1x128xf32> -> vector<1x128xf32>
    %290 = arith.addf %284, %289 : vector<1x128xf32>
    %291 = vector.extract_strided_slice %253 {offsets = [6, 0], sizes = [1, 64], strides = [1, 1]} : vector<8x64xf32> to vector<1x64xf32>
    %292 = arith.truncf %291 : vector<1x64xf32> to vector<1x64xbf16>
    %c6_266 = arith.constant 6 : index
    %c0_267 = arith.constant 0 : index
    %c0_268 = arith.constant 0 : index
    %293 = vector.load %arg5[%c6_266, %c0_267, %c0_268] : memref<8x64x128xbf16, #tpu.memory_space<vmem>>, vector<1x64x128xbf16>
    %294 = vector.shape_cast %293 : vector<1x64x128xbf16> to vector<64x128xbf16>
    %cst_269 = arith.constant dense<0.000000e+00> : vector<1x128xf32>
    %295 = tpu.matmul %292, %294, %cst_269 {dimension_numbers = #tpu.dot_dimension_numbers<[1], [0], [0], [1], [0, 0, 1, 1], [], []>} : vector<1x64xbf16>, vector<64x128xbf16>, vector<1x128xf32> -> vector<1x128xf32>
    %296 = arith.addf %290, %295 : vector<1x128xf32>
    %297 = vector.extract_strided_slice %253 {offsets = [7, 0], sizes = [1, 64], strides = [1, 1]} : vector<8x64xf32> to vector<1x64xf32>
    %298 = arith.truncf %297 : vector<1x64xf32> to vector<1x64xbf16>
    %c7_270 = arith.constant 7 : index
    %c0_271 = arith.constant 0 : index
    %c0_272 = arith.constant 0 : index
    %299 = vector.load %arg5[%c7_270, %c0_271, %c0_272] : memref<8x64x128xbf16, #tpu.memory_space<vmem>>, vector<1x64x128xbf16>
    %300 = vector.shape_cast %299 : vector<1x64x128xbf16> to vector<64x128xbf16>
    %cst_273 = arith.constant dense<0.000000e+00> : vector<1x128xf32>
    %301 = tpu.matmul %298, %300, %cst_273 {dimension_numbers = #tpu.dot_dimension_numbers<[1], [0], [0], [1], [0, 0, 1, 1], [], []>} : vector<1x64xbf16>, vector<64x128xbf16>, vector<1x128xf32> -> vector<1x128xf32>
    %302 = arith.addf %296, %301 : vector<1x128xf32>
    %cst_274 = arith.constant 0.000000e+00 : f32
    %303 = vector.broadcast %cst_274 : f32 to vector<1x128xf32>
    %304 = arith.maximumf %302, %303 : vector<1x128xf32>
    %305 = arith.truncf %304 : vector<1x128xf32> to vector<1x128xbf16>
    %c0_275 = arith.constant 0 : index
    %c0_276 = arith.constant 0 : index
    %306 = vector.load %arg7[%c0_275, %c0_276] : memref<128x128xbf16, #tpu.memory_space<vmem>>, vector<128x128xbf16>
    %cst_277 = arith.constant dense<0.000000e+00> : vector<1x128xf32>
    %307 = tpu.matmul %305, %306, %cst_277 {dimension_numbers = #tpu.dot_dimension_numbers<[1], [0], [0], [1], [0, 0, 1, 1], [], []>} : vector<1x128xbf16>, vector<128x128xbf16>, vector<1x128xf32> -> vector<1x128xf32>
    %c0_278 = arith.constant 0 : index
    %c0_279 = arith.constant 0 : index
    %308 = vector.load %arg8[%c0_278, %c0_279] : memref<1x128xf32, #tpu.memory_space<vmem>>, vector<1x128xf32>
    %309 = arith.addf %307, %308 : vector<1x128xf32>
    %cst_280 = arith.constant 0.000000e+00 : f32
    %310 = vector.broadcast %cst_280 : f32 to vector<1x128xf32>
    %311 = arith.maximumf %309, %310 : vector<1x128xf32>
    %312 = arith.truncf %311 : vector<1x128xf32> to vector<1x128xbf16>
    %c0_281 = arith.constant 0 : index
    %c0_282 = arith.constant 0 : index
    %313 = vector.load %arg9[%c0_281, %c0_282] : memref<128x11xbf16, #tpu.memory_space<vmem>>, vector<128x11xbf16>
    %cst_283 = arith.constant dense<0.000000e+00> : vector<1x11xf32>
    %314 = tpu.matmul %312, %313, %cst_283 {dimension_numbers = #tpu.dot_dimension_numbers<[1], [0], [0], [1], [0, 0, 1, 1], [], []>} : vector<1x128xbf16>, vector<128x11xbf16>, vector<1x11xf32> -> vector<1x11xf32>
    %c0_284 = arith.constant 0 : index
    %c0_285 = arith.constant 0 : index
    %315 = vector.load %arg10[%c0_284, %c0_285] : memref<1x11xf32, #tpu.memory_space<vmem>>, vector<1x11xf32>
    %316 = arith.addf %314, %315 : vector<1x11xf32>
    %cst_286 = arith.constant dense<0xFF800000> : vector<1xf32>
    %317 = vector.multi_reduction <maximumf>, %316, %cst_286 [1] : vector<1x11xf32> to vector<1xf32>
    %318 = vector.shape_cast %317 : vector<1xf32> to vector<1x1xf32>
    %319 = vector.broadcast %318 : vector<1x1xf32> to vector<1x11xf32>
    %320 = arith.subf %316, %319 : vector<1x11xf32>
    %321 = math.exp %320 : vector<1x11xf32>
    %cst_287 = arith.constant dense<0.000000e+00> : vector<1xf32>
    %322 = vector.multi_reduction <add>, %321, %cst_287 [1] : vector<1x11xf32> to vector<1xf32>
    %323 = vector.shape_cast %322 : vector<1xf32> to vector<1x1xf32>
    %324 = tpu.reciprocal %323 {approx = true} : vector<1x1xf32> -> vector<1x1xf32>
    %325 = vector.broadcast %324 : vector<1x1xf32> to vector<1x11xf32>
    %326 = arith.mulf %321, %325 : vector<1x11xf32>
    %c0_288 = arith.constant 0 : index
    %c0_289 = arith.constant 0 : index
    %c0_290 = arith.constant 0 : index
    %327 = vector.load %arg11[%c0_288, %c0_289, %c0_290] : memref<1x1x11xf32, #tpu.memory_space<vmem>>, vector<1x1x11xf32>
    %328 = vector.shape_cast %327 : vector<1x1x11xf32> to vector<1x11xf32>
    %329 = vector.shape_cast %326 : vector<1x11xf32> to vector<1x1x11xf32>
    tpu.vector_store %arg11[%c0_288, %c0_289, %c0_290], %329 {strides = array<i32>} : memref<1x1x11xf32, #tpu.memory_space<vmem>>, vector<1x1x11xf32>,
    return
  }
  func.func @transform_0(%arg0: i32) -> (i32, i32, i32) {
    %c0_i32 = arith.constant 0 : i32
    %c0_i32_0 = arith.constant 0 : i32
    %c0_i32_1 = arith.constant 0 : i32
    return %arg0, %c0_i32, %c0_i32_0 : i32, i32, i32
  }
  func.func @transform_1(%arg0: i32) -> (i32, i32, i32, i32) {
    %c0_i32 = arith.constant 0 : i32
    %c0_i32_0 = arith.constant 0 : i32
    %c0_i32_1 = arith.constant 0 : i32
    %c0_i32_2 = arith.constant 0 : i32
    %c0_i32_3 = arith.constant 0 : i32
    return %c0_i32, %c0_i32_0, %c0_i32_1, %c0_i32_2 : i32, i32, i32, i32
  }
  func.func @transform_2(%arg0: i32) -> (i32, i32) {
    %c0_i32 = arith.constant 0 : i32
    %c0_i32_0 = arith.constant 0 : i32
    %c0_i32_1 = arith.constant 0 : i32
    return %c0_i32, %c0_i32_0 : i32, i32
  }
  func.func @transform_3(%arg0: i32) -> (i32, i32) {
    %c0_i32 = arith.constant 0 : i32
    %c0_i32_0 = arith.constant 0 : i32
    %c0_i32_1 = arith.constant 0 : i32
    return %c0_i32, %c0_i32_0 : i32, i32
  }
  func.func @transform_4(%arg0: i32) -> (i32, i32, i32) {
    %c0_i32 = arith.constant 0 : i32
    %c0_i32_0 = arith.constant 0 : i32
    %c0_i32_1 = arith.constant 0 : i32
    %c0_i32_2 = arith.constant 0 : i32
    return %c0_i32, %c0_i32_0, %c0_i32_1 : i32, i32, i32
  }
  func.func @transform_5(%arg0: i32) -> (i32, i32) {
    %c0_i32 = arith.constant 0 : i32
    %c0_i32_0 = arith.constant 0 : i32
    %c0_i32_1 = arith.constant 0 : i32
    return %c0_i32, %c0_i32_0 : i32, i32
  }
  func.func @transform_6(%arg0: i32) -> (i32, i32) {
    %c0_i32 = arith.constant 0 : i32
    %c0_i32_0 = arith.constant 0 : i32
    %c0_i32_1 = arith.constant 0 : i32
    return %c0_i32, %c0_i32_0 : i32, i32
  }
  func.func @transform_7(%arg0: i32) -> (i32, i32) {
    %c0_i32 = arith.constant 0 : i32
    %c0_i32_0 = arith.constant 0 : i32
    %c0_i32_1 = arith.constant 0 : i32
    return %c0_i32, %c0_i32_0 : i32, i32
  }
  func.func @transform_8(%arg0: i32) -> (i32, i32) {
    %c0_i32 = arith.constant 0 : i32
    %c0_i32_0 = arith.constant 0 : i32
    %c0_i32_1 = arith.constant 0 : i32
    return %c0_i32, %c0_i32_0 : i32, i32
  }
  func.func @transform_9(%arg0: i32) -> (i32, i32) {
    %c0_i32 = arith.constant 0 : i32
    %c0_i32_0 = arith.constant 0 : i32
    %c0_i32_1 = arith.constant 0 : i32
    return %c0_i32, %c0_i32_0 : i32, i32
  }
  func.func @transform_10(%arg0: i32) -> (i32, i32, i32) {
    %c0_i32 = arith.constant 0 : i32
    %c0_i32_0 = arith.constant 0 : i32
    %c0_i32_1 = arith.constant 0 : i32
    return %arg0, %c0_i32, %c0_i32_0 : i32, i32, i32
  }
}

</mosaic_0001>

<llo_original>
// kernel: _lambda_.1
$region0: #{_lambda_.1}
  #allocation0 [shape = 'u32[]', space=smem, size = 0x4, offset = 0x4, fixed_abs, tag = 'smem constant byte address 0x4 - core index']
  #allocation1 [shape = 'u32[144,128]{1,0:T(1,128)}', space=vmem, size = 0x12000, scoped, tag = 'internal scratch']
  #allocation2 [shape = 'f32[1040,64]{1,0:T(8,128)}', space=vmem, size = 0x82000, scoped, tag = 'scratch operand']
  #allocation3 [shape = 'f32[528,64]{1,0:T(8,128)}', space=vmem, size = 0x42000, scoped, tag = 'scratch operand']
  %s0 = inlined_call_operand.vmem [shape: f32[2,1024,2], index: 0, kind: input, shape index: {}]
  %s1 = inlined_call_operand.vmem [shape: bf16[7,3,64,64], index: 1, kind: input, shape index: {}]
  %s2 = inlined_call_operand.vmem [shape: f32[7,64], index: 2, kind: input, shape index: {}]
  %s3 = inlined_call_operand.vmem [shape: f32[7,64], index: 3, kind: input, shape index: {}]
  %s4 = inlined_call_operand.vmem [shape: bf16[8,64,128], index: 4, kind: input, shape index: {}]
  %s5 = inlined_call_operand.vmem [shape: f32[1,128], index: 5, kind: input, shape index: {}]
  %s6 = inlined_call_operand.vmem [shape: bf16[128,128], index: 6, kind: input, shape index: {}]
  %s7 = inlined_call_operand.vmem [shape: f32[1,128], index: 7, kind: input, shape index: {}]
  %s8 = inlined_call_operand.vmem [shape: bf16[128,11], index: 8, kind: input, shape index: {}]
  %s9 = inlined_call_operand.vmem [shape: f32[1,11], index: 9, kind: input, shape index: {}]
  %s10 = inlined_call_operand.hbm [shape: f32[2,1,11], index: 10, kind: output, shape index: {}]
  %s11 = sld [smem:[#allocation0]]
  $region73: #{_lambda_.1} parent=0
    _
  %s13 = ssub.s32 1, %s11
  %s14 = scalar_select 0, %s13, %s11
  $region1: #{_lambda_.1} parent=0
    #allocation4 [shape = 'u8[1024]{0}', space=vmem, size = 0x400, scoped, tag = 'output window, operand 0']
    #allocation5 [shape = 's32[2]{0}', space=sflag, size = 0x8, scoped, tag = 'scoped memory for _lambda_.1']
    %15 = vsyncpa [#allocation5], 0
    %s16 = scalar_lea.sflag [#allocation5], 1
    %17 = vsyncpa %s16, 0
    loop: start=0, step=1, limit=4
    $region2: #{_lambda_.1} parent=1 // loop_pre_header
      _
    $region3: #{_lambda_.1} parent=1 // loop_header
      %s19 = sphi 0, %s23
      %p20 = scmp.ge.s32.totalorder %s19, 4
      %s29 = sphi 0, %s31
      %s32 = sphi 0, %s29
      %s33 = sphi 0, %s32
      %s49 = sphi 0, %s33
      %s53 = sphi 0, %s53
      %s55 = sphi 0, %s53
      %s56 = sphi 0, %s55
      %s70 = sphi 0, %s56
      %s74 = sphi 0, %s74
      %s76 = sphi 0, %s74
      %s77 = sphi 0, %s76
      %s91 = sphi 0, %s77
      %s95 = sphi 0, %s95
      %s97 = sphi 0, %s95
      %s98 = sphi 0, %s97
      %s112 = sphi 0, %s98
      %s116 = sphi 0, %s116
      %s118 = sphi 0, %s116
      %s119 = sphi 0, %s118
      %s133 = sphi 0, %s119
      %s137 = sphi 0, %s137
      %s139 = sphi 0, %s137
      %s140 = sphi 0, %s139
      %s154 = sphi 0, %s140
      %s158 = sphi 0, %s158
      %s160 = sphi 0, %s158
      %s161 = sphi 0, %s160
      %s175 = sphi 0, %s161
      %s179 = sphi 0, %s179
      %s181 = sphi 0, %s179
      %s182 = sphi 0, %s181
      %s196 = sphi 0, %s182
      %s200 = sphi 0, %s200
      %s202 = sphi 0, %s200
      %s203 = sphi 0, %s202
      %s217 = sphi 0, %s203
      %s221 = sphi 0, %s221
      %s223 = sphi 0, %s221
      %s224 = sphi 0, %s223
      %s238 = sphi 0, %s224
      %s244 = sphi 0, %s246
      %s247 = sphi 0, %s244
      %s248 = sphi 0, %s247
      %s264 = sphi 0, %s248
    $region4: #{_lambda_.1} parent=1 // loop_header_branch
      %22 = sbr.rel (%p20) target = $region8
    $region5: #{_lambda_.1} parent=1 // loop_body
      %s24 = ssub.s32 %s19, 1
      %s25 = ssub.s32 %s19, 2
      %s26 = sadd.s32 %s19, 1
      %s27 = ssub.s32 %s19, %s26
      %p28 = scmp.eq.s32.totalorder %s27, 0
      %s30 = sadd.s32 %s29, 1
      %s31 = scalar_select %p28, %s29, %s30
      %p34 = pneg %p28
      %p35 = scmp.eq.s32.totalorder %s19, 1
      %p36 = por %p34, %p35
      %p37 = scmp.ne.s32.totalorder %s29, %s32
      %p38 = scmp.eq.s32.totalorder %s19, 0
      %p39 = por %p37, %p38
      %p40 = scmp.ne.s32.totalorder %s29, %s32
      %p41 = scmp.eq.s32.totalorder %s24, 1
      %p42 = por %p40, %p41
      %p43 = scmp.ne.s32.totalorder %s32, %s33
      %p44 = scmp.eq.s32.totalorder %s24, 0
      %p45 = por %p43, %p44
      %p46 = scmp.ne.s32.totalorder %s32, %s33
      %p47 = scmp.eq.s32.totalorder %s25, 1
      %p48 = por %p46, %p47
      %p50 = scmp.ne.s32.totalorder %s33, %s49
      %p51 = scmp.eq.s32.totalorder %s25, 0
      %p52 = por %p50, %p51
      %s54 = sadd.s32 %s53, 1
      %p57 = scmp.eq.s32.totalorder %s19, 1
      %p58 = scmp.ne.s32.totalorder %s53, %s55
      %p59 = scmp.eq.s32.totalorder %s19, 0
      %p60 = por %p58, %p59
      %p61 = scmp.ne.s32.totalorder %s53, %s55
      %p62 = scmp.eq.s32.totalorder %s24, 1
      %p63 = por %p61, %p62
      %p64 = scmp.ne.s32.totalorder %s55, %s56
      %p65 = scmp.eq.s32.totalorder %s24, 0
      %p66 = por %p64, %p65
      %p67 = scmp.ne.s32.totalorder %s55, %s56
      %p68 = scmp.eq.s32.totalorder %s25, 1
      %p69 = por %p67, %p68
      %p71 = scmp.ne.s32.totalorder %s56, %s70
      %p72 = scmp.eq.s32.totalorder %s25, 0
      %p73 = por %p71, %p72
      %s75 = sadd.s32 %s74, 1
      %p78 = scmp.eq.s32.totalorder %s19, 1
      %p79 = scmp.ne.s32.totalorder %s74, %s76
      %p80 = scmp.eq.s32.totalorder %s19, 0
      %p81 = por %p79, %p80
      %p82 = scmp.ne.s32.totalorder %s74, %s76
      %p83 = scmp.eq.s32.totalorder %s24, 1
      %p84 = por %p82, %p83
      %p85 = scmp.ne.s32.totalorder %s76, %s77
      %p86 = scmp.eq.s32.totalorder %s24, 0
      %p87 = por %p85, %p86
      %p88 = scmp.ne.s32.totalorder %s76, %s77
      %p89 = scmp.eq.s32.totalorder %s25, 1
      %p90 = por %p88, %p89
      %p92 = scmp.ne.s32.totalorder %s77, %s91
      %p93 = scmp.eq.s32.totalorder %s25, 0
      %p94 = por %p92, %p93
      %s96 = sadd.s32 %s95, 1
      %p99 = scmp.eq.s32.totalorder %s19, 1
      %p100 = scmp.ne.s32.totalorder %s95, %s97
      %p101 = scmp.eq.s32.totalorder %s19, 0
      %p102 = por %p100, %p101
      %p103 = scmp.ne.s32.totalorder %s95, %s97
      %p104 = scmp.eq.s32.totalorder %s24, 1
      %p105 = por %p103, %p104
      %p106 = scmp.ne.s32.totalorder %s97, %s98
      %p107 = scmp.eq.s32.totalorder %s24, 0
      %p108 = por %p106, %p107
      %p109 = scmp.ne.s32.totalorder %s97, %s98
      %p110 = scmp.eq.s32.totalorder %s25, 1
      %p111 = por %p109, %p110
      %p113 = scmp.ne.s32.totalorder %s98, %s112
      %p114 = scmp.eq.s32.totalorder %s25, 0
      %p115 = por %p113, %p114
      %s117 = sadd.s32 %s116, 1
      %p120 = scmp.eq.s32.totalorder %s19, 1
      %p121 = scmp.ne.s32.totalorder %s116, %s118
      %p122 = scmp.eq.s32.totalorder %s19, 0
      %p123 = por %p121, %p122
      %p124 = scmp.ne.s32.totalorder %s116, %s118
      %p125 = scmp.eq.s32.totalorder %s24, 1
      %p126 = por %p124, %p125
      %p127 = scmp.ne.s32.totalorder %s118, %s119
      %p128 = scmp.eq.s32.totalorder %s24, 0
      %p129 = por %p127, %p128
      %p130 = scmp.ne.s32.totalorder %s118, %s119
      %p131 = scmp.eq.s32.totalorder %s25, 1
      %p132 = por %p130, %p131
      %p134 = scmp.ne.s32.totalorder %s119, %s133
      %p135 = scmp.eq.s32.totalorder %s25, 0
      %p136 = por %p134, %p135
      %s138 = sadd.s32 %s137, 1
      %p141 = scmp.eq.s32.totalorder %s19, 1
      %p142 = scmp.ne.s32.totalorder %s137, %s139
      %p143 = scmp.eq.s32.totalorder %s19, 0
      %p144 = por %p142, %p143
      %p145 = scmp.ne.s32.totalorder %s137, %s139
      %p146 = scmp.eq.s32.totalorder %s24, 1
      %p147 = por %p145, %p146
      %p148 = scmp.ne.s32.totalorder %s139, %s140
      %p149 = scmp.eq.s32.totalorder %s24, 0
      %p150 = por %p148, %p149
      %p151 = scmp.ne.s32.totalorder %s139, %s140
      %p152 = scmp.eq.s32.totalorder %s25, 1
      %p153 = por %p151, %p152
      %p155 = scmp.ne.s32.totalorder %s140, %s154
      %p156 = scmp.eq.s32.totalorder %s25, 0
      %p157 = por %p155, %p156
      %s159 = sadd.s32 %s158, 1
      %p162 = scmp.eq.s32.totalorder %s19, 1
      %p163 = scmp.ne.s32.totalorder %s158, %s160
      %p164 = scmp.eq.s32.totalorder %s19, 0
      %p165 = por %p163, %p164
      %p166 = scmp.ne.s32.totalorder %s158, %s160
      %p167 = scmp.eq.s32.totalorder %s24, 1
      %p168 = por %p166, %p167
      %p169 = scmp.ne.s32.totalorder %s160, %s161
      %p170 = scmp.eq.s32.totalorder %s24, 0
      %p171 = por %p169, %p170
      %p172 = scmp.ne.s32.totalorder %s160, %s161
      %p173 = scmp.eq.s32.totalorder %s25, 1
      %p174 = por %p172, %p173
      %p176 = scmp.ne.s32.totalorder %s161, %s175
      %p177 = scmp.eq.s32.totalorder %s25, 0
      %p178 = por %p176, %p177
      %s180 = sadd.s32 %s179, 1
      %p183 = scmp.eq.s32.totalorder %s19, 1
      %p184 = scmp.ne.s32.totalorder %s179, %s181
      %p185 = scmp.eq.s32.totalorder %s19, 0
      %p186 = por %p184, %p185
      %p187 = scmp.ne.s32.totalorder %s179, %s181
      %p188 = scmp.eq.s32.totalorder %s24, 1
      %p189 = por %p187, %p188
      %p190 = scmp.ne.s32.totalorder %s181, %s182
      %p191 = scmp.eq.s32.totalorder %s24, 0
      %p192 = por %p190, %p191
      %p193 = scmp.ne.s32.totalorder %s181, %s182
      %p194 = scmp.eq.s32.totalorder %s25, 1
      %p195 = por %p193, %p194
      %p197 = scmp.ne.s32.totalorder %s182, %s196
      %p198 = scmp.eq.s32.totalorder %s25, 0
      %p199 = por %p197, %p198
      %s201 = sadd.s32 %s200, 1
      %p204 = scmp.eq.s32.totalorder %s19, 1
      %p205 = scmp.ne.s32.totalorder %s200, %s202
      %p206 = scmp.eq.s32.totalorder %s19, 0
      %p207 = por %p205, %p206
      %p208 = scmp.ne.s32.totalorder %s200, %s202
      %p209 = scmp.eq.s32.totalorder %s24, 1
      %p210 = por %p208, %p209
      %p211 = scmp.ne.s32.totalorder %s202, %s203
      %p212 = scmp.eq.s32.totalorder %s24, 0
      %p213 = por %p211, %p212
      %p214 = scmp.ne.s32.totalorder %s202, %s203
      %p215 = scmp.eq.s32.totalorder %s25, 1
      %p216 = por %p214, %p215
      %p218 = scmp.ne.s32.totalorder %s203, %s217
      %p219 = scmp.eq.s32.totalorder %s25, 0
      %p220 = por %p218, %p219
      %s222 = sadd.s32 %s221, 1
      %p225 = scmp.eq.s32.totalorder %s19, 1
      %p226 = scmp.ne.s32.totalorder %s221, %s223
      %p227 = scmp.eq.s32.totalorder %s19, 0
      %p228 = por %p226, %p227
      %p229 = scmp.ne.s32.totalorder %s221, %s223
      %p230 = scmp.eq.s32.totalorder %s24, 1
      %p231 = por %p229, %p230
      %p232 = scmp.ne.s32.totalorder %s223, %s224
      %p233 = scmp.eq.s32.totalorder %s24, 0
      %p234 = por %p232, %p233
      %p235 = scmp.ne.s32.totalorder %s223, %s224
      %p236 = scmp.eq.s32.totalorder %s25, 1
      %p237 = por %p235, %p236
      %p239 = scmp.ne.s32.totalorder %s224, %s238
      %p240 = scmp.eq.s32.totalorder %s25, 0
      %p241 = por %p239, %p240
      %s242 = ssub.s32 %s19, %s26
      %p243 = scmp.eq.s32.totalorder %s242, 0
      %s245 = sadd.s32 %s244, 1
      %s246 = scalar_select %p243, %s244, %s245
      %p249 = pneg %p243
      %p250 = scmp.eq.s32.totalorder %s19, 1
      %p251 = por %p249, %p250
      %p252 = scmp.ne.s32.totalorder %s244, %s247
      %p253 = scmp.eq.s32.totalorder %s19, 0
      %p254 = por %p252, %p253
      %p255 = scmp.ne.s32.totalorder %s244, %s247
      %p256 = scmp.eq.s32.totalorder %s24, 1
      %p257 = por %p255, %p256
      %p258 = scmp.ne.s32.totalorder %s247, %s248
      %p259 = scmp.eq.s32.totalorder %s24, 0
      %p260 = por %p258, %p259
      %p261 = scmp.ne.s32.totalorder %s247, %s248
      %p262 = scmp.eq.s32.totalorder %s25, 1
      %p263 = por %p261, %p262
      %p265 = scmp.ne.s32.totalorder %s248, %s264
      %p266 = scmp.eq.s32.totalorder %s25, 0
      %p267 = por %p265, %p266
      %p268 = scmp.le.s32.totalorder 1, %s19
      %p269 = scmp.lt.s32.totalorder %s19, 3
      %p270 = pnand %p268, %p269
      %p271 = pneg %p270
      // Predicated region
      $region9: #{_lambda_.1} parent=5 // pred_check
        _
      $region10: #{_lambda_.1} parent=5 // pred_check_branch
        %273 = sbr.rel (%p270) target = $region12
      $region11: #{_lambda_.1} parent=5 // pred_region
        %s274 = ssub.s32 %s19, 1
        // Predicated region
        $region13: #{_lambda_.1} parent=11 // pred_check
          %p275 = pneg %p66
        $region14: #{_lambda_.1} parent=11 // pred_check_branch
          %277 = sbr.rel (%p275) target = $region16
        $region15: #{_lambda_.1} parent=11 // pred_region
          _
        $region16: #{_lambda_.1} parent=11 // pred_fallthru
          _
        // Predicated region
        $region17: #{_lambda_.1} parent=11 // pred_check
          %p278 = pneg %p87
        $region18: #{_lambda_.1} parent=11 // pred_check_branch
          %280 = sbr.rel (%p278) target = $region20
        $region19: #{_lambda_.1} parent=11 // pred_region
          _
        $region20: #{_lambda_.1} parent=11 // pred_fallthru
          _
        // Predicated region
        $region21: #{_lambda_.1} parent=11 // pred_check
          %p281 = pneg %p108
        $region22: #{_lambda_.1} parent=11 // pred_check_branch
          %283 = sbr.rel (%p281) target = $region24
        $region23: #{_lambda_.1} parent=11 // pred_region
          _
        $region24: #{_lambda_.1} parent=11 // pred_fallthru
          _
        // Predicated region
        $region25: #{_lambda_.1} parent=11 // pred_check
          %p284 = pneg %p129
        $region26: #{_lambda_.1} parent=11 // pred_check_branch
          %286 = sbr.rel (%p284) target = $region28
        $region27: #{_lambda_.1} parent=11 // pred_region
          _
        $region28: #{_lambda_.1} parent=11 // pred_fallthru
          _
        // Predicated region
        $region29: #{_lambda_.1} parent=11 // pred_check
          %p287 = pneg %p150
        $region30: #{_lambda_.1} parent=11 // pred_check_branch
          %289 = sbr.rel (%p287) target = $region32
        $region31: #{_lambda_.1} parent=11 // pred_region
          _
        $region32: #{_lambda_.1} parent=11 // pred_fallthru
          _
        // Predicated region
        $region33: #{_lambda_.1} parent=11 // pred_check
          %p290 = pneg %p171
        $region34: #{_lambda_.1} parent=11 // pred_check_branch
          %292 = sbr.rel (%p290) target = $region36
        $region35: #{_lambda_.1} parent=11 // pred_region
          _
        $region36: #{_lambda_.1} parent=11 // pred_fallthru
          _
        // Predicated region
        $region37: #{_lambda_.1} parent=11 // pred_check
          %p293 = pneg %p192
        $region38: #{_lambda_.1} parent=11 // pred_check_branch
          %295 = sbr.rel (%p293) target = $region40
        $region39: #{_lambda_.1} parent=11 // pred_region
          _
        $region40: #{_lambda_.1} parent=11 // pred_fallthru
          _
        // Predicated region
        $region41: #{_lambda_.1} parent=11 // pred_check
          %p296 = pneg %p213
        $region42: #{_lambda_.1} parent=11 // pred_check_branch
          %298 = sbr.rel (%p296) target = $region44
        $region43: #{_lambda_.1} parent=11 // pred_region
          _
        $region44: #{_lambda_.1} parent=11 // pred_fallthru
          _
        // Predicated region
        $region45: #{_lambda_.1} parent=11 // pred_check
          %p299 = pneg %p234
        $region46: #{_lambda_.1} parent=11 // pred_check_branch
          %301 = sbr.rel (%p299) target = $region48
        $region47: #{_lambda_.1} parent=11 // pred_region
          _
        $region48: #{_lambda_.1} parent=11 // pred_fallthru
          _
      $region12: #{_lambda_.1} parent=5 // pred_fallthru
        _
      %p302 = scmp.lt.s32.totalorder %s19, 2
      // Predicated region
      $region49: #{_lambda_.1} parent=5 // pred_check
        %p303 = pneg %p302
      $region50: #{_lambda_.1} parent=5 // pred_check_branch
        %305 = sbr.rel (%p303) target = $region52
      $region51: #{_lambda_.1} parent=5 // pred_region
        // Predicated region
        $region53: #{_lambda_.1} parent=51 // pred_check
          %p306 = pneg %p39
        $region54: #{_lambda_.1} parent=51 // pred_check_branch
          %308 = sbr.rel (%p306) target = $region56
        $region55: #{_lambda_.1} parent=51 // pred_region
          %p309 = scmp.lt.s32.totalorder %s19, 1
          %s310 = scalar_select %p309, %s19, 1
          %s311 = smul.addr %s310, 128
          %s312 = smul.addr %s311, 8
          %s313 = scalar_lea.vmem %s0, %s312
        $region56: #{_lambda_.1} parent=51 // pred_fallthru
          _
      $region52: #{_lambda_.1} parent=5 // pred_fallthru
        _
      %p314 = scmp.le.s32.totalorder 1, %s19
      %p315 = scmp.lt.s32.totalorder %s19, 3
      %p316 = pnand %p314, %p315
      %p317 = pneg %p316
      // Predicated region
      $region57: #{_lambda_.1} parent=5 // pred_check
        _
      $region58: #{_lambda_.1} parent=5 // pred_check_branch
        %319 = sbr.rel (%p316) target = $region60
      $region59: #{_lambda_.1} parent=5 // pred_region
        %s320 = ssub.s32 %s19, 1
        %p321 = scmp.lt.s32.totalorder %s24, 1
        %s322 = scalar_select %p321, %s24, 1
        %s323 = smul.addr %s322, 128
        %s324 = smul.addr %s323, 8
        %s325 = scalar_lea.vmem %s0, %s324
        %p326 = pneg %p45
        %p327 = pneg %p42
        %p328 = pneg %p66
        %p329 = pneg %p63
        %p330 = pneg %p87
        %p331 = pneg %p84
        %p332 = pneg %p108
        %p333 = pneg %p105
        %p334 = pneg %p129
        %p335 = pneg %p126
        %p336 = pneg %p150
        %p337 = pneg %p147
        %p338 = pneg %p171
        %p339 = pneg %p168
        %p340 = pneg %p192
        %p341 = pneg %p189
        %p342 = pneg %p213
        %p343 = pneg %p210
        %p344 = pneg %p234
        %p345 = pneg %p231
        %p346 = pneg %p260
        %p347 = pneg %p257
        %s348 = sand.u32 %s247, 1
        %s349 = scalar_lea.sflag [#allocation5], %s348
        %s350 = sand.u32 %s247, 1
        %s351 = scalar_lea.vmem [#allocation4], %s350
        %p352 = scmp.lt.s32.totalorder %s24, 1
        %s353 = scalar_select %p352, %s24, 1
        %s354 = smul.addr %s353, 128
        %s355 = smul.addr %s354, 8
        %s356 = scalar_lea.vmem %s0, %s355
        %vm358 = vcmask 523264
        %359 = vst.msk [vmem:[#allocation2] sm:$0xff] %vm358, 0.0
        %360 = vst.msk [vmem:[#allocation2 + $0x8] sm:$0xff] %vm358, 0.0
        %361 = vst.msk [vmem:[#allocation2 + $0x10] sm:$0xff] %vm358, 0.0
        %362 = vst.msk [vmem:[#allocation2 + $0x18] sm:$0xff] %vm358, 0.0
        %363 = vst.msk [vmem:[#allocation2 + $0x20] sm:$0xff] %vm358, 0.0
        %364 = vst.msk [vmem:[#allocation2 + $0x28] sm:$0xff] %vm358, 0.0
        %365 = vst.msk [vmem:[#allocation2 + $0x30] sm:$0xff] %vm358, 0.0
        %366 = vst.msk [vmem:[#allocation2 + $0x38] sm:$0xff] %vm358, 0.0
        %367 = vst.msk [vmem:[#allocation2 + $0x40] sm:$0xff] %vm358, 0.0
        %368 = vst.msk [vmem:[#allocation2 + $0x48] sm:$0xff] %vm358, 0.0
        %369 = vst.msk [vmem:[#allocation2 + $0x50] sm:$0xff] %vm358, 0.0
        %370 = vst.msk [vmem:[#allocation2 + $0x58] sm:$0xff] %vm358, 0.0
        %371 = vst.msk [vmem:[#allocation2 + $0x60] sm:$0xff] %vm358, 0.0
        %372 = vst.msk [vmem:[#allocation2 + $0x68] sm:$0xff] %vm358, 0.0
        %373 = vst.msk [vmem:[#allocation2 + $0x70] sm:$0xff] %vm358, 0.0
        %374 = vst.msk [vmem:[#allocation2 + $0x78] sm:$0xff] %vm358, 0.0
        %375 = vst.msk [vmem:[#allocation2 + $0x80] sm:$0xff] %vm358, 0.0
        %376 = vst.msk [vmem:[#allocation2 + $0x88] sm:$0xff] %vm358, 0.0
        %377 = vst.msk [vmem:[#allocation2 + $0x90] sm:$0xff] %vm358, 0.0
        %378 = vst.msk [vmem:[#allocation2 + $0x98] sm:$0xff] %vm358, 0.0
        %379 = vst.msk [vmem:[#allocation2 + $0xa0] sm:$0xff] %vm358, 0.0
        %380 = vst.msk [vmem:[#allocation2 + $0xa8] sm:$0xff] %vm358, 0.0
        %381 = vst.msk [vmem:[#allocation2 + $0xb0] sm:$0xff] %vm358, 0.0
        %382 = vst.msk [vmem:[#allocation2 + $0xb8] sm:$0xff] %vm358, 0.0
        %383 = vst.msk [vmem:[#allocation2 + $0xc0] sm:$0xff] %vm358, 0.0
        %384 = vst.msk [vmem:[#allocation2 + $0xc8] sm:$0xff] %vm358, 0.0
        %385 = vst.msk [vmem:[#allocation2 + $0xd0] sm:$0xff] %vm358, 0.0
        %386 = vst.msk [vmem:[#allocation2 + $0xd8] sm:$0xff] %vm358, 0.0
        %387 = vst.msk [vmem:[#allocation2 + $0xe0] sm:$0xff] %vm358, 0.0
        %388 = vst.msk [vmem:[#allocation2 + $0xe8] sm:$0xff] %vm358, 0.0
        %389 = vst.msk [vmem:[#allocation2 + $0xf0] sm:$0xff] %vm358, 0.0
        %390 = vst.msk [vmem:[#allocation2 + $0xf8] sm:$0xff] %vm358, 0.0
        %391 = vst.msk [vmem:[#allocation2 + $0x100] sm:$0xff] %vm358, 0.0
        %392 = vst.msk [vmem:[#allocation2 + $0x108] sm:$0xff] %vm358, 0.0
        %393 = vst.msk [vmem:[#allocation2 + $0x110] sm:$0xff] %vm358, 0.0
        %394 = vst.msk [vmem:[#allocation2 + $0x118] sm:$0xff] %vm358, 0.0
        %395 = vst.msk [vmem:[#allocation2 + $0x120] sm:$0xff] %vm358, 0.0
        %396 = vst.msk [vmem:[#allocation2 + $0x128] sm:$0xff] %vm358, 0.0
        %397 = vst.msk [vmem:[#allocation2 + $0x130] sm:$0xff] %vm358, 0.0
        %398 = vst.msk [vmem:[#allocation2 + $0x138] sm:$0xff] %vm358, 0.0
        %399 = vst.msk [vmem:[#allocation2 + $0x140] sm:$0xff] %vm358, 0.0
        %400 = vst.msk [vmem:[#allocation2 + $0x148] sm:$0xff] %vm358, 0.0
        %401 = vst.msk [vmem:[#allocation2 + $0x150] sm:$0xff] %vm358, 0.0
        %402 = vst.msk [vmem:[#allocation2 + $0x158] sm:$0xff] %vm358, 0.0
        %403 = vst.msk [vmem:[#allocation2 + $0x160] sm:$0xff] %vm358, 0.0
        %404 = vst.msk [vmem:[#allocation2 + $0x168] sm:$0xff] %vm358, 0.0
        %405 = vst.msk [vmem:[#allocation2 + $0x170] sm:$0xff] %vm358, 0.0
        %406 = vst.msk [vmem:[#allocation2 + $0x178] sm:$0xff] %vm358, 0.0
        %407 = vst.msk [vmem:[#allocation2 + $0x180] sm:$0xff] %vm358, 0.0
        %408 = vst.msk [vmem:[#allocation2 + $0x188] sm:$0xff] %vm358, 0.0
        %409 = vst.msk [vmem:[#allocation2 + $0x190] sm:$0xff] %vm358, 0.0
        %410 = vst.msk [vmem:[#allocation2 + $0x198] sm:$0xff] %vm358, 0.0
        %411 = vst.msk [vmem:[#allocation2 + $0x1a0] sm:$0xff] %vm358, 0.0
        %412 = vst.msk [vmem:[#allocation2 + $0x1a8] sm:$0xff] %vm358, 0.0
        %413 = vst.msk [vmem:[#allocation2 + $0x1b0] sm:$0xff] %vm358, 0.0
        %414 = vst.msk [vmem:[#allocation2 + $0x1b8] sm:$0xff] %vm358, 0.0
        %415 = vst.msk [vmem:[#allocation2 + $0x1c0] sm:$0xff] %vm358, 0.0
        %416 = vst.msk [vmem:[#allocation2 + $0x1c8] sm:$0xff] %vm358, 0.0
        %417 = vst.msk [vmem:[#allocation2 + $0x1d0] sm:$0xff] %vm358, 0.0
        %418 = vst.msk [vmem:[#allocation2 + $0x1d8] sm:$0xff] %vm358, 0.0
        %419 = vst.msk [vmem:[#allocation2 + $0x1e0] sm:$0xff] %vm358, 0.0
        %420 = vst.msk [vmem:[#allocation2 + $0x1e8] sm:$0xff] %vm358, 0.0
        %421 = vst.msk [vmem:[#allocation2 + $0x1f0] sm:$0xff] %vm358, 0.0
        %422 = vst.msk [vmem:[#allocation2 + $0x1f8] sm:$0xff] %vm358, 0.0
        %423 = vst.msk [vmem:[#allocation2 + $0x200] sm:$0xff] %vm358, 0.0
        %424 = vst.msk [vmem:[#allocation2 + $0x208] sm:$0xff] %vm358, 0.0
        %425 = vst.msk [vmem:[#allocation2 + $0x210] sm:$0xff] %vm358, 0.0
        %426 = vst.msk [vmem:[#allocation2 + $0x218] sm:$0xff] %vm358, 0.0
        %427 = vst.msk [vmem:[#allocation2 + $0x220] sm:$0xff] %vm358, 0.0
        %428 = vst.msk [vmem:[#allocation2 + $0x228] sm:$0xff] %vm358, 0.0
        %429 = vst.msk [vmem:[#allocation2 + $0x230] sm:$0xff] %vm358, 0.0
        %430 = vst.msk [vmem:[#allocation2 + $0x238] sm:$0xff] %vm358, 0.0
        %431 = vst.msk [vmem:[#allocation2 + $0x240] sm:$0xff] %vm358, 0.0
        %432 = vst.msk [vmem:[#allocation2 + $0x248] sm:$0xff] %vm358, 0.0
        %433 = vst.msk [vmem:[#allocation2 + $0x250] sm:$0xff] %vm358, 0.0
        %434 = vst.msk [vmem:[#allocation2 + $0x258] sm:$0xff] %vm358, 0.0
        %435 = vst.msk [vmem:[#allocation2 + $0x260] sm:$0xff] %vm358, 0.0
        %436 = vst.msk [vmem:[#allocation2 + $0x268] sm:$0xff] %vm358, 0.0
        %437 = vst.msk [vmem:[#allocation2 + $0x270] sm:$0xff] %vm358, 0.0
        %438 = vst.msk [vmem:[#allocation2 + $0x278] sm:$0xff] %vm358, 0.0
        %439 = vst.msk [vmem:[#allocation2 + $0x280] sm:$0xff] %vm358, 0.0
        %440 = vst.msk [vmem:[#allocation2 + $0x288] sm:$0xff] %vm358, 0.0
        %441 = vst.msk [vmem:[#allocation2 + $0x290] sm:$0xff] %vm358, 0.0
        %442 = vst.msk [vmem:[#allocation2 + $0x298] sm:$0xff] %vm358, 0.0
        %443 = vst.msk [vmem:[#allocation2 + $0x2a0] sm:$0xff] %vm358, 0.0
        %444 = vst.msk [vmem:[#allocation2 + $0x2a8] sm:$0xff] %vm358, 0.0
        %445 = vst.msk [vmem:[#allocation2 + $0x2b0] sm:$0xff] %vm358, 0.0
        %446 = vst.msk [vmem:[#allocation2 + $0x2b8] sm:$0xff] %vm358, 0.0
        %447 = vst.msk [vmem:[#allocation2 + $0x2c0] sm:$0xff] %vm358, 0.0
        %448 = vst.msk [vmem:[#allocation2 + $0x2c8] sm:$0xff] %vm358, 0.0
        %449 = vst.msk [vmem:[#allocation2 + $0x2d0] sm:$0xff] %vm358, 0.0
        %450 = vst.msk [vmem:[#allocation2 + $0x2d8] sm:$0xff] %vm358, 0.0
        %451 = vst.msk [vmem:[#allocation2 + $0x2e0] sm:$0xff] %vm358, 0.0
        %452 = vst.msk [vmem:[#allocation2 + $0x2e8] sm:$0xff] %vm358, 0.0
        %453 = vst.msk [vmem:[#allocation2 + $0x2f0] sm:$0xff] %vm358, 0.0
        %454 = vst.msk [vmem:[#allocation2 + $0x2f8] sm:$0xff] %vm358, 0.0
        %455 = vst.msk [vmem:[#allocation2 + $0x300] sm:$0xff] %vm358, 0.0
        %456 = vst.msk [vmem:[#allocation2 + $0x308] sm:$0xff] %vm358, 0.0
        %457 = vst.msk [vmem:[#allocation2 + $0x310] sm:$0xff] %vm358, 0.0
        %458 = vst.msk [vmem:[#allocation2 + $0x318] sm:$0xff] %vm358, 0.0
        %459 = vst.msk [vmem:[#allocation2 + $0x320] sm:$0xff] %vm358, 0.0
        %460 = vst.msk [vmem:[#allocation2 + $0x328] sm:$0xff] %vm358, 0.0
        %461 = vst.msk [vmem:[#allocation2 + $0x330] sm:$0xff] %vm358, 0.0
        %462 = vst.msk [vmem:[#allocation2 + $0x338] sm:$0xff] %vm358, 0.0
        %463 = vst.msk [vmem:[#allocation2 + $0x340] sm:$0xff] %vm358, 0.0
        %464 = vst.msk [vmem:[#allocation2 + $0x348] sm:$0xff] %vm358, 0.0
        %465 = vst.msk [vmem:[#allocation2 + $0x350] sm:$0xff] %vm358, 0.0
        %466 = vst.msk [vmem:[#allocation2 + $0x358] sm:$0xff] %vm358, 0.0
        %467 = vst.msk [vmem:[#allocation2 + $0x360] sm:$0xff] %vm358, 0.0
        %468 = vst.msk [vmem:[#allocation2 + $0x368] sm:$0xff] %vm358, 0.0
        %469 = vst.msk [vmem:[#allocation2 + $0x370] sm:$0xff] %vm358, 0.0
        %470 = vst.msk [vmem:[#allocation2 + $0x378] sm:$0xff] %vm358, 0.0
        %471 = vst.msk [vmem:[#allocation2 + $0x380] sm:$0xff] %vm358, 0.0
        %472 = vst.msk [vmem:[#allocation2 + $0x388] sm:$0xff] %vm358, 0.0
        %473 = vst.msk [vmem:[#allocation2 + $0x390] sm:$0xff] %vm358, 0.0
        %474 = vst.msk [vmem:[#allocation2 + $0x398] sm:$0xff] %vm358, 0.0
        %475 = vst.msk [vmem:[#allocation2 + $0x3a0] sm:$0xff] %vm358, 0.0
        %476 = vst.msk [vmem:[#allocation2 + $0x3a8] sm:$0xff] %vm358, 0.0
        %477 = vst.msk [vmem:[#allocation2 + $0x3b0] sm:$0xff] %vm358, 0.0
        %478 = vst.msk [vmem:[#allocation2 + $0x3b8] sm:$0xff] %vm358, 0.0
        %479 = vst.msk [vmem:[#allocation2 + $0x3c0] sm:$0xff] %vm358, 0.0
        %480 = vst.msk [vmem:[#allocation2 + $0x3c8] sm:$0xff] %vm358, 0.0
        %481 = vst.msk [vmem:[#allocation2 + $0x3d0] sm:$0xff] %vm358, 0.0
        %482 = vst.msk [vmem:[#allocation2 + $0x3d8] sm:$0xff] %vm358, 0.0
        %483 = vst.msk [vmem:[#allocation2 + $0x3e0] sm:$0xff] %vm358, 0.0
        %484 = vst.msk [vmem:[#allocation2 + $0x3e8] sm:$0xff] %vm358, 0.0
        %485 = vst.msk [vmem:[#allocation2 + $0x3f0] sm:$0xff] %vm358, 0.0
        %486 = vst.msk [vmem:[#allocation2 + $0x3f8] sm:$0xff] %vm358, 0.0
        %487 = vst.msk [vmem:[#allocation2 + $0x400] sm:$0xff] %vm358, 0.0
        %488 = vst.msk [vmem:[#allocation2 + $0x408] sm:$0xff] %vm358, 0.0
        %v489 = vld [vmem:[%s356] sm:$0xff]
        %v490 = vld [vmem:[%s356 + $0x8] sm:$0xff]
        %v491 = vld [vmem:[%s356 + $0x10] sm:$0xff]
        %v492 = vld [vmem:[%s356 + $0x18] sm:$0xff]
        %v493 = vld [vmem:[%s356 + $0x20] sm:$0xff]
        %v494 = vld [vmem:[%s356 + $0x28] sm:$0xff]
        %v495 = vld [vmem:[%s356 + $0x30] sm:$0xff]
        %v496 = vld [vmem:[%s356 + $0x38] sm:$0xff]
        %v497 = vld [vmem:[%s356 + $0x40] sm:$0xff]
        %v498 = vld [vmem:[%s356 + $0x48] sm:$0xff]
        %v499 = vld [vmem:[%s356 + $0x50] sm:$0xff]
        %v500 = vld [vmem:[%s356 + $0x58] sm:$0xff]
        %v501 = vld [vmem:[%s356 + $0x60] sm:$0xff]
        %v502 = vld [vmem:[%s356 + $0x68] sm:$0xff]
        %v503 = vld [vmem:[%s356 + $0x70] sm:$0xff]
        %v504 = vld [vmem:[%s356 + $0x78] sm:$0xff]
        %v505 = vld [vmem:[%s356 + $0x80] sm:$0xff]
        %v506 = vld [vmem:[%s356 + $0x88] sm:$0xff]
        %v507 = vld [vmem:[%s356 + $0x90] sm:$0xff]
        %v508 = vld [vmem:[%s356 + $0x98] sm:$0xff]
        %v509 = vld [vmem:[%s356 + $0xa0] sm:$0xff]
        %v510 = vld [vmem:[%s356 + $0xa8] sm:$0xff]
        %v511 = vld [vmem:[%s356 + $0xb0] sm:$0xff]
        %v512 = vld [vmem:[%s356 + $0xb8] sm:$0xff]
        %v513 = vld [vmem:[%s356 + $0xc0] sm:$0xff]
        %v514 = vld [vmem:[%s356 + $0xc8] sm:$0xff]
        %v515 = vld [vmem:[%s356 + $0xd0] sm:$0xff]
        %v516 = vld [vmem:[%s356 + $0xd8] sm:$0xff]
        %v517 = vld [vmem:[%s356 + $0xe0] sm:$0xff]
        %v518 = vld [vmem:[%s356 + $0xe8] sm:$0xff]
        %v519 = vld [vmem:[%s356 + $0xf0] sm:$0xff]
        %v520 = vld [vmem:[%s356 + $0xf8] sm:$0xff]
        %v521 = vld [vmem:[%s356 + $0x100] sm:$0xff]
        %v522 = vld [vmem:[%s356 + $0x108] sm:$0xff]
        %v523 = vld [vmem:[%s356 + $0x110] sm:$0xff]
        %v524 = vld [vmem:[%s356 + $0x118] sm:$0xff]
        %v525 = vld [vmem:[%s356 + $0x120] sm:$0xff]
        %v526 = vld [vmem:[%s356 + $0x128] sm:$0xff]
        %v527 = vld [vmem:[%s356 + $0x130] sm:$0xff]
        %v528 = vld [vmem:[%s356 + $0x138] sm:$0xff]
        %v529 = vld [vmem:[%s356 + $0x140] sm:$0xff]
        %v530 = vld [vmem:[%s356 + $0x148] sm:$0xff]
        %v531 = vld [vmem:[%s356 + $0x150] sm:$0xff]
        %v532 = vld [vmem:[%s356 + $0x158] sm:$0xff]
        %v533 = vld [vmem:[%s356 + $0x160] sm:$0xff]
        %v534 = vld [vmem:[%s356 + $0x168] sm:$0xff]
        %v535 = vld [vmem:[%s356 + $0x170] sm:$0xff]
        %v536 = vld [vmem:[%s356 + $0x178] sm:$0xff]
        %v537 = vld [vmem:[%s356 + $0x180] sm:$0xff]
        %v538 = vld [vmem:[%s356 + $0x188] sm:$0xff]
        %v539 = vld [vmem:[%s356 + $0x190] sm:$0xff]
        %v540 = vld [vmem:[%s356 + $0x198] sm:$0xff]
        %v541 = vld [vmem:[%s356 + $0x1a0] sm:$0xff]
        %v542 = vld [vmem:[%s356 + $0x1a8] sm:$0xff]
        %v543 = vld [vmem:[%s356 + $0x1b0] sm:$0xff]
        %v544 = vld [vmem:[%s356 + $0x1b8] sm:$0xff]
        %v545 = vld [vmem:[%s356 + $0x1c0] sm:$0xff]
        %v546 = vld [vmem:[%s356 + $0x1c8] sm:$0xff]
        %v547 = vld [vmem:[%s356 + $0x1d0] sm:$0xff]
        %v548 = vld [vmem:[%s356 + $0x1d8] sm:$0xff]
        %v549 = vld [vmem:[%s356 + $0x1e0] sm:$0xff]
        %v550 = vld [vmem:[%s356 + $0x1e8] sm:$0xff]
        %v551 = vld [vmem:[%s356 + $0x1f0] sm:$0xff]
        %v552 = vld [vmem:[%s356 + $0x1f8] sm:$0xff]
        %v553 = vld [vmem:[%s356 + $0x200] sm:$0xff]
        %v554 = vld [vmem:[%s356 + $0x208] sm:$0xff]
        %v555 = vld [vmem:[%s356 + $0x210] sm:$0xff]
        %v556 = vld [vmem:[%s356 + $0x218] sm:$0xff]
        %v557 = vld [vmem:[%s356 + $0x220] sm:$0xff]
        %v558 = vld [vmem:[%s356 + $0x228] sm:$0xff]
        %v559 = vld [vmem:[%s356 + $0x230] sm:$0xff]
        %v560 = vld [vmem:[%s356 + $0x238] sm:$0xff]
        %v561 = vld [vmem:[%s356 + $0x240] sm:$0xff]
        %v562 = vld [vmem:[%s356 + $0x248] sm:$0xff]
        %v563 = vld [vmem:[%s356 + $0x250] sm:$0xff]
        %v564 = vld [vmem:[%s356 + $0x258] sm:$0xff]
        %v565 = vld [vmem:[%s356 + $0x260] sm:$0xff]
        %v566 = vld [vmem:[%s356 + $0x268] sm:$0xff]
        %v567 = vld [vmem:[%s356 + $0x270] sm:$0xff]
        %v568 = vld [vmem:[%s356 + $0x278] sm:$0xff]
        %v569 = vld [vmem:[%s356 + $0x280] sm:$0xff]
        %v570 = vld [vmem:[%s356 + $0x288] sm:$0xff]
        %v571 = vld [vmem:[%s356 + $0x290] sm:$0xff]
        %v572 = vld [vmem:[%s356 + $0x298] sm:$0xff]
        %v573 = vld [vmem:[%s356 + $0x2a0] sm:$0xff]
        %v574 = vld [vmem:[%s356 + $0x2a8] sm:$0xff]
        %v575 = vld [vmem:[%s356 + $0x2b0] sm:$0xff]
        %v576 = vld [vmem:[%s356 + $0x2b8] sm:$0xff]
        %v577 = vld [vmem:[%s356 + $0x2c0] sm:$0xff]
        %v578 = vld [vmem:[%s356 + $0x2c8] sm:$0xff]
        %v579 = vld [vmem:[%s356 + $0x2d0] sm:$0xff]
        %v580 = vld [vmem:[%s356 + $0x2d8] sm:$0xff]
        %v581 = vld [vmem:[%s356 + $0x2e0] sm:$0xff]
        %v582 = vld [vmem:[%s356 + $0x2e8] sm:$0xff]
        %v583 = vld [vmem:[%s356 + $0x2f0] sm:$0xff]
        %v584 = vld [vmem:[%s356 + $0x2f8] sm:$0xff]
        %v585 = vld [vmem:[%s356 + $0x300] sm:$0xff]
        %v586 = vld [vmem:[%s356 + $0x308] sm:$0xff]
        %v587 = vld [vmem:[%s356 + $0x310] sm:$0xff]
        %v588 = vld [vmem:[%s356 + $0x318] sm:$0xff]
        %v589 = vld [vmem:[%s356 + $0x320] sm:$0xff]
        %v590 = vld [vmem:[%s356 + $0x328] sm:$0xff]
        %v591 = vld [vmem:[%s356 + $0x330] sm:$0xff]
        %v592 = vld [vmem:[%s356 + $0x338] sm:$0xff]
        %v593 = vld [vmem:[%s356 + $0x340] sm:$0xff]
        %v594 = vld [vmem:[%s356 + $0x348] sm:$0xff]
        %v595 = vld [vmem:[%s356 + $0x350] sm:$0xff]
        %v596 = vld [vmem:[%s356 + $0x358] sm:$0xff]
        %v597 = vld [vmem:[%s356 + $0x360] sm:$0xff]
        %v598 = vld [vmem:[%s356 + $0x368] sm:$0xff]
        %v599 = vld [vmem:[%s356 + $0x370] sm:$0xff]
        %v600 = vld [vmem:[%s356 + $0x378] sm:$0xff]
        %v601 = vld [vmem:[%s356 + $0x380] sm:$0xff]
        %v602 = vld [vmem:[%s356 + $0x388] sm:$0xff]
        %v603 = vld [vmem:[%s356 + $0x390] sm:$0xff]
        %v604 = vld [vmem:[%s356 + $0x398] sm:$0xff]
        %v605 = vld [vmem:[%s356 + $0x3a0] sm:$0xff]
        %v606 = vld [vmem:[%s356 + $0x3a8] sm:$0xff]
        %v607 = vld [vmem:[%s356 + $0x3b0] sm:$0xff]
        %v608 = vld [vmem:[%s356 + $0x3b8] sm:$0xff]
        %v609 = vld [vmem:[%s356 + $0x3c0] sm:$0xff]
        %v610 = vld [vmem:[%s356 + $0x3c8] sm:$0xff]
        %v611 = vld [vmem:[%s356 + $0x3d0] sm:$0xff]
        %v612 = vld [vmem:[%s356 + $0x3d8] sm:$0xff]
        %v613 = vld [vmem:[%s356 + $0x3e0] sm:$0xff]
        %v614 = vld [vmem:[%s356 + $0x3e8] sm:$0xff]
        %v615 = vld [vmem:[%s356 + $0x3f0] sm:$0xff]
        %v616 = vld [vmem:[%s356 + $0x3f8] sm:$0xff]
        %vm617 = vcmask 15360
        %618 = vst.msk [vmem:[#allocation2 + $0x8] sm:$0xff] %vm617, %v489
        %619 = vst.msk [vmem:[#allocation2 + $0x10] sm:$0xff] %vm617, %v490
        %620 = vst.msk [vmem:[#allocation2 + $0x18] sm:$0xff] %vm617, %v491
        %621 = vst.msk [vmem:[#allocation2 + $0x20] sm:$0xff] %vm617, %v492
        %622 = vst.msk [vmem:[#allocation2 + $0x28] sm:$0xff] %vm617, %v493
        %623 = vst.msk [vmem:[#allocation2 + $0x30] sm:$0xff] %vm617, %v494
        %624 = vst.msk [vmem:[#allocation2 + $0x38] sm:$0xff] %vm617, %v495
        %625 = vst.msk [vmem:[#allocation2 + $0x40] sm:$0xff] %vm617, %v496
        %626 = vst.msk [vmem:[#allocation2 + $0x48] sm:$0xff] %vm617, %v497
        %627 = vst.msk [vmem:[#allocation2 + $0x50] sm:$0xff] %vm617, %v498
        %628 = vst.msk [vmem:[#allocation2 + $0x58] sm:$0xff] %vm617, %v499
        %629 = vst.msk [vmem:[#allocation2 + $0x60] sm:$0xff] %vm617, %v500
        %630 = vst.msk [vmem:[#allocation2 + $0x68] sm:$0xff] %vm617, %v501
        %631 = vst.msk [vmem:[#allocation2 + $0x70] sm:$0xff] %vm617, %v502
        %632 = vst.msk [vmem:[#allocation2 + $0x78] sm:$0xff] %vm617, %v503
        %633 = vst.msk [vmem:[#allocation2 + $0x80] sm:$0xff] %vm617, %v504
        %634 = vst.msk [vmem:[#allocation2 + $0x88] sm:$0xff] %vm617, %v505
        %635 = vst.msk [vmem:[#allocation2 + $0x90] sm:$0xff] %vm617, %v506
        %636 = vst.msk [vmem:[#allocation2 + $0x98] sm:$0xff] %vm617, %v507
        %637 = vst.msk [vmem:[#allocation2 + $0xa0] sm:$0xff] %vm617, %v508
        %638 = vst.msk [vmem:[#allocation2 + $0xa8] sm:$0xff] %vm617, %v509
        %639 = vst.msk [vmem:[#allocation2 + $0xb0] sm:$0xff] %vm617, %v510
        %640 = vst.msk [vmem:[#allocation2 + $0xb8] sm:$0xff] %vm617, %v511
        %641 = vst.msk [vmem:[#allocation2 + $0xc0] sm:$0xff] %vm617, %v512
        %642 = vst.msk [vmem:[#allocation2 + $0xc8] sm:$0xff] %vm617, %v513
        %643 = vst.msk [vmem:[#allocation2 + $0xd0] sm:$0xff] %vm617, %v514
        %644 = vst.msk [vmem:[#allocation2 + $0xd8] sm:$0xff] %vm617, %v515
        %645 = vst.msk [vmem:[#allocation2 + $0xe0] sm:$0xff] %vm617, %v516
        %646 = vst.msk [vmem:[#allocation2 + $0xe8] sm:$0xff] %vm617, %v517
        %647 = vst.msk [vmem:[#allocation2 + $0xf0] sm:$0xff] %vm617, %v518
        %648 = vst.msk [vmem:[#allocation2 + $0xf8] sm:$0xff] %vm617, %v519
        %649 = vst.msk [vmem:[#allocation2 + $0x100] sm:$0xff] %vm617, %v520
        %650 = vst.msk [vmem:[#allocation2 + $0x108] sm:$0xff] %vm617, %v521
        %651 = vst.msk [vmem:[#allocation2 + $0x110] sm:$0xff] %vm617, %v522
        %652 = vst.msk [vmem:[#allocation2 + $0x118] sm:$0xff] %vm617, %v523
        %653 = vst.msk [vmem:[#allocation2 + $0x120] sm:$0xff] %vm617, %v524
        %654 = vst.msk [vmem:[#allocation2 + $0x128] sm:$0xff] %vm617, %v525
        %655 = vst.msk [vmem:[#allocation2 + $0x130] sm:$0xff] %vm617, %v526
        %656 = vst.msk [vmem:[#allocation2 + $0x138] sm:$0xff] %vm617, %v527
        %657 = vst.msk [vmem:[#allocation2 + $0x140] sm:$0xff] %vm617, %v528
        %658 = vst.msk [vmem:[#allocation2 + $0x148] sm:$0xff] %vm617, %v529
        %659 = vst.msk [vmem:[#allocation2 + $0x150] sm:$0xff] %vm617, %v530
        %660 = vst.msk [vmem:[#allocation2 + $0x158] sm:$0xff] %vm617, %v531
        %661 = vst.msk [vmem:[#allocation2 + $0x160] sm:$0xff] %vm617, %v532
        %662 = vst.msk [vmem:[#allocation2 + $0x168] sm:$0xff] %vm617, %v533
        %663 = vst.msk [vmem:[#allocation2 + $0x170] sm:$0xff] %vm617, %v534
        %664 = vst.msk [vmem:[#allocation2 + $0x178] sm:$0xff] %vm617, %v535
        %665 = vst.msk [vmem:[#allocation2 + $0x180] sm:$0xff] %vm617, %v536
        %666 = vst.msk [vmem:[#allocation2 + $0x188] sm:$0xff] %vm617, %v537
        %667 = vst.msk [vmem:[#allocation2 + $0x190] sm:$0xff] %vm617, %v538
        %668 = vst.msk [vmem:[#allocation2 + $0x198] sm:$0xff] %vm617, %v539
        %669 = vst.msk [vmem:[#allocation2 + $0x1a0] sm:$0xff] %vm617, %v540
        %670 = vst.msk [vmem:[#allocation2 + $0x1a8] sm:$0xff] %vm617, %v541
        %671 = vst.msk [vmem:[#allocation2 + $0x1b0] sm:$0xff] %vm617, %v542
        %672 = vst.msk [vmem:[#allocation2 + $0x1b8] sm:$0xff] %vm617, %v543
        %673 = vst.msk [vmem:[#allocation2 + $0x1c0] sm:$0xff] %vm617, %v544
        %674 = vst.msk [vmem:[#allocation2 + $0x1c8] sm:$0xff] %vm617, %v545
        %675 = vst.msk [vmem:[#allocation2 + $0x1d0] sm:$0xff] %vm617, %v546
        %676 = vst.msk [vmem:[#allocation2 + $0x1d8] sm:$0xff] %vm617, %v547
        %677 = vst.msk [vmem:[#allocation2 + $0x1e0] sm:$0xff] %vm617, %v548
        %678 = vst.msk [vmem:[#allocation2 + $0x1e8] sm:$0xff] %vm617, %v549
        %679 = vst.msk [vmem:[#allocation2 + $0x1f0] sm:$0xff] %vm617, %v550
        %680 = vst.msk [vmem:[#allocation2 + $0x1f8] sm:$0xff] %vm617, %v551
        %681 = vst.msk [vmem:[#allocation2 + $0x200] sm:$0xff] %vm617, %v552
        %682 = vst.msk [vmem:[#allocation2 + $0x208] sm:$0xff] %vm617, %v553
        %683 = vst.msk [vmem:[#allocation2 + $0x210] sm:$0xff] %vm617, %v554
        %684 = vst.msk [vmem:[#allocation2 + $0x218] sm:$0xff] %vm617, %v555
        %685 = vst.msk [vmem:[#allocation2 + $0x220] sm:$0xff] %vm617, %v556
        %686 = vst.msk [vmem:[#allocation2 + $0x228] sm:$0xff] %vm617, %v557
        %687 = vst.msk [vmem:[#allocation2 + $0x230] sm:$0xff] %vm617, %v558
        %688 = vst.msk [vmem:[#allocation2 + $0x238] sm:$0xff] %vm617, %v559
        %689 = vst.msk [vmem:[#allocation2 + $0x240] sm:$0xff] %vm617, %v560
        %690 = vst.msk [vmem:[#allocation2 + $0x248] sm:$0xff] %vm617, %v561
        %691 = vst.msk [vmem:[#allocation2 + $0x250] sm:$0xff] %vm617, %v562
        %692 = vst.msk [vmem:[#allocation2 + $0x258] sm:$0xff] %vm617, %v563
        %693 = vst.msk [vmem:[#allocation2 + $0x260] sm:$0xff] %vm617, %v564
        %694 = vst.msk [vmem:[#allocation2 + $0x268] sm:$0xff] %vm617, %v565
        %695 = vst.msk [vmem:[#allocation2 + $0x270] sm:$0xff] %vm617, %v566
        %696 = vst.msk [vmem:[#allocation2 + $0x278] sm:$0xff] %vm617, %v567
        %697 = vst.msk [vmem:[#allocation2 + $0x280] sm:$0xff] %vm617, %v568
        %698 = vst.msk [vmem:[#allocation2 + $0x288] sm:$0xff] %vm617, %v569
        %699 = vst.msk [vmem:[#allocation2 + $0x290] sm:$0xff] %vm617, %v570
        %700 = vst.msk [vmem:[#allocation2 + $0x298] sm:$0xff] %vm617, %v571
        %701 = vst.msk [vmem:[#allocation2 + $0x2a0] sm:$0xff] %vm617, %v572
        %702 = vst.msk [vmem:[#allocation2 + $0x2a8] sm:$0xff] %vm617, %v573
        %703 = vst.msk [vmem:[#allocation2 + $0x2b0] sm:$0xff] %vm617, %v574
        %704 = vst.msk [vmem:[#allocation2 + $0x2b8] sm:$0xff] %vm617, %v575
        %705 = vst.msk [vmem:[#allocation2 + $0x2c0] sm:$0xff] %vm617, %v576
        %706 = vst.msk [vmem:[#allocation2 + $0x2c8] sm:$0xff] %vm617, %v577
        %707 = vst.msk [vmem:[#allocation2 + $0x2d0] sm:$0xff] %vm617, %v578
        %708 = vst.msk [vmem:[#allocation2 + $0x2d8] sm:$0xff] %vm617, %v579
        %709 = vst.msk [vmem:[#allocation2 + $0x2e0] sm:$0xff] %vm617, %v580
        %710 = vst.msk [vmem:[#allocation2 + $0x2e8] sm:$0xff] %vm617, %v581
        %711 = vst.msk [vmem:[#allocation2 + $0x2f0] sm:$0xff] %vm617, %v582
        %712 = vst.msk [vmem:[#allocation2 + $0x2f8] sm:$0xff] %vm617, %v583
        %713 = vst.msk [vmem:[#allocation2 + $0x300] sm:$0xff] %vm617, %v584
        %714 = vst.msk [vmem:[#allocation2 + $0x308] sm:$0xff] %vm617, %v585
        %715 = vst.msk [vmem:[#allocation2 + $0x310] sm:$0xff] %vm617, %v586
        %716 = vst.msk [vmem:[#allocation2 + $0x318] sm:$0xff] %vm617, %v587
        %717 = vst.msk [vmem:[#allocation2 + $0x320] sm:$0xff] %vm617, %v588
        %718 = vst.msk [vmem:[#allocation2 + $0x328] sm:$0xff] %vm617, %v589
        %719 = vst.msk [vmem:[#allocation2 + $0x330] sm:$0xff] %vm617, %v590
        %720 = vst.msk [vmem:[#allocation2 + $0x338] sm:$0xff] %vm617, %v591
        %721 = vst.msk [vmem:[#allocation2 + $0x340] sm:$0xff] %vm617, %v592
        %722 = vst.msk [vmem:[#allocation2 + $0x348] sm:$0xff] %vm617, %v593
        %723 = vst.msk [vmem:[#allocation2 + $0x350] sm:$0xff] %vm617, %v594
        %724 = vst.msk [vmem:[#allocation2 + $0x358] sm:$0xff] %vm617, %v595
        %725 = vst.msk [vmem:[#allocation2 + $0x360] sm:$0xff] %vm617, %v596
        %726 = vst.msk [vmem:[#allocation2 + $0x368] sm:$0xff] %vm617, %v597
        %727 = vst.msk [vmem:[#allocation2 + $0x370] sm:$0xff] %vm617, %v598
        %728 = vst.msk [vmem:[#allocation2 + $0x378] sm:$0xff] %vm617, %v599
        %729 = vst.msk [vmem:[#allocation2 + $0x380] sm:$0xff] %vm617, %v600
        %730 = vst.msk [vmem:[#allocation2 + $0x388] sm:$0xff] %vm617, %v601
        %731 = vst.msk [vmem:[#allocation2 + $0x390] sm:$0xff] %vm617, %v602
        %732 = vst.msk [vmem:[#allocation2 + $0x398] sm:$0xff] %vm617, %v603
        %733 = vst.msk [vmem:[#allocation2 + $0x3a0] sm:$0xff] %vm617, %v604
        %734 = vst.msk [vmem:[#allocation2 + $0x3a8] sm:$0xff] %vm617, %v605
        %735 = vst.msk [vmem:[#allocation2 + $0x3b0] sm:$0xff] %vm617, %v606
        %736 = vst.msk [vmem:[#allocation2 + $0x3b8] sm:$0xff] %vm617, %v607
        %737 = vst.msk [vmem:[#allocation2 + $0x3c0] sm:$0xff] %vm617, %v608
        %738 = vst.msk [vmem:[#allocation2 + $0x3c8] sm:$0xff] %vm617, %v609
        %739 = vst.msk [vmem:[#allocation2 + $0x3d0] sm:$0xff] %vm617, %v610
        %740 = vst.msk [vmem:[#allocation2 + $0x3d8] sm:$0xff] %vm617, %v611
        %741 = vst.msk [vmem:[#allocation2 + $0x3e0] sm:$0xff] %vm617, %v612
        %742 = vst.msk [vmem:[#allocation2 + $0x3e8] sm:$0xff] %vm617, %v613
        %743 = vst.msk [vmem:[#allocation2 + $0x3f0] sm:$0xff] %vm617, %v614
        %744 = vst.msk [vmem:[#allocation2 + $0x3f8] sm:$0xff] %vm617, %v615
        %745 = vst.msk [vmem:[#allocation2 + $0x400] sm:$0xff] %vm617, %v616
        %746 = vst.msk [vmem:[#allocation3] sm:$0xff] %vm358, 0.0
        %s747 = scalar_lea.vmem [#allocation2], 7
        %v748 = vld [vmem:[%s747] ss:$2 sm:$0xff]
        %s749 = scalar_lea.vmem [#allocation2], 23
        %v750 = vld [vmem:[%s749] ss:$2 sm:$0xff]
        %s751 = scalar_lea.vmem [#allocation2], 39
        %v752 = vld [vmem:[%s751] ss:$2 sm:$0xff]
        %s753 = scalar_lea.vmem [#allocation2], 55
        %v754 = vld [vmem:[%s753] ss:$2 sm:$0xff]
        %s755 = scalar_lea.vmem [#allocation2], 71
        %v756 = vld [vmem:[%s755] ss:$2 sm:$0xff]
        %s757 = scalar_lea.vmem [#allocation2], 87
        %v758 = vld [vmem:[%s757] ss:$2 sm:$0xff]
        %s759 = scalar_lea.vmem [#allocation2], 103
        %v760 = vld [vmem:[%s759] ss:$2 sm:$0xff]
        %s761 = scalar_lea.vmem [#allocation2], 119
        %v762 = vld [vmem:[%s761] ss:$2 sm:$0xff]
        %s763 = scalar_lea.vmem [#allocation2], 135
        %v764 = vld [vmem:[%s763] ss:$2 sm:$0xff]
        %s765 = scalar_lea.vmem [#allocation2], 151
        %v766 = vld [vmem:[%s765] ss:$2 sm:$0xff]
        %s767 = scalar_lea.vmem [#allocation2], 167
        %v768 = vld [vmem:[%s767] ss:$2 sm:$0xff]
        %s769 = scalar_lea.vmem [#allocation2], 183
        %v770 = vld [vmem:[%s769] ss:$2 sm:$0xff]
        %s771 = scalar_lea.vmem [#allocation2], 199
        %v772 = vld [vmem:[%s771] ss:$2 sm:$0xff]
        %s773 = scalar_lea.vmem [#allocation2], 215
        %v774 = vld [vmem:[%s773] ss:$2 sm:$0xff]
        %s775 = scalar_lea.vmem [#allocation2], 231
        %v776 = vld [vmem:[%s775] ss:$2 sm:$0xff]
        %s777 = scalar_lea.vmem [#allocation2], 247
        %v778 = vld [vmem:[%s777] ss:$2 sm:$0xff]
        %s779 = scalar_lea.vmem [#allocation2], 263
        %v780 = vld [vmem:[%s779] ss:$2 sm:$0xff]
        %s781 = scalar_lea.vmem [#allocation2], 279
        %v782 = vld [vmem:[%s781] ss:$2 sm:$0xff]
        %s783 = scalar_lea.vmem [#allocation2], 295
        %v784 = vld [vmem:[%s783] ss:$2 sm:$0xff]
        %s785 = scalar_lea.vmem [#allocation2], 311
        %v786 = vld [vmem:[%s785] ss:$2 sm:$0xff]
        %s787 = scalar_lea.vmem [#allocation2], 327
        %v788 = vld [vmem:[%s787] ss:$2 sm:$0xff]
        %s789 = scalar_lea.vmem [#allocation2], 343
        %v790 = vld [vmem:[%s789] ss:$2 sm:$0xff]
        %s791 = scalar_lea.vmem [#allocation2], 359
        %v792 = vld [vmem:[%s791] ss:$2 sm:$0xff]
        %s793 = scalar_lea.vmem [#allocation2], 375
        %v794 = vld [vmem:[%s793] ss:$2 sm:$0xff]
        %s795 = scalar_lea.vmem [#allocation2], 391
        %v796 = vld [vmem:[%s795] ss:$2 sm:$0xff]
        %s797 = scalar_lea.vmem [#allocation2], 407
        %v798 = vld [vmem:[%s797] ss:$2 sm:$0xff]
        %s799 = scalar_lea.vmem [#allocation2], 423
        %v800 = vld [vmem:[%s799] ss:$2 sm:$0xff]
        %s801 = scalar_lea.vmem [#allocation2], 439
        %v802 = vld [vmem:[%s801] ss:$2 sm:$0xff]
        %s803 = scalar_lea.vmem [#allocation2], 455
        %v804 = vld [vmem:[%s803] ss:$2 sm:$0xff]
        %s805 = scalar_lea.vmem [#allocation2], 471
        %v806 = vld [vmem:[%s805] ss:$2 sm:$0xff]
        %s807 = scalar_lea.vmem [#allocation2], 487
        %v808 = vld [vmem:[%s807] ss:$2 sm:$0xff]
        %s809 = scalar_lea.vmem [#allocation2], 503
        %v810 = vld [vmem:[%s809] ss:$2 sm:$0xff]
        %s811 = scalar_lea.vmem [#allocation2], 519
        %v812 = vld [vmem:[%s811] ss:$2 sm:$0xff]
        %s813 = scalar_lea.vmem [#allocation2], 535
        %v814 = vld [vmem:[%s813] ss:$2 sm:$0xff]
        %s815 = scalar_lea.vmem [#allocation2], 551
        %v816 = vld [vmem:[%s815] ss:$2 sm:$0xff]
        %s817 = scalar_lea.vmem [#allocation2], 567
        %v818 = vld [vmem:[%s817] ss:$2 sm:$0xff]
        %s819 = scalar_lea.vmem [#allocation2], 583
        %v820 = vld [vmem:[%s819] ss:$2 sm:$0xff]
        %s821 = scalar_lea.vmem [#allocation2], 599
        %v822 = vld [vmem:[%s821] ss:$2 sm:$0xff]
        %s823 = scalar_lea.vmem [#allocation2], 615
        %v824 = vld [vmem:[%s823] ss:$2 sm:$0xff]
        %s825 = scalar_lea.vmem [#allocation2], 631
        %v826 = vld [vmem:[%s825] ss:$2 sm:$0xff]
        %s827 = scalar_lea.vmem [#allocation2], 647
        %v828 = vld [vmem:[%s827] ss:$2 sm:$0xff]
        %s829 = scalar_lea.vmem [#allocation2], 663
        %v830 = vld [vmem:[%s829] ss:$2 sm:$0xff]
        %s831 = scalar_lea.vmem [#allocation2], 679
        %v832 = vld [vmem:[%s831] ss:$2 sm:$0xff]
        %s833 = scalar_lea.vmem [#allocation2], 695
        %v834 = vld [vmem:[%s833] ss:$2 sm:$0xff]
        %s835 = scalar_lea.vmem [#allocation2], 711
        %v836 = vld [vmem:[%s835] ss:$2 sm:$0xff]
        %s837 = scalar_lea.vmem [#allocation2], 727
        %v838 = vld [vmem:[%s837] ss:$2 sm:$0xff]
        %s839 = scalar_lea.vmem [#allocation2], 743
        %v840 = vld [vmem:[%s839] ss:$2 sm:$0xff]
        %s841 = scalar_lea.vmem [#allocation2], 759
        %v842 = vld [vmem:[%s841] ss:$2 sm:$0xff]
        %s843 = scalar_lea.vmem [#allocation2], 775
        %v844 = vld [vmem:[%s843] ss:$2 sm:$0xff]
        %s845 = scalar_lea.vmem [#allocation2], 791
        %v846 = vld [vmem:[%s845] ss:$2 sm:$0xff]
        %s847 = scalar_lea.vmem [#allocation2], 807
        %v848 = vld [vmem:[%s847] ss:$2 sm:$0xff]
        %s849 = scalar_lea.vmem [#allocation2], 823
        %v850 = vld [vmem:[%s849] ss:$2 sm:$0xff]
        %s851 = scalar_lea.vmem [#allocation2], 839
        %v852 = vld [vmem:[%s851] ss:$2 sm:$0xff]
        %s853 = scalar_lea.vmem [#allocation2], 855
        %v854 = vld [vmem:[%s853] ss:$2 sm:$0xff]
        %s855 = scalar_lea.vmem [#allocation2], 871
        %v856 = vld [vmem:[%s855] ss:$2 sm:$0xff]
        %s857 = scalar_lea.vmem [#allocation2], 887
        %v858 = vld [vmem:[%s857] ss:$2 sm:$0xff]
        %s859 = scalar_lea.vmem [#allocation2], 903
        %v860 = vld [vmem:[%s859] ss:$2 sm:$0xff]
        %s861 = scalar_lea.vmem [#allocation2], 919
        %v862 = vld [vmem:[%s861] ss:$2 sm:$0xff]
        %s863 = scalar_lea.vmem [#allocation2], 935
        %v864 = vld [vmem:[%s863] ss:$2 sm:$0xff]
        %s865 = scalar_lea.vmem [#allocation2], 951
        %v866 = vld [vmem:[%s865] ss:$2 sm:$0xff]
        %s867 = scalar_lea.vmem [#allocation2], 967
        %v868 = vld [vmem:[%s867] ss:$2 sm:$0xff]
        %s869 = scalar_lea.vmem [#allocation2], 983
        %v870 = vld [vmem:[%s869] ss:$2 sm:$0xff]
        %s871 = scalar_lea.vmem [#allocation2], 999
        %v872 = vld [vmem:[%s871] ss:$2 sm:$0xff]
        %s873 = scalar_lea.vmem [#allocation2], 1015
        %v874 = vld [vmem:[%s873] ss:$2 sm:$0xff]
        %v875 = vpack.c.bf16 %v750, %v748
        %v876 = vpack.c.bf16 %v754, %v752
        %v877 = vpack.c.bf16 %v758, %v756
        %v878 = vpack.c.bf16 %v762, %v760
        %v879 = vpack.c.bf16 %v766, %v764
        %v880 = vpack.c.bf16 %v770, %v768
        %v881 = vpack.c.bf16 %v774, %v772
        %v882 = vpack.c.bf16 %v778, %v776
        %v883 = vpack.c.bf16 %v782, %v780
        %v884 = vpack.c.bf16 %v786, %v784
        %v885 = vpack.c.bf16 %v790, %v788
        %v886 = vpack.c.bf16 %v794, %v792
        %v887 = vpack.c.bf16 %v798, %v796
        %v888 = vpack.c.bf16 %v802, %v800
        %v889 = vpack.c.bf16 %v806, %v804
        %v890 = vpack.c.bf16 %v810, %v808
        %v891 = vpack.c.bf16 %v814, %v812
        %v892 = vpack.c.bf16 %v818, %v816
        %v893 = vpack.c.bf16 %v822, %v820
        %v894 = vpack.c.bf16 %v826, %v824
        %v895 = vpack.c.bf16 %v830, %v828
        %v896 = vpack.c.bf16 %v834, %v832
        %v897 = vpack.c.bf16 %v838, %v836
        %v898 = vpack.c.bf16 %v842, %v840
        %v899 = vpack.c.bf16 %v846, %v844
        %v900 = vpack.c.bf16 %v850, %v848
        %v901 = vpack.c.bf16 %v854, %v852
        %v902 = vpack.c.bf16 %v858, %v856
        %v903 = vpack.c.bf16 %v862, %v860
        %v904 = vpack.c.bf16 %v866, %v864
        %v905 = vpack.c.bf16 %v870, %v868
        %v906 = vpack.c.bf16 %v874, %v872
        %s907 = scalar_lea.vmem [#allocation2], 8
        %v908 = vld [vmem:[%s907] ss:$2 sm:$0xff]
        %s909 = scalar_lea.vmem [#allocation2], 24
        %v910 = vld [vmem:[%s909] ss:$2 sm:$0xff]
        %s911 = scalar_lea.vmem [#allocation2], 40
        %v912 = vld [vmem:[%s911] ss:$2 sm:$0xff]
        %s913 = scalar_lea.vmem [#allocation2], 56
        %v914 = vld [vmem:[%s913] ss:$2 sm:$0xff]
        %s915 = scalar_lea.vmem [#allocation2], 72
        %v916 = vld [vmem:[%s915] ss:$2 sm:$0xff]
        %s917 = scalar_lea.vmem [#allocation2], 88
        %v918 = vld [vmem:[%s917] ss:$2 sm:$0xff]
        %s919 = scalar_lea.vmem [#allocation2], 104
        %v920 = vld [vmem:[%s919] ss:$2 sm:$0xff]
        %s921 = scalar_lea.vmem [#allocation2], 120
        %v922 = vld [vmem:[%s921] ss:$2 sm:$0xff]
        %s923 = scalar_lea.vmem [#allocation2], 136
        %v924 = vld [vmem:[%s923] ss:$2 sm:$0xff]
        %s925 = scalar_lea.vmem [#allocation2], 152
        %v926 = vld [vmem:[%s925] ss:$2 sm:$0xff]
        %s927 = scalar_lea.vmem [#allocation2], 168
        %v928 = vld [vmem:[%s927] ss:$2 sm:$0xff]
        %s929 = scalar_lea.vmem [#allocation2], 184
        %v930 = vld [vmem:[%s929] ss:$2 sm:$0xff]
        %s931 = scalar_lea.vmem [#allocation2], 200
        %v932 = vld [vmem:[%s931] ss:$2 sm:$0xff]
        %s933 = scalar_lea.vmem [#allocation2], 216
        %v934 = vld [vmem:[%s933] ss:$2 sm:$0xff]
        %s935 = scalar_lea.vmem [#allocation2], 232
        %v936 = vld [vmem:[%s935] ss:$2 sm:$0xff]
        %s937 = scalar_lea.vmem [#allocation2], 248
        %v938 = vld [vmem:[%s937] ss:$2 sm:$0xff]
        %s939 = scalar_lea.vmem [#allocation2], 264
        %v940 = vld [vmem:[%s939] ss:$2 sm:$0xff]
        %s941 = scalar_lea.vmem [#allocation2], 280
        %v942 = vld [vmem:[%s941] ss:$2 sm:$0xff]
        %s943 = scalar_lea.vmem [#allocation2], 296
        %v944 = vld [vmem:[%s943] ss:$2 sm:$0xff]
        %s945 = scalar_lea.vmem [#allocation2], 312
        %v946 = vld [vmem:[%s945] ss:$2 sm:$0xff]
        %s947 = scalar_lea.vmem [#allocation2], 328
        %v948 = vld [vmem:[%s947] ss:$2 sm:$0xff]
        %s949 = scalar_lea.vmem [#allocation2], 344
        %v950 = vld [vmem:[%s949] ss:$2 sm:$0xff]
        %s951 = scalar_lea.vmem [#allocation2], 360
        %v952 = vld [vmem:[%s951] ss:$2 sm:$0xff]
        %s953 = scalar_lea.vmem [#allocation2], 376
        %v954 = vld [vmem:[%s953] ss:$2 sm:$0xff]
        %s955 = scalar_lea.vmem [#allocation2], 392
        %v956 = vld [vmem:[%s955] ss:$2 sm:$0xff]
        %s957 = scalar_lea.vmem [#allocation2], 408
        %v958 = vld [vmem:[%s957] ss:$2 sm:$0xff]
        %s959 = scalar_lea.vmem [#allocation2], 424
        %v960 = vld [vmem:[%s959] ss:$2 sm:$0xff]
        %s961 = scalar_lea.vmem [#allocation2], 440
        %v962 = vld [vmem:[%s961] ss:$2 sm:$0xff]
        %s963 = scalar_lea.vmem [#allocation2], 456
        %v964 = vld [vmem:[%s963] ss:$2 sm:$0xff]
        %s965 = scalar_lea.vmem [#allocation2], 472
        %v966 = vld [vmem:[%s965] ss:$2 sm:$0xff]
        %s967 = scalar_lea.vmem [#allocation2], 488
        %v968 = vld [vmem:[%s967] ss:$2 sm:$0xff]
        %s969 = scalar_lea.vmem [#allocation2], 504
        %v970 = vld [vmem:[%s969] ss:$2 sm:$0xff]
        %s971 = scalar_lea.vmem [#allocation2], 520
        %v972 = vld [vmem:[%s971] ss:$2 sm:$0xff]
        %s973 = scalar_lea.vmem [#allocation2], 536
        %v974 = vld [vmem:[%s973] ss:$2 sm:$0xff]
        %s975 = scalar_lea.vmem [#allocation2], 552
        %v976 = vld [vmem:[%s975] ss:$2 sm:$0xff]
        %s977 = scalar_lea.vmem [#allocation2], 568
        %v978 = vld [vmem:[%s977] ss:$2 sm:$0xff]
        %s979 = scalar_lea.vmem [#allocation2], 584
        %v980 = vld [vmem:[%s979] ss:$2 sm:$0xff]
        %s981 = scalar_lea.vmem [#allocation2], 600
        %v982 = vld [vmem:[%s981] ss:$2 sm:$0xff]
        %s983 = scalar_lea.vmem [#allocation2], 616
        %v984 = vld [vmem:[%s983] ss:$2 sm:$0xff]
        %s985 = scalar_lea.vmem [#allocation2], 632
        %v986 = vld [vmem:[%s985] ss:$2 sm:$0xff]
        %s987 = scalar_lea.vmem [#allocation2], 648
        %v988 = vld [vmem:[%s987] ss:$2 sm:$0xff]
        %s989 = scalar_lea.vmem [#allocation2], 664
        %v990 = vld [vmem:[%s989] ss:$2 sm:$0xff]
        %s991 = scalar_lea.vmem [#allocation2], 680
        %v992 = vld [vmem:[%s991] ss:$2 sm:$0xff]
        %s993 = scalar_lea.vmem [#allocation2], 696
        %v994 = vld [vmem:[%s993] ss:$2 sm:$0xff]
        %s995 = scalar_lea.vmem [#allocation2], 712
        %v996 = vld [vmem:[%s995] ss:$2 sm:$0xff]
        %s997 = scalar_lea.vmem [#allocation2], 728
        %v998 = vld [vmem:[%s997] ss:$2 sm:$0xff]
        %s999 = scalar_lea.vmem [#allocation2], 744
        %v1000 = vld [vmem:[%s999] ss:$2 sm:$0xff]
        %s1001 = scalar_lea.vmem [#allocation2], 760
        %v1002 = vld [vmem:[%s1001] ss:$2 sm:$0xff]
        %s1003 = scalar_lea.vmem [#allocation2], 776
        %v1004 = vld [vmem:[%s1003] ss:$2 sm:$0xff]
        %s1005 = scalar_lea.vmem [#allocation2], 792
        %v1006 = vld [vmem:[%s1005] ss:$2 sm:$0xff]
        %s1007 = scalar_lea.vmem [#allocation2], 808
        %v1008 = vld [vmem:[%s1007] ss:$2 sm:$0xff]
        %s1009 = scalar_lea.vmem [#allocation2], 824
        %v1010 = vld [vmem:[%s1009] ss:$2 sm:$0xff]
        %s1011 = scalar_lea.vmem [#allocation2], 840
        %v1012 = vld [vmem:[%s1011] ss:$2 sm:$0xff]
        %s1013 = scalar_lea.vmem [#allocation2], 856
        %v1014 = vld [vmem:[%s1013] ss:$2 sm:$0xff]
        %s1015 = scalar_lea.vmem [#allocation2], 872
        %v1016 = vld [vmem:[%s1015] ss:$2 sm:$0xff]
        %s1017 = scalar_lea.vmem [#allocation2], 888
        %v1018 = vld [vmem:[%s1017] ss:$2 sm:$0xff]
        %s1019 = scalar_lea.vmem [#allocation2], 904
        %v1020 = vld [vmem:[%s1019] ss:$2 sm:$0xff]
        %s1021 = scalar_lea.vmem [#allocation2], 920
        %v1022 = vld [vmem:[%s1021] ss:$2 sm:$0xff]
        %s1023 = scalar_lea.vmem [#allocation2], 936
        %v1024 = vld [vmem:[%s1023] ss:$2 sm:$0xff]
        %s1025 = scalar_lea.vmem [#allocation2], 952
        %v1026 = vld [vmem:[%s1025] ss:$2 sm:$0xff]
        %s1027 = scalar_lea.vmem [#allocation2], 968
        %v1028 = vld [vmem:[%s1027] ss:$2 sm:$0xff]
        %s1029 = scalar_lea.vmem [#allocation2], 984
        %v1030 = vld [vmem:[%s1029] ss:$2 sm:$0xff]
        %s1031 = scalar_lea.vmem [#allocation2], 1000
        %v1032 = vld [vmem:[%s1031] ss:$2 sm:$0xff]
        %s1033 = scalar_lea.vmem [#allocation2], 1016
        %v1034 = vld [vmem:[%s1033] ss:$2 sm:$0xff]
        %v1035 = vpack.c.bf16 %v910, %v908
        %v1036 = vpack.c.bf16 %v914, %v912
        %v1037 = vpack.c.bf16 %v918, %v916
        %v1038 = vpack.c.bf16 %v922, %v920
        %v1039 = vpack.c.bf16 %v926, %v924
        %v1040 = vpack.c.bf16 %v930, %v928
        %v1041 = vpack.c.bf16 %v934, %v932
        %v1042 = vpack.c.bf16 %v938, %v936
        %v1043 = vpack.c.bf16 %v942, %v940
        %v1044 = vpack.c.bf16 %v946, %v944
        %v1045 = vpack.c.bf16 %v950, %v948
        %v1046 = vpack.c.bf16 %v954, %v952
        %v1047 = vpack.c.bf16 %v958, %v956
        %v1048 = vpack.c.bf16 %v962, %v960
        %v1049 = vpack.c.bf16 %v966, %v964
        %v1050 = vpack.c.bf16 %v970, %v968
        %v1051 = vpack.c.bf16 %v974, %v972
        %v1052 = vpack.c.bf16 %v978, %v976
        %v1053 = vpack.c.bf16 %v982, %v980
        %v1054 = vpack.c.bf16 %v986, %v984
        %v1055 = vpack.c.bf16 %v990, %v988
        %v1056 = vpack.c.bf16 %v994, %v992
        %v1057 = vpack.c.bf16 %v998, %v996
        %v1058 = vpack.c.bf16 %v1002, %v1000
        %v1059 = vpack.c.bf16 %v1006, %v1004
        %v1060 = vpack.c.bf16 %v1010, %v1008
        %v1061 = vpack.c.bf16 %v1014, %v1012
        %v1062 = vpack.c.bf16 %v1018, %v1016
        %v1063 = vpack.c.bf16 %v1022, %v1020
        %v1064 = vpack.c.bf16 %v1026, %v1024
        %v1065 = vpack.c.bf16 %v1030, %v1028
        %v1066 = vpack.c.bf16 %v1034, %v1032
        %s1067 = scalar_lea.vmem [#allocation2], 9
        %v1068 = vld [vmem:[%s1067] ss:$2 sm:$0xff]
        %s1069 = scalar_lea.vmem [#allocation2], 25
        %v1070 = vld [vmem:[%s1069] ss:$2 sm:$0xff]
        %s1071 = scalar_lea.vmem [#allocation2], 41
        %v1072 = vld [vmem:[%s1071] ss:$2 sm:$0xff]
        %s1073 = scalar_lea.vmem [#allocation2], 57
        %v1074 = vld [vmem:[%s1073] ss:$2 sm:$0xff]
        %s1075 = scalar_lea.vmem [#allocation2], 73
        %v1076 = vld [vmem:[%s1075] ss:$2 sm:$0xff]
        %s1077 = scalar_lea.vmem [#allocation2], 89
        %v1078 = vld [vmem:[%s1077] ss:$2 sm:$0xff]
        %s1079 = scalar_lea.vmem [#allocation2], 105
        %v1080 = vld [vmem:[%s1079] ss:$2 sm:$0xff]
        %s1081 = scalar_lea.vmem [#allocation2], 121
        %v1082 = vld [vmem:[%s1081] ss:$2 sm:$0xff]
        %s1083 = scalar_lea.vmem [#allocation2], 137
        %v1084 = vld [vmem:[%s1083] ss:$2 sm:$0xff]
        %s1085 = scalar_lea.vmem [#allocation2], 153
        %v1086 = vld [vmem:[%s1085] ss:$2 sm:$0xff]
        %s1087 = scalar_lea.vmem [#allocation2], 169
        %v1088 = vld [vmem:[%s1087] ss:$2 sm:$0xff]
        %s1089 = scalar_lea.vmem [#allocation2], 185
        %v1090 = vld [vmem:[%s1089] ss:$2 sm:$0xff]
        %s1091 = scalar_lea.vmem [#allocation2], 201
        %v1092 = vld [vmem:[%s1091] ss:$2 sm:$0xff]
        %s1093 = scalar_lea.vmem [#allocation2], 217
        %v1094 = vld [vmem:[%s1093] ss:$2 sm:$0xff]
        %s1095 = scalar_lea.vmem [#allocation2], 233
        %v1096 = vld [vmem:[%s1095] ss:$2 sm:$0xff]
        %s1097 = scalar_lea.vmem [#allocation2], 249
        %v1098 = vld [vmem:[%s1097] ss:$2 sm:$0xff]
        %s1099 = scalar_lea.vmem [#allocation2], 265
        %v1100 = vld [vmem:[%s1099] ss:$2 sm:$0xff]
        %s1101 = scalar_lea.vmem [#allocation2], 281
        %v1102 = vld [vmem:[%s1101] ss:$2 sm:$0xff]
        %s1103 = scalar_lea.vmem [#allocation2], 297
        %v1104 = vld [vmem:[%s1103] ss:$2 sm:$0xff]
        %s1105 = scalar_lea.vmem [#allocation2], 313
        %v1106 = vld [vmem:[%s1105] ss:$2 sm:$0xff]
        %s1107 = scalar_lea.vmem [#allocation2], 329
        %v1108 = vld [vmem:[%s1107] ss:$2 sm:$0xff]
        %s1109 = scalar_lea.vmem [#allocation2], 345
        %v1110 = vld [vmem:[%s1109] ss:$2 sm:$0xff]
        %s1111 = scalar_lea.vmem [#allocation2], 361
        %v1112 = vld [vmem:[%s1111] ss:$2 sm:$0xff]
        %s1113 = scalar_lea.vmem [#allocation2], 377
        %v1114 = vld [vmem:[%s1113] ss:$2 sm:$0xff]
        %s1115 = scalar_lea.vmem [#allocation2], 393
        %v1116 = vld [vmem:[%s1115] ss:$2 sm:$0xff]
        %s1117 = scalar_lea.vmem [#allocation2], 409
        %v1118 = vld [vmem:[%s1117] ss:$2 sm:$0xff]
        %s1119 = scalar_lea.vmem [#allocation2], 425
        %v1120 = vld [vmem:[%s1119] ss:$2 sm:$0xff]
        %s1121 = scalar_lea.vmem [#allocation2], 441
        %v1122 = vld [vmem:[%s1121] ss:$2 sm:$0xff]
        %s1123 = scalar_lea.vmem [#allocation2], 457
        %v1124 = vld [vmem:[%s1123] ss:$2 sm:$0xff]
        %s1125 = scalar_lea.vmem [#allocation2], 473
        %v1126 = vld [vmem:[%s1125] ss:$2 sm:$0xff]
        %s1127 = scalar_lea.vmem [#allocation2], 489
        %v1128 = vld [vmem:[%s1127] ss:$2 sm:$0xff]
        %s1129 = scalar_lea.vmem [#allocation2], 505
        %v1130 = vld [vmem:[%s1129] ss:$2 sm:$0xff]
        %s1131 = scalar_lea.vmem [#allocation2], 521
        %v1132 = vld [vmem:[%s1131] ss:$2 sm:$0xff]
        %s1133 = scalar_lea.vmem [#allocation2], 537
        %v1134 = vld [vmem:[%s1133] ss:$2 sm:$0xff]
        %s1135 = scalar_lea.vmem [#allocation2], 553
        %v1136 = vld [vmem:[%s1135] ss:$2 sm:$0xff]
        %s1137 = scalar_lea.vmem [#allocation2], 569
        %v1138 = vld [vmem:[%s1137] ss:$2 sm:$0xff]
        %s1139 = scalar_lea.vmem [#allocation2], 585
        %v1140 = vld [vmem:[%s1139] ss:$2 sm:$0xff]
        %s1141 = scalar_lea.vmem [#allocation2], 601
        %v1142 = vld [vmem:[%s1141] ss:$2 sm:$0xff]
        %s1143 = scalar_lea.vmem [#allocation2], 617
        %v1144 = vld [vmem:[%s1143] ss:$2 sm:$0xff]
        %s1145 = scalar_lea.vmem [#allocation2], 633
        %v1146 = vld [vmem:[%s1145] ss:$2 sm:$0xff]
        %s1147 = scalar_lea.vmem [#allocation2], 649
        %v1148 = vld [vmem:[%s1147] ss:$2 sm:$0xff]
        %s1149 = scalar_lea.vmem [#allocation2], 665
        %v1150 = vld [vmem:[%s1149] ss:$2 sm:$0xff]
        %s1151 = scalar_lea.vmem [#allocation2], 681
        %v1152 = vld [vmem:[%s1151] ss:$2 sm:$0xff]
        %s1153 = scalar_lea.vmem [#allocation2], 697
        %v1154 = vld [vmem:[%s1153] ss:$2 sm:$0xff]
        %s1155 = scalar_lea.vmem [#allocation2], 713
        %v1156 = vld [vmem:[%s1155] ss:$2 sm:$0xff]
        %s1157 = scalar_lea.vmem [#allocation2], 729
        %v1158 = vld [vmem:[%s1157] ss:$2 sm:$0xff]
        %s1159 = scalar_lea.vmem [#allocation2], 745
        %v1160 = vld [vmem:[%s1159] ss:$2 sm:$0xff]
        %s1161 = scalar_lea.vmem [#allocation2], 761
        %v1162 = vld [vmem:[%s1161] ss:$2 sm:$0xff]
        %s1163 = scalar_lea.vmem [#allocation2], 777
        %v1164 = vld [vmem:[%s1163] ss:$2 sm:$0xff]
        %s1165 = scalar_lea.vmem [#allocation2], 793
        %v1166 = vld [vmem:[%s1165] ss:$2 sm:$0xff]
        %s1167 = scalar_lea.vmem [#allocation2], 809
        %v1168 = vld [vmem:[%s1167] ss:$2 sm:$0xff]
        %s1169 = scalar_lea.vmem [#allocation2], 825
        %v1170 = vld [vmem:[%s1169] ss:$2 sm:$0xff]
        %s1171 = scalar_lea.vmem [#allocation2], 841
        %v1172 = vld [vmem:[%s1171] ss:$2 sm:$0xff]
        %s1173 = scalar_lea.vmem [#allocation2], 857
        %v1174 = vld [vmem:[%s1173] ss:$2 sm:$0xff]
        %s1175 = scalar_lea.vmem [#allocation2], 873
        %v1176 = vld [vmem:[%s1175] ss:$2 sm:$0xff]
        %s1177 = scalar_lea.vmem [#allocation2], 889
        %v1178 = vld [vmem:[%s1177] ss:$2 sm:$0xff]
        %s1179 = scalar_lea.vmem [#allocation2], 905
        %v1180 = vld [vmem:[%s1179] ss:$2 sm:$0xff]
        %s1181 = scalar_lea.vmem [#allocation2], 921
        %v1182 = vld [vmem:[%s1181] ss:$2 sm:$0xff]
        %s1183 = scalar_lea.vmem [#allocation2], 937
        %v1184 = vld [vmem:[%s1183] ss:$2 sm:$0xff]
        %s1185 = scalar_lea.vmem [#allocation2], 953
        %v1186 = vld [vmem:[%s1185] ss:$2 sm:$0xff]
        %s1187 = scalar_lea.vmem [#allocation2], 969
        %v1188 = vld [vmem:[%s1187] ss:$2 sm:$0xff]
        %s1189 = scalar_lea.vmem [#allocation2], 985
        %v1190 = vld [vmem:[%s1189] ss:$2 sm:$0xff]
        %s1191 = scalar_lea.vmem [#allocation2], 1001
        %v1192 = vld [vmem:[%s1191] ss:$2 sm:$0xff]
        %s1193 = scalar_lea.vmem [#allocation2], 1017
        %v1194 = vld [vmem:[%s1193] ss:$2 sm:$0xff]
        %v1195 = vpack.c.bf16 %v1070, %v1068
        %v1196 = vpack.c.bf16 %v1074, %v1072
        %v1197 = vpack.c.bf16 %v1078, %v1076
        %v1198 = vpack.c.bf16 %v1082, %v1080
        %v1199 = vpack.c.bf16 %v1086, %v1084
        %v1200 = vpack.c.bf16 %v1090, %v1088
        %v1201 = vpack.c.bf16 %v1094, %v1092
        %v1202 = vpack.c.bf16 %v1098, %v1096
        %v1203 = vpack.c.bf16 %v1102, %v1100
        %v1204 = vpack.c.bf16 %v1106, %v1104
        %v1205 = vpack.c.bf16 %v1110, %v1108
        %v1206 = vpack.c.bf16 %v1114, %v1112
        %v1207 = vpack.c.bf16 %v1118, %v1116
        %v1208 = vpack.c.bf16 %v1122, %v1120
        %v1209 = vpack.c.bf16 %v1126, %v1124
        %v1210 = vpack.c.bf16 %v1130, %v1128
        %v1211 = vpack.c.bf16 %v1134, %v1132
        %v1212 = vpack.c.bf16 %v1138, %v1136
        %v1213 = vpack.c.bf16 %v1142, %v1140
        %v1214 = vpack.c.bf16 %v1146, %v1144
        %v1215 = vpack.c.bf16 %v1150, %v1148
        %v1216 = vpack.c.bf16 %v1154, %v1152
        %v1217 = vpack.c.bf16 %v1158, %v1156
        %v1218 = vpack.c.bf16 %v1162, %v1160
        %v1219 = vpack.c.bf16 %v1166, %v1164
        %v1220 = vpack.c.bf16 %v1170, %v1168
        %v1221 = vpack.c.bf16 %v1174, %v1172
        %v1222 = vpack.c.bf16 %v1178, %v1176
        %v1223 = vpack.c.bf16 %v1182, %v1180
        %v1224 = vpack.c.bf16 %v1186, %v1184
        %v1225 = vpack.c.bf16 %v1190, %v1188
        %v1226 = vpack.c.bf16 %v1194, %v1192
        %s1227 = scalar_lea.vmem [#allocation2], 10
        %v1228 = vld [vmem:[%s1227] ss:$2 sm:$0xff]
        %s1229 = scalar_lea.vmem [#allocation2], 26
        %v1230 = vld [vmem:[%s1229] ss:$2 sm:$0xff]
        %s1231 = scalar_lea.vmem [#allocation2], 42
        %v1232 = vld [vmem:[%s1231] ss:$2 sm:$0xff]
        %s1233 = scalar_lea.vmem [#allocation2], 58
        %v1234 = vld [vmem:[%s1233] ss:$2 sm:$0xff]
        %s1235 = scalar_lea.vmem [#allocation2], 74
        %v1236 = vld [vmem:[%s1235] ss:$2 sm:$0xff]
        %s1237 = scalar_lea.vmem [#allocation2], 90
        %v1238 = vld [vmem:[%s1237] ss:$2 sm:$0xff]
        %s1239 = scalar_lea.vmem [#allocation2], 106
        %v1240 = vld [vmem:[%s1239] ss:$2 sm:$0xff]
        %s1241 = scalar_lea.vmem [#allocation2], 122
        %v1242 = vld [vmem:[%s1241] ss:$2 sm:$0xff]
        %s1243 = scalar_lea.vmem [#allocation2], 138
        %v1244 = vld [vmem:[%s1243] ss:$2 sm:$0xff]
        %s1245 = scalar_lea.vmem [#allocation2], 154
        %v1246 = vld [vmem:[%s1245] ss:$2 sm:$0xff]
        %s1247 = scalar_lea.vmem [#allocation2], 170
        %v1248 = vld [vmem:[%s1247] ss:$2 sm:$0xff]
        %s1249 = scalar_lea.vmem [#allocation2], 186
        %v1250 = vld [vmem:[%s1249] ss:$2 sm:$0xff]
        %s1251 = scalar_lea.vmem [#allocation2], 202
        %v1252 = vld [vmem:[%s1251] ss:$2 sm:$0xff]
        %s1253 = scalar_lea.vmem [#allocation2], 218
        %v1254 = vld [vmem:[%s1253] ss:$2 sm:$0xff]
        %s1255 = scalar_lea.vmem [#allocation2], 234
        %v1256 = vld [vmem:[%s1255] ss:$2 sm:$0xff]
        %s1257 = scalar_lea.vmem [#allocation2], 250
        %v1258 = vld [vmem:[%s1257] ss:$2 sm:$0xff]
        %s1259 = scalar_lea.vmem [#allocation2], 266
        %v1260 = vld [vmem:[%s1259] ss:$2 sm:$0xff]
        %s1261 = scalar_lea.vmem [#allocation2], 282
        %v1262 = vld [vmem:[%s1261] ss:$2 sm:$0xff]
        %s1263 = scalar_lea.vmem [#allocation2], 298
        %v1264 = vld [vmem:[%s1263] ss:$2 sm:$0xff]
        %s1265 = scalar_lea.vmem [#allocation2], 314
        %v1266 = vld [vmem:[%s1265] ss:$2 sm:$0xff]
        %s1267 = scalar_lea.vmem [#allocation2], 330
        %v1268 = vld [vmem:[%s1267] ss:$2 sm:$0xff]
        %s1269 = scalar_lea.vmem [#allocation2], 346
        %v1270 = vld [vmem:[%s1269] ss:$2 sm:$0xff]
        %s1271 = scalar_lea.vmem [#allocation2], 362
        %v1272 = vld [vmem:[%s1271] ss:$2 sm:$0xff]
        %s1273 = scalar_lea.vmem [#allocation2], 378
        %v1274 = vld [vmem:[%s1273] ss:$2 sm:$0xff]
        %s1275 = scalar_lea.vmem [#allocation2], 394
        %v1276 = vld [vmem:[%s1275] ss:$2 sm:$0xff]
        %s1277 = scalar_lea.vmem [#allocation2], 410
        %v1278 = vld [vmem:[%s1277] ss:$2 sm:$0xff]
        %s1279 = scalar_lea.vmem [#allocation2], 426
        %v1280 = vld [vmem:[%s1279] ss:$2 sm:$0xff]
        %s1281 = scalar_lea.vmem [#allocation2], 442
        %v1282 = vld [vmem:[%s1281] ss:$2 sm:$0xff]
        %s1283 = scalar_lea.vmem [#allocation2], 458
        %v1284 = vld [vmem:[%s1283] ss:$2 sm:$0xff]
        %s1285 = scalar_lea.vmem [#allocation2], 474
        %v1286 = vld [vmem:[%s1285] ss:$2 sm:$0xff]
        %s1287 = scalar_lea.vmem [#allocation2], 490
        %v1288 = vld [vmem:[%s1287] ss:$2 sm:$0xff]
        %s1289 = scalar_lea.vmem [#allocation2], 506
        %v1290 = vld [vmem:[%s1289] ss:$2 sm:$0xff]
        %s1291 = scalar_lea.vmem [#allocation2], 522
        %v1292 = vld [vmem:[%s1291] ss:$2 sm:$0xff]
        %s1293 = scalar_lea.vmem [#allocation2], 538
        %v1294 = vld [vmem:[%s1293] ss:$2 sm:$0xff]
        %s1295 = scalar_lea.vmem [#allocation2], 554
        %v1296 = vld [vmem:[%s1295] ss:$2 sm:$0xff]
        %s1297 = scalar_lea.vmem [#allocation2], 570
        %v1298 = vld [vmem:[%s1297] ss:$2 sm:$0xff]
        %s1299 = scalar_lea.vmem [#allocation2], 586
        %v1300 = vld [vmem:[%s1299] ss:$2 sm:$0xff]
        %s1301 = scalar_lea.vmem [#allocation2], 602
        %v1302 = vld [vmem:[%s1301] ss:$2 sm:$0xff]
        %s1303 = scalar_lea.vmem [#allocation2], 618
        %v1304 = vld [vmem:[%s1303] ss:$2 sm:$0xff]
        %s1305 = scalar_lea.vmem [#allocation2], 634
        %v1306 = vld [vmem:[%s1305] ss:$2 sm:$0xff]
        %s1307 = scalar_lea.vmem [#allocation2], 650
        %v1308 = vld [vmem:[%s1307] ss:$2 sm:$0xff]
        %s1309 = scalar_lea.vmem [#allocation2], 666
        %v1310 = vld [vmem:[%s1309] ss:$2 sm:$0xff]
        %s1311 = scalar_lea.vmem [#allocation2], 682
        %v1312 = vld [vmem:[%s1311] ss:$2 sm:$0xff]
        %s1313 = scalar_lea.vmem [#allocation2], 698
        %v1314 = vld [vmem:[%s1313] ss:$2 sm:$0xff]
        %s1315 = scalar_lea.vmem [#allocation2], 714
        %v1316 = vld [vmem:[%s1315] ss:$2 sm:$0xff]
        %s1317 = scalar_lea.vmem [#allocation2], 730
        %v1318 = vld [vmem:[%s1317] ss:$2 sm:$0xff]
        %s1319 = scalar_lea.vmem [#allocation2], 746
        %v1320 = vld [vmem:[%s1319] ss:$2 sm:$0xff]
        %s1321 = scalar_lea.vmem [#allocation2], 762
        %v1322 = vld [vmem:[%s1321] ss:$2 sm:$0xff]
        %s1323 = scalar_lea.vmem [#allocation2], 778
        %v1324 = vld [vmem:[%s1323] ss:$2 sm:$0xff]
        %s1325 = scalar_lea.vmem [#allocation2], 794
        %v1326 = vld [vmem:[%s1325] ss:$2 sm:$0xff]
        %s1327 = scalar_lea.vmem [#allocation2], 810
        %v1328 = vld [vmem:[%s1327] ss:$2 sm:$0xff]
        %s1329 = scalar_lea.vmem [#allocation2], 826
        %v1330 = vld [vmem:[%s1329] ss:$2 sm:$0xff]
        %s1331 = scalar_lea.vmem [#allocation2], 842
        %v1332 = vld [vmem:[%s1331] ss:$2 sm:$0xff]
        %s1333 = scalar_lea.vmem [#allocation2], 858
        %v1334 = vld [vmem:[%s1333] ss:$2 sm:$0xff]
        %s1335 = scalar_lea.vmem [#allocation2], 874
        %v1336 = vld [vmem:[%s1335] ss:$2 sm:$0xff]
        %s1337 = scalar_lea.vmem [#allocation2], 890
        %v1338 = vld [vmem:[%s1337] ss:$2 sm:$0xff]
        %s1339 = scalar_lea.vmem [#allocation2], 906
        %v1340 = vld [vmem:[%s1339] ss:$2 sm:$0xff]
        %s1341 = scalar_lea.vmem [#allocation2], 922
        %v1342 = vld [vmem:[%s1341] ss:$2 sm:$0xff]
        %s1343 = scalar_lea.vmem [#allocation2], 938
        %v1344 = vld [vmem:[%s1343] ss:$2 sm:$0xff]
        %s1345 = scalar_lea.vmem [#allocation2], 954
        %v1346 = vld [vmem:[%s1345] ss:$2 sm:$0xff]
        %s1347 = scalar_lea.vmem [#allocation2], 970
        %v1348 = vld [vmem:[%s1347] ss:$2 sm:$0xff]
        %s1349 = scalar_lea.vmem [#allocation2], 986
        %v1350 = vld [vmem:[%s1349] ss:$2 sm:$0xff]
        %s1351 = scalar_lea.vmem [#allocation2], 1002
        %v1352 = vld [vmem:[%s1351] ss:$2 sm:$0xff]
        %s1353 = scalar_lea.vmem [#allocation2], 1018
        %v1354 = vld [vmem:[%s1353] ss:$2 sm:$0xff]
        %v1355 = vpack.c.bf16 %v1230, %v1228
        %v1356 = vpack.c.bf16 %v1234, %v1232
        %v1357 = vpack.c.bf16 %v1238, %v1236
        %v1358 = vpack.c.bf16 %v1242, %v1240
        %v1359 = vpack.c.bf16 %v1246, %v1244
        %v1360 = vpack.c.bf16 %v1250, %v1248
        %v1361 = vpack.c.bf16 %v1254, %v1252
        %v1362 = vpack.c.bf16 %v1258, %v1256
        %v1363 = vpack.c.bf16 %v1262, %v1260
        %v1364 = vpack.c.bf16 %v1266, %v1264
        %v1365 = vpack.c.bf16 %v1270, %v1268
        %v1366 = vpack.c.bf16 %v1274, %v1272
        %v1367 = vpack.c.bf16 %v1278, %v1276
        %v1368 = vpack.c.bf16 %v1282, %v1280
        %v1369 = vpack.c.bf16 %v1286, %v1284
        %v1370 = vpack.c.bf16 %v1290, %v1288
        %v1371 = vpack.c.bf16 %v1294, %v1292
        %v1372 = vpack.c.bf16 %v1298, %v1296
        %v1373 = vpack.c.bf16 %v1302, %v1300
        %v1374 = vpack.c.bf16 %v1306, %v1304
        %v1375 = vpack.c.bf16 %v1310, %v1308
        %v1376 = vpack.c.bf16 %v1314, %v1312
        %v1377 = vpack.c.bf16 %v1318, %v1316
        %v1378 = vpack.c.bf16 %v1322, %v1320
        %v1379 = vpack.c.bf16 %v1326, %v1324
        %v1380 = vpack.c.bf16 %v1330, %v1328
        %v1381 = vpack.c.bf16 %v1334, %v1332
        %v1382 = vpack.c.bf16 %v1338, %v1336
        %v1383 = vpack.c.bf16 %v1342, %v1340
        %v1384 = vpack.c.bf16 %v1346, %v1344
        %v1385 = vpack.c.bf16 %v1350, %v1348
        %v1386 = vpack.c.bf16 %v1354, %v1352
        %v1387 = vld [vmem:[%s1] sm:$0xf]
        %v1388 = vld [vmem:[%s1 + $0x4] sm:$0xf]
        %v1389 = vld [vmem:[%s1 + $0x8] sm:$0xf]
        %v1390 = vld [vmem:[%s1 + $0xc] sm:$0xf]
        %v1391 = vld [vmem:[%s1 + $0x10] sm:$0xf]
        %v1392 = vld [vmem:[%s1 + $0x14] sm:$0xf]
        %v1393 = vld [vmem:[%s1 + $0x18] sm:$0xf]
        %v1394 = vld [vmem:[%s1 + $0x1c] sm:$0xf]
        %s1395 = scalar_lea.vmem %s1, 32
        %v1396 = vld [vmem:[%s1395] sm:$0xf]
        %v1397 = vld [vmem:[%s1395 + $0x4] sm:$0xf]
        %v1398 = vld [vmem:[%s1395 + $0x8] sm:$0xf]
        %v1399 = vld [vmem:[%s1395 + $0xc] sm:$0xf]
        %v1400 = vld [vmem:[%s1395 + $0x10] sm:$0xf]
        %v1401 = vld [vmem:[%s1395 + $0x14] sm:$0xf]
        %v1402 = vld [vmem:[%s1395 + $0x18] sm:$0xf]
        %v1403 = vld [vmem:[%s1395 + $0x1c] sm:$0xf]
        %s1404 = scalar_lea.vmem %s1, 64
        %v1405 = vld [vmem:[%s1404] sm:$0xf]
        %v1406 = vld [vmem:[%s1404 + $0x4] sm:$0xf]
        %v1407 = vld [vmem:[%s1404 + $0x8] sm:$0xf]
        %v1408 = vld [vmem:[%s1404 + $0xc] sm:$0xf]
        %v1409 = vld [vmem:[%s1404 + $0x10] sm:$0xf]
        %v1410 = vld [vmem:[%s1404 + $0x14] sm:$0xf]
        %v1411 = vld [vmem:[%s1404 + $0x18] sm:$0xf]
        %v1412 = vld [vmem:[%s1404 + $0x1c] sm:$0xf]
        %v1421 = vunpack.c.l.b16 %v1396
        %v1422 = vunpack.c.l.b16 %v1397
        %v1423 = vunpack.c.l.b16 %v1398
        %v1424 = vunpack.c.l.b16 %v1399
        %v1425 = vunpack.c.l.b16 %v1400
        %v1426 = vunpack.c.l.b16 %v1401
        %v1427 = vunpack.c.l.b16 %v1402
        %v1428 = vunpack.c.l.b16 %v1403
        %v1429 = vpack.c.b16 %v1422, %v1421
        %v1430 = vpack.c.b16 %v1424, %v1423
        %v1431 = vpack.c.b16 %v1426, %v1425
        %v1432 = vpack.c.b16 %v1428, %v1427
        %v1438 = vsel %vm358, %v1035, 0
        %v1441 = vsel %vm358, %v1036, 0
        %v1444 = vsel %vm358, %v1037, 0
        %v1447 = vsel %vm358, %v1038, 0
        %v1450 = vsel %vm358, %v1039, 0
        %v1453 = vsel %vm358, %v1040, 0
        %v1456 = vsel %vm358, %v1041, 0
        %v1459 = vsel %vm358, %v1042, 0
        %v1462 = vsel %vm358, %v1043, 0
        %v1465 = vsel %vm358, %v1044, 0
        %v1468 = vsel %vm358, %v1045, 0
        %v1471 = vsel %vm358, %v1046, 0
        %v1474 = vsel %vm358, %v1047, 0
        %v1477 = vsel %vm358, %v1048, 0
        %v1480 = vsel %vm358, %v1049, 0
        %v1483 = vsel %vm358, %v1050, 0
        %v1486 = vsel %vm358, %v1051, 0
        %v1489 = vsel %vm358, %v1052, 0
        %v1492 = vsel %vm358, %v1053, 0
        %v1495 = vsel %vm358, %v1054, 0
        %v1498 = vsel %vm358, %v1055, 0
        %v1501 = vsel %vm358, %v1056, 0
        %v1504 = vsel %vm358, %v1057, 0
        %v1507 = vsel %vm358, %v1058, 0
        %v1510 = vsel %vm358, %v1059, 0
        %v1513 = vsel %vm358, %v1060, 0
        %v1516 = vsel %vm358, %v1061, 0
        %v1519 = vsel %vm358, %v1062, 0
        %v1522 = vsel %vm358, %v1063, 0
        %v1525 = vsel %vm358, %v1064, 0
        %v1528 = vsel %vm358, %v1065, 0
        %v1531 = vsel %vm358, %v1066, 0
        %1533 = vmatprep.subr.bf16.mxu0 0
        %1534 = vmatpush1.bf16.msra.mxu0 %v1429
        %1535 = vmatprep.subr.bf16.mxu0 0
        %1536 = vmatpush1.bf16.msra.mxu0 %v1430
        %1537 = vmatprep.subr.bf16.mxu0 0
        %1538 = vmatpush1.bf16.msra.mxu0 %v1431
        %1539 = vmatprep.subr.bf16.mxu0 0
        %1540 = vmatpush1.bf16.msra.mxu0 %v1432
        %1541 = vmatprep.subr.bf16.mxu0 0
        %1542 = vmatpush1.bf16.msra.mxu0 0
        %1543 = vmatprep.subr.bf16.mxu0 0
        %1544 = vmatpush1.bf16.msra.mxu0 0
        %1545 = vmatprep.subr.bf16.mxu0 0
        %1546 = vmatpush1.bf16.msra.mxu0 0
        %1547 = vmatprep.subr.bf16.mxu0 0
        %1548 = vmatpush1.bf16.msra.mxu0 0
        %1549 = vmatprep.subr.bf16.mxu0 0
        %1550 = vmatpush1.bf16.msra.mxu0 0
        %1551 = vmatprep.subr.bf16.mxu0 0
        %1552 = vmatpush1.bf16.msra.mxu0 0
        %1553 = vmatprep.subr.bf16.mxu0 0
        %1554 = vmatpush1.bf16.msra.mxu0 0
        %1555 = vmatprep.subr.bf16.mxu0 0
        %1556 = vmatpush1.bf16.msra.mxu0 0
        %1557 = vmatprep.subr.bf16.mxu0 0
        %1558 = vmatpush1.bf16.msra.mxu0 0
        %1559 = vmatprep.subr.bf16.mxu0 0
        %1560 = vmatpush1.bf16.msra.mxu0 0
        %1561 = vmatprep.subr.bf16.mxu0 0
        %1562 = vmatpush1.bf16.msra.mxu0 0
        %1563 = vmatprep.subr.bf16.mxu0 0
        %1564 = vmatpush1.bf16.msra.mxu0 0
        %1565 = vmatprep.mubr.bf16.mxu0 0
        %1566 = vmatmul.mubr.bf16.gmra.mrb[0].mxu0 %v1438
        %v1567 = vpop.f32.mrb[0].mxu0
        %v1568 = vadd.f32 0.0, %v1567
        %v1569 = vpop.f32.mrb[0].mxu0
        %v1570 = vpop.f32.mrb[0].mxu0
        %v1571 = vadd.f32 0.0, %v1570
        %v1572 = vpop.f32.mrb[0].mxu0
        %1573 = vmatprep.mubr.bf16.mxu0 0
        %1574 = vmatmul.mubr.bf16.gmra.mrb[0].mxu0 %v1441
        %v1575 = vpop.f32.mrb[0].mxu0
        %v1576 = vadd.f32 0.0, %v1575
        %v1577 = vpop.f32.mrb[0].mxu0
        %v1578 = vpop.f32.mrb[0].mxu0
        %v1579 = vadd.f32 0.0, %v1578
        %v1580 = vpop.f32.mrb[0].mxu0
        %1581 = vmatprep.mubr.bf16.mxu0 0
        %1582 = vmatmul.mubr.bf16.gmra.mrb[0].mxu0 %v1444
        %v1583 = vpop.f32.mrb[0].mxu0
        %v1584 = vadd.f32 0.0, %v1583
        %v1585 = vpop.f32.mrb[0].mxu0
        %v1586 = vpop.f32.mrb[0].mxu0
        %v1587 = vadd.f32 0.0, %v1586
        %v1588 = vpop.f32.mrb[0].mxu0
        %1589 = vmatprep.mubr.bf16.mxu0 0
        %1590 = vmatmul.mubr.bf16.gmra.mrb[0].mxu0 %v1447
        %v1591 = vpop.f32.mrb[0].mxu0
        %v1592 = vadd.f32 0.0, %v1591
        %v1593 = vpop.f32.mrb[0].mxu0
        %v1594 = vpop.f32.mrb[0].mxu0
        %v1595 = vadd.f32 0.0, %v1594
        %v1596 = vpop.f32.mrb[0].mxu0
        %1597 = vmatprep.mubr.bf16.mxu0 0
        %1598 = vmatmul.mubr.bf16.gmra.mrb[0].mxu0 %v1450
        %v1599 = vpop.f32.mrb[0].mxu0
        %v1600 = vadd.f32 0.0, %v1599
        %v1601 = vpop.f32.mrb[0].mxu0
        %v1602 = vpop.f32.mrb[0].mxu0
        %v1603 = vadd.f32 0.0, %v1602
        %v1604 = vpop.f32.mrb[0].mxu0
        %1605 = vmatprep.mubr.bf16.mxu0 0
        %1606 = vmatmul.mubr.bf16.gmra.mrb[0].mxu0 %v1453
        %v1607 = vpop.f32.mrb[0].mxu0
        %v1608 = vadd.f32 0.0, %v1607
        %v1609 = vpop.f32.mrb[0].mxu0
        %v1610 = vpop.f32.mrb[0].mxu0
        %v1611 = vadd.f32 0.0, %v1610
        %v1612 = vpop.f32.mrb[0].mxu0
        %1613 = vmatprep.mubr.bf16.mxu0 0
        %1614 = vmatmul.mubr.bf16.gmra.mrb[0].mxu0 %v1456
        %v1615 = vpop.f32.mrb[0].mxu0
        %v1616 = vadd.f32 0.0, %v1615
        %v1617 = vpop.f32.mrb[0].mxu0
        %v1618 = vpop.f32.mrb[0].mxu0
        %v1619 = vadd.f32 0.0, %v1618
        %v1620 = vpop.f32.mrb[0].mxu0
        %1621 = vmatprep.mubr.bf16.mxu0 0
        %1622 = vmatmul.mubr.bf16.gmra.mrb[0].mxu0 %v1459
        %v1623 = vpop.f32.mrb[0].mxu0
        %v1624 = vadd.f32 0.0, %v1623
        %v1625 = vpop.f32.mrb[0].mxu0
        %v1626 = vpop.f32.mrb[0].mxu0
        %v1627 = vadd.f32 0.0, %v1626
        %v1628 = vpop.f32.mrb[0].mxu0
        %1629 = vmatprep.mubr.bf16.mxu0 0
        %1630 = vmatmul.mubr.bf16.gmra.mrb[0].mxu0 %v1462
        %v1631 = vpop.f32.mrb[0].mxu0
        %v1632 = vadd.f32 0.0, %v1631
        %v1633 = vpop.f32.mrb[0].mxu0
        %v1634 = vpop.f32.mrb[0].mxu0
        %v1635 = vadd.f32 0.0, %v1634
        %v1636 = vpop.f32.mrb[0].mxu0
        %1637 = vmatprep.mubr.bf16.mxu0 0
        %1638 = vmatmul.mubr.bf16.gmra.mrb[0].mxu0 %v1465
        %v1639 = vpop.f32.mrb[0].mxu0
        %v1640 = vadd.f32 0.0, %v1639
        %v1641 = vpop.f32.mrb[0].mxu0
        %v1642 = vpop.f32.mrb[0].mxu0
        %v1643 = vadd.f32 0.0, %v1642
        %v1644 = vpop.f32.mrb[0].mxu0
        %1645 = vmatprep.mubr.bf16.mxu0 0
        %1646 = vmatmul.mubr.bf16.gmra.mrb[0].mxu0 %v1468
        %v1647 = vpop.f32.mrb[0].mxu0
        %v1648 = vadd.f32 0.0, %v1647
        %v1649 = vpop.f32.mrb[0].mxu0
        %v1650 = vpop.f32.mrb[0].mxu0
        %v1651 = vadd.f32 0.0, %v1650
        %v1652 = vpop.f32.mrb[0].mxu0
        %1653 = vmatprep.mubr.bf16.mxu0 0
        %1654 = vmatmul.mubr.bf16.gmra.mrb[0].mxu0 %v1471
        %v1655 = vpop.f32.mrb[0].mxu0
        %v1656 = vadd.f32 0.0, %v1655
        %v1657 = vpop.f32.mrb[0].mxu0
        %v1658 = vpop.f32.mrb[0].mxu0
        %v1659 = vadd.f32 0.0, %v1658
        %v1660 = vpop.f32.mrb[0].mxu0
        %1661 = vmatprep.mubr.bf16.mxu0 0
        %1662 = vmatmul.mubr.bf16.gmra.mrb[0].mxu0 %v1474
        %v1663 = vpop.f32.mrb[0].mxu0
        %v1664 = vadd.f32 0.0, %v1663
        %v1665 = vpop.f32.mrb[0].mxu0
        %v1666 = vpop.f32.mrb[0].mxu0
        %v1667 = vadd.f32 0.0, %v1666
        %v1668 = vpop.f32.mrb[0].mxu0
        %1669 = vmatprep.mubr.bf16.mxu0 0
        %1670 = vmatmul.mubr.bf16.gmra.mrb[0].mxu0 %v1477
        %v1671 = vpop.f32.mrb[0].mxu0
        %v1672 = vadd.f32 0.0, %v1671
        %v1673 = vpop.f32.mrb[0].mxu0
        %v1674 = vpop.f32.mrb[0].mxu0
        %v1675 = vadd.f32 0.0, %v1674
        %v1676 = vpop.f32.mrb[0].mxu0
        %1677 = vmatprep.mubr.bf16.mxu0 0
        %1678 = vmatmul.mubr.bf16.gmra.mrb[0].mxu0 %v1480
        %v1679 = vpop.f32.mrb[0].mxu0
        %v1680 = vadd.f32 0.0, %v1679
        %v1681 = vpop.f32.mrb[0].mxu0
        %v1682 = vpop.f32.mrb[0].mxu0
        %v1683 = vadd.f32 0.0, %v1682
        %v1684 = vpop.f32.mrb[0].mxu0
        %1685 = vmatprep.mubr.bf16.mxu0 0
        %1686 = vmatmul.mubr.bf16.gmra.mrb[0].mxu0 %v1483
        %v1687 = vpop.f32.mrb[0].mxu0
        %v1688 = vadd.f32 0.0, %v1687
        %v1689 = vpop.f32.mrb[0].mxu0
        %v1690 = vpop.f32.mrb[0].mxu0
        %v1691 = vadd.f32 0.0, %v1690
        %v1692 = vpop.f32.mrb[0].mxu0
        %1693 = vmatprep.mubr.bf16.mxu0 0
        %1694 = vmatmul.mubr.bf16.gmra.mrb[0].mxu0 %v1486
        %v1695 = vpop.f32.mrb[0].mxu0
        %v1696 = vadd.f32 0.0, %v1695
        %v1697 = vpop.f32.mrb[0].mxu0
        %v1698 = vpop.f32.mrb[0].mxu0
        %v1699 = vadd.f32 0.0, %v1698
        %v1700 = vpop.f32.mrb[0].mxu0
        %1701 = vmatprep.mubr.bf16.mxu0 0
        %1702 = vmatmul.mubr.bf16.gmra.mrb[0].mxu0 %v1489
        %v1703 = vpop.f32.mrb[0].mxu0
        %v1704 = vadd.f32 0.0, %v1703
        %v1705 = vpop.f32.mrb[0].mxu0
        %v1706 = vpop.f32.mrb[0].mxu0
        %v1707 = vadd.f32 0.0, %v1706
        %v1708 = vpop.f32.mrb[0].mxu0
        %1709 = vmatprep.mubr.bf16.mxu0 0
        %1710 = vmatmul.mubr.bf16.gmra.mrb[0].mxu0 %v1492
        %v1711 = vpop.f32.mrb[0].mxu0
        %v1712 = vadd.f32 0.0, %v1711
        %v1713 = vpop.f32.mrb[0].mxu0
        %v1714 = vpop.f32.mrb[0].mxu0
        %v1715 = vadd.f32 0.0, %v1714
        %v1716 = vpop.f32.mrb[0].mxu0
        %1717 = vmatprep.mubr.bf16.mxu0 0
        %1718 = vmatmul.mubr.bf16.gmra.mrb[0].mxu0 %v1495
        %v1719 = vpop.f32.mrb[0].mxu0
        %v1720 = vadd.f32 0.0, %v1719
        %v1721 = vpop.f32.mrb[0].mxu0
        %v1722 = vpop.f32.mrb[0].mxu0
        %v1723 = vadd.f32 0.0, %v1722
        %v1724 = vpop.f32.mrb[0].mxu0
        %1725 = vmatprep.mubr.bf16.mxu0 0
        %1726 = vmatmul.mubr.bf16.gmra.mrb[0].mxu0 %v1498
        %v1727 = vpop.f32.mrb[0].mxu0
        %v1728 = vadd.f32 0.0, %v1727
        %v1729 = vpop.f32.mrb[0].mxu0
        %v1730 = vpop.f32.mrb[0].mxu0
        %v1731 = vadd.f32 0.0, %v1730
        %v1732 = vpop.f32.mrb[0].mxu0
        %1733 = vmatprep.mubr.bf16.mxu0 0
        %1734 = vmatmul.mubr.bf16.gmra.mrb[0].mxu0 %v1501
        %v1735 = vpop.f32.mrb[0].mxu0
        %v1736 = vadd.f32 0.0, %v1735
        %v1737 = vpop.f32.mrb[0].mxu0
        %v1738 = vpop.f32.mrb[0].mxu0
        %v1739 = vadd.f32 0.0, %v1738
        %v1740 = vpop.f32.mrb[0].mxu0
        %1741 = vmatprep.mubr.bf16.mxu0 0
        %1742 = vmatmul.mubr.bf16.gmra.mrb[0].mxu0 %v1504
        %v1743 = vpop.f32.mrb[0].mxu0
        %v1744 = vadd.f32 0.0, %v1743
        %v1745 = vpop.f32.mrb[0].mxu0
        %v1746 = vpop.f32.mrb[0].mxu0
        %v1747 = vadd.f32 0.0, %v1746
        %v1748 = vpop.f32.mrb[0].mxu0
        %1749 = vmatprep.mubr.bf16.mxu0 0
        %1750 = vmatmul.mubr.bf16.gmra.mrb[0].mxu0 %v1507
        %v1751 = vpop.f32.mrb[0].mxu0
        %v1752 = vadd.f32 0.0, %v1751
        %v1753 = vpop.f32.mrb[0].mxu0
        %v1754 = vpop.f32.mrb[0].mxu0
        %v1755 = vadd.f32 0.0, %v1754
        %v1756 = vpop.f32.mrb[0].mxu0
        %1757 = vmatprep.mubr.bf16.mxu0 0
        %1758 = vmatmul.mubr.bf16.gmra.mrb[0].mxu0 %v1510
        %v1759 = vpop.f32.mrb[0].mxu0
        %v1760 = vadd.f32 0.0, %v1759
        %v1761 = vpop.f32.mrb[0].mxu0
        %v1762 = vpop.f32.mrb[0].mxu0
        %v1763 = vadd.f32 0.0, %v1762
        %v1764 = vpop.f32.mrb[0].mxu0
        %1765 = vmatprep.mubr.bf16.mxu0 0
        %1766 = vmatmul.mubr.bf16.gmra.mrb[0].mxu0 %v1513
        %v1767 = vpop.f32.mrb[0].mxu0
        %v1768 = vadd.f32 0.0, %v1767
        %v1769 = vpop.f32.mrb[0].mxu0
        %v1770 = vpop.f32.mrb[0].mxu0
        %v1771 = vadd.f32 0.0, %v1770
        %v1772 = vpop.f32.mrb[0].mxu0
        %1773 = vmatprep.mubr.bf16.mxu0 0
        %1774 = vmatmul.mubr.bf16.gmra.mrb[0].mxu0 %v1516
        %v1775 = vpop.f32.mrb[0].mxu0
        %v1776 = vadd.f32 0.0, %v1775
        %v1777 = vpop.f32.mrb[0].mxu0
        %v1778 = vpop.f32.mrb[0].mxu0
        %v1779 = vadd.f32 0.0, %v1778
        %v1780 = vpop.f32.mrb[0].mxu0
        %1781 = vmatprep.mubr.bf16.mxu0 0
        %1782 = vmatmul.mubr.bf16.gmra.mrb[0].mxu0 %v1519
        %v1783 = vpop.f32.mrb[0].mxu0
        %v1784 = vadd.f32 0.0, %v1783
        %v1785 = vpop.f32.mrb[0].mxu0
        %v1786 = vpop.f32.mrb[0].mxu0
        %v1787 = vadd.f32 0.0, %v1786
        %v1788 = vpop.f32.mrb[0].mxu0
        %1789 = vmatprep.mubr.bf16.mxu0 0
        %1790 = vmatmul.mubr.bf16.gmra.mrb[0].mxu0 %v1522
        %v1791 = vpop.f32.mrb[0].mxu0
        %v1792 = vadd.f32 0.0, %v1791
        %v1793 = vpop.f32.mrb[0].mxu0
        %v1794 = vpop.f32.mrb[0].mxu0
        %v1795 = vadd.f32 0.0, %v1794
        %v1796 = vpop.f32.mrb[0].mxu0
        %1797 = vmatprep.mubr.bf16.mxu0 0
        %1798 = vmatmul.mubr.bf16.gmra.mrb[0].mxu0 %v1525
        %v1799 = vpop.f32.mrb[0].mxu0
        %v1800 = vadd.f32 0.0, %v1799
        %v1801 = vpop.f32.mrb[0].mxu0
        %v1802 = vpop.f32.mrb[0].mxu0
        %v1803 = vadd.f32 0.0, %v1802
        %v1804 = vpop.f32.mrb[0].mxu0
        %1805 = vmatprep.mubr.bf16.mxu0 0
        %1806 = vmatmul.mubr.bf16.gmra.mrb[0].mxu0 %v1528
        %v1807 = vpop.f32.mrb[0].mxu0
        %v1808 = vadd.f32 0.0, %v1807
        %v1809 = vpop.f32.mrb[0].mxu0
        %v1810 = vpop.f32.mrb[0].mxu0
        %v1811 = vadd.f32 0.0, %v1810
        %v1812 = vpop.f32.mrb[0].mxu0
        %1813 = vmatprep.mubr.bf16.mxu0 0
        %1814 = vmatmul.mubr.bf16.gmra.mrb[0].mxu0 %v1531
        %v1815 = vpop.f32.mrb[0].mxu0
        %v1816 = vadd.f32 0.0, %v1815
        %v1817 = vpop.f32.mrb[0].mxu0
        %v1818 = vpop.f32.mrb[0].mxu0
        %v1819 = vadd.f32 0.0, %v1818
        %v1820 = vpop.f32.mrb[0].mxu0
        %1821 = vdwg.mxu0
        %v1830 = vunpack.c.l.b16 %v1387
        %v1831 = vunpack.c.l.b16 %v1388
        %v1832 = vunpack.c.l.b16 %v1389
        %v1833 = vunpack.c.l.b16 %v1390
        %v1834 = vunpack.c.l.b16 %v1391
        %v1835 = vunpack.c.l.b16 %v1392
        %v1836 = vunpack.c.l.b16 %v1393
        %v1837 = vunpack.c.l.b16 %v1394
        %v1838 = vpack.c.b16 %v1831, %v1830
        %v1839 = vpack.c.b16 %v1833, %v1832
        %v1840 = vpack.c.b16 %v1835, %v1834
        %v1841 = vpack.c.b16 %v1837, %v1836
        %v1847 = vsel %vm358, %v875, 0
        %v1850 = vsel %vm358, %v876, 0
        %v1853 = vsel %vm358, %v877, 0
        %v1856 = vsel %vm358, %v878, 0
        %v1859 = vsel %vm358, %v879, 0
        %v1862 = vsel %vm358, %v880, 0
        %v1865 = vsel %vm358, %v881, 0
        %v1868 = vsel %vm358, %v882, 0
        %v1871 = vsel %vm358, %v883, 0
        %v1874 = vsel %vm358, %v884, 0
        %v1877 = vsel %vm358, %v885, 0
        %v1880 = vsel %vm358, %v886, 0
        %v1883 = vsel %vm358, %v887, 0
        %v1886 = vsel %vm358, %v888, 0
        %v1889 = vsel %vm358, %v889, 0
        %v1892 = vsel %vm358, %v890, 0
        %v1895 = vsel %vm358, %v891, 0
        %v1898 = vsel %vm358, %v892, 0
        %v1901 = vsel %vm358, %v893, 0
        %v1904 = vsel %vm358, %v894, 0
        %v1907 = vsel %vm358, %v895, 0
        %v1910 = vsel %vm358, %v896, 0
        %v1913 = vsel %vm358, %v897, 0
        %v1916 = vsel %vm358, %v898, 0
        %v1919 = vsel %vm358, %v899, 0
        %v1922 = vsel %vm358, %v900, 0
        %v1925 = vsel %vm358, %v901, 0
        %v1928 = vsel %vm358, %v902, 0
        %v1931 = vsel %vm358, %v903, 0
        %v1934 = vsel %vm358, %v904, 0
        %v1937 = vsel %vm358, %v905, 0
        %v1940 = vsel %vm358, %v906, 0
        %1942 = vmatprep.subr.bf16.mxu0 0
        %1943 = vmatpush1.bf16.msra.mxu0 %v1838
        %1944 = vmatprep.subr.bf16.mxu0 0
        %1945 = vmatpush1.bf16.msra.mxu0 %v1839
        %1946 = vmatprep.subr.bf16.mxu0 0
        %1947 = vmatpush1.bf16.msra.mxu0 %v1840
        %1948 = vmatprep.subr.bf16.mxu0 0
        %1949 = vmatpush1.bf16.msra.mxu0 %v1841
        %1950 = vmatprep.subr.bf16.mxu0 0
        %1951 = vmatpush1.bf16.msra.mxu0 0
        %1952 = vmatprep.subr.bf16.mxu0 0
        %1953 = vmatpush1.bf16.msra.mxu0 0
        %1954 = vmatprep.subr.bf16.mxu0 0
        %1955 = vmatpush1.bf16.msra.mxu0 0
        %1956 = vmatprep.subr.bf16.mxu0 0
        %1957 = vmatpush1.bf16.msra.mxu0 0
        %1958 = vmatprep.subr.bf16.mxu0 0
        %1959 = vmatpush1.bf16.msra.mxu0 0
        %1960 = vmatprep.subr.bf16.mxu0 0
        %1961 = vmatpush1.bf16.msra.mxu0 0
        %1962 = vmatprep.subr.bf16.mxu0 0
        %1963 = vmatpush1.bf16.msra.mxu0 0
        %1964 = vmatprep.subr.bf16.mxu0 0
        %1965 = vmatpush1.bf16.msra.mxu0 0
        %1966 = vmatprep.subr.bf16.mxu0 0
        %1967 = vmatpush1.bf16.msra.mxu0 0
        %1968 = vmatprep.subr.bf16.mxu0 0
        %1969 = vmatpush1.bf16.msra.mxu0 0
        %1970 = vmatprep.subr.bf16.mxu0 0
        %1971 = vmatpush1.bf16.msra.mxu0 0
        %1972 = vmatprep.subr.bf16.mxu0 0
        %1973 = vmatpush1.bf16.msra.mxu0 0
        %1974 = vmatprep.mubr.bf16.mxu0 0
        %1975 = vmatmul.mubr.bf16.gmra.mrb[0].mxu0 %v1847
        %v1976 = vpop.f32.mrb[0].mxu0
        %v1977 = vadd.f32 %v1568, %v1976
        %v1978 = vpop.f32.mrb[0].mxu0
        %v1979 = vpop.f32.mrb[0].mxu0
        %v1980 = vadd.f32 %v1571, %v1979
        %v1981 = vpop.f32.mrb[0].mxu0
        %1982 = vmatprep.mubr.bf16.mxu0 0
        %1983 = vmatmul.mubr.bf16.gmra.mrb[0].mxu0 %v1850
        %v1984 = vpop.f32.mrb[0].mxu0
        %v1985 = vadd.f32 %v1576, %v1984
        %v1986 = vpop.f32.mrb[0].mxu0
        %v1987 = vpop.f32.mrb[0].mxu0
        %v1988 = vadd.f32 %v1579, %v1987
        %v1989 = vpop.f32.mrb[0].mxu0
        %1990 = vmatprep.mubr.bf16.mxu0 0
        %1991 = vmatmul.mubr.bf16.gmra.mrb[0].mxu0 %v1853
        %v1992 = vpop.f32.mrb[0].mxu0
        %v1993 = vadd.f32 %v1584, %v1992
        %v1994 = vpop.f32.mrb[0].mxu0
        %v1995 = vpop.f32.mrb[0].mxu0
        %v1996 = vadd.f32 %v1587, %v1995
        %v1997 = vpop.f32.mrb[0].mxu0
        %1998 = vmatprep.mubr.bf16.mxu0 0
        %1999 = vmatmul.mubr.bf16.gmra.mrb[0].mxu0 %v1856
        %v2000 = vpop.f32.mrb[0].mxu0
        %v2001 = vadd.f32 %v1592, %v2000
        %v2002 = vpop.f32.mrb[0].mxu0
        %v2003 = vpop.f32.mrb[0].mxu0
        %v2004 = vadd.f32 %v1595, %v2003
        %v2005 = vpop.f32.mrb[0].mxu0
        %2006 = vmatprep.mubr.bf16.mxu0 0
        %2007 = vmatmul.mubr.bf16.gmra.mrb[0].mxu0 %v1859
        %v2008 = vpop.f32.mrb[0].mxu0
        %v2009 = vadd.f32 %v1600, %v2008
        %v2010 = vpop.f32.mrb[0].mxu0
        %v2011 = vpop.f32.mrb[0].mxu0
        %v2012 = vadd.f32 %v1603, %v2011
        %v2013 = vpop.f32.mrb[0].mxu0
        %2014 = vmatprep.mubr.bf16.mxu0 0
        %2015 = vmatmul.mubr.bf16.gmra.mrb[0].mxu0 %v1862
        %v2016 = vpop.f32.mrb[0].mxu0
        %v2017 = vadd.f32 %v1608, %v2016
        %v2018 = vpop.f32.mrb[0].mxu0
        %v2019 = vpop.f32.mrb[0].mxu0
        %v2020 = vadd.f32 %v1611, %v2019
        %v2021 = vpop.f32.mrb[0].mxu0
        %2022 = vmatprep.mubr.bf16.mxu0 0
        %2023 = vmatmul.mubr.bf16.gmra.mrb[0].mxu0 %v1865
        %v2024 = vpop.f32.mrb[0].mxu0
        %v2025 = vadd.f32 %v1616, %v2024
        %v2026 = vpop.f32.mrb[0].mxu0
        %v2027 = vpop.f32.mrb[0].mxu0
        %v2028 = vadd.f32 %v1619, %v2027
        %v2029 = vpop.f32.mrb[0].mxu0
        %2030 = vmatprep.mubr.bf16.mxu0 0
        %2031 = vmatmul.mubr.bf16.gmra.mrb[0].mxu0 %v1868
        %v2032 = vpop.f32.mrb[0].mxu0
        %v2033 = vadd.f32 %v1624, %v2032
        %v2034 = vpop.f32.mrb[0].mxu0
        %v2035 = vpop.f32.mrb[0].mxu0
        %v2036 = vadd.f32 %v1627, %v2035
        %v2037 = vpop.f32.mrb[0].mxu0
        %2038 = vmatprep.mubr.bf16.mxu0 0
        %2039 = vmatmul.mubr.bf16.gmra.mrb[0].mxu0 %v1871
        %v2040 = vpop.f32.mrb[0].mxu0
        %v2041 = vadd.f32 %v1632, %v2040
        %v2042 = vpop.f32.mrb[0].mxu0
        %v2043 = vpop.f32.mrb[0].mxu0
        %v2044 = vadd.f32 %v1635, %v2043
        %v2045 = vpop.f32.mrb[0].mxu0
        %2046 = vmatprep.mubr.bf16.mxu0 0
        %2047 = vmatmul.mubr.bf16.gmra.mrb[0].mxu0 %v1874
        %v2048 = vpop.f32.mrb[0].mxu0
        %v2049 = vadd.f32 %v1640, %v2048
        %v2050 = vpop.f32.mrb[0].mxu0
        %v2051 = vpop.f32.mrb[0].mxu0
        %v2052 = vadd.f32 %v1643, %v2051
        %v2053 = vpop.f32.mrb[0].mxu0
        %2054 = vmatprep.mubr.bf16.mxu0 0
        %2055 = vmatmul.mubr.bf16.gmra.mrb[0].mxu0 %v1877
        %v2056 = vpop.f32.mrb[0].mxu0
        %v2057 = vadd.f32 %v1648, %v2056
        %v2058 = vpop.f32.mrb[0].mxu0
        %v2059 = vpop.f32.mrb[0].mxu0
        %v2060 = vadd.f32 %v1651, %v2059
        %v2061 = vpop.f32.mrb[0].mxu0
        %2062 = vmatprep.mubr.bf16.mxu0 0
        %2063 = vmatmul.mubr.bf16.gmra.mrb[0].mxu0 %v1880
        %v2064 = vpop.f32.mrb[0].mxu0
        %v2065 = vadd.f32 %v1656, %v2064
        %v2066 = vpop.f32.mrb[0].mxu0
        %v2067 = vpop.f32.mrb[0].mxu0
        %v2068 = vadd.f32 %v1659, %v2067
        %v2069 = vpop.f32.mrb[0].mxu0
        %2070 = vmatprep.mubr.bf16.mxu0 0
        %2071 = vmatmul.mubr.bf16.gmra.mrb[0].mxu0 %v1883
        %v2072 = vpop.f32.mrb[0].mxu0
        %v2073 = vadd.f32 %v1664, %v2072
        %v2074 = vpop.f32.mrb[0].mxu0
        %v2075 = vpop.f32.mrb[0].mxu0
        %v2076 = vadd.f32 %v1667, %v2075
        %v2077 = vpop.f32.mrb[0].mxu0
        %2078 = vmatprep.mubr.bf16.mxu0 0
        %2079 = vmatmul.mubr.bf16.gmra.mrb[0].mxu0 %v1886
        %v2080 = vpop.f32.mrb[0].mxu0
        %v2081 = vadd.f32 %v1672, %v2080
        %v2082 = vpop.f32.mrb[0].mxu0
        %v2083 = vpop.f32.mrb[0].mxu0
        %v2084 = vadd.f32 %v1675, %v2083
        %v2085 = vpop.f32.mrb[0].mxu0
        %2086 = vmatprep.mubr.bf16.mxu0 0
        %2087 = vmatmul.mubr.bf16.gmra.mrb[0].mxu0 %v1889
        %v2088 = vpop.f32.mrb[0].mxu0
        %v2089 = vadd.f32 %v1680, %v2088
        %v2090 = vpop.f32.mrb[0].mxu0
        %v2091 = vpop.f32.mrb[0].mxu0
        %v2092 = vadd.f32 %v1683, %v2091
        %v2093 = vpop.f32.mrb[0].mxu0
        %2094 = vmatprep.mubr.bf16.mxu0 0
        %2095 = vmatmul.mubr.bf16.gmra.mrb[0].mxu0 %v1892
        %v2096 = vpop.f32.mrb[0].mxu0
        %v2097 = vadd.f32 %v1688, %v2096
        %v2098 = vpop.f32.mrb[0].mxu0
        %v2099 = vpop.f32.mrb[0].mxu0
        %v2100 = vadd.f32 %v1691, %v2099
        %v2101 = vpop.f32.mrb[0].mxu0
        %2102 = vmatprep.mubr.bf16.mxu0 0
        %2103 = vmatmul.mubr.bf16.gmra.mrb[0].mxu0 %v1895
        %v2104 = vpop.f32.mrb[0].mxu0
        %v2105 = vadd.f32 %v1696, %v2104
        %v2106 = vpop.f32.mrb[0].mxu0
        %v2107 = vpop.f32.mrb[0].mxu0
        %v2108 = vadd.f32 %v1699, %v2107
        %v2109 = vpop.f32.mrb[0].mxu0
        %2110 = vmatprep.mubr.bf16.mxu0 0
        %2111 = vmatmul.mubr.bf16.gmra.mrb[0].mxu0 %v1898
        %v2112 = vpop.f32.mrb[0].mxu0
        %v2113 = vadd.f32 %v1704, %v2112
        %v2114 = vpop.f32.mrb[0].mxu0
        %v2115 = vpop.f32.mrb[0].mxu0
        %v2116 = vadd.f32 %v1707, %v2115
        %v2117 = vpop.f32.mrb[0].mxu0
        %2118 = vmatprep.mubr.bf16.mxu0 0
        %2119 = vmatmul.mubr.bf16.gmra.mrb[0].mxu0 %v1901
        %v2120 = vpop.f32.mrb[0].mxu0
        %v2121 = vadd.f32 %v1712, %v2120
        %v2122 = vpop.f32.mrb[0].mxu0
        %v2123 = vpop.f32.mrb[0].mxu0
        %v2124 = vadd.f32 %v1715, %v2123
        %v2125 = vpop.f32.mrb[0].mxu0
        %2126 = vmatprep.mubr.bf16.mxu0 0
        %2127 = vmatmul.mubr.bf16.gmra.mrb[0].mxu0 %v1904
        %v2128 = vpop.f32.mrb[0].mxu0
        %v2129 = vadd.f32 %v1720, %v2128
        %v2130 = vpop.f32.mrb[0].mxu0
        %v2131 = vpop.f32.mrb[0].mxu0
        %v2132 = vadd.f32 %v1723, %v2131
        %v2133 = vpop.f32.mrb[0].mxu0
        %2134 = vmatprep.mubr.bf16.mxu0 0
        %2135 = vmatmul.mubr.bf16.gmra.mrb[0].mxu0 %v1907
        %v2136 = vpop.f32.mrb[0].mxu0
        %v2137 = vadd.f32 %v1728, %v2136
        %v2138 = vpop.f32.mrb[0].mxu0
        %v2139 = vpop.f32.mrb[0].mxu0
        %v2140 = vadd.f32 %v1731, %v2139
        %v2141 = vpop.f32.mrb[0].mxu0
        %2142 = vmatprep.mubr.bf16.mxu0 0
        %2143 = vmatmul.mubr.bf16.gmra.mrb[0].mxu0 %v1910
        %v2144 = vpop.f32.mrb[0].mxu0
        %v2145 = vadd.f32 %v1736, %v2144
        %v2146 = vpop.f32.mrb[0].mxu0
        %v2147 = vpop.f32.mrb[0].mxu0
        %v2148 = vadd.f32 %v1739, %v2147
        %v2149 = vpop.f32.mrb[0].mxu0
        %2150 = vmatprep.mubr.bf16.mxu0 0
        %2151 = vmatmul.mubr.bf16.gmra.mrb[0].mxu0 %v1913
        %v2152 = vpop.f32.mrb[0].mxu0
        %v2153 = vadd.f32 %v1744, %v2152
        %v2154 = vpop.f32.mrb[0].mxu0
        %v2155 = vpop.f32.mrb[0].mxu0
        %v2156 = vadd.f32 %v1747, %v2155
        %v2157 = vpop.f32.mrb[0].mxu0
        %2158 = vmatprep.mubr.bf16.mxu0 0
        %2159 = vmatmul.mubr.bf16.gmra.mrb[0].mxu0 %v1916
        %v2160 = vpop.f32.mrb[0].mxu0
        %v2161 = vadd.f32 %v1752, %v2160
        %v2162 = vpop.f32.mrb[0].mxu0
        %v2163 = vpop.f32.mrb[0].mxu0
        %v2164 = vadd.f32 %v1755, %v2163
        %v2165 = vpop.f32.mrb[0].mxu0
        %2166 = vmatprep.mubr.bf16.mxu0 0
        %2167 = vmatmul.mubr.bf16.gmra.mrb[0].mxu0 %v1919
        %v2168 = vpop.f32.mrb[0].mxu0
        %v2169 = vadd.f32 %v1760, %v2168
        %v2170 = vpop.f32.mrb[0].mxu0
        %v2171 = vpop.f32.mrb[0].mxu0
        %v2172 = vadd.f32 %v1763, %v2171
        %v2173 = vpop.f32.mrb[0].mxu0
        %2174 = vmatprep.mubr.bf16.mxu0 0
        %2175 = vmatmul.mubr.bf16.gmra.mrb[0].mxu0 %v1922
        %v2176 = vpop.f32.mrb[0].mxu0
        %v2177 = vadd.f32 %v1768, %v2176
        %v2178 = vpop.f32.mrb[0].mxu0
        %v2179 = vpop.f32.mrb[0].mxu0
        %v2180 = vadd.f32 %v1771, %v2179
        %v2181 = vpop.f32.mrb[0].mxu0
        %2182 = vmatprep.mubr.bf16.mxu0 0
        %2183 = vmatmul.mubr.bf16.gmra.mrb[0].mxu0 %v1925
        %v2184 = vpop.f32.mrb[0].mxu0
        %v2185 = vadd.f32 %v1776, %v2184
        %v2186 = vpop.f32.mrb[0].mxu0
        %v2187 = vpop.f32.mrb[0].mxu0
        %v2188 = vadd.f32 %v1779, %v2187
        %v2189 = vpop.f32.mrb[0].mxu0
        %2190 = vmatprep.mubr.bf16.mxu0 0
        %2191 = vmatmul.mubr.bf16.gmra.mrb[0].mxu0 %v1928
        %v2192 = vpop.f32.mrb[0].mxu0
        %v2193 = vadd.f32 %v1784, %v2192
        %v2194 = vpop.f32.mrb[0].mxu0
        %v2195 = vpop.f32.mrb[0].mxu0
        %v2196 = vadd.f32 %v1787, %v2195
        %v2197 = vpop.f32.mrb[0].mxu0
        %2198 = vmatprep.mubr.bf16.mxu0 0
        %2199 = vmatmul.mubr.bf16.gmra.mrb[0].mxu0 %v1931
        %v2200 = vpop.f32.mrb[0].mxu0
        %v2201 = vadd.f32 %v1792, %v2200
        %v2202 = vpop.f32.mrb[0].mxu0
        %v2203 = vpop.f32.mrb[0].mxu0
        %v2204 = vadd.f32 %v1795, %v2203
        %v2205 = vpop.f32.mrb[0].mxu0
        %2206 = vmatprep.mubr.bf16.mxu0 0
        %2207 = vmatmul.mubr.bf16.gmra.mrb[0].mxu0 %v1934
        %v2208 = vpop.f32.mrb[0].mxu0
        %v2209 = vadd.f32 %v1800, %v2208
        %v2210 = vpop.f32.mrb[0].mxu0
        %v2211 = vpop.f32.mrb[0].mxu0
        %v2212 = vadd.f32 %v1803, %v2211
        %v2213 = vpop.f32.mrb[0].mxu0
        %2214 = vmatprep.mubr.bf16.mxu0 0
        %2215 = vmatmul.mubr.bf16.gmra.mrb[0].mxu0 %v1937
        %v2216 = vpop.f32.mrb[0].mxu0
        %v2217 = vadd.f32 %v1808, %v2216
        %v2218 = vpop.f32.mrb[0].mxu0
        %v2219 = vpop.f32.mrb[0].mxu0
        %v2220 = vadd.f32 %v1811, %v2219
        %v2221 = vpop.f32.mrb[0].mxu0
        %2222 = vmatprep.mubr.bf16.mxu0 0
        %2223 = vmatmul.mubr.bf16.gmra.mrb[0].mxu0 %v1940
        %v2224 = vpop.f32.mrb[0].mxu0
        %v2225 = vadd.f32 %v1816, %v2224
        %v2226 = vpop.f32.mrb[0].mxu0
        %v2227 = vpop.f32.mrb[0].mxu0
        %v2228 = vadd.f32 %v1819, %v2227
        %v2229 = vpop.f32.mrb[0].mxu0
        %2230 = vdwg.mxu0
        %v2239 = vunpack.c.l.b16 %v1405
        %v2240 = vunpack.c.l.b16 %v1406
        %v2241 = vunpack.c.l.b16 %v1407
        %v2242 = vunpack.c.l.b16 %v1408
        %v2243 = vunpack.c.l.b16 %v1409
        %v2244 = vunpack.c.l.b16 %v1410
        %v2245 = vunpack.c.l.b16 %v1411
        %v2246 = vunpack.c.l.b16 %v1412
        %v2247 = vpack.c.b16 %v2240, %v2239
        %v2248 = vpack.c.b16 %v2242, %v2241
        %v2249 = vpack.c.b16 %v2244, %v2243
        %v2250 = vpack.c.b16 %v2246, %v2245
        %v2256 = vsel %vm358, %v1195, 0
        %v2259 = vsel %vm358, %v1196, 0
        %v2262 = vsel %vm358, %v1197, 0
        %v2265 = vsel %vm358, %v1198, 0
        %v2268 = vsel %vm358, %v1199, 0
        %v2271 = vsel %vm358, %v1200, 0
        %v2274 = vsel %vm358, %v1201, 0
        %v2277 = vsel %vm358, %v1202, 0
        %v2280 = vsel %vm358, %v1203, 0
        %v2283 = vsel %vm358, %v1204, 0
        %v2286 = vsel %vm358, %v1205, 0
        %v2289 = vsel %vm358, %v1206, 0
        %v2292 = vsel %vm358, %v1207, 0
        %v2295 = vsel %vm358, %v1208, 0
        %v2298 = vsel %vm358, %v1209, 0
        %v2301 = vsel %vm358, %v1210, 0
        %v2304 = vsel %vm358, %v1211, 0
        %v2307 = vsel %vm358, %v1212, 0
        %v2310 = vsel %vm358, %v1213, 0
        %v2313 = vsel %vm358, %v1214, 0
        %v2316 = vsel %vm358, %v1215, 0
        %v2319 = vsel %vm358, %v1216, 0
        %v2322 = vsel %vm358, %v1217, 0
        %v2325 = vsel %vm358, %v1218, 0
        %v2328 = vsel %vm358, %v1219, 0
        %v2331 = vsel %vm358, %v1220, 0
        %v2334 = vsel %vm358, %v1221, 0
        %v2337 = vsel %vm358, %v1222, 0
        %v2340 = vsel %vm358, %v1223, 0
        %v2343 = vsel %vm358, %v1224, 0
        %v2346 = vsel %vm358, %v1225, 0
        %v2349 = vsel %vm358, %v1226, 0
        %2351 = vmatprep.subr.bf16.mxu0 0
        %2352 = vmatpush1.bf16.msra.mxu0 %v2247
        %2353 = vmatprep.subr.bf16.mxu0 0
        %2354 = vmatpush1.bf16.msra.mxu0 %v2248
        %2355 = vmatprep.subr.bf16.mxu0 0
        %2356 = vmatpush1.bf16.msra.mxu0 %v2249
        %2357 = vmatprep.subr.bf16.mxu0 0
        %2358 = vmatpush1.bf16.msra.mxu0 %v2250
        %2359 = vmatprep.subr.bf16.mxu0 0
        %2360 = vmatpush1.bf16.msra.mxu0 0
        %2361 = vmatprep.subr.bf16.mxu0 0
        %2362 = vmatpush1.bf16.msra.mxu0 0
        %2363 = vmatprep.subr.bf16.mxu0 0
        %2364 = vmatpush1.bf16.msra.mxu0 0
        %2365 = vmatprep.subr.bf16.mxu0 0
        %2366 = vmatpush1.bf16.msra.mxu0 0
        %2367 = vmatprep.subr.bf16.mxu0 0
        %2368 = vmatpush1.bf16.msra.mxu0 0
        %2369 = vmatprep.subr.bf16.mxu0 0
        %2370 = vmatpush1.bf16.msra.mxu0 0
        %2371 = vmatprep.subr.bf16.mxu0 0
        %2372 = vmatpush1.bf16.msra.mxu0 0
        %2373 = vmatprep.subr.bf16.mxu0 0
        %2374 = vmatpush1.bf16.msra.mxu0 0
        %2375 = vmatprep.subr.bf16.mxu0 0
        %2376 = vmatpush1.bf16.msra.mxu0 0
        %2377 = vmatprep.subr.bf16.mxu0 0
        %2378 = vmatpush1.bf16.msra.mxu0 0
        %2379 = vmatprep.subr.bf16.mxu0 0
        %2380 = vmatpush1.bf16.msra.mxu0 0
        %2381 = vmatprep.subr.bf16.mxu0 0
        %2382 = vmatpush1.bf16.msra.mxu0 0
        %2383 = vmatprep.mubr.bf16.mxu0 0
        %2384 = vmatmul.mubr.bf16.gmra.mrb[0].mxu0 %v2256
        %v2385 = vpop.f32.mrb[0].mxu0
        %v2386 = vadd.f32 0.0, %v2385
        %v2387 = vpop.f32.mrb[0].mxu0
        %v2388 = vpop.f32.mrb[0].mxu0
        %v2389 = vadd.f32 0.0, %v2388
        %v2390 = vpop.f32.mrb[0].mxu0
        %2391 = vmatprep.mubr.bf16.mxu0 0
        %2392 = vmatmul.mubr.bf16.gmra.mrb[0].mxu0 %v2259
        %v2393 = vpop.f32.mrb[0].mxu0
        %v2394 = vadd.f32 0.0, %v2393
        %v2395 = vpop.f32.mrb[0].mxu0
        %v2396 = vpop.f32.mrb[0].mxu0
        %v2397 = vadd.f32 0.0, %v2396
        %v2398 = vpop.f32.mrb[0].mxu0
        %2399 = vmatprep.mubr.bf16.mxu0 0
        %2400 = vmatmul.mubr.bf16.gmra.mrb[0].mxu0 %v2262
        %v2401 = vpop.f32.mrb[0].mxu0
        %v2402 = vadd.f32 0.0, %v2401
        %v2403 = vpop.f32.mrb[0].mxu0
        %v2404 = vpop.f32.mrb[0].mxu0
        %v2405 = vadd.f32 0.0, %v2404
        %v2406 = vpop.f32.mrb[0].mxu0
        %2407 = vmatprep.mubr.bf16.mxu0 0
        %2408 = vmatmul.mubr.bf16.gmra.mrb[0].mxu0 %v2265
        %v2409 = vpop.f32.mrb[0].mxu0
        %v2410 = vadd.f32 0.0, %v2409
        %v2411 = vpop.f32.mrb[0].mxu0
        %v2412 = vpop.f32.mrb[0].mxu0
        %v2413 = vadd.f32 0.0, %v2412
        %v2414 = vpop.f32.mrb[0].mxu0
        %2415 = vmatprep.mubr.bf16.mxu0 0
        %2416 = vmatmul.mubr.bf16.gmra.mrb[0].mxu0 %v2268
        %v2417 = vpop.f32.mrb[0].mxu0
        %v2418 = vadd.f32 0.0, %v2417
        %v2419 = vpop.f32.mrb[0].mxu0
        %v2420 = vpop.f32.mrb[0].mxu0
        %v2421 = vadd.f32 0.0, %v2420
        %v2422 = vpop.f32.mrb[0].mxu0
        %2423 = vmatprep.mubr.bf16.mxu0 0
        %2424 = vmatmul.mubr.bf16.gmra.mrb[0].mxu0 %v2271
        %v2425 = vpop.f32.mrb[0].mxu0
        %v2426 = vadd.f32 0.0, %v2425
        %v2427 = vpop.f32.mrb[0].mxu0
        %v2428 = vpop.f32.mrb[0].mxu0
        %v2429 = vadd.f32 0.0, %v2428
        %v2430 = vpop.f32.mrb[0].mxu0
        %2431 = vmatprep.mubr.bf16.mxu0 0
        %2432 = vmatmul.mubr.bf16.gmra.mrb[0].mxu0 %v2274
        %v2433 = vpop.f32.mrb[0].mxu0
        %v2434 = vadd.f32 0.0, %v2433
        %v2435 = vpop.f32.mrb[0].mxu0
        %v2436 = vpop.f32.mrb[0].mxu0
        %v2437 = vadd.f32 0.0, %v2436
        %v2438 = vpop.f32.mrb[0].mxu0
        %2439 = vmatprep.mubr.bf16.mxu0 0
        %2440 = vmatmul.mubr.bf16.gmra.mrb[0].mxu0 %v2277
        %v2441 = vpop.f32.mrb[0].mxu0
        %v2442 = vadd.f32 0.0, %v2441
        %v2443 = vpop.f32.mrb[0].mxu0
        %v2444 = vpop.f32.mrb[0].mxu0
        %v2445 = vadd.f32 0.0, %v2444
        %v2446 = vpop.f32.mrb[0].mxu0
        %2447 = vmatprep.mubr.bf16.mxu0 0
        %2448 = vmatmul.mubr.bf16.gmra.mrb[0].mxu0 %v2280
        %v2449 = vpop.f32.mrb[0].mxu0
        %v2450 = vadd.f32 0.0, %v2449
        %v2451 = vpop.f32.mrb[0].mxu0
        %v2452 = vpop.f32.mrb[0].mxu0
        %v2453 = vadd.f32 0.0, %v2452
        %v2454 = vpop.f32.mrb[0].mxu0
        %2455 = vmatprep.mubr.bf16.mxu0 0
        %2456 = vmatmul.mubr.bf16.gmra.mrb[0].mxu0 %v2283
        %v2457 = vpop.f32.mrb[0].mxu0
        %v2458 = vadd.f32 0.0, %v2457
        %v2459 = vpop.f32.mrb[0].mxu0
        %v2460 = vpop.f32.mrb[0].mxu0
        %v2461 = vadd.f32 0.0, %v2460
        %v2462 = vpop.f32.mrb[0].mxu0
        %2463 = vmatprep.mubr.bf16.mxu0 0
        %2464 = vmatmul.mubr.bf16.gmra.mrb[0].mxu0 %v2286
        %v2465 = vpop.f32.mrb[0].mxu0
        %v2466 = vadd.f32 0.0, %v2465
        %v2467 = vpop.f32.mrb[0].mxu0
        %v2468 = vpop.f32.mrb[0].mxu0
        %v2469 = vadd.f32 0.0, %v2468
        %v2470 = vpop.f32.mrb[0].mxu0
        %2471 = vmatprep.mubr.bf16.mxu0 0
        %2472 = vmatmul.mubr.bf16.gmra.mrb[0].mxu0 %v2289
        %v2473 = vpop.f32.mrb[0].mxu0
        %v2474 = vadd.f32 0.0, %v2473
        %v2475 = vpop.f32.mrb[0].mxu0
        %v2476 = vpop.f32.mrb[0].mxu0
        %v2477 = vadd.f32 0.0, %v2476
        %v2478 = vpop.f32.mrb[0].mxu0
        %2479 = vmatprep.mubr.bf16.mxu0 0
        %2480 = vmatmul.mubr.bf16.gmra.mrb[0].mxu0 %v2292
        %v2481 = vpop.f32.mrb[0].mxu0
        %v2482 = vadd.f32 0.0, %v2481
        %v2483 = vpop.f32.mrb[0].mxu0
        %v2484 = vpop.f32.mrb[0].mxu0
        %v2485 = vadd.f32 0.0, %v2484
        %v2486 = vpop.f32.mrb[0].mxu0
        %2487 = vmatprep.mubr.bf16.mxu0 0
        %2488 = vmatmul.mubr.bf16.gmra.mrb[0].mxu0 %v2295
        %v2489 = vpop.f32.mrb[0].mxu0
        %v2490 = vadd.f32 0.0, %v2489
        %v2491 = vpop.f32.mrb[0].mxu0
        %v2492 = vpop.f32.mrb[0].mxu0
        %v2493 = vadd.f32 0.0, %v2492
        %v2494 = vpop.f32.mrb[0].mxu0
        %2495 = vmatprep.mubr.bf16.mxu0 0
        %2496 = vmatmul.mubr.bf16.gmra.mrb[0].mxu0 %v2298
        %v2497 = vpop.f32.mrb[0].mxu0
        %v2498 = vadd.f32 0.0, %v2497
        %v2499 = vpop.f32.mrb[0].mxu0
        %v2500 = vpop.f32.mrb[0].mxu0
        %v2501 = vadd.f32 0.0, %v2500
        %v2502 = vpop.f32.mrb[0].mxu0
        %2503 = vmatprep.mubr.bf16.mxu0 0
        %2504 = vmatmul.mubr.bf16.gmra.mrb[0].mxu0 %v2301
        %v2505 = vpop.f32.mrb[0].mxu0
        %v2506 = vadd.f32 0.0, %v2505
        %v2507 = vpop.f32.mrb[0].mxu0
        %v2508 = vpop.f32.mrb[0].mxu0
        %v2509 = vadd.f32 0.0, %v2508
        %v2510 = vpop.f32.mrb[0].mxu0
        %2511 = vmatprep.mubr.bf16.mxu0 0
        %2512 = vmatmul.mubr.bf16.gmra.mrb[0].mxu0 %v2304
        %v2513 = vpop.f32.mrb[0].mxu0
        %v2514 = vadd.f32 0.0, %v2513
        %v2515 = vpop.f32.mrb[0].mxu0
        %v2516 = vpop.f32.mrb[0].mxu0
        %v2517 = vadd.f32 0.0, %v2516
        %v2518 = vpop.f32.mrb[0].mxu0
        %2519 = vmatprep.mubr.bf16.mxu0 0
        %2520 = vmatmul.mubr.bf16.gmra.mrb[0].mxu0 %v2307
        %v2521 = vpop.f32.mrb[0].mxu0
        %v2522 = vadd.f32 0.0, %v2521
        %v2523 = vpop.f32.mrb[0].mxu0
        %v2524 = vpop.f32.mrb[0].mxu0
        %v2525 = vadd.f32 0.0, %v2524
        %v2526 = vpop.f32.mrb[0].mxu0
        %2527 = vmatprep.mubr.bf16.mxu0 0
        %2528 = vmatmul.mubr.bf16.gmra.mrb[0].mxu0 %v2310
        %v2529 = vpop.f32.mrb[0].mxu0
        %v2530 = vadd.f32 0.0, %v2529
        %v2531 = vpop.f32.mrb[0].mxu0
        %v2532 = vpop.f32.mrb[0].mxu0
        %v2533 = vadd.f32 0.0, %v2532
        %v2534 = vpop.f32.mrb[0].mxu0
        %2535 = vmatprep.mubr.bf16.mxu0 0
        %2536 = vmatmul.mubr.bf16.gmra.mrb[0].mxu0 %v2313
        %v2537 = vpop.f32.mrb[0].mxu0
        %v2538 = vadd.f32 0.0, %v2537
        %v2539 = vpop.f32.mrb[0].mxu0
        %v2540 = vpop.f32.mrb[0].mxu0
        %v2541 = vadd.f32 0.0, %v2540
        %v2542 = vpop.f32.mrb[0].mxu0
        %2543 = vmatprep.mubr.bf16.mxu0 0
        %2544 = vmatmul.mubr.bf16.gmra.mrb[0].mxu0 %v2316
        %v2545 = vpop.f32.mrb[0].mxu0
        %v2546 = vadd.f32 0.0, %v2545
        %v2547 = vpop.f32.mrb[0].mxu0
        %v2548 = vpop.f32.mrb[0].mxu0
        %v2549 = vadd.f32 0.0, %v2548
        %v2550 = vpop.f32.mrb[0].mxu0
        %2551 = vmatprep.mubr.bf16.mxu0 0
        %2552 = vmatmul.mubr.bf16.gmra.mrb[0].mxu0 %v2319
        %v2553 = vpop.f32.mrb[0].mxu0
        %v2554 = vadd.f32 0.0, %v2553
        %v2555 = vpop.f32.mrb[0].mxu0
        %v2556 = vpop.f32.mrb[0].mxu0
        %v2557 = vadd.f32 0.0, %v2556
        %v2558 = vpop.f32.mrb[0].mxu0
        %2559 = vmatprep.mubr.bf16.mxu0 0
        %2560 = vmatmul.mubr.bf16.gmra.mrb[0].mxu0 %v2322
        %v2561 = vpop.f32.mrb[0].mxu0
        %v2562 = vadd.f32 0.0, %v2561
        %v2563 = vpop.f32.mrb[0].mxu0
        %v2564 = vpop.f32.mrb[0].mxu0
        %v2565 = vadd.f32 0.0, %v2564
        %v2566 = vpop.f32.mrb[0].mxu0
        %2567 = vmatprep.mubr.bf16.mxu0 0
        %2568 = vmatmul.mubr.bf16.gmra.mrb[0].mxu0 %v2325
        %v2569 = vpop.f32.mrb[0].mxu0
        %v2570 = vadd.f32 0.0, %v2569
        %v2571 = vpop.f32.mrb[0].mxu0
        %v2572 = vpop.f32.mrb[0].mxu0
        %v2573 = vadd.f32 0.0, %v2572
        %v2574 = vpop.f32.mrb[0].mxu0
        %2575 = vmatprep.mubr.bf16.mxu0 0
        %2576 = vmatmul.mubr.bf16.gmra.mrb[0].mxu0 %v2328
        %v2577 = vpop.f32.mrb[0].mxu0
        %v2578 = vadd.f32 0.0, %v2577
        %v2579 = vpop.f32.mrb[0].mxu0
        %v2580 = vpop.f32.mrb[0].mxu0
        %v2581 = vadd.f32 0.0, %v2580
        %v2582 = vpop.f32.mrb[0].mxu0
        %2583 = vmatprep.mubr.bf16.mxu0 0
        %2584 = vmatmul.mubr.bf16.gmra.mrb[0].mxu0 %v2331
        %v2585 = vpop.f32.mrb[0].mxu0
        %v2586 = vadd.f32 0.0, %v2585
        %v2587 = vpop.f32.mrb[0].mxu0
        %v2588 = vpop.f32.mrb[0].mxu0
        %v2589 = vadd.f32 0.0, %v2588
        %v2590 = vpop.f32.mrb[0].mxu0
        %2591 = vmatprep.mubr.bf16.mxu0 0
        %2592 = vmatmul.mubr.bf16.gmra.mrb[0].mxu0 %v2334
        %v2593 = vpop.f32.mrb[0].mxu0
        %v2594 = vadd.f32 0.0, %v2593
        %v2595 = vpop.f32.mrb[0].mxu0
        %v2596 = vpop.f32.mrb[0].mxu0
        %v2597 = vadd.f32 0.0, %v2596
        %v2598 = vpop.f32.mrb[0].mxu0
        %2599 = vmatprep.mubr.bf16.mxu0 0
        %2600 = vmatmul.mubr.bf16.gmra.mrb[0].mxu0 %v2337
        %v2601 = vpop.f32.mrb[0].mxu0
        %v2602 = vadd.f32 0.0, %v2601
        %v2603 = vpop.f32.mrb[0].mxu0
        %v2604 = vpop.f32.mrb[0].mxu0
        %v2605 = vadd.f32 0.0, %v2604
        %v2606 = vpop.f32.mrb[0].mxu0
        %2607 = vmatprep.mubr.bf16.mxu0 0
        %2608 = vmatmul.mubr.bf16.gmra.mrb[0].mxu0 %v2340
        %v2609 = vpop.f32.mrb[0].mxu0
        %v2610 = vadd.f32 0.0, %v2609
        %v2611 = vpop.f32.mrb[0].mxu0
        %v2612 = vpop.f32.mrb[0].mxu0
        %v2613 = vadd.f32 0.0, %v2612
        %v2614 = vpop.f32.mrb[0].mxu0
        %2615 = vmatprep.mubr.bf16.mxu0 0
        %2616 = vmatmul.mubr.bf16.gmra.mrb[0].mxu0 %v2343
        %v2617 = vpop.f32.mrb[0].mxu0
        %v2618 = vadd.f32 0.0, %v2617
        %v2619 = vpop.f32.mrb[0].mxu0
        %v2620 = vpop.f32.mrb[0].mxu0
        %v2621 = vadd.f32 0.0, %v2620
        %v2622 = vpop.f32.mrb[0].mxu0
        %2623 = vmatprep.mubr.bf16.mxu0 0
        %2624 = vmatmul.mubr.bf16.gmra.mrb[0].mxu0 %v2346
        %v2625 = vpop.f32.mrb[0].mxu0
        %v2626 = vadd.f32 0.0, %v2625
        %v2627 = vpop.f32.mrb[0].mxu0
        %v2628 = vpop.f32.mrb[0].mxu0
        %v2629 = vadd.f32 0.0, %v2628
        %v2630 = vpop.f32.mrb[0].mxu0
        %2631 = vmatprep.mubr.bf16.mxu0 0
        %2632 = vmatmul.mubr.bf16.gmra.mrb[0].mxu0 %v2349
        %v2633 = vpop.f32.mrb[0].mxu0
        %v2634 = vadd.f32 0.0, %v2633
        %v2635 = vpop.f32.mrb[0].mxu0
        %v2636 = vpop.f32.mrb[0].mxu0
        %v2637 = vadd.f32 0.0, %v2636
        %v2638 = vpop.f32.mrb[0].mxu0
        %2639 = vdwg.mxu0
        %v2640 = vadd.f32 %v1977, %v2386
        %v2641 = vadd.f32 %v1980, %v2389
        %v2642 = vadd.f32 %v1985, %v2394
        %v2643 = vadd.f32 %v1988, %v2397
        %v2644 = vadd.f32 %v1993, %v2402
        %v2645 = vadd.f32 %v1996, %v2405
        %v2646 = vadd.f32 %v2001, %v2410
        %v2647 = vadd.f32 %v2004, %v2413
        %v2648 = vadd.f32 %v2009, %v2418
        %v2649 = vadd.f32 %v2012, %v2421
        %v2650 = vadd.f32 %v2017, %v2426
        %v2651 = vadd.f32 %v2020, %v2429
        %v2652 = vadd.f32 %v2025, %v2434
        %v2653 = vadd.f32 %v2028, %v2437
        %v2654 = vadd.f32 %v2033, %v2442
        %v2655 = vadd.f32 %v2036, %v2445
        %v2656 = vadd.f32 %v2041, %v2450
        %v2657 = vadd.f32 %v2044, %v2453
        %v2658 = vadd.f32 %v2049, %v2458
        %v2659 = vadd.f32 %v2052, %v2461
        %v2660 = vadd.f32 %v2057, %v2466
        %v2661 = vadd.f32 %v2060, %v2469
        %v2662 = vadd.f32 %v2065, %v2474
        %v2663 = vadd.f32 %v2068, %v2477
        %v2664 = vadd.f32 %v2073, %v2482
        %v2665 = vadd.f32 %v2076, %v2485
        %v2666 = vadd.f32 %v2081, %v2490
        %v2667 = vadd.f32 %v2084, %v2493
        %v2668 = vadd.f32 %v2089, %v2498
        %v2669 = vadd.f32 %v2092, %v2501
        %v2670 = vadd.f32 %v2097, %v2506
        %v2671 = vadd.f32 %v2100, %v2509
        %v2672 = vadd.f32 %v2105, %v2514
        %v2673 = vadd.f32 %v2108, %v2517
        %v2674 = vadd.f32 %v2113, %v2522
        %v2675 = vadd.f32 %v2116, %v2525
        %v2676 = vadd.f32 %v2121, %v2530
        %v2677 = vadd.f32 %v2124, %v2533
        %v2678 = vadd.f32 %v2129, %v2538
        %v2679 = vadd.f32 %v2132, %v2541
        %v2680 = vadd.f32 %v2137, %v2546
        %v2681 = vadd.f32 %v2140, %v2549
        %v2682 = vadd.f32 %v2145, %v2554
        %v2683 = vadd.f32 %v2148, %v2557
        %v2684 = vadd.f32 %v2153, %v2562
        %v2685 = vadd.f32 %v2156, %v2565
        %v2686 = vadd.f32 %v2161, %v2570
        %v2687 = vadd.f32 %v2164, %v2573
        %v2688 = vadd.f32 %v2169, %v2578
        %v2689 = vadd.f32 %v2172, %v2581
        %v2690 = vadd.f32 %v2177, %v2586
        %v2691 = vadd.f32 %v2180, %v2589
        %v2692 = vadd.f32 %v2185, %v2594
        %v2693 = vadd.f32 %v2188, %v2597
        %v2694 = vadd.f32 %v2193, %v2602
        %v2695 = vadd.f32 %v2196, %v2605
        %v2696 = vadd.f32 %v2201, %v2610
        %v2697 = vadd.f32 %v2204, %v2613
        %v2698 = vadd.f32 %v2209, %v2618
        %v2699 = vadd.f32 %v2212, %v2621
        %v2700 = vadd.f32 %v2217, %v2626
        %v2701 = vadd.f32 %v2220, %v2629
        %v2702 = vadd.f32 %v2225, %v2634
        %v2703 = vadd.f32 %v2228, %v2637
        %2704 = vmatprep.subr.bf16.mxu0 0
        %2705 = vmatpush1.bf16.msra.mxu0 %v1429
        %2706 = vmatprep.subr.bf16.mxu0 0
        %2707 = vmatpush1.bf16.msra.mxu0 %v1430
        %2708 = vmatprep.subr.bf16.mxu0 0
        %2709 = vmatpush1.bf16.msra.mxu0 %v1431
        %2710 = vmatprep.subr.bf16.mxu0 0
        %2711 = vmatpush1.bf16.msra.mxu0 %v1432
        %2712 = vmatprep.subr.bf16.mxu0 0
        %2713 = vmatpush1.bf16.msra.mxu0 0
        %2714 = vmatprep.subr.bf16.mxu0 0
        %2715 = vmatpush1.bf16.msra.mxu0 0
        %2716 = vmatprep.subr.bf16.mxu0 0
        %2717 = vmatpush1.bf16.msra.mxu0 0
        %2718 = vmatprep.subr.bf16.mxu0 0
        %2719 = vmatpush1.bf16.msra.mxu0 0
        %2720 = vmatprep.subr.bf16.mxu0 0
        %2721 = vmatpush1.bf16.msra.mxu0 0
        %2722 = vmatprep.subr.bf16.mxu0 0
        %2723 = vmatpush1.bf16.msra.mxu0 0
        %2724 = vmatprep.subr.bf16.mxu0 0
        %2725 = vmatpush1.bf16.msra.mxu0 0
        %2726 = vmatprep.subr.bf16.mxu0 0
        %2727 = vmatpush1.bf16.msra.mxu0 0
        %2728 = vmatprep.subr.bf16.mxu0 0
        %2729 = vmatpush1.bf16.msra.mxu0 0
        %2730 = vmatprep.subr.bf16.mxu0 0
        %2731 = vmatpush1.bf16.msra.mxu0 0
        %2732 = vmatprep.subr.bf16.mxu0 0
        %2733 = vmatpush1.bf16.msra.mxu0 0
        %2734 = vmatprep.subr.bf16.mxu0 0
        %2735 = vmatpush1.bf16.msra.mxu0 0
        %2736 = vmatprep.mubr.bf16.mxu0 0
        %2737 = vmatmul.mubr.bf16.gmra.mrb[0].mxu0 %v2256
        %v2738 = vpop.f32.mrb[0].mxu0
        %v2739 = vadd.f32 0.0, %v2738
        %v2740 = vpop.f32.mrb[0].mxu0
        %v2741 = vpop.f32.mrb[0].mxu0
        %v2742 = vadd.f32 0.0, %v2741
        %v2743 = vpop.f32.mrb[0].mxu0
        %2744 = vmatprep.mubr.bf16.mxu0 0
        %2745 = vmatmul.mubr.bf16.gmra.mrb[0].mxu0 %v2259
        %v2746 = vpop.f32.mrb[0].mxu0
        %v2747 = vadd.f32 0.0, %v2746
        %v2748 = vpop.f32.mrb[0].mxu0
        %v2749 = vpop.f32.mrb[0].mxu0
        %v2750 = vadd.f32 0.0, %v2749
        %v2751 = vpop.f32.mrb[0].mxu0
        %2752 = vmatprep.mubr.bf16.mxu0 0
        %2753 = vmatmul.mubr.bf16.gmra.mrb[0].mxu0 %v2262
        %v2754 = vpop.f32.mrb[0].mxu0
        %v2755 = vadd.f32 0.0, %v2754
        %v2756 = vpop.f32.mrb[0].mxu0
        %v2757 = vpop.f32.mrb[0].mxu0
        %v2758 = vadd.f32 0.0, %v2757
        %v2759 = vpop.f32.mrb[0].mxu0
        %2760 = vmatprep.mubr.bf16.mxu0 0
        %2761 = vmatmul.mubr.bf16.gmra.mrb[0].mxu0 %v2265
        %v2762 = vpop.f32.mrb[0].mxu0
        %v2763 = vadd.f32 0.0, %v2762
        %v2764 = vpop.f32.mrb[0].mxu0
        %v2765 = vpop.f32.mrb[0].mxu0
        %v2766 = vadd.f32 0.0, %v2765
        %v2767 = vpop.f32.mrb[0].mxu0
        %2768 = vmatprep.mubr.bf16.mxu0 0
        %2769 = vmatmul.mubr.bf16.gmra.mrb[0].mxu0 %v2268
        %v2770 = vpop.f32.mrb[0].mxu0
        %v2771 = vadd.f32 0.0, %v2770
        %v2772 = vpop.f32.mrb[0].mxu0
        %v2773 = vpop.f32.mrb[0].mxu0
        %v2774 = vadd.f32 0.0, %v2773
        %v2775 = vpop.f32.mrb[0].mxu0
        %2776 = vmatprep.mubr.bf16.mxu0 0
        %2777 = vmatmul.mubr.bf16.gmra.mrb[0].mxu0 %v2271
        %v2778 = vpop.f32.mrb[0].mxu0
        %v2779 = vadd.f32 0.0, %v2778
        %v2780 = vpop.f32.mrb[0].mxu0
        %v2781 = vpop.f32.mrb[0].mxu0
        %v2782 = vadd.f32 0.0, %v2781
        %v2783 = vpop.f32.mrb[0].mxu0
        %2784 = vmatprep.mubr.bf16.mxu0 0
        %2785 = vmatmul.mubr.bf16.gmra.mrb[0].mxu0 %v2274
        %v2786 = vpop.f32.mrb[0].mxu0
        %v2787 = vadd.f32 0.0, %v2786
        %v2788 = vpop.f32.mrb[0].mxu0
        %v2789 = vpop.f32.mrb[0].mxu0
        %v2790 = vadd.f32 0.0, %v2789
        %v2791 = vpop.f32.mrb[0].mxu0
        %2792 = vmatprep.mubr.bf16.mxu0 0
        %2793 = vmatmul.mubr.bf16.gmra.mrb[0].mxu0 %v2277
        %v2794 = vpop.f32.mrb[0].mxu0
        %v2795 = vadd.f32 0.0, %v2794
        %v2796 = vpop.f32.mrb[0].mxu0
        %v2797 = vpop.f32.mrb[0].mxu0
        %v2798 = vadd.f32 0.0, %v2797
        %v2799 = vpop.f32.mrb[0].mxu0
        %2800 = vmatprep.mubr.bf16.mxu0 0
        %2801 = vmatmul.mubr.bf16.gmra.mrb[0].mxu0 %v2280
        %v2802 = vpop.f32.mrb[0].mxu0
        %v2803 = vadd.f32 0.0, %v2802
        %v2804 = vpop.f32.mrb[0].mxu0
        %v2805 = vpop.f32.mrb[0].mxu0
        %v2806 = vadd.f32 0.0, %v2805
        %v2807 = vpop.f32.mrb[0].mxu0
        %2808 = vmatprep.mubr.bf16.mxu0 0
        %2809 = vmatmul.mubr.bf16.gmra.mrb[0].mxu0 %v2283
        %v2810 = vpop.f32.mrb[0].mxu0
        %v2811 = vadd.f32 0.0, %v2810
        %v2812 = vpop.f32.mrb[0].mxu0
        %v2813 = vpop.f32.mrb[0].mxu0
        %v2814 = vadd.f32 0.0, %v2813
        %v2815 = vpop.f32.mrb[0].mxu0
        %2816 = vmatprep.mubr.bf16.mxu0 0
        %2817 = vmatmul.mubr.bf16.gmra.mrb[0].mxu0 %v2286
        %v2818 = vpop.f32.mrb[0].mxu0
        %v2819 = vadd.f32 0.0, %v2818
        %v2820 = vpop.f32.mrb[0].mxu0
        %v2821 = vpop.f32.mrb[0].mxu0
        %v2822 = vadd.f32 0.0, %v2821
        %v2823 = vpop.f32.mrb[0].mxu0
        %2824 = vmatprep.mubr.bf16.mxu0 0
        %2825 = vmatmul.mubr.bf16.gmra.mrb[0].mxu0 %v2289
        %v2826 = vpop.f32.mrb[0].mxu0
        %v2827 = vadd.f32 0.0, %v2826
        %v2828 = vpop.f32.mrb[0].mxu0
        %v2829 = vpop.f32.mrb[0].mxu0
        %v2830 = vadd.f32 0.0, %v2829
        %v2831 = vpop.f32.mrb[0].mxu0
        %2832 = vmatprep.mubr.bf16.mxu0 0
        %2833 = vmatmul.mubr.bf16.gmra.mrb[0].mxu0 %v2292
        %v2834 = vpop.f32.mrb[0].mxu0
        %v2835 = vadd.f32 0.0, %v2834
        %v2836 = vpop.f32.mrb[0].mxu0
        %v2837 = vpop.f32.mrb[0].mxu0
        %v2838 = vadd.f32 0.0, %v2837
        %v2839 = vpop.f32.mrb[0].mxu0
        %2840 = vmatprep.mubr.bf16.mxu0 0
        %2841 = vmatmul.mubr.bf16.gmra.mrb[0].mxu0 %v2295
        %v2842 = vpop.f32.mrb[0].mxu0
        %v2843 = vadd.f32 0.0, %v2842
        %v2844 = vpop.f32.mrb[0].mxu0
        %v2845 = vpop.f32.mrb[0].mxu0
        %v2846 = vadd.f32 0.0, %v2845
        %v2847 = vpop.f32.mrb[0].mxu0
        %2848 = vmatprep.mubr.bf16.mxu0 0
        %2849 = vmatmul.mubr.bf16.gmra.mrb[0].mxu0 %v2298
        %v2850 = vpop.f32.mrb[0].mxu0
        %v2851 = vadd.f32 0.0, %v2850
        %v2852 = vpop.f32.mrb[0].mxu0
        %v2853 = vpop.f32.mrb[0].mxu0
        %v2854 = vadd.f32 0.0, %v2853
        %v2855 = vpop.f32.mrb[0].mxu0
        %2856 = vmatprep.mubr.bf16.mxu0 0
        %2857 = vmatmul.mubr.bf16.gmra.mrb[0].mxu0 %v2301
        %v2858 = vpop.f32.mrb[0].mxu0
        %v2859 = vadd.f32 0.0, %v2858
        %v2860 = vpop.f32.mrb[0].mxu0
        %v2861 = vpop.f32.mrb[0].mxu0
        %v2862 = vadd.f32 0.0, %v2861
        %v2863 = vpop.f32.mrb[0].mxu0
        %2864 = vmatprep.mubr.bf16.mxu0 0
        %2865 = vmatmul.mubr.bf16.gmra.mrb[0].mxu0 %v2304
        %v2866 = vpop.f32.mrb[0].mxu0
        %v2867 = vadd.f32 0.0, %v2866
        %v2868 = vpop.f32.mrb[0].mxu0
        %v2869 = vpop.f32.mrb[0].mxu0
        %v2870 = vadd.f32 0.0, %v2869
        %v2871 = vpop.f32.mrb[0].mxu0
        %2872 = vmatprep.mubr.bf16.mxu0 0
        %2873 = vmatmul.mubr.bf16.gmra.mrb[0].mxu0 %v2307
        %v2874 = vpop.f32.mrb[0].mxu0
        %v2875 = vadd.f32 0.0, %v2874
        %v2876 = vpop.f32.mrb[0].mxu0
        %v2877 = vpop.f32.mrb[0].mxu0
        %v2878 = vadd.f32 0.0, %v2877
        %v2879 = vpop.f32.mrb[0].mxu0
        %2880 = vmatprep.mubr.bf16.mxu0 0
        %2881 = vmatmul.mubr.bf16.gmra.mrb[0].mxu0 %v2310
        %v2882 = vpop.f32.mrb[0].mxu0
        %v2883 = vadd.f32 0.0, %v2882
        %v2884 = vpop.f32.mrb[0].mxu0
        %v2885 = vpop.f32.mrb[0].mxu0
        %v2886 = vadd.f32 0.0, %v2885
        %v2887 = vpop.f32.mrb[0].mxu0
        %2888 = vmatprep.mubr.bf16.mxu0 0
        %2889 = vmatmul.mubr.bf16.gmra.mrb[0].mxu0 %v2313
        %v2890 = vpop.f32.mrb[0].mxu0
        %v2891 = vadd.f32 0.0, %v2890
        %v2892 = vpop.f32.mrb[0].mxu0
        %v2893 = vpop.f32.mrb[0].mxu0
        %v2894 = vadd.f32 0.0, %v2893
        %v2895 = vpop.f32.mrb[0].mxu0
        %2896 = vmatprep.mubr.bf16.mxu0 0
        %2897 = vmatmul.mubr.bf16.gmra.mrb[0].mxu0 %v2316
        %v2898 = vpop.f32.mrb[0].mxu0
        %v2899 = vadd.f32 0.0, %v2898
        %v2900 = vpop.f32.mrb[0].mxu0
        %v2901 = vpop.f32.mrb[0].mxu0
        %v2902 = vadd.f32 0.0, %v2901
        %v2903 = vpop.f32.mrb[0].mxu0
        %2904 = vmatprep.mubr.bf16.mxu0 0
        %2905 = vmatmul.mubr.bf16.gmra.mrb[0].mxu0 %v2319
        %v2906 = vpop.f32.mrb[0].mxu0
        %v2907 = vadd.f32 0.0, %v2906
        %v2908 = vpop.f32.mrb[0].mxu0
        %v2909 = vpop.f32.mrb[0].mxu0
        %v2910 = vadd.f32 0.0, %v2909
        %v2911 = vpop.f32.mrb[0].mxu0
        %2912 = vmatprep.mubr.bf16.mxu0 0
        %2913 = vmatmul.mubr.bf16.gmra.mrb[0].mxu0 %v2322
        %v2914 = vpop.f32.mrb[0].mxu0
        %v2915 = vadd.f32 0.0, %v2914
        %v2916 = vpop.f32.mrb[0].mxu0
        %v2917 = vpop.f32.mrb[0].mxu0
        %v2918 = vadd.f32 0.0, %v2917
        %v2919 = vpop.f32.mrb[0].mxu0
        %2920 = vmatprep.mubr.bf16.mxu0 0
        %2921 = vmatmul.mubr.bf16.gmra.mrb[0].mxu0 %v2325
        %v2922 = vpop.f32.mrb[0].mxu0
        %v2923 = vadd.f32 0.0, %v2922
        %v2924 = vpop.f32.mrb[0].mxu0
        %v2925 = vpop.f32.mrb[0].mxu0
        %v2926 = vadd.f32 0.0, %v2925
        %v2927 = vpop.f32.mrb[0].mxu0
        %2928 = vmatprep.mubr.bf16.mxu0 0
        %2929 = vmatmul.mubr.bf16.gmra.mrb[0].mxu0 %v2328
        %v2930 = vpop.f32.mrb[0].mxu0
        %v2931 = vadd.f32 0.0, %v2930
        %v2932 = vpop.f32.mrb[0].mxu0
        %v2933 = vpop.f32.mrb[0].mxu0
        %v2934 = vadd.f32 0.0, %v2933
        %v2935 = vpop.f32.mrb[0].mxu0
        %2936 = vmatprep.mubr.bf16.mxu0 0
        %2937 = vmatmul.mubr.bf16.gmra.mrb[0].mxu0 %v2331
        %v2938 = vpop.f32.mrb[0].mxu0
        %v2939 = vadd.f32 0.0, %v2938
        %v2940 = vpop.f32.mrb[0].mxu0
        %v2941 = vpop.f32.mrb[0].mxu0
        %v2942 = vadd.f32 0.0, %v2941
        %v2943 = vpop.f32.mrb[0].mxu0
        %2944 = vmatprep.mubr.bf16.mxu0 0
        %2945 = vmatmul.mubr.bf16.gmra.mrb[0].mxu0 %v2334
        %v2946 = vpop.f32.mrb[0].mxu0
        %v2947 = vadd.f32 0.0, %v2946
        %v2948 = vpop.f32.mrb[0].mxu0
        %v2949 = vpop.f32.mrb[0].mxu0
        %v2950 = vadd.f32 0.0, %v2949
        %v2951 = vpop.f32.mrb[0].mxu0
        %2952 = vmatprep.mubr.bf16.mxu0 0
        %2953 = vmatmul.mubr.bf16.gmra.mrb[0].mxu0 %v2337
        %v2954 = vpop.f32.mrb[0].mxu0
        %v2955 = vadd.f32 0.0, %v2954
        %v2956 = vpop.f32.mrb[0].mxu0
        %v2957 = vpop.f32.mrb[0].mxu0
        %v2958 = vadd.f32 0.0, %v2957
        %v2959 = vpop.f32.mrb[0].mxu0
        %2960 = vmatprep.mubr.bf16.mxu0 0
        %2961 = vmatmul.mubr.bf16.gmra.mrb[0].mxu0 %v2340
        %v2962 = vpop.f32.mrb[0].mxu0
        %v2963 = vadd.f32 0.0, %v2962
        %v2964 = vpop.f32.mrb[0].mxu0
        %v2965 = vpop.f32.mrb[0].mxu0
        %v2966 = vadd.f32 0.0, %v2965
        %v2967 = vpop.f32.mrb[0].mxu0
        %2968 = vmatprep.mubr.bf16.mxu0 0
        %2969 = vmatmul.mubr.bf16.gmra.mrb[0].mxu0 %v2343
        %v2970 = vpop.f32.mrb[0].mxu0
        %v2971 = vadd.f32 0.0, %v2970
        %v2972 = vpop.f32.mrb[0].mxu0
        %v2973 = vpop.f32.mrb[0].mxu0
        %v2974 = vadd.f32 0.0, %v2973
        %v2975 = vpop.f32.mrb[0].mxu0
        %2976 = vmatprep.mubr.bf16.mxu0 0
        %2977 = vmatmul.mubr.bf16.gmra.mrb[0].mxu0 %v2346
        %v2978 = vpop.f32.mrb[0].mxu0
        %v2979 = vadd.f32 0.0, %v2978
        %v2980 = vpop.f32.mrb[0].mxu0
        %v2981 = vpop.f32.mrb[0].mxu0
        %v2982 = vadd.f32 0.0, %v2981
        %v2983 = vpop.f32.mrb[0].mxu0
        %2984 = vmatprep.mubr.bf16.mxu0 0
        %2985 = vmatmul.mubr.bf16.gmra.mrb[0].mxu0 %v2349
        %v2986 = vpop.f32.mrb[0].mxu0
        %v2987 = vadd.f32 0.0, %v2986
        %v2988 = vpop.f32.mrb[0].mxu0
        %v2989 = vpop.f32.mrb[0].mxu0
        %v2990 = vadd.f32 0.0, %v2989
        %v2991 = vpop.f32.mrb[0].mxu0
        %2992 = vdwg.mxu0
        %2993 = vmatprep.subr.bf16.mxu0 0
        %2994 = vmatpush1.bf16.msra.mxu0 %v1838
        %2995 = vmatprep.subr.bf16.mxu0 0
        %2996 = vmatpush1.bf16.msra.mxu0 %v1839
        %2997 = vmatprep.subr.bf16.mxu0 0
        %2998 = vmatpush1.bf16.msra.mxu0 %v1840
        %2999 = vmatprep.subr.bf16.mxu0 0
        %3000 = vmatpush1.bf16.msra.mxu0 %v1841
        %3001 = vmatprep.subr.bf16.mxu0 0
        %3002 = vmatpush1.bf16.msra.mxu0 0
        %3003 = vmatprep.subr.bf16.mxu0 0
        %3004 = vmatpush1.bf16.msra.mxu0 0
        %3005 = vmatprep.subr.bf16.mxu0 0
        %3006 = vmatpush1.bf16.msra.mxu0 0
        %3007 = vmatprep.subr.bf16.mxu0 0
        %3008 = vmatpush1.bf16.msra.mxu0 0
        %3009 = vmatprep.subr.bf16.mxu0 0
        %3010 = vmatpush1.bf16.msra.mxu0 0
        %3011 = vmatprep.subr.bf16.mxu0 0
        %3012 = vmatpush1.bf16.msra.mxu0 0
        %3013 = vmatprep.subr.bf16.mxu0 0
        %3014 = vmatpush1.bf16.msra.mxu0 0
        %3015 = vmatprep.subr.bf16.mxu0 0
        %3016 = vmatpush1.bf16.msra.mxu0 0
        %3017 = vmatprep.subr.bf16.mxu0 0
        %3018 = vmatpush1.bf16.msra.mxu0 0
        %3019 = vmatprep.subr.bf16.mxu0 0
        %3020 = vmatpush1.bf16.msra.mxu0 0
        %3021 = vmatprep.subr.bf16.mxu0 0
        %3022 = vmatpush1.bf16.msra.mxu0 0
        %3023 = vmatprep.subr.bf16.mxu0 0
        %3024 = vmatpush1.bf16.msra.mxu0 0
        %3025 = vmatprep.mubr.bf16.mxu0 0
        %3026 = vmatmul.mubr.bf16.gmra.mrb[0].mxu0 %v1438
        %v3027 = vpop.f32.mrb[0].mxu0
        %v3028 = vadd.f32 %v2739, %v3027
        %v3029 = vpop.f32.mrb[0].mxu0
        %v3030 = vpop.f32.mrb[0].mxu0
        %v3031 = vadd.f32 %v2742, %v3030
        %v3032 = vpop.f32.mrb[0].mxu0
        %3033 = vmatprep.mubr.bf16.mxu0 0
        %3034 = vmatmul.mubr.bf16.gmra.mrb[0].mxu0 %v1441
        %v3035 = vpop.f32.mrb[0].mxu0
        %v3036 = vadd.f32 %v2747, %v3035
        %v3037 = vpop.f32.mrb[0].mxu0
        %v3038 = vpop.f32.mrb[0].mxu0
        %v3039 = vadd.f32 %v2750, %v3038
        %v3040 = vpop.f32.mrb[0].mxu0
        %3041 = vmatprep.mubr.bf16.mxu0 0
        %3042 = vmatmul.mubr.bf16.gmra.mrb[0].mxu0 %v1444
        %v3043 = vpop.f32.mrb[0].mxu0
        %v3044 = vadd.f32 %v2755, %v3043
        %v3045 = vpop.f32.mrb[0].mxu0
        %v3046 = vpop.f32.mrb[0].mxu0
        %v3047 = vadd.f32 %v2758, %v3046
        %v3048 = vpop.f32.mrb[0].mxu0
        %3049 = vmatprep.mubr.bf16.mxu0 0
        %3050 = vmatmul.mubr.bf16.gmra.mrb[0].mxu0 %v1447
        %v3051 = vpop.f32.mrb[0].mxu0
        %v3052 = vadd.f32 %v2763, %v3051
        %v3053 = vpop.f32.mrb[0].mxu0
        %v3054 = vpop.f32.mrb[0].mxu0
        %v3055 = vadd.f32 %v2766, %v3054
        %v3056 = vpop.f32.mrb[0].mxu0
        %3057 = vmatprep.mubr.bf16.mxu0 0
        %3058 = vmatmul.mubr.bf16.gmra.mrb[0].mxu0 %v1450
        %v3059 = vpop.f32.mrb[0].mxu0
        %v3060 = vadd.f32 %v2771, %v3059
        %v3061 = vpop.f32.mrb[0].mxu0
        %v3062 = vpop.f32.mrb[0].mxu0
        %v3063 = vadd.f32 %v2774, %v3062
        %v3064 = vpop.f32.mrb[0].mxu0
        %3065 = vmatprep.mubr.bf16.mxu0 0
        %3066 = vmatmul.mubr.bf16.gmra.mrb[0].mxu0 %v1453
        %v3067 = vpop.f32.mrb[0].mxu0
        %v3068 = vadd.f32 %v2779, %v3067
        %v3069 = vpop.f32.mrb[0].mxu0
        %v3070 = vpop.f32.mrb[0].mxu0
        %v3071 = vadd.f32 %v2782, %v3070
        %v3072 = vpop.f32.mrb[0].mxu0
        %3073 = vmatprep.mubr.bf16.mxu0 0
        %3074 = vmatmul.mubr.bf16.gmra.mrb[0].mxu0 %v1456
        %v3075 = vpop.f32.mrb[0].mxu0
        %v3076 = vadd.f32 %v2787, %v3075
        %v3077 = vpop.f32.mrb[0].mxu0
        %v3078 = vpop.f32.mrb[0].mxu0
        %v3079 = vadd.f32 %v2790, %v3078
        %v3080 = vpop.f32.mrb[0].mxu0
        %3081 = vmatprep.mubr.bf16.mxu0 0
        %3082 = vmatmul.mubr.bf16.gmra.mrb[0].mxu0 %v1459
        %v3083 = vpop.f32.mrb[0].mxu0
        %v3084 = vadd.f32 %v2795, %v3083
        %v3085 = vpop.f32.mrb[0].mxu0
        %v3086 = vpop.f32.mrb[0].mxu0
        %v3087 = vadd.f32 %v2798, %v3086
        %v3088 = vpop.f32.mrb[0].mxu0
        %3089 = vmatprep.mubr.bf16.mxu0 0
        %3090 = vmatmul.mubr.bf16.gmra.mrb[0].mxu0 %v1462
        %v3091 = vpop.f32.mrb[0].mxu0
        %v3092 = vadd.f32 %v2803, %v3091
        %v3093 = vpop.f32.mrb[0].mxu0
        %v3094 = vpop.f32.mrb[0].mxu0
        %v3095 = vadd.f32 %v2806, %v3094
        %v3096 = vpop.f32.mrb[0].mxu0
        %3097 = vmatprep.mubr.bf16.mxu0 0
        %3098 = vmatmul.mubr.bf16.gmra.mrb[0].mxu0 %v1465
        %v3099 = vpop.f32.mrb[0].mxu0
        %v3100 = vadd.f32 %v2811, %v3099
        %v3101 = vpop.f32.mrb[0].mxu0
        %v3102 = vpop.f32.mrb[0].mxu0
        %v3103 = vadd.f32 %v2814, %v3102
        %v3104 = vpop.f32.mrb[0].mxu0
        %3105 = vmatprep.mubr.bf16.mxu0 0
        %3106 = vmatmul.mubr.bf16.gmra.mrb[0].mxu0 %v1468
        %v3107 = vpop.f32.mrb[0].mxu0
        %v3108 = vadd.f32 %v2819, %v3107
        %v3109 = vpop.f32.mrb[0].mxu0
        %v3110 = vpop.f32.mrb[0].mxu0
        %v3111 = vadd.f32 %v2822, %v3110
        %v3112 = vpop.f32.mrb[0].mxu0
        %3113 = vmatprep.mubr.bf16.mxu0 0
        %3114 = vmatmul.mubr.bf16.gmra.mrb[0].mxu0 %v1471
        %v3115 = vpop.f32.mrb[0].mxu0
        %v3116 = vadd.f32 %v2827, %v3115
        %v3117 = vpop.f32.mrb[0].mxu0
        %v3118 = vpop.f32.mrb[0].mxu0
        %v3119 = vadd.f32 %v2830, %v3118
        %v3120 = vpop.f32.mrb[0].mxu0
        %3121 = vmatprep.mubr.bf16.mxu0 0
        %3122 = vmatmul.mubr.bf16.gmra.mrb[0].mxu0 %v1474
        %v3123 = vpop.f32.mrb[0].mxu0
        %v3124 = vadd.f32 %v2835, %v3123
        %v3125 = vpop.f32.mrb[0].mxu0
        %v3126 = vpop.f32.mrb[0].mxu0
        %v3127 = vadd.f32 %v2838, %v3126
        %v3128 = vpop.f32.mrb[0].mxu0
        %3129 = vmatprep.mubr.bf16.mxu0 0
        %3130 = vmatmul.mubr.bf16.gmra.mrb[0].mxu0 %v1477
        %v3131 = vpop.f32.mrb[0].mxu0
        %v3132 = vadd.f32 %v2843, %v3131
        %v3133 = vpop.f32.mrb[0].mxu0
        %v3134 = vpop.f32.mrb[0].mxu0
        %v3135 = vadd.f32 %v2846, %v3134
        %v3136 = vpop.f32.mrb[0].mxu0
        %3137 = vmatprep.mubr.bf16.mxu0 0
        %3138 = vmatmul.mubr.bf16.gmra.mrb[0].mxu0 %v1480
        %v3139 = vpop.f32.mrb[0].mxu0
        %v3140 = vadd.f32 %v2851, %v3139
        %v3141 = vpop.f32.mrb[0].mxu0
        %v3142 = vpop.f32.mrb[0].mxu0
        %v3143 = vadd.f32 %v2854, %v3142
        %v3144 = vpop.f32.mrb[0].mxu0
        %3145 = vmatprep.mubr.bf16.mxu0 0
        %3146 = vmatmul.mubr.bf16.gmra.mrb[0].mxu0 %v1483
        %v3147 = vpop.f32.mrb[0].mxu0
        %v3148 = vadd.f32 %v2859, %v3147
        %v3149 = vpop.f32.mrb[0].mxu0
        %v3150 = vpop.f32.mrb[0].mxu0
        %v3151 = vadd.f32 %v2862, %v3150
        %v3152 = vpop.f32.mrb[0].mxu0
        %3153 = vmatprep.mubr.bf16.mxu0 0
        %3154 = vmatmul.mubr.bf16.gmra.mrb[0].mxu0 %v1486
        %v3155 = vpop.f32.mrb[0].mxu0
        %v3156 = vadd.f32 %v2867, %v3155
        %v3157 = vpop.f32.mrb[0].mxu0
        %v3158 = vpop.f32.mrb[0].mxu0
        %v3159 = vadd.f32 %v2870, %v3158
        %v3160 = vpop.f32.mrb[0].mxu0
        %3161 = vmatprep.mubr.bf16.mxu0 0
        %3162 = vmatmul.mubr.bf16.gmra.mrb[0].mxu0 %v1489
        %v3163 = vpop.f32.mrb[0].mxu0
        %v3164 = vadd.f32 %v2875, %v3163
        %v3165 = vpop.f32.mrb[0].mxu0
        %v3166 = vpop.f32.mrb[0].mxu0
        %v3167 = vadd.f32 %v2878, %v3166
        %v3168 = vpop.f32.mrb[0].mxu0
        %3169 = vmatprep.mubr.bf16.mxu0 0
        %3170 = vmatmul.mubr.bf16.gmra.mrb[0].mxu0 %v1492
        %v3171 = vpop.f32.mrb[0].mxu0
        %v3172 = vadd.f32 %v2883, %v3171
        %v3173 = vpop.f32.mrb[0].mxu0
        %v3174 = vpop.f32.mrb[0].mxu0
        %v3175 = vadd.f32 %v2886, %v3174
        %v3176 = vpop.f32.mrb[0].mxu0
        %3177 = vmatprep.mubr.bf16.mxu0 0
        %3178 = vmatmul.mubr.bf16.gmra.mrb[0].mxu0 %v1495
        %v3179 = vpop.f32.mrb[0].mxu0
        %v3180 = vadd.f32 %v2891, %v3179
        %v3181 = vpop.f32.mrb[0].mxu0
        %v3182 = vpop.f32.mrb[0].mxu0
        %v3183 = vadd.f32 %v2894, %v3182
        %v3184 = vpop.f32.mrb[0].mxu0
        %3185 = vmatprep.mubr.bf16.mxu0 0
        %3186 = vmatmul.mubr.bf16.gmra.mrb[0].mxu0 %v1498
        %v3187 = vpop.f32.mrb[0].mxu0
        %v3188 = vadd.f32 %v2899, %v3187
        %v3189 = vpop.f32.mrb[0].mxu0
        %v3190 = vpop.f32.mrb[0].mxu0
        %v3191 = vadd.f32 %v2902, %v3190
        %v3192 = vpop.f32.mrb[0].mxu0
        %3193 = vmatprep.mubr.bf16.mxu0 0
        %3194 = vmatmul.mubr.bf16.gmra.mrb[0].mxu0 %v1501
        %v3195 = vpop.f32.mrb[0].mxu0
        %v3196 = vadd.f32 %v2907, %v3195
        %v3197 = vpop.f32.mrb[0].mxu0
        %v3198 = vpop.f32.mrb[0].mxu0
        %v3199 = vadd.f32 %v2910, %v3198
        %v3200 = vpop.f32.mrb[0].mxu0
        %3201 = vmatprep.mubr.bf16.mxu0 0
        %3202 = vmatmul.mubr.bf16.gmra.mrb[0].mxu0 %v1504
        %v3203 = vpop.f32.mrb[0].mxu0
        %v3204 = vadd.f32 %v2915, %v3203
        %v3205 = vpop.f32.mrb[0].mxu0
        %v3206 = vpop.f32.mrb[0].mxu0
        %v3207 = vadd.f32 %v2918, %v3206
        %v3208 = vpop.f32.mrb[0].mxu0
        %3209 = vmatprep.mubr.bf16.mxu0 0
        %3210 = vmatmul.mubr.bf16.gmra.mrb[0].mxu0 %v1507
        %v3211 = vpop.f32.mrb[0].mxu0
        %v3212 = vadd.f32 %v2923, %v3211
        %v3213 = vpop.f32.mrb[0].mxu0
        %v3214 = vpop.f32.mrb[0].mxu0
        %v3215 = vadd.f32 %v2926, %v3214
        %v3216 = vpop.f32.mrb[0].mxu0
        %3217 = vmatprep.mubr.bf16.mxu0 0
        %3218 = vmatmul.mubr.bf16.gmra.mrb[0].mxu0 %v1510
        %v3219 = vpop.f32.mrb[0].mxu0
        %v3220 = vadd.f32 %v2931, %v3219
        %v3221 = vpop.f32.mrb[0].mxu0
        %v3222 = vpop.f32.mrb[0].mxu0
        %v3223 = vadd.f32 %v2934, %v3222
        %v3224 = vpop.f32.mrb[0].mxu0
        %3225 = vmatprep.mubr.bf16.mxu0 0
        %3226 = vmatmul.mubr.bf16.gmra.mrb[0].mxu0 %v1513
        %v3227 = vpop.f32.mrb[0].mxu0
        %v3228 = vadd.f32 %v2939, %v3227
        %v3229 = vpop.f32.mrb[0].mxu0
        %v3230 = vpop.f32.mrb[0].mxu0
        %v3231 = vadd.f32 %v2942, %v3230
        %v3232 = vpop.f32.mrb[0].mxu0
        %3233 = vmatprep.mubr.bf16.mxu0 0
        %3234 = vmatmul.mubr.bf16.gmra.mrb[0].mxu0 %v1516
        %v3235 = vpop.f32.mrb[0].mxu0
        %v3236 = vadd.f32 %v2947, %v3235
        %v3237 = vpop.f32.mrb[0].mxu0
        %v3238 = vpop.f32.mrb[0].mxu0
        %v3239 = vadd.f32 %v2950, %v3238
        %v3240 = vpop.f32.mrb[0].mxu0
        %3241 = vmatprep.mubr.bf16.mxu0 0
        %3242 = vmatmul.mubr.bf16.gmra.mrb[0].mxu0 %v1519
        %v3243 = vpop.f32.mrb[0].mxu0
        %v3244 = vadd.f32 %v2955, %v3243
        %v3245 = vpop.f32.mrb[0].mxu0
        %v3246 = vpop.f32.mrb[0].mxu0
        %v3247 = vadd.f32 %v2958, %v3246
        %v3248 = vpop.f32.mrb[0].mxu0
        %3249 = vmatprep.mubr.bf16.mxu0 0
        %3250 = vmatmul.mubr.bf16.gmra.mrb[0].mxu0 %v1522
        %v3251 = vpop.f32.mrb[0].mxu0
        %v3252 = vadd.f32 %v2963, %v3251
        %v3253 = vpop.f32.mrb[0].mxu0
        %v3254 = vpop.f32.mrb[0].mxu0
        %v3255 = vadd.f32 %v2966, %v3254
        %v3256 = vpop.f32.mrb[0].mxu0
        %3257 = vmatprep.mubr.bf16.mxu0 0
        %3258 = vmatmul.mubr.bf16.gmra.mrb[0].mxu0 %v1525
        %v3259 = vpop.f32.mrb[0].mxu0
        %v3260 = vadd.f32 %v2971, %v3259
        %v3261 = vpop.f32.mrb[0].mxu0
        %v3262 = vpop.f32.mrb[0].mxu0
        %v3263 = vadd.f32 %v2974, %v3262
        %v3264 = vpop.f32.mrb[0].mxu0
        %3265 = vmatprep.mubr.bf16.mxu0 0
        %3266 = vmatmul.mubr.bf16.gmra.mrb[0].mxu0 %v1528
        %v3267 = vpop.f32.mrb[0].mxu0
        %v3268 = vadd.f32 %v2979, %v3267
        %v3269 = vpop.f32.mrb[0].mxu0
        %v3270 = vpop.f32.mrb[0].mxu0
        %v3271 = vadd.f32 %v2982, %v3270
        %v3272 = vpop.f32.mrb[0].mxu0
        %3273 = vmatprep.mubr.bf16.mxu0 0
        %3274 = vmatmul.mubr.bf16.gmra.mrb[0].mxu0 %v1531
        %v3275 = vpop.f32.mrb[0].mxu0
        %v3276 = vadd.f32 %v2987, %v3275
        %v3277 = vpop.f32.mrb[0].mxu0
        %v3278 = vpop.f32.mrb[0].mxu0
        %v3279 = vadd.f32 %v2990, %v3278
        %v3280 = vpop.f32.mrb[0].mxu0
        %3281 = vdwg.mxu0
        %v3283 = vsel %vm358, %v1355, 0
        %v3286 = vsel %vm358, %v1356, 0
        %v3289 = vsel %vm358, %v1357, 0
        %v3292 = vsel %vm358, %v1358, 0
        %v3295 = vsel %vm358, %v1359, 0
        %v3298 = vsel %vm358, %v1360, 0
        %v3301 = vsel %vm358, %v1361, 0
        %v3304 = vsel %vm358, %v1362, 0
        %v3307 = vsel %vm358, %v1363, 0
        %v3310 = vsel %vm358, %v1364, 0
        %v3313 = vsel %vm358, %v1365, 0
        %v3316 = vsel %vm358, %v1366, 0
        %v3319 = vsel %vm358, %v1367, 0
        %v3322 = vsel %vm358, %v1368, 0
        %v3325 = vsel %vm358, %v1369, 0
        %v3328 = vsel %vm358, %v1370, 0
        %v3331 = vsel %vm358, %v1371, 0
        %v3334 = vsel %vm358, %v1372, 0
        %v3337 = vsel %vm358, %v1373, 0
        %v3340 = vsel %vm358, %v1374, 0
        %v3343 = vsel %vm358, %v1375, 0
        %v3346 = vsel %vm358, %v1376, 0
        %v3349 = vsel %vm358, %v1377, 0
        %v3352 = vsel %vm358, %v1378, 0
        %v3355 = vsel %vm358, %v1379, 0
        %v3358 = vsel %vm358, %v1380, 0
        %v3361 = vsel %vm358, %v1381, 0
        %v3364 = vsel %vm358, %v1382, 0
        %v3367 = vsel %vm358, %v1383, 0
        %v3370 = vsel %vm358, %v1384, 0
        %v3373 = vsel %vm358, %v1385, 0
        %v3376 = vsel %vm358, %v1386, 0
        %3378 = vmatprep.subr.bf16.mxu0 0
        %3379 = vmatpush1.bf16.msra.mxu0 %v2247
        %3380 = vmatprep.subr.bf16.mxu0 0
        %3381 = vmatpush1.bf16.msra.mxu0 %v2248
        %3382 = vmatprep.subr.bf16.mxu0 0
        %3383 = vmatpush1.bf16.msra.mxu0 %v2249
        %3384 = vmatprep.subr.bf16.mxu0 0
        %3385 = vmatpush1.bf16.msra.mxu0 %v2250
        %3386 = vmatprep.subr.bf16.mxu0 0
        %3387 = vmatpush1.bf16.msra.mxu0 0
        %3388 = vmatprep.subr.bf16.mxu0 0
        %3389 = vmatpush1.bf16.msra.mxu0 0
        %3390 = vmatprep.subr.bf16.mxu0 0
        %3391 = vmatpush1.bf16.msra.mxu0 0
        %3392 = vmatprep.subr.bf16.mxu0 0
        %3393 = vmatpush1.bf16.msra.mxu0 0
        %3394 = vmatprep.subr.bf16.mxu0 0
        %3395 = vmatpush1.bf16.msra.mxu0 0
        %3396 = vmatprep.subr.bf16.mxu0 0
        %3397 = vmatpush1.bf16.msra.mxu0 0
        %3398 = vmatprep.subr.bf16.mxu0 0
        %3399 = vmatpush1.bf16.msra.mxu0 0
        %3400 = vmatprep.subr.bf16.mxu0 0
        %3401 = vmatpush1.bf16.msra.mxu0 0
        %3402 = vmatprep.subr.bf16.mxu0 0
        %3403 = vmatpush1.bf16.msra.mxu0 0
        %3404 = vmatprep.subr.bf16.mxu0 0
        %3405 = vmatpush1.bf16.msra.mxu0 0
        %3406 = vmatprep.subr.bf16.mxu0 0
        %3407 = vmatpush1.bf16.msra.mxu0 0
        %3408 = vmatprep.subr.bf16.mxu0 0
        %3409 = vmatpush1.bf16.msra.mxu0 0
        %3410 = vmatprep.mubr.bf16.mxu0 0
        %3411 = vmatmul.mubr.bf16.gmra.mrb[0].mxu0 %v3283
        %v3412 = vpop.f32.mrb[0].mxu0
        %v3413 = vadd.f32 0.0, %v3412
        %v3414 = vpop.f32.mrb[0].mxu0
        %v3415 = vpop.f32.mrb[0].mxu0
        %v3416 = vadd.f32 0.0, %v3415
        %v3417 = vpop.f32.mrb[0].mxu0
        %3418 = vmatprep.mubr.bf16.mxu0 0
        %3419 = vmatmul.mubr.bf16.gmra.mrb[0].mxu0 %v3286
        %v3420 = vpop.f32.mrb[0].mxu0
        %v3421 = vadd.f32 0.0, %v3420
        %v3422 = vpop.f32.mrb[0].mxu0
        %v3423 = vpop.f32.mrb[0].mxu0
        %v3424 = vadd.f32 0.0, %v3423
        %v3425 = vpop.f32.mrb[0].mxu0
        %3426 = vmatprep.mubr.bf16.mxu0 0
        %3427 = vmatmul.mubr.bf16.gmra.mrb[0].mxu0 %v3289
        %v3428 = vpop.f32.mrb[0].mxu0
        %v3429 = vadd.f32 0.0, %v3428
        %v3430 = vpop.f32.mrb[0].mxu0
        %v3431 = vpop.f32.mrb[0].mxu0
        %v3432 = vadd.f32 0.0, %v3431
        %v3433 = vpop.f32.mrb[0].mxu0
        %3434 = vmatprep.mubr.bf16.mxu0 0
        %3435 = vmatmul.mubr.bf16.gmra.mrb[0].mxu0 %v3292
        %v3436 = vpop.f32.mrb[0].mxu0
        %v3437 = vadd.f32 0.0, %v3436
        %v3438 = vpop.f32.mrb[0].mxu0
        %v3439 = vpop.f32.mrb[0].mxu0
        %v3440 = vadd.f32 0.0, %v3439
        %v3441 = vpop.f32.mrb[0].mxu0
        %3442 = vmatprep.mubr.bf16.mxu0 0
        %3443 = vmatmul.mubr.bf16.gmra.mrb[0].mxu0 %v3295
        %v3444 = vpop.f32.mrb[0].mxu0
        %v3445 = vadd.f32 0.0, %v3444
        %v3446 = vpop.f32.mrb[0].mxu0
        %v3447 = vpop.f32.mrb[0].mxu0
        %v3448 = vadd.f32 0.0, %v3447
        %v3449 = vpop.f32.mrb[0].mxu0
        %3450 = vmatprep.mubr.bf16.mxu0 0
        %3451 = vmatmul.mubr.bf16.gmra.mrb[0].mxu0 %v3298
        %v3452 = vpop.f32.mrb[0].mxu0
        %v3453 = vadd.f32 0.0, %v3452
        %v3454 = vpop.f32.mrb[0].mxu0
        %v3455 = vpop.f32.mrb[0].mxu0
        %v3456 = vadd.f32 0.0, %v3455
        %v3457 = vpop.f32.mrb[0].mxu0
        %3458 = vmatprep.mubr.bf16.mxu0 0
        %3459 = vmatmul.mubr.bf16.gmra.mrb[0].mxu0 %v3301
        %v3460 = vpop.f32.mrb[0].mxu0
        %v3461 = vadd.f32 0.0, %v3460
        %v3462 = vpop.f32.mrb[0].mxu0
        %v3463 = vpop.f32.mrb[0].mxu0
        %v3464 = vadd.f32 0.0, %v3463
        %v3465 = vpop.f32.mrb[0].mxu0
        %3466 = vmatprep.mubr.bf16.mxu0 0
        %3467 = vmatmul.mubr.bf16.gmra.mrb[0].mxu0 %v3304
        %v3468 = vpop.f32.mrb[0].mxu0
        %v3469 = vadd.f32 0.0, %v3468
        %v3470 = vpop.f32.mrb[0].mxu0
        %v3471 = vpop.f32.mrb[0].mxu0
        %v3472 = vadd.f32 0.0, %v3471
        %v3473 = vpop.f32.mrb[0].mxu0
        %3474 = vmatprep.mubr.bf16.mxu0 0
        %3475 = vmatmul.mubr.bf16.gmra.mrb[0].mxu0 %v3307
        %v3476 = vpop.f32.mrb[0].mxu0
        %v3477 = vadd.f32 0.0, %v3476
        %v3478 = vpop.f32.mrb[0].mxu0
        %v3479 = vpop.f32.mrb[0].mxu0
        %v3480 = vadd.f32 0.0, %v3479
        %v3481 = vpop.f32.mrb[0].mxu0
        %3482 = vmatprep.mubr.bf16.mxu0 0
        %3483 = vmatmul.mubr.bf16.gmra.mrb[0].mxu0 %v3310
        %v3484 = vpop.f32.mrb[0].mxu0
        %v3485 = vadd.f32 0.0, %v3484
        %v3486 = vpop.f32.mrb[0].mxu0
        %v3487 = vpop.f32.mrb[0].mxu0
        %v3488 = vadd.f32 0.0, %v3487
        %v3489 = vpop.f32.mrb[0].mxu0
        %3490 = vmatprep.mubr.bf16.mxu0 0
        %3491 = vmatmul.mubr.bf16.gmra.mrb[0].mxu0 %v3313
        %v3492 = vpop.f32.mrb[0].mxu0
        %v3493 = vadd.f32 0.0, %v3492
        %v3494 = vpop.f32.mrb[0].mxu0
        %v3495 = vpop.f32.mrb[0].mxu0
        %v3496 = vadd.f32 0.0, %v3495
        %v3497 = vpop.f32.mrb[0].mxu0
        %3498 = vmatprep.mubr.bf16.mxu0 0
        %3499 = vmatmul.mubr.bf16.gmra.mrb[0].mxu0 %v3316
        %v3500 = vpop.f32.mrb[0].mxu0
        %v3501 = vadd.f32 0.0, %v3500
        %v3502 = vpop.f32.mrb[0].mxu0
        %v3503 = vpop.f32.mrb[0].mxu0
        %v3504 = vadd.f32 0.0, %v3503
        %v3505 = vpop.f32.mrb[0].mxu0
        %3506 = vmatprep.mubr.bf16.mxu0 0
        %3507 = vmatmul.mubr.bf16.gmra.mrb[0].mxu0 %v3319
        %v3508 = vpop.f32.mrb[0].mxu0
        %v3509 = vadd.f32 0.0, %v3508
        %v3510 = vpop.f32.mrb[0].mxu0
        %v3511 = vpop.f32.mrb[0].mxu0
        %v3512 = vadd.f32 0.0, %v3511
        %v3513 = vpop.f32.mrb[0].mxu0
        %3514 = vmatprep.mubr.bf16.mxu0 0
        %3515 = vmatmul.mubr.bf16.gmra.mrb[0].mxu0 %v3322
        %v3516 = vpop.f32.mrb[0].mxu0
        %v3517 = vadd.f32 0.0, %v3516
        %v3518 = vpop.f32.mrb[0].mxu0
        %v3519 = vpop.f32.mrb[0].mxu0
        %v3520 = vadd.f32 0.0, %v3519
        %v3521 = vpop.f32.mrb[0].mxu0
        %3522 = vmatprep.mubr.bf16.mxu0 0
        %3523 = vmatmul.mubr.bf16.gmra.mrb[0].mxu0 %v3325
        %v3524 = vpop.f32.mrb[0].mxu0
        %v3525 = vadd.f32 0.0, %v3524
        %v3526 = vpop.f32.mrb[0].mxu0
        %v3527 = vpop.f32.mrb[0].mxu0
        %v3528 = vadd.f32 0.0, %v3527
        %v3529 = vpop.f32.mrb[0].mxu0
        %3530 = vmatprep.mubr.bf16.mxu0 0
        %3531 = vmatmul.mubr.bf16.gmra.mrb[0].mxu0 %v3328
        %v3532 = vpop.f32.mrb[0].mxu0
        %v3533 = vadd.f32 0.0, %v3532
        %v3534 = vpop.f32.mrb[0].mxu0
        %v3535 = vpop.f32.mrb[0].mxu0
        %v3536 = vadd.f32 0.0, %v3535
        %v3537 = vpop.f32.mrb[0].mxu0
        %3538 = vmatprep.mubr.bf16.mxu0 0
        %3539 = vmatmul.mubr.bf16.gmra.mrb[0].mxu0 %v3331
        %v3540 = vpop.f32.mrb[0].mxu0
        %v3541 = vadd.f32 0.0, %v3540
        %v3542 = vpop.f32.mrb[0].mxu0
        %v3543 = vpop.f32.mrb[0].mxu0
        %v3544 = vadd.f32 0.0, %v3543
        %v3545 = vpop.f32.mrb[0].mxu0
        %3546 = vmatprep.mubr.bf16.mxu0 0
        %3547 = vmatmul.mubr.bf16.gmra.mrb[0].mxu0 %v3334
        %v3548 = vpop.f32.mrb[0].mxu0
        %v3549 = vadd.f32 0.0, %v3548
        %v3550 = vpop.f32.mrb[0].mxu0
        %v3551 = vpop.f32.mrb[0].mxu0
        %v3552 = vadd.f32 0.0, %v3551
        %v3553 = vpop.f32.mrb[0].mxu0
        %3554 = vmatprep.mubr.bf16.mxu0 0
        %3555 = vmatmul.mubr.bf16.gmra.mrb[0].mxu0 %v3337
        %v3556 = vpop.f32.mrb[0].mxu0
        %v3557 = vadd.f32 0.0, %v3556
        %v3558 = vpop.f32.mrb[0].mxu0
        %v3559 = vpop.f32.mrb[0].mxu0
        %v3560 = vadd.f32 0.0, %v3559
        %v3561 = vpop.f32.mrb[0].mxu0
        %3562 = vmatprep.mubr.bf16.mxu0 0
        %3563 = vmatmul.mubr.bf16.gmra.mrb[0].mxu0 %v3340
        %v3564 = vpop.f32.mrb[0].mxu0
        %v3565 = vadd.f32 0.0, %v3564
        %v3566 = vpop.f32.mrb[0].mxu0
        %v3567 = vpop.f32.mrb[0].mxu0
        %v3568 = vadd.f32 0.0, %v3567
        %v3569 = vpop.f32.mrb[0].mxu0
        %3570 = vmatprep.mubr.bf16.mxu0 0
        %3571 = vmatmul.mubr.bf16.gmra.mrb[0].mxu0 %v3343
        %v3572 = vpop.f32.mrb[0].mxu0
        %v3573 = vadd.f32 0.0, %v3572
        %v3574 = vpop.f32.mrb[0].mxu0
        %v3575 = vpop.f32.mrb[0].mxu0
        %v3576 = vadd.f32 0.0, %v3575
        %v3577 = vpop.f32.mrb[0].mxu0
        %3578 = vmatprep.mubr.bf16.mxu0 0
        %3579 = vmatmul.mubr.bf16.gmra.mrb[0].mxu0 %v3346
        %v3580 = vpop.f32.mrb[0].mxu0
        %v3581 = vadd.f32 0.0, %v3580
        %v3582 = vpop.f32.mrb[0].mxu0
        %v3583 = vpop.f32.mrb[0].mxu0
        %v3584 = vadd.f32 0.0, %v3583
        %v3585 = vpop.f32.mrb[0].mxu0
        %3586 = vmatprep.mubr.bf16.mxu0 0
        %3587 = vmatmul.mubr.bf16.gmra.mrb[0].mxu0 %v3349
        %v3588 = vpop.f32.mrb[0].mxu0
        %v3589 = vadd.f32 0.0, %v3588
        %v3590 = vpop.f32.mrb[0].mxu0
        %v3591 = vpop.f32.mrb[0].mxu0
        %v3592 = vadd.f32 0.0, %v3591
        %v3593 = vpop.f32.mrb[0].mxu0
        %3594 = vmatprep.mubr.bf16.mxu0 0
        %3595 = vmatmul.mubr.bf16.gmra.mrb[0].mxu0 %v3352
        %v3596 = vpop.f32.mrb[0].mxu0
        %v3597 = vadd.f32 0.0, %v3596
        %v3598 = vpop.f32.mrb[0].mxu0
        %v3599 = vpop.f32.mrb[0].mxu0
        %v3600 = vadd.f32 0.0, %v3599
        %v3601 = vpop.f32.mrb[0].mxu0
        %3602 = vmatprep.mubr.bf16.mxu0 0
        %3603 = vmatmul.mubr.bf16.gmra.mrb[0].mxu0 %v3355
        %v3604 = vpop.f32.mrb[0].mxu0
        %v3605 = vadd.f32 0.0, %v3604
        %v3606 = vpop.f32.mrb[0].mxu0
        %v3607 = vpop.f32.mrb[0].mxu0
        %v3608 = vadd.f32 0.0, %v3607
        %v3609 = vpop.f32.mrb[0].mxu0
        %3610 = vmatprep.mubr.bf16.mxu0 0
        %3611 = vmatmul.mubr.bf16.gmra.mrb[0].mxu0 %v3358
        %v3612 = vpop.f32.mrb[0].mxu0
        %v3613 = vadd.f32 0.0, %v3612
        %v3614 = vpop.f32.mrb[0].mxu0
        %v3615 = vpop.f32.mrb[0].mxu0
        %v3616 = vadd.f32 0.0, %v3615
        %v3617 = vpop.f32.mrb[0].mxu0
        %3618 = vmatprep.mubr.bf16.mxu0 0
        %3619 = vmatmul.mubr.bf16.gmra.mrb[0].mxu0 %v3361
        %v3620 = vpop.f32.mrb[0].mxu0
        %v3621 = vadd.f32 0.0, %v3620
        %v3622 = vpop.f32.mrb[0].mxu0
        %v3623 = vpop.f32.mrb[0].mxu0
        %v3624 = vadd.f32 0.0, %v3623
        %v3625 = vpop.f32.mrb[0].mxu0
        %3626 = vmatprep.mubr.bf16.mxu0 0
        %3627 = vmatmul.mubr.bf16.gmra.mrb[0].mxu0 %v3364
        %v3628 = vpop.f32.mrb[0].mxu0
        %v3629 = vadd.f32 0.0, %v3628
        %v3630 = vpop.f32.mrb[0].mxu0
        %v3631 = vpop.f32.mrb[0].mxu0
        %v3632 = vadd.f32 0.0, %v3631
        %v3633 = vpop.f32.mrb[0].mxu0
        %3634 = vmatprep.mubr.bf16.mxu0 0
        %3635 = vmatmul.mubr.bf16.gmra.mrb[0].mxu0 %v3367
        %v3636 = vpop.f32.mrb[0].mxu0
        %v3637 = vadd.f32 0.0, %v3636
        %v3638 = vpop.f32.mrb[0].mxu0
        %v3639 = vpop.f32.mrb[0].mxu0
        %v3640 = vadd.f32 0.0, %v3639
        %v3641 = vpop.f32.mrb[0].mxu0
        %3642 = vmatprep.mubr.bf16.mxu0 0
        %3643 = vmatmul.mubr.bf16.gmra.mrb[0].mxu0 %v3370
        %v3644 = vpop.f32.mrb[0].mxu0
        %v3645 = vadd.f32 0.0, %v3644
        %v3646 = vpop.f32.mrb[0].mxu0
        %v3647 = vpop.f32.mrb[0].mxu0
        %v3648 = vadd.f32 0.0, %v3647
        %v3649 = vpop.f32.mrb[0].mxu0
        %3650 = vmatprep.mubr.bf16.mxu0 0
        %3651 = vmatmul.mubr.bf16.gmra.mrb[0].mxu0 %v3373
        %v3652 = vpop.f32.mrb[0].mxu0
        %v3653 = vadd.f32 0.0, %v3652
        %v3654 = vpop.f32.mrb[0].mxu0
        %v3655 = vpop.f32.mrb[0].mxu0
        %v3656 = vadd.f32 0.0, %v3655
        %v3657 = vpop.f32.mrb[0].mxu0
        %3658 = vmatprep.mubr.bf16.mxu0 0
        %3659 = vmatmul.mubr.bf16.gmra.mrb[0].mxu0 %v3376
        %v3660 = vpop.f32.mrb[0].mxu0
        %v3661 = vadd.f32 0.0, %v3660
        %v3662 = vpop.f32.mrb[0].mxu0
        %v3663 = vpop.f32.mrb[0].mxu0
        %v3664 = vadd.f32 0.0, %v3663
        %v3665 = vpop.f32.mrb[0].mxu0
        %3666 = vdwg.mxu0
        %v3667 = vadd.f32 %v3028, %v3413
        %v3668 = vadd.f32 %v3031, %v3416
        %v3669 = vadd.f32 %v3036, %v3421
        %v3670 = vadd.f32 %v3039, %v3424
        %v3671 = vadd.f32 %v3044, %v3429
        %v3672 = vadd.f32 %v3047, %v3432
        %v3673 = vadd.f32 %v3052, %v3437
        %v3674 = vadd.f32 %v3055, %v3440
        %v3675 = vadd.f32 %v3060, %v3445
        %v3676 = vadd.f32 %v3063, %v3448
        %v3677 = vadd.f32 %v3068, %v3453
        %v3678 = vadd.f32 %v3071, %v3456
        %v3679 = vadd.f32 %v3076, %v3461
        %v3680 = vadd.f32 %v3079, %v3464
        %v3681 = vadd.f32 %v3084, %v3469
        %v3682 = vadd.f32 %v3087, %v3472
        %v3683 = vadd.f32 %v3092, %v3477
        %v3684 = vadd.f32 %v3095, %v3480
        %v3685 = vadd.f32 %v3100, %v3485
        %v3686 = vadd.f32 %v3103, %v3488
        %v3687 = vadd.f32 %v3108, %v3493
        %v3688 = vadd.f32 %v3111, %v3496
        %v3689 = vadd.f32 %v3116, %v3501
        %v3690 = vadd.f32 %v3119, %v3504
        %v3691 = vadd.f32 %v3124, %v3509
        %v3692 = vadd.f32 %v3127, %v3512
        %v3693 = vadd.f32 %v3132, %v3517
        %v3694 = vadd.f32 %v3135, %v3520
        %v3695 = vadd.f32 %v3140, %v3525
        %v3696 = vadd.f32 %v3143, %v3528
        %v3697 = vadd.f32 %v3148, %v3533
        %v3698 = vadd.f32 %v3151, %v3536
        %v3699 = vadd.f32 %v3156, %v3541
        %v3700 = vadd.f32 %v3159, %v3544
        %v3701 = vadd.f32 %v3164, %v3549
        %v3702 = vadd.f32 %v3167, %v3552
        %v3703 = vadd.f32 %v3172, %v3557
        %v3704 = vadd.f32 %v3175, %v3560
        %v3705 = vadd.f32 %v3180, %v3565
        %v3706 = vadd.f32 %v3183, %v3568
        %v3707 = vadd.f32 %v3188, %v3573
        %v3708 = vadd.f32 %v3191, %v3576
        %v3709 = vadd.f32 %v3196, %v3581
        %v3710 = vadd.f32 %v3199, %v3584
        %v3711 = vadd.f32 %v3204, %v3589
        %v3712 = vadd.f32 %v3207, %v3592
        %v3713 = vadd.f32 %v3212, %v3597
        %v3714 = vadd.f32 %v3215, %v3600
        %v3715 = vadd.f32 %v3220, %v3605
        %v3716 = vadd.f32 %v3223, %v3608
        %v3717 = vadd.f32 %v3228, %v3613
        %v3718 = vadd.f32 %v3231, %v3616
        %v3719 = vadd.f32 %v3236, %v3621
        %v3720 = vadd.f32 %v3239, %v3624
        %v3721 = vadd.f32 %v3244, %v3629
        %v3722 = vadd.f32 %v3247, %v3632
        %v3723 = vadd.f32 %v3252, %v3637
        %v3724 = vadd.f32 %v3255, %v3640
        %v3725 = vadd.f32 %v3260, %v3645
        %v3726 = vadd.f32 %v3263, %v3648
        %v3727 = vadd.f32 %v3268, %v3653
        %v3728 = vadd.f32 %v3271, %v3656
        %v3729 = vadd.f32 %v3276, %v3661
        %v3730 = vadd.f32 %v3279, %v3664
        %v3731 = vmax.f32 %v2640, %v3667
        %v3732 = vmax.f32 %v2641, %v3668
        %v3733 = vmax.f32 %v2642, %v3669
        %v3734 = vmax.f32 %v2643, %v3670
        %v3735 = vmax.f32 %v2644, %v3671
        %v3736 = vmax.f32 %v2645, %v3672
        %v3737 = vmax.f32 %v2646, %v3673
        %v3738 = vmax.f32 %v2647, %v3674
        %v3739 = vmax.f32 %v2648, %v3675
        %v3740 = vmax.f32 %v2649, %v3676
        %v3741 = vmax.f32 %v2650, %v3677
        %v3742 = vmax.f32 %v2651, %v3678
        %v3743 = vmax.f32 %v2652, %v3679
        %v3744 = vmax.f32 %v2653, %v3680
        %v3745 = vmax.f32 %v2654, %v3681
        %v3746 = vmax.f32 %v2655, %v3682
        %v3747 = vmax.f32 %v2656, %v3683
        %v3748 = vmax.f32 %v2657, %v3684
        %v3749 = vmax.f32 %v2658, %v3685
        %v3750 = vmax.f32 %v2659, %v3686
        %v3751 = vmax.f32 %v2660, %v3687
        %v3752 = vmax.f32 %v2661, %v3688
        %v3753 = vmax.f32 %v2662, %v3689
        %v3754 = vmax.f32 %v2663, %v3690
        %v3755 = vmax.f32 %v2664, %v3691
        %v3756 = vmax.f32 %v2665, %v3692
        %v3757 = vmax.f32 %v2666, %v3693
        %v3758 = vmax.f32 %v2667, %v3694
        %v3759 = vmax.f32 %v2668, %v3695
        %v3760 = vmax.f32 %v2669, %v3696
        %v3761 = vmax.f32 %v2670, %v3697
        %v3762 = vmax.f32 %v2671, %v3698
        %v3763 = vmax.f32 %v2672, %v3699
        %v3764 = vmax.f32 %v2673, %v3700
        %v3765 = vmax.f32 %v2674, %v3701
        %v3766 = vmax.f32 %v2675, %v3702
        %v3767 = vmax.f32 %v2676, %v3703
        %v3768 = vmax.f32 %v2677, %v3704
        %v3769 = vmax.f32 %v2678, %v3705
        %v3770 = vmax.f32 %v2679, %v3706
        %v3771 = vmax.f32 %v2680, %v3707
        %v3772 = vmax.f32 %v2681, %v3708
        %v3773 = vmax.f32 %v2682, %v3709
        %v3774 = vmax.f32 %v2683, %v3710
        %v3775 = vmax.f32 %v2684, %v3711
        %v3776 = vmax.f32 %v2685, %v3712
        %v3777 = vmax.f32 %v2686, %v3713
        %v3778 = vmax.f32 %v2687, %v3714
        %v3779 = vmax.f32 %v2688, %v3715
        %v3780 = vmax.f32 %v2689, %v3716
        %v3781 = vmax.f32 %v2690, %v3717
        %v3782 = vmax.f32 %v2691, %v3718
        %v3783 = vmax.f32 %v2692, %v3719
        %v3784 = vmax.f32 %v2693, %v3720
        %v3785 = vmax.f32 %v2694, %v3721
        %v3786 = vmax.f32 %v2695, %v3722
        %v3787 = vmax.f32 %v2696, %v3723
        %v3788 = vmax.f32 %v2697, %v3724
        %v3789 = vmax.f32 %v2698, %v3725
        %v3790 = vmax.f32 %v2699, %v3726
        %v3791 = vmax.f32 %v2700, %v3727
        %v3792 = vmax.f32 %v2701, %v3728
        %v3793 = vmax.f32 %v2702, %v3729
        %v3794 = vmax.f32 %v2703, %v3730
        %v3795 = vld [vmem:[%s2] sm:$0x1]
        %v3796 = vlaneseq
        %v3797 = vshrl.u32 %v3796, 7
        %v3798 = vsub.s32 0, %v3797
        %v3799 = vrot.slane %v3795, %v3798
        %v3800 = vmul.f32 %v3731, %v3799
        %v3801 = vmul.f32 %v3732, %v3799
        %v3802 = vmul.f32 %v3733, %v3799
        %v3803 = vmul.f32 %v3734, %v3799
        %v3804 = vmul.f32 %v3735, %v3799
        %v3805 = vmul.f32 %v3736, %v3799
        %v3806 = vmul.f32 %v3737, %v3799
        %v3807 = vmul.f32 %v3738, %v3799
        %v3808 = vmul.f32 %v3739, %v3799
        %v3809 = vmul.f32 %v3740, %v3799
        %v3810 = vmul.f32 %v3741, %v3799
        %v3811 = vmul.f32 %v3742, %v3799
        %v3812 = vmul.f32 %v3743, %v3799
        %v3813 = vmul.f32 %v3744, %v3799
        %v3814 = vmul.f32 %v3745, %v3799
        %v3815 = vmul.f32 %v3746, %v3799
        %v3816 = vmul.f32 %v3747, %v3799
        %v3817 = vmul.f32 %v3748, %v3799
        %v3818 = vmul.f32 %v3749, %v3799
        %v3819 = vmul.f32 %v3750, %v3799
        %v3820 = vmul.f32 %v3751, %v3799
        %v3821 = vmul.f32 %v3752, %v3799
        %v3822 = vmul.f32 %v3753, %v3799
        %v3823 = vmul.f32 %v3754, %v3799
        %v3824 = vmul.f32 %v3755, %v3799
        %v3825 = vmul.f32 %v3756, %v3799
        %v3826 = vmul.f32 %v3757, %v3799
        %v3827 = vmul.f32 %v3758, %v3799
        %v3828 = vmul.f32 %v3759, %v3799
        %v3829 = vmul.f32 %v3760, %v3799
        %v3830 = vmul.f32 %v3761, %v3799
        %v3831 = vmul.f32 %v3762, %v3799
        %v3832 = vmul.f32 %v3763, %v3799
        %v3833 = vmul.f32 %v3764, %v3799
        %v3834 = vmul.f32 %v3765, %v3799
        %v3835 = vmul.f32 %v3766, %v3799
        %v3836 = vmul.f32 %v3767, %v3799
        %v3837 = vmul.f32 %v3768, %v3799
        %v3838 = vmul.f32 %v3769, %v3799
        %v3839 = vmul.f32 %v3770, %v3799
        %v3840 = vmul.f32 %v3771, %v3799
        %v3841 = vmul.f32 %v3772, %v3799
        %v3842 = vmul.f32 %v3773, %v3799
        %v3843 = vmul.f32 %v3774, %v3799
        %v3844 = vmul.f32 %v3775, %v3799
        %v3845 = vmul.f32 %v3776, %v3799
        %v3846 = vmul.f32 %v3777, %v3799
        %v3847 = vmul.f32 %v3778, %v3799
        %v3848 = vmul.f32 %v3779, %v3799
        %v3849 = vmul.f32 %v3780, %v3799
        %v3850 = vmul.f32 %v3781, %v3799
        %v3851 = vmul.f32 %v3782, %v3799
        %v3852 = vmul.f32 %v3783, %v3799
        %v3853 = vmul.f32 %v3784, %v3799
        %v3854 = vmul.f32 %v3785, %v3799
        %v3855 = vmul.f32 %v3786, %v3799
        %v3856 = vmul.f32 %v3787, %v3799
        %v3857 = vmul.f32 %v3788, %v3799
        %v3858 = vmul.f32 %v3789, %v3799
        %v3859 = vmul.f32 %v3790, %v3799
        %v3860 = vmul.f32 %v3791, %v3799
        %v3861 = vmul.f32 %v3792, %v3799
        %v3862 = vmul.f32 %v3793, %v3799
        %v3863 = vmul.f32 %v3794, %v3799
        %v3864 = vld [vmem:[%s3] sm:$0x1]
        %v3865 = vlaneseq
        %v3866 = vshrl.u32 %v3865, 7
        %v3867 = vsub.s32 0, %v3866
        %v3868 = vrot.slane %v3864, %v3867
        %v3869 = vadd.f32 %v3800, %v3868
        %v3870 = vadd.f32 %v3801, %v3868
        %v3871 = vadd.f32 %v3802, %v3868
        %v3872 = vadd.f32 %v3803, %v3868
        %v3873 = vadd.f32 %v3804, %v3868
        %v3874 = vadd.f32 %v3805, %v3868
        %v3875 = vadd.f32 %v3806, %v3868
        %v3876 = vadd.f32 %v3807, %v3868
        %v3877 = vadd.f32 %v3808, %v3868
        %v3878 = vadd.f32 %v3809, %v3868
        %v3879 = vadd.f32 %v3810, %v3868
        %v3880 = vadd.f32 %v3811, %v3868
        %v3881 = vadd.f32 %v3812, %v3868
        %v3882 = vadd.f32 %v3813, %v3868
        %v3883 = vadd.f32 %v3814, %v3868
        %v3884 = vadd.f32 %v3815, %v3868
        %v3885 = vadd.f32 %v3816, %v3868
        %v3886 = vadd.f32 %v3817, %v3868
        %v3887 = vadd.f32 %v3818, %v3868
        %v3888 = vadd.f32 %v3819, %v3868
        %v3889 = vadd.f32 %v3820, %v3868
        %v3890 = vadd.f32 %v3821, %v3868
        %v3891 = vadd.f32 %v3822, %v3868
        %v3892 = vadd.f32 %v3823, %v3868
        %v3893 = vadd.f32 %v3824, %v3868
        %v3894 = vadd.f32 %v3825, %v3868
        %v3895 = vadd.f32 %v3826, %v3868
        %v3896 = vadd.f32 %v3827, %v3868
        %v3897 = vadd.f32 %v3828, %v3868
        %v3898 = vadd.f32 %v3829, %v3868
        %v3899 = vadd.f32 %v3830, %v3868
        %v3900 = vadd.f32 %v3831, %v3868
        %v3901 = vadd.f32 %v3832, %v3868
        %v3902 = vadd.f32 %v3833, %v3868
        %v3903 = vadd.f32 %v3834, %v3868
        %v3904 = vadd.f32 %v3835, %v3868
        %v3905 = vadd.f32 %v3836, %v3868
        %v3906 = vadd.f32 %v3837, %v3868
        %v3907 = vadd.f32 %v3838, %v3868
        %v3908 = vadd.f32 %v3839, %v3868
        %v3909 = vadd.f32 %v3840, %v3868
        %v3910 = vadd.f32 %v3841, %v3868
        %v3911 = vadd.f32 %v3842, %v3868
        %v3912 = vadd.f32 %v3843, %v3868
        %v3913 = vadd.f32 %v3844, %v3868
        %v3914 = vadd.f32 %v3845, %v3868
        %v3915 = vadd.f32 %v3846, %v3868
        %v3916 = vadd.f32 %v3847, %v3868
        %v3917 = vadd.f32 %v3848, %v3868
        %v3918 = vadd.f32 %v3849, %v3868
        %v3919 = vadd.f32 %v3850, %v3868
        %v3920 = vadd.f32 %v3851, %v3868
        %v3921 = vadd.f32 %v3852, %v3868
        %v3922 = vadd.f32 %v3853, %v3868
        %v3923 = vadd.f32 %v3854, %v3868
        %v3924 = vadd.f32 %v3855, %v3868
        %v3925 = vadd.f32 %v3856, %v3868
        %v3926 = vadd.f32 %v3857, %v3868
        %v3927 = vadd.f32 %v3858, %v3868
        %v3928 = vadd.f32 %v3859, %v3868
        %v3929 = vadd.f32 %v3860, %v3868
        %v3930 = vadd.f32 %v3861, %v3868
        %v3931 = vadd.f32 %v3862, %v3868
        %v3932 = vadd.f32 %v3863, %v3868
        %v3933 = vmax.f32 %v3869, 0.0
        %v3934 = vmax.f32 %v3870, 0.0
        %v3935 = vmax.f32 %v3871, 0.0
        %v3936 = vmax.f32 %v3872, 0.0
        %v3937 = vmax.f32 %v3873, 0.0
        %v3938 = vmax.f32 %v3874, 0.0
        %v3939 = vmax.f32 %v3875, 0.0
        %v3940 = vmax.f32 %v3876, 0.0
        %v3941 = vmax.f32 %v3877, 0.0
        %v3942 = vmax.f32 %v3878, 0.0
        %v3943 = vmax.f32 %v3879, 0.0
        %v3944 = vmax.f32 %v3880, 0.0
        %v3945 = vmax.f32 %v3881, 0.0
        %v3946 = vmax.f32 %v3882, 0.0
        %v3947 = vmax.f32 %v3883, 0.0
        %v3948 = vmax.f32 %v3884, 0.0
        %v3949 = vmax.f32 %v3885, 0.0
        %v3950 = vmax.f32 %v3886, 0.0
        %v3951 = vmax.f32 %v3887, 0.0
        %v3952 = vmax.f32 %v3888, 0.0
        %v3953 = vmax.f32 %v3889, 0.0
        %v3954 = vmax.f32 %v3890, 0.0
        %v3955 = vmax.f32 %v3891, 0.0
        %v3956 = vmax.f32 %v3892, 0.0
        %v3957 = vmax.f32 %v3893, 0.0
        %v3958 = vmax.f32 %v3894, 0.0
        %v3959 = vmax.f32 %v3895, 0.0
        %v3960 = vmax.f32 %v3896, 0.0
        %v3961 = vmax.f32 %v3897, 0.0
        %v3962 = vmax.f32 %v3898, 0.0
        %v3963 = vmax.f32 %v3899, 0.0
        %v3964 = vmax.f32 %v3900, 0.0
        %v3965 = vmax.f32 %v3901, 0.0
        %v3966 = vmax.f32 %v3902, 0.0
        %v3967 = vmax.f32 %v3903, 0.0
        %v3968 = vmax.f32 %v3904, 0.0
        %v3969 = vmax.f32 %v3905, 0.0
        %v3970 = vmax.f32 %v3906, 0.0
        %v3971 = vmax.f32 %v3907, 0.0
        %v3972 = vmax.f32 %v3908, 0.0
        %v3973 = vmax.f32 %v3909, 0.0
        %v3974 = vmax.f32 %v3910, 0.0
        %v3975 = vmax.f32 %v3911, 0.0
        %v3976 = vmax.f32 %v3912, 0.0
        %v3977 = vmax.f32 %v3913, 0.0
        %v3978 = vmax.f32 %v3914, 0.0
        %v3979 = vmax.f32 %v3915, 0.0
        %v3980 = vmax.f32 %v3916, 0.0
        %v3981 = vmax.f32 %v3917, 0.0
        %v3982 = vmax.f32 %v3918, 0.0
        %v3983 = vmax.f32 %v3919, 0.0
        %v3984 = vmax.f32 %v3920, 0.0
        %v3985 = vmax.f32 %v3921, 0.0
        %v3986 = vmax.f32 %v3922, 0.0
        %v3987 = vmax.f32 %v3923, 0.0
        %v3988 = vmax.f32 %v3924, 0.0
        %v3989 = vmax.f32 %v3925, 0.0
        %v3990 = vmax.f32 %v3926, 0.0
        %v3991 = vmax.f32 %v3927, 0.0
        %v3992 = vmax.f32 %v3928, 0.0
        %v3993 = vmax.f32 %v3929, 0.0
        %v3994 = vmax.f32 %v3930, 0.0
        %v3995 = vmax.f32 %v3931, 0.0
        %v3996 = vmax.f32 %v3932, 0.0
        %3997 = vst.msk [vmem:[#allocation3 + $0x8] sm:$0xff] %vm358, %v3933
        %3998 = vst.msk [vmem:[#allocation3 + $0x10] sm:$0xff] %vm358, %v3934
        %3999 = vst.msk [vmem:[#allocation3 + $0x18] sm:$0xff] %vm358, %v3935
        %4000 = vst.msk [vmem:[#allocation3 + $0x20] sm:$0xff] %vm358, %v3936
        %4001 = vst.msk [vmem:[#allocation3 + $0x28] sm:$0xff] %vm358, %v3937
        %4002 = vst.msk [vmem:[#allocation3 + $0x30] sm:$0xff] %vm358, %v3938
        %4003 = vst.msk [vmem:[#allocation3 + $0x38] sm:$0xff] %vm358, %v3939
        %4004 = vst.msk [vmem:[#allocation3 + $0x40] sm:$0xff] %vm358, %v3940
        %4005 = vst.msk [vmem:[#allocation3 + $0x48] sm:$0xff] %vm358, %v3941
        %4006 = vst.msk [vmem:[#allocation3 + $0x50] sm:$0xff] %vm358, %v3942
        %4007 = vst.msk [vmem:[#allocation3 + $0x58] sm:$0xff] %vm358, %v3943
        %4008 = vst.msk [vmem:[#allocation3 + $0x60] sm:$0xff] %vm358, %v3944
        %4009 = vst.msk [vmem:[#allocation3 + $0x68] sm:$0xff] %vm358, %v3945
        %4010 = vst.msk [vmem:[#allocation3 + $0x70] sm:$0xff] %vm358, %v3946
        %4011 = vst.msk [vmem:[#allocation3 + $0x78] sm:$0xff] %vm358, %v3947
        %4012 = vst.msk [vmem:[#allocation3 + $0x80] sm:$0xff] %vm358, %v3948
        %4013 = vst.msk [vmem:[#allocation3 + $0x88] sm:$0xff] %vm358, %v3949
        %4014 = vst.msk [vmem:[#allocation3 + $0x90] sm:$0xff] %vm358, %v3950
        %4015 = vst.msk [vmem:[#allocation3 + $0x98] sm:$0xff] %vm358, %v3951
        %4016 = vst.msk [vmem:[#allocation3 + $0xa0] sm:$0xff] %vm358, %v3952
        %4017 = vst.msk [vmem:[#allocation3 + $0xa8] sm:$0xff] %vm358, %v3953
        %4018 = vst.msk [vmem:[#allocation3 + $0xb0] sm:$0xff] %vm358, %v3954
        %4019 = vst.msk [vmem:[#allocation3 + $0xb8] sm:$0xff] %vm358, %v3955
        %4020 = vst.msk [vmem:[#allocation3 + $0xc0] sm:$0xff] %vm358, %v3956
        %4021 = vst.msk [vmem:[#allocation3 + $0xc8] sm:$0xff] %vm358, %v3957
        %4022 = vst.msk [vmem:[#allocation3 + $0xd0] sm:$0xff] %vm358, %v3958
        %4023 = vst.msk [vmem:[#allocation3 + $0xd8] sm:$0xff] %vm358, %v3959
        %4024 = vst.msk [vmem:[#allocation3 + $0xe0] sm:$0xff] %vm358, %v3960
        %4025 = vst.msk [vmem:[#allocation3 + $0xe8] sm:$0xff] %vm358, %v3961
        %4026 = vst.msk [vmem:[#allocation3 + $0xf0] sm:$0xff] %vm358, %v3962
        %4027 = vst.msk [vmem:[#allocation3 + $0xf8] sm:$0xff] %vm358, %v3963
        %4028 = vst.msk [vmem:[#allocation3 + $0x100] sm:$0xff] %vm358, %v3964
        %4029 = vst.msk [vmem:[#allocation3 + $0x108] sm:$0xff] %vm358, %v3965
        %4030 = vst.msk [vmem:[#allocation3 + $0x110] sm:$0xff] %vm358, %v3966
        %4031 = vst.msk [vmem:[#allocation3 + $0x118] sm:$0xff] %vm358, %v3967
        %4032 = vst.msk [vmem:[#allocation3 + $0x120] sm:$0xff] %vm358, %v3968
        %4033 = vst.msk [vmem:[#allocation3 + $0x128] sm:$0xff] %vm358, %v3969
        %4034 = vst.msk [vmem:[#allocation3 + $0x130] sm:$0xff] %vm358, %v3970
        %4035 = vst.msk [vmem:[#allocation3 + $0x138] sm:$0xff] %vm358, %v3971
        %4036 = vst.msk [vmem:[#allocation3 + $0x140] sm:$0xff] %vm358, %v3972
        %4037 = vst.msk [vmem:[#allocation3 + $0x148] sm:$0xff] %vm358, %v3973
        %4038 = vst.msk [vmem:[#allocation3 + $0x150] sm:$0xff] %vm358, %v3974
        %4039 = vst.msk [vmem:[#allocation3 + $0x158] sm:$0xff] %vm358, %v3975
        %4040 = vst.msk [vmem:[#allocation3 + $0x160] sm:$0xff] %vm358, %v3976
        %4041 = vst.msk [vmem:[#allocation3 + $0x168] sm:$0xff] %vm358, %v3977
        %4042 = vst.msk [vmem:[#allocation3 + $0x170] sm:$0xff] %vm358, %v3978
        %4043 = vst.msk [vmem:[#allocation3 + $0x178] sm:$0xff] %vm358, %v3979
        %4044 = vst.msk [vmem:[#allocation3 + $0x180] sm:$0xff] %vm358, %v3980
        %4045 = vst.msk [vmem:[#allocation3 + $0x188] sm:$0xff] %vm358, %v3981
        %4046 = vst.msk [vmem:[#allocation3 + $0x190] sm:$0xff] %vm358, %v3982
        %4047 = vst.msk [vmem:[#allocation3 + $0x198] sm:$0xff] %vm358, %v3983
        %4048 = vst.msk [vmem:[#allocation3 + $0x1a0] sm:$0xff] %vm358, %v3984
        %4049 = vst.msk [vmem:[#allocation3 + $0x1a8] sm:$0xff] %vm358, %v3985
        %4050 = vst.msk [vmem:[#allocation3 + $0x1b0] sm:$0xff] %vm358, %v3986
        %4051 = vst.msk [vmem:[#allocation3 + $0x1b8] sm:$0xff] %vm358, %v3987
        %4052 = vst.msk [vmem:[#allocation3 + $0x1c0] sm:$0xff] %vm358, %v3988
        %4053 = vst.msk [vmem:[#allocation3 + $0x1c8] sm:$0xff] %vm358, %v3989
        %4054 = vst.msk [vmem:[#allocation3 + $0x1d0] sm:$0xff] %vm358, %v3990
        %4055 = vst.msk [vmem:[#allocation3 + $0x1d8] sm:$0xff] %vm358, %v3991
        %4056 = vst.msk [vmem:[#allocation3 + $0x1e0] sm:$0xff] %vm358, %v3992
        %4057 = vst.msk [vmem:[#allocation3 + $0x1e8] sm:$0xff] %vm358, %v3993
        %4058 = vst.msk [vmem:[#allocation3 + $0x1f0] sm:$0xff] %vm358, %v3994
        %4059 = vst.msk [vmem:[#allocation3 + $0x1f8] sm:$0xff] %vm358, %v3995
        %4060 = vst.msk [vmem:[#allocation3 + $0x200] sm:$0xff] %vm358, %v3996
        %vm4061 = vcmask 516096
        %4062 = vst.msk [vmem:[#allocation3 + $0x208] sm:$0x1] %vm4061, 0.0
        %s4063 = scalar_lea.vmem [#allocation3], 7
        %v4064 = vld [vmem:[%s4063] ss:$2 sm:$0xff]
        %s4065 = scalar_lea.vmem [#allocation3], 23
        %v4066 = vld [vmem:[%s4065] ss:$2 sm:$0xff]
        %s4067 = scalar_lea.vmem [#allocation3], 39
        %v4068 = vld [vmem:[%s4067] ss:$2 sm:$0xff]
        %s4069 = scalar_lea.vmem [#allocation3], 55
        %v4070 = vld [vmem:[%s4069] ss:$2 sm:$0xff]
        %s4071 = scalar_lea.vmem [#allocation3], 71
        %v4072 = vld [vmem:[%s4071] ss:$2 sm:$0xff]
        %s4073 = scalar_lea.vmem [#allocation3], 87
        %v4074 = vld [vmem:[%s4073] ss:$2 sm:$0xff]
        %s4075 = scalar_lea.vmem [#allocation3], 103
        %v4076 = vld [vmem:[%s4075] ss:$2 sm:$0xff]
        %s4077 = scalar_lea.vmem [#allocation3], 119
        %v4078 = vld [vmem:[%s4077] ss:$2 sm:$0xff]
        %s4079 = scalar_lea.vmem [#allocation3], 135
        %v4080 = vld [vmem:[%s4079] ss:$2 sm:$0xff]
        %s4081 = scalar_lea.vmem [#allocation3], 151
        %v4082 = vld [vmem:[%s4081] ss:$2 sm:$0xff]
        %s4083 = scalar_lea.vmem [#allocation3], 167
        %v4084 = vld [vmem:[%s4083] ss:$2 sm:$0xff]
        %s4085 = scalar_lea.vmem [#allocation3], 183
        %v4086 = vld [vmem:[%s4085] ss:$2 sm:$0xff]
        %s4087 = scalar_lea.vmem [#allocation3], 199
        %v4088 = vld [vmem:[%s4087] ss:$2 sm:$0xff]
        %s4089 = scalar_lea.vmem [#allocation3], 215
        %v4090 = vld [vmem:[%s4089] ss:$2 sm:$0xff]
        %s4091 = scalar_lea.vmem [#allocation3], 231
        %v4092 = vld [vmem:[%s4091] ss:$2 sm:$0xff]
        %s4093 = scalar_lea.vmem [#allocation3], 247
        %v4094 = vld [vmem:[%s4093] ss:$2 sm:$0xff]
        %s4095 = scalar_lea.vmem [#allocation3], 263
        %v4096 = vld [vmem:[%s4095] ss:$2 sm:$0xff]
        %s4097 = scalar_lea.vmem [#allocation3], 279
        %v4098 = vld [vmem:[%s4097] ss:$2 sm:$0xff]
        %s4099 = scalar_lea.vmem [#allocation3], 295
        %v4100 = vld [vmem:[%s4099] ss:$2 sm:$0xff]
        %s4101 = scalar_lea.vmem [#allocation3], 311
        %v4102 = vld [vmem:[%s4101] ss:$2 sm:$0xff]
        %s4103 = scalar_lea.vmem [#allocation3], 327
        %v4104 = vld [vmem:[%s4103] ss:$2 sm:$0xff]
        %s4105 = scalar_lea.vmem [#allocation3], 343
        %v4106 = vld [vmem:[%s4105] ss:$2 sm:$0xff]
        %s4107 = scalar_lea.vmem [#allocation3], 359
        %v4108 = vld [vmem:[%s4107] ss:$2 sm:$0xff]
        %s4109 = scalar_lea.vmem [#allocation3], 375
        %v4110 = vld [vmem:[%s4109] ss:$2 sm:$0xff]
        %s4111 = scalar_lea.vmem [#allocation3], 391
        %v4112 = vld [vmem:[%s4111] ss:$2 sm:$0xff]
        %s4113 = scalar_lea.vmem [#allocation3], 407
        %v4114 = vld [vmem:[%s4113] ss:$2 sm:$0xff]
        %s4115 = scalar_lea.vmem [#allocation3], 423
        %v4116 = vld [vmem:[%s4115] ss:$2 sm:$0xff]
        %s4117 = scalar_lea.vmem [#allocation3], 439
        %v4118 = vld [vmem:[%s4117] ss:$2 sm:$0xff]
        %s4119 = scalar_lea.vmem [#allocation3], 455
        %v4120 = vld [vmem:[%s4119] ss:$2 sm:$0xff]
        %s4121 = scalar_lea.vmem [#allocation3], 471
        %v4122 = vld [vmem:[%s4121] ss:$2 sm:$0xff]
        %s4123 = scalar_lea.vmem [#allocation3], 487
        %v4124 = vld [vmem:[%s4123] ss:$2 sm:$0xff]
        %s4125 = scalar_lea.vmem [#allocation3], 503
        %v4126 = vld [vmem:[%s4125] ss:$2 sm:$0xff]
        %v4127 = vpack.c.bf16 %v4066, %v4064
        %v4128 = vpack.c.bf16 %v4070, %v4068
        %v4129 = vpack.c.bf16 %v4074, %v4072
        %v4130 = vpack.c.bf16 %v4078, %v4076
        %v4131 = vpack.c.bf16 %v4082, %v4080
        %v4132 = vpack.c.bf16 %v4086, %v4084
        %v4133 = vpack.c.bf16 %v4090, %v4088
        %v4134 = vpack.c.bf16 %v4094, %v4092
        %v4135 = vpack.c.bf16 %v4098, %v4096
        %v4136 = vpack.c.bf16 %v4102, %v4100
        %v4137 = vpack.c.bf16 %v4106, %v4104
        %v4138 = vpack.c.bf16 %v4110, %v4108
        %v4139 = vpack.c.bf16 %v4114, %v4112
        %v4140 = vpack.c.bf16 %v4118, %v4116
        %v4141 = vpack.c.bf16 %v4122, %v4120
        %v4142 = vpack.c.bf16 %v4126, %v4124
        %s4143 = scalar_lea.vmem [#allocation3], 8
        %v4144 = vld [vmem:[%s4143] ss:$2 sm:$0xff]
        %s4145 = scalar_lea.vmem [#allocation3], 24
        %v4146 = vld [vmem:[%s4145] ss:$2 sm:$0xff]
        %s4147 = scalar_lea.vmem [#allocation3], 40
        %v4148 = vld [vmem:[%s4147] ss:$2 sm:$0xff]
        %s4149 = scalar_lea.vmem [#allocation3], 56
        %v4150 = vld [vmem:[%s4149] ss:$2 sm:$0xff]
        %s4151 = scalar_lea.vmem [#allocation3], 72
        %v4152 = vld [vmem:[%s4151] ss:$2 sm:$0xff]
        %s4153 = scalar_lea.vmem [#allocation3], 88
        %v4154 = vld [vmem:[%s4153] ss:$2 sm:$0xff]
        %s4155 = scalar_lea.vmem [#allocation3], 104
        %v4156 = vld [vmem:[%s4155] ss:$2 sm:$0xff]
        %s4157 = scalar_lea.vmem [#allocation3], 120
        %v4158 = vld [vmem:[%s4157] ss:$2 sm:$0xff]
        %s4159 = scalar_lea.vmem [#allocation3], 136
        %v4160 = vld [vmem:[%s4159] ss:$2 sm:$0xff]
        %s4161 = scalar_lea.vmem [#allocation3], 152
        %v4162 = vld [vmem:[%s4161] ss:$2 sm:$0xff]
        %s4163 = scalar_lea.vmem [#allocation3], 168
        %v4164 = vld [vmem:[%s4163] ss:$2 sm:$0xff]
        %s4165 = scalar_lea.vmem [#allocation3], 184
        %v4166 = vld [vmem:[%s4165] ss:$2 sm:$0xff]
        %s4167 = scalar_lea.vmem [#allocation3], 200
        %v4168 = vld [vmem:[%s4167] ss:$2 sm:$0xff]
        %s4169 = scalar_lea.vmem [#allocation3], 216
        %v4170 = vld [vmem:[%s4169] ss:$2 sm:$0xff]
        %s4171 = scalar_lea.vmem [#allocation3], 232
        %v4172 = vld [vmem:[%s4171] ss:$2 sm:$0xff]
        %s4173 = scalar_lea.vmem [#allocation3], 248
        %v4174 = vld [vmem:[%s4173] ss:$2 sm:$0xff]
        %s4175 = scalar_lea.vmem [#allocation3], 264
        %v4176 = vld [vmem:[%s4175] ss:$2 sm:$0xff]
        %s4177 = scalar_lea.vmem [#allocation3], 280
        %v4178 = vld [vmem:[%s4177] ss:$2 sm:$0xff]
        %s4179 = scalar_lea.vmem [#allocation3], 296
        %v4180 = vld [vmem:[%s4179] ss:$2 sm:$0xff]
        %s4181 = scalar_lea.vmem [#allocation3], 312
        %v4182 = vld [vmem:[%s4181] ss:$2 sm:$0xff]
        %s4183 = scalar_lea.vmem [#allocation3], 328
        %v4184 = vld [vmem:[%s4183] ss:$2 sm:$0xff]
        %s4185 = scalar_lea.vmem [#allocation3], 344
        %v4186 = vld [vmem:[%s4185] ss:$2 sm:$0xff]
        %s4187 = scalar_lea.vmem [#allocation3], 360
        %v4188 = vld [vmem:[%s4187] ss:$2 sm:$0xff]
        %s4189 = scalar_lea.vmem [#allocation3], 376
        %v4190 = vld [vmem:[%s4189] ss:$2 sm:$0xff]
        %s4191 = scalar_lea.vmem [#allocation3], 392
        %v4192 = vld [vmem:[%s4191] ss:$2 sm:$0xff]
        %s4193 = scalar_lea.vmem [#allocation3], 408
        %v4194 = vld [vmem:[%s4193] ss:$2 sm:$0xff]
        %s4195 = scalar_lea.vmem [#allocation3], 424
        %v4196 = vld [vmem:[%s4195] ss:$2 sm:$0xff]
        %s4197 = scalar_lea.vmem [#allocation3], 440
        %v4198 = vld [vmem:[%s4197] ss:$2 sm:$0xff]
        %s4199 = scalar_lea.vmem [#allocation3], 456
        %v4200 = vld [vmem:[%s4199] ss:$2 sm:$0xff]
        %s4201 = scalar_lea.vmem [#allocation3], 472
        %v4202 = vld [vmem:[%s4201] ss:$2 sm:$0xff]
        %s4203 = scalar_lea.vmem [#allocation3], 488
        %v4204 = vld [vmem:[%s4203] ss:$2 sm:$0xff]
        %s4205 = scalar_lea.vmem [#allocation3], 504
        %v4206 = vld [vmem:[%s4205] ss:$2 sm:$0xff]
        %v4207 = vpack.c.bf16 %v4146, %v4144
        %v4208 = vpack.c.bf16 %v4150, %v4148
        %v4209 = vpack.c.bf16 %v4154, %v4152
        %v4210 = vpack.c.bf16 %v4158, %v4156
        %v4211 = vpack.c.bf16 %v4162, %v4160
        %v4212 = vpack.c.bf16 %v4166, %v4164
        %v4213 = vpack.c.bf16 %v4170, %v4168
        %v4214 = vpack.c.bf16 %v4174, %v4172
        %v4215 = vpack.c.bf16 %v4178, %v4176
        %v4216 = vpack.c.bf16 %v4182, %v4180
        %v4217 = vpack.c.bf16 %v4186, %v4184
        %v4218 = vpack.c.bf16 %v4190, %v4188
        %v4219 = vpack.c.bf16 %v4194, %v4192
        %v4220 = vpack.c.bf16 %v4198, %v4196
        %v4221 = vpack.c.bf16 %v4202, %v4200
        %v4222 = vpack.c.bf16 %v4206, %v4204
        %s4223 = scalar_lea.vmem [#allocation3], 9
        %v4224 = vld [vmem:[%s4223] ss:$2 sm:$0xff]
        %s4225 = scalar_lea.vmem [#allocation3], 25
        %v4226 = vld [vmem:[%s4225] ss:$2 sm:$0xff]
        %s4227 = scalar_lea.vmem [#allocation3], 41
        %v4228 = vld [vmem:[%s4227] ss:$2 sm:$0xff]
        %s4229 = scalar_lea.vmem [#allocation3], 57
        %v4230 = vld [vmem:[%s4229] ss:$2 sm:$0xff]
        %s4231 = scalar_lea.vmem [#allocation3], 73
        %v4232 = vld [vmem:[%s4231] ss:$2 sm:$0xff]
        %s4233 = scalar_lea.vmem [#allocation3], 89
        %v4234 = vld [vmem:[%s4233] ss:$2 sm:$0xff]
        %s4235 = scalar_lea.vmem [#allocation3], 105
        %v4236 = vld [vmem:[%s4235] ss:$2 sm:$0xff]
        %s4237 = scalar_lea.vmem [#allocation3], 121
        %v4238 = vld [vmem:[%s4237] ss:$2 sm:$0xff]
        %s4239 = scalar_lea.vmem [#allocation3], 137
        %v4240 = vld [vmem:[%s4239] ss:$2 sm:$0xff]
        %s4241 = scalar_lea.vmem [#allocation3], 153
        %v4242 = vld [vmem:[%s4241] ss:$2 sm:$0xff]
        %s4243 = scalar_lea.vmem [#allocation3], 169
        %v4244 = vld [vmem:[%s4243] ss:$2 sm:$0xff]
        %s4245 = scalar_lea.vmem [#allocation3], 185
        %v4246 = vld [vmem:[%s4245] ss:$2 sm:$0xff]
        %s4247 = scalar_lea.vmem [#allocation3], 201
        %v4248 = vld [vmem:[%s4247] ss:$2 sm:$0xff]
        %s4249 = scalar_lea.vmem [#allocation3], 217
        %v4250 = vld [vmem:[%s4249] ss:$2 sm:$0xff]
        %s4251 = scalar_lea.vmem [#allocation3], 233
        %v4252 = vld [vmem:[%s4251] ss:$2 sm:$0xff]
        %s4253 = scalar_lea.vmem [#allocation3], 249
        %v4254 = vld [vmem:[%s4253] ss:$2 sm:$0xff]
        %s4255 = scalar_lea.vmem [#allocation3], 265
        %v4256 = vld [vmem:[%s4255] ss:$2 sm:$0xff]
        %s4257 = scalar_lea.vmem [#allocation3], 281
        %v4258 = vld [vmem:[%s4257] ss:$2 sm:$0xff]
        %s4259 = scalar_lea.vmem [#allocation3], 297
        %v4260 = vld [vmem:[%s4259] ss:$2 sm:$0xff]
        %s4261 = scalar_lea.vmem [#allocation3], 313
        %v4262 = vld [vmem:[%s4261] ss:$2 sm:$0xff]
        %s4263 = scalar_lea.vmem [#allocation3], 329
        %v4264 = vld [vmem:[%s4263] ss:$2 sm:$0xff]
        %s4265 = scalar_lea.vmem [#allocation3], 345
        %v4266 = vld [vmem:[%s4265] ss:$2 sm:$0xff]
        %s4267 = scalar_lea.vmem [#allocation3], 361
        %v4268 = vld [vmem:[%s4267] ss:$2 sm:$0xff]
        %s4269 = scalar_lea.vmem [#allocation3], 377
        %v4270 = vld [vmem:[%s4269] ss:$2 sm:$0xff]
        %s4271 = scalar_lea.vmem [#allocation3], 393
        %v4272 = vld [vmem:[%s4271] ss:$2 sm:$0xff]
        %s4273 = scalar_lea.vmem [#allocation3], 409
        %v4274 = vld [vmem:[%s4273] ss:$2 sm:$0xff]
        %s4275 = scalar_lea.vmem [#allocation3], 425
        %v4276 = vld [vmem:[%s4275] ss:$2 sm:$0xff]
        %s4277 = scalar_lea.vmem [#allocation3], 441
        %v4278 = vld [vmem:[%s4277] ss:$2 sm:$0xff]
        %s4279 = scalar_lea.vmem [#allocation3], 457
        %v4280 = vld [vmem:[%s4279] ss:$2 sm:$0xff]
        %s4281 = scalar_lea.vmem [#allocation3], 473
        %v4282 = vld [vmem:[%s4281] ss:$2 sm:$0xff]
        %s4283 = scalar_lea.vmem [#allocation3], 489
        %v4284 = vld [vmem:[%s4283] ss:$2 sm:$0xff]
        %s4285 = scalar_lea.vmem [#allocation3], 505
        %v4286 = vld [vmem:[%s4285] ss:$2 sm:$0xff]
        %v4287 = vpack.c.bf16 %v4226, %v4224
        %v4288 = vpack.c.bf16 %v4230, %v4228
        %v4289 = vpack.c.bf16 %v4234, %v4232
        %v4290 = vpack.c.bf16 %v4238, %v4236
        %v4291 = vpack.c.bf16 %v4242, %v4240
        %v4292 = vpack.c.bf16 %v4246, %v4244
        %v4293 = vpack.c.bf16 %v4250, %v4248
        %v4294 = vpack.c.bf16 %v4254, %v4252
        %v4295 = vpack.c.bf16 %v4258, %v4256
        %v4296 = vpack.c.bf16 %v4262, %v4260
        %v4297 = vpack.c.bf16 %v4266, %v4264
        %v4298 = vpack.c.bf16 %v4270, %v4268
        %v4299 = vpack.c.bf16 %v4274, %v4272
        %v4300 = vpack.c.bf16 %v4278, %v4276
        %v4301 = vpack.c.bf16 %v4282, %v4280
        %v4302 = vpack.c.bf16 %v4286, %v4284
        %s4303 = scalar_lea.vmem [#allocation3], 10
        %v4304 = vld [vmem:[%s4303] ss:$2 sm:$0xff]
        %s4305 = scalar_lea.vmem [#allocation3], 26
        %v4306 = vld [vmem:[%s4305] ss:$2 sm:$0xff]
        %s4307 = scalar_lea.vmem [#allocation3], 42
        %v4308 = vld [vmem:[%s4307] ss:$2 sm:$0xff]
        %s4309 = scalar_lea.vmem [#allocation3], 58
        %v4310 = vld [vmem:[%s4309] ss:$2 sm:$0xff]
        %s4311 = scalar_lea.vmem [#allocation3], 74
        %v4312 = vld [vmem:[%s4311] ss:$2 sm:$0xff]
        %s4313 = scalar_lea.vmem [#allocation3], 90
        %v4314 = vld [vmem:[%s4313] ss:$2 sm:$0xff]
        %s4315 = scalar_lea.vmem [#allocation3], 106
        %v4316 = vld [vmem:[%s4315] ss:$2 sm:$0xff]
        %s4317 = scalar_lea.vmem [#allocation3], 122
        %v4318 = vld [vmem:[%s4317] ss:$2 sm:$0xff]
        %s4319 = scalar_lea.vmem [#allocation3], 138
        %v4320 = vld [vmem:[%s4319] ss:$2 sm:$0xff]
        %s4321 = scalar_lea.vmem [#allocation3], 154
        %v4322 = vld [vmem:[%s4321] ss:$2 sm:$0xff]
        %s4323 = scalar_lea.vmem [#allocation3], 170
        %v4324 = vld [vmem:[%s4323] ss:$2 sm:$0xff]
        %s4325 = scalar_lea.vmem [#allocation3], 186
        %v4326 = vld [vmem:[%s4325] ss:$2 sm:$0xff]
        %s4327 = scalar_lea.vmem [#allocation3], 202
        %v4328 = vld [vmem:[%s4327] ss:$2 sm:$0xff]
        %s4329 = scalar_lea.vmem [#allocation3], 218
        %v4330 = vld [vmem:[%s4329] ss:$2 sm:$0xff]
        %s4331 = scalar_lea.vmem [#allocation3], 234
        %v4332 = vld [vmem:[%s4331] ss:$2 sm:$0xff]
        %s4333 = scalar_lea.vmem [#allocation3], 250
        %v4334 = vld [vmem:[%s4333] ss:$2 sm:$0xff]
        %s4335 = scalar_lea.vmem [#allocation3], 266
        %v4336 = vld [vmem:[%s4335] ss:$2 sm:$0xff]
        %s4337 = scalar_lea.vmem [#allocation3], 282
        %v4338 = vld [vmem:[%s4337] ss:$2 sm:$0xff]
        %s4339 = scalar_lea.vmem [#allocation3], 298
        %v4340 = vld [vmem:[%s4339] ss:$2 sm:$0xff]
        %s4341 = scalar_lea.vmem [#allocation3], 314
        %v4342 = vld [vmem:[%s4341] ss:$2 sm:$0xff]
        %s4343 = scalar_lea.vmem [#allocation3], 330
        %v4344 = vld [vmem:[%s4343] ss:$2 sm:$0xff]
        %s4345 = scalar_lea.vmem [#allocation3], 346
        %v4346 = vld [vmem:[%s4345] ss:$2 sm:$0xff]
        %s4347 = scalar_lea.vmem [#allocation3], 362
        %v4348 = vld [vmem:[%s4347] ss:$2 sm:$0xff]
        %s4349 = scalar_lea.vmem [#allocation3], 378
        %v4350 = vld [vmem:[%s4349] ss:$2 sm:$0xff]
        %s4351 = scalar_lea.vmem [#allocation3], 394
        %v4352 = vld [vmem:[%s4351] ss:$2 sm:$0xff]
        %s4353 = scalar_lea.vmem [#allocation3], 410
        %v4354 = vld [vmem:[%s4353] ss:$2 sm:$0xff]
        %s4355 = scalar_lea.vmem [#allocation3], 426
        %v4356 = vld [vmem:[%s4355] ss:$2 sm:$0xff]
        %s4357 = scalar_lea.vmem [#allocation3], 442
        %v4358 = vld [vmem:[%s4357] ss:$2 sm:$0xff]
        %s4359 = scalar_lea.vmem [#allocation3], 458
        %v4360 = vld [vmem:[%s4359] ss:$2 sm:$0xff]
        %s4361 = scalar_lea.vmem [#allocation3], 474
        %v4362 = vld [vmem:[%s4361] ss:$2 sm:$0xff]
        %s4363 = scalar_lea.vmem [#allocation3], 490
        %v4364 = vld [vmem:[%s4363] ss:$2 sm:$0xff]
        %s4365 = scalar_lea.vmem [#allocation3], 506
        %v4366 = vld [vmem:[%s4365] ss:$2 sm:$0xff]
        %v4367 = vpack.c.bf16 %v4306, %v4304
        %v4368 = vpack.c.bf16 %v4310, %v4308
        %v4369 = vpack.c.bf16 %v4314, %v4312
        %v4370 = vpack.c.bf16 %v4318, %v4316
        %v4371 = vpack.c.bf16 %v4322, %v4320
        %v4372 = vpack.c.bf16 %v4326, %v4324
        %v4373 = vpack.c.bf16 %v4330, %v4328
        %v4374 = vpack.c.bf16 %v4334, %v4332
        %v4375 = vpack.c.bf16 %v4338, %v4336
        %v4376 = vpack.c.bf16 %v4342, %v4340
        %v4377 = vpack.c.bf16 %v4346, %v4344
        %v4378 = vpack.c.bf16 %v4350, %v4348
        %v4379 = vpack.c.bf16 %v4354, %v4352
        %v4380 = vpack.c.bf16 %v4358, %v4356
        %v4381 = vpack.c.bf16 %v4362, %v4360
        %v4382 = vpack.c.bf16 %v4366, %v4364
        %s4383 = scalar_lea.vmem %s1, 96
        %v4384 = vld [vmem:[%s4383] sm:$0xf]
        %v4385 = vld [vmem:[%s4383 + $0x4] sm:$0xf]
        %v4386 = vld [vmem:[%s4383 + $0x8] sm:$0xf]
        %v4387 = vld [vmem:[%s4383 + $0xc] sm:$0xf]
        %v4388 = vld [vmem:[%s4383 + $0x10] sm:$0xf]
        %v4389 = vld [vmem:[%s4383 + $0x14] sm:$0xf]
        %v4390 = vld [vmem:[%s4383 + $0x18] sm:$0xf]
        %v4391 = vld [vmem:[%s4383 + $0x1c] sm:$0xf]
        %s4392 = scalar_lea.vmem %s1, 128
        %v4393 = vld [vmem:[%s4392] sm:$0xf]
        %v4394 = vld [vmem:[%s4392 + $0x4] sm:$0xf]
        %v4395 = vld [vmem:[%s4392 + $0x8] sm:$0xf]
        %v4396 = vld [vmem:[%s4392 + $0xc] sm:$0xf]
        %v4397 = vld [vmem:[%s4392 + $0x10] sm:$0xf]
        %v4398 = vld [vmem:[%s4392 + $0x14] sm:$0xf]
        %v4399 = vld [vmem:[%s4392 + $0x18] sm:$0xf]
        %v4400 = vld [vmem:[%s4392 + $0x1c] sm:$0xf]
        %s4401 = scalar_lea.vmem %s1, 160
        %v4402 = vld [vmem:[%s4401] sm:$0xf]
        %v4403 = vld [vmem:[%s4401 + $0x4] sm:$0xf]
        %v4404 = vld [vmem:[%s4401 + $0x8] sm:$0xf]
        %v4405 = vld [vmem:[%s4401 + $0xc] sm:$0xf]
        %v4406 = vld [vmem:[%s4401 + $0x10] sm:$0xf]
        %v4407 = vld [vmem:[%s4401 + $0x14] sm:$0xf]
        %v4408 = vld [vmem:[%s4401 + $0x18] sm:$0xf]
        %v4409 = vld [vmem:[%s4401 + $0x1c] sm:$0xf]
        %v4418 = vunpack.c.l.b16 %v4393
        %v4419 = vunpack.c.l.b16 %v4394
        %v4420 = vunpack.c.l.b16 %v4395
        %v4421 = vunpack.c.l.b16 %v4396
        %v4422 = vunpack.c.l.b16 %v4397
        %v4423 = vunpack.c.l.b16 %v4398
        %v4424 = vunpack.c.l.b16 %v4399
        %v4425 = vunpack.c.l.b16 %v4400
        %v4426 = vpack.c.b16 %v4419, %v4418
        %v4427 = vpack.c.b16 %v4421, %v4420
        %v4428 = vpack.c.b16 %v4423, %v4422
        %v4429 = vpack.c.b16 %v4425, %v4424
        %v4435 = vsel %vm358, %v4207, 0
        %v4438 = vsel %vm358, %v4208, 0
        %v4441 = vsel %vm358, %v4209, 0
        %v4444 = vsel %vm358, %v4210, 0
        %v4447 = vsel %vm358, %v4211, 0
        %v4450 = vsel %vm358, %v4212, 0
        %v4453 = vsel %vm358, %v4213, 0
        %v4456 = vsel %vm358, %v4214, 0
        %v4459 = vsel %vm358, %v4215, 0
        %v4462 = vsel %vm358, %v4216, 0
        %v4465 = vsel %vm358, %v4217, 0
        %v4468 = vsel %vm358, %v4218, 0
        %v4471 = vsel %vm358, %v4219, 0
        %v4474 = vsel %vm358, %v4220, 0
        %v4477 = vsel %vm358, %v4221, 0
        %v4480 = vsel %vm358, %v4222, 0
        %4482 = vmatprep.subr.bf16.mxu0 0
        %4483 = vmatpush1.bf16.msra.mxu0 %v4426
        %4484 = vmatprep.subr.bf16.mxu0 0
        %4485 = vmatpush1.bf16.msra.mxu0 %v4427
        %4486 = vmatprep.subr.bf16.mxu0 0
        %4487 = vmatpush1.bf16.msra.mxu0 %v4428
        %4488 = vmatprep.subr.bf16.mxu0 0
        %4489 = vmatpush1.bf16.msra.mxu0 %v4429
        %4490 = vmatprep.subr.bf16.mxu0 0
        %4491 = vmatpush1.bf16.msra.mxu0 0
        %4492 = vmatprep.subr.bf16.mxu0 0
        %4493 = vmatpush1.bf16.msra.mxu0 0
        %4494 = vmatprep.subr.bf16.mxu0 0
        %4495 = vmatpush1.bf16.msra.mxu0 0
        %4496 = vmatprep.subr.bf16.mxu0 0
        %4497 = vmatpush1.bf16.msra.mxu0 0
        %4498 = vmatprep.subr.bf16.mxu0 0
        %4499 = vmatpush1.bf16.msra.mxu0 0
        %4500 = vmatprep.subr.bf16.mxu0 0
        %4501 = vmatpush1.bf16.msra.mxu0 0
        %4502 = vmatprep.subr.bf16.mxu0 0
        %4503 = vmatpush1.bf16.msra.mxu0 0
        %4504 = vmatprep.subr.bf16.mxu0 0
        %4505 = vmatpush1.bf16.msra.mxu0 0
        %4506 = vmatprep.subr.bf16.mxu0 0
        %4507 = vmatpush1.bf16.msra.mxu0 0
        %4508 = vmatprep.subr.bf16.mxu0 0
        %4509 = vmatpush1.bf16.msra.mxu0 0
        %4510 = vmatprep.subr.bf16.mxu0 0
        %4511 = vmatpush1.bf16.msra.mxu0 0
        %4512 = vmatprep.subr.bf16.mxu0 0
        %4513 = vmatpush1.bf16.msra.mxu0 0
        %4514 = vmatprep.mubr.bf16.mxu0 0
        %4515 = vmatmul.mubr.bf16.gmra.mrb[0].mxu0 %v4435
        %v4516 = vpop.f32.mrb[0].mxu0
        %v4517 = vadd.f32 0.0, %v4516
        %v4518 = vpop.f32.mrb[0].mxu0
        %v4519 = vpop.f32.mrb[0].mxu0
        %v4520 = vadd.f32 0.0, %v4519
        %v4521 = vpop.f32.mrb[0].mxu0
        %4522 = vmatprep.mubr.bf16.mxu0 0
        %4523 = vmatmul.mubr.bf16.gmra.mrb[0].mxu0 %v4438
        %v4524 = vpop.f32.mrb[0].mxu0
        %v4525 = vadd.f32 0.0, %v4524
        %v4526 = vpop.f32.mrb[0].mxu0
        %v4527 = vpop.f32.mrb[0].mxu0
        %v4528 = vadd.f32 0.0, %v4527
        %v4529 = vpop.f32.mrb[0].mxu0
        %4530 = vmatprep.mubr.bf16.mxu0 0
        %4531 = vmatmul.mubr.bf16.gmra.mrb[0].mxu0 %v4441
        %v4532 = vpop.f32.mrb[0].mxu0
        %v4533 = vadd.f32 0.0, %v4532
        %v4534 = vpop.f32.mrb[0].mxu0
        %v4535 = vpop.f32.mrb[0].mxu0
        %v4536 = vadd.f32 0.0, %v4535
        %v4537 = vpop.f32.mrb[0].mxu0
        %4538 = vmatprep.mubr.bf16.mxu0 0
        %4539 = vmatmul.mubr.bf16.gmra.mrb[0].mxu0 %v4444
        %v4540 = vpop.f32.mrb[0].mxu0
        %v4541 = vadd.f32 0.0, %v4540
        %v4542 = vpop.f32.mrb[0].mxu0
        %v4543 = vpop.f32.mrb[0].mxu0
        %v4544 = vadd.f32 0.0, %v4543
        %v4545 = vpop.f32.mrb[0].mxu0
        %4546 = vmatprep.mubr.bf16.mxu0 0
        %4547 = vmatmul.mubr.bf16.gmra.mrb[0].mxu0 %v4447
        %v4548 = vpop.f32.mrb[0].mxu0
        %v4549 = vadd.f32 0.0, %v4548
        %v4550 = vpop.f32.mrb[0].mxu0
        %v4551 = vpop.f32.mrb[0].mxu0
        %v4552 = vadd.f32 0.0, %v4551
        %v4553 = vpop.f32.mrb[0].mxu0
        %4554 = vmatprep.mubr.bf16.mxu0 0
        %4555 = vmatmul.mubr.bf16.gmra.mrb[0].mxu0 %v4450
        %v4556 = vpop.f32.mrb[0].mxu0
        %v4557 = vadd.f32 0.0, %v4556
        %v4558 = vpop.f32.mrb[0].mxu0
        %v4559 = vpop.f32.mrb[0].mxu0
        %v4560 = vadd.f32 0.0, %v4559
        %v4561 = vpop.f32.mrb[0].mxu0
        %4562 = vmatprep.mubr.bf16.mxu0 0
        %4563 = vmatmul.mubr.bf16.gmra.mrb[0].mxu0 %v4453
        %v4564 = vpop.f32.mrb[0].mxu0
        %v4565 = vadd.f32 0.0, %v4564
        %v4566 = vpop.f32.mrb[0].mxu0
        %v4567 = vpop.f32.mrb[0].mxu0
        %v4568 = vadd.f32 0.0, %v4567
        %v4569 = vpop.f32.mrb[0].mxu0
        %4570 = vmatprep.mubr.bf16.mxu0 0
        %4571 = vmatmul.mubr.bf16.gmra.mrb[0].mxu0 %v4456
        %v4572 = vpop.f32.mrb[0].mxu0
        %v4573 = vadd.f32 0.0, %v4572
        %v4574 = vpop.f32.mrb[0].mxu0
        %v4575 = vpop.f32.mrb[0].mxu0
        %v4576 = vadd.f32 0.0, %v4575
        %v4577 = vpop.f32.mrb[0].mxu0
        %4578 = vmatprep.mubr.bf16.mxu0 0
        %4579 = vmatmul.mubr.bf16.gmra.mrb[0].mxu0 %v4459
        %v4580 = vpop.f32.mrb[0].mxu0
        %v4581 = vadd.f32 0.0, %v4580
        %v4582 = vpop.f32.mrb[0].mxu0
        %v4583 = vpop.f32.mrb[0].mxu0
        %v4584 = vadd.f32 0.0, %v4583
        %v4585 = vpop.f32.mrb[0].mxu0
        %4586 = vmatprep.mubr.bf16.mxu0 0
        %4587 = vmatmul.mubr.bf16.gmra.mrb[0].mxu0 %v4462
        %v4588 = vpop.f32.mrb[0].mxu0
        %v4589 = vadd.f32 0.0, %v4588
        %v4590 = vpop.f32.mrb[0].mxu0
        %v4591 = vpop.f32.mrb[0].mxu0
        %v4592 = vadd.f32 0.0, %v4591
        %v4593 = vpop.f32.mrb[0].mxu0
        %4594 = vmatprep.mubr.bf16.mxu0 0
        %4595 = vmatmul.mubr.bf16.gmra.mrb[0].mxu0 %v4465
        %v4596 = vpop.f32.mrb[0].mxu0
        %v4597 = vadd.f32 0.0, %v4596
        %v4598 = vpop.f32.mrb[0].mxu0
        %v4599 = vpop.f32.mrb[0].mxu0
        %v4600 = vadd.f32 0.0, %v4599
        %v4601 = vpop.f32.mrb[0].mxu0
        %4602 = vmatprep.mubr.bf16.mxu0 0
        %4603 = vmatmul.mubr.bf16.gmra.mrb[0].mxu0 %v4468
        %v4604 = vpop.f32.mrb[0].mxu0
        %v4605 = vadd.f32 0.0, %v4604
        %v4606 = vpop.f32.mrb[0].mxu0
        %v4607 = vpop.f32.mrb[0].mxu0
        %v4608 = vadd.f32 0.0, %v4607
        %v4609 = vpop.f32.mrb[0].mxu0
        %4610 = vmatprep.mubr.bf16.mxu0 0
        %4611 = vmatmul.mubr.bf16.gmra.mrb[0].mxu0 %v4471
        %v4612 = vpop.f32.mrb[0].mxu0
        %v4613 = vadd.f32 0.0, %v4612
        %v4614 = vpop.f32.mrb[0].mxu0
        %v4615 = vpop.f32.mrb[0].mxu0
        %v4616 = vadd.f32 0.0, %v4615
        %v4617 = vpop.f32.mrb[0].mxu0
        %4618 = vmatprep.mubr.bf16.mxu0 0
        %4619 = vmatmul.mubr.bf16.gmra.mrb[0].mxu0 %v4474
        %v4620 = vpop.f32.mrb[0].mxu0
        %v4621 = vadd.f32 0.0, %v4620
        %v4622 = vpop.f32.mrb[0].mxu0
        %v4623 = vpop.f32.mrb[0].mxu0
        %v4624 = vadd.f32 0.0, %v4623
        %v4625 = vpop.f32.mrb[0].mxu0
        %4626 = vmatprep.mubr.bf16.mxu0 0
        %4627 = vmatmul.mubr.bf16.gmra.mrb[0].mxu0 %v4477
        %v4628 = vpop.f32.mrb[0].mxu0
        %v4629 = vadd.f32 0.0, %v4628
        %v4630 = vpop.f32.mrb[0].mxu0
        %v4631 = vpop.f32.mrb[0].mxu0
        %v4632 = vadd.f32 0.0, %v4631
        %v4633 = vpop.f32.mrb[0].mxu0
        %4634 = vmatprep.mubr.bf16.mxu0 0
        %4635 = vmatmul.mubr.bf16.gmra.mrb[0].mxu0 %v4480
        %v4636 = vpop.f32.mrb[0].mxu0
        %v4637 = vadd.f32 0.0, %v4636
        %v4638 = vpop.f32.mrb[0].mxu0
        %v4639 = vpop.f32.mrb[0].mxu0
        %v4640 = vadd.f32 0.0, %v4639
        %v4641 = vpop.f32.mrb[0].mxu0
        %4642 = vdwg.mxu0
        %v4651 = vunpack.c.l.b16 %v4384
        %v4652 = vunpack.c.l.b16 %v4385
        %v4653 = vunpack.c.l.b16 %v4386
        %v4654 = vunpack.c.l.b16 %v4387
        %v4655 = vunpack.c.l.b16 %v4388
        %v4656 = vunpack.c.l.b16 %v4389
        %v4657 = vunpack.c.l.b16 %v4390
        %v4658 = vunpack.c.l.b16 %v4391
        %v4659 = vpack.c.b16 %v4652, %v4651
        %v4660 = vpack.c.b16 %v4654, %v4653
        %v4661 = vpack.c.b16 %v4656, %v4655
        %v4662 = vpack.c.b16 %v4658, %v4657
        %v4668 = vsel %vm358, %v4127, 0
        %v4671 = vsel %vm358, %v4128, 0
        %v4674 = vsel %vm358, %v4129, 0
        %v4677 = vsel %vm358, %v4130, 0
        %v4680 = vsel %vm358, %v4131, 0
        %v4683 = vsel %vm358, %v4132, 0
        %v4686 = vsel %vm358, %v4133, 0
        %v4689 = vsel %vm358, %v4134, 0
        %v4692 = vsel %vm358, %v4135, 0
        %v4695 = vsel %vm358, %v4136, 0
        %v4698 = vsel %vm358, %v4137, 0
        %v4701 = vsel %vm358, %v4138, 0
        %v4704 = vsel %vm358, %v4139, 0
        %v4707 = vsel %vm358, %v4140, 0
        %v4710 = vsel %vm358, %v4141, 0
        %v4713 = vsel %vm358, %v4142, 0
        %4715 = vmatprep.subr.bf16.mxu0 0
        %4716 = vmatpush1.bf16.msra.mxu0 %v4659
        %4717 = vmatprep.subr.bf16.mxu0 0
        %4718 = vmatpush1.bf16.msra.mxu0 %v4660
        %4719 = vmatprep.subr.bf16.mxu0 0
        %4720 = vmatpush1.bf16.msra.mxu0 %v4661
        %4721 = vmatprep.subr.bf16.mxu0 0
        %4722 = vmatpush1.bf16.msra.mxu0 %v4662
        %4723 = vmatprep.subr.bf16.mxu0 0
        %4724 = vmatpush1.bf16.msra.mxu0 0
        %4725 = vmatprep.subr.bf16.mxu0 0
        %4726 = vmatpush1.bf16.msra.mxu0 0
        %4727 = vmatprep.subr.bf16.mxu0 0
        %4728 = vmatpush1.bf16.msra.mxu0 0
        %4729 = vmatprep.subr.bf16.mxu0 0
        %4730 = vmatpush1.bf16.msra.mxu0 0
        %4731 = vmatprep.subr.bf16.mxu0 0
        %4732 = vmatpush1.bf16.msra.mxu0 0
        %4733 = vmatprep.subr.bf16.mxu0 0
        %4734 = vmatpush1.bf16.msra.mxu0 0
        %4735 = vmatprep.subr.bf16.mxu0 0
        %4736 = vmatpush1.bf16.msra.mxu0 0
        %4737 = vmatprep.subr.bf16.mxu0 0
        %4738 = vmatpush1.bf16.msra.mxu0 0
        %4739 = vmatprep.subr.bf16.mxu0 0
        %4740 = vmatpush1.bf16.msra.mxu0 0
        %4741 = vmatprep.subr.bf16.mxu0 0
        %4742 = vmatpush1.bf16.msra.mxu0 0
        %4743 = vmatprep.subr.bf16.mxu0 0
        %4744 = vmatpush1.bf16.msra.mxu0 0
        %4745 = vmatprep.subr.bf16.mxu0 0
        %4746 = vmatpush1.bf16.msra.mxu0 0
        %4747 = vmatprep.mubr.bf16.mxu0 0
        %4748 = vmatmul.mubr.bf16.gmra.mrb[0].mxu0 %v4668
        %v4749 = vpop.f32.mrb[0].mxu0
        %v4750 = vadd.f32 %v4517, %v4749
        %v4751 = vpop.f32.mrb[0].mxu0
        %v4752 = vpop.f32.mrb[0].mxu0
        %v4753 = vadd.f32 %v4520, %v4752
        %v4754 = vpop.f32.mrb[0].mxu0
        %4755 = vmatprep.mubr.bf16.mxu0 0
        %4756 = vmatmul.mubr.bf16.gmra.mrb[0].mxu0 %v4671
        %v4757 = vpop.f32.mrb[0].mxu0
        %v4758 = vadd.f32 %v4525, %v4757
        %v4759 = vpop.f32.mrb[0].mxu0
        %v4760 = vpop.f32.mrb[0].mxu0
        %v4761 = vadd.f32 %v4528, %v4760
        %v4762 = vpop.f32.mrb[0].mxu0
        %4763 = vmatprep.mubr.bf16.mxu0 0
        %4764 = vmatmul.mubr.bf16.gmra.mrb[0].mxu0 %v4674
        %v4765 = vpop.f32.mrb[0].mxu0
        %v4766 = vadd.f32 %v4533, %v4765
        %v4767 = vpop.f32.mrb[0].mxu0
        %v4768 = vpop.f32.mrb[0].mxu0
        %v4769 = vadd.f32 %v4536, %v4768
        %v4770 = vpop.f32.mrb[0].mxu0
        %4771 = vmatprep.mubr.bf16.mxu0 0
        %4772 = vmatmul.mubr.bf16.gmra.mrb[0].mxu0 %v4677
        %v4773 = vpop.f32.mrb[0].mxu0
        %v4774 = vadd.f32 %v4541, %v4773
        %v4775 = vpop.f32.mrb[0].mxu0
        %v4776 = vpop.f32.mrb[0].mxu0
        %v4777 = vadd.f32 %v4544, %v4776
        %v4778 = vpop.f32.mrb[0].mxu0
        %4779 = vmatprep.mubr.bf16.mxu0 0
        %4780 = vmatmul.mubr.bf16.gmra.mrb[0].mxu0 %v4680
        %v4781 = vpop.f32.mrb[0].mxu0
        %v4782 = vadd.f32 %v4549, %v4781
        %v4783 = vpop.f32.mrb[0].mxu0
        %v4784 = vpop.f32.mrb[0].mxu0
        %v4785 = vadd.f32 %v4552, %v4784
        %v4786 = vpop.f32.mrb[0].mxu0
        %4787 = vmatprep.mubr.bf16.mxu0 0
        %4788 = vmatmul.mubr.bf16.gmra.mrb[0].mxu0 %v4683
        %v4789 = vpop.f32.mrb[0].mxu0
        %v4790 = vadd.f32 %v4557, %v4789
        %v4791 = vpop.f32.mrb[0].mxu0
        %v4792 = vpop.f32.mrb[0].mxu0
        %v4793 = vadd.f32 %v4560, %v4792
        %v4794 = vpop.f32.mrb[0].mxu0
        %4795 = vmatprep.mubr.bf16.mxu0 0
        %4796 = vmatmul.mubr.bf16.gmra.mrb[0].mxu0 %v4686
        %v4797 = vpop.f32.mrb[0].mxu0
        %v4798 = vadd.f32 %v4565, %v4797
        %v4799 = vpop.f32.mrb[0].mxu0
        %v4800 = vpop.f32.mrb[0].mxu0
        %v4801 = vadd.f32 %v4568, %v4800
        %v4802 = vpop.f32.mrb[0].mxu0
        %4803 = vmatprep.mubr.bf16.mxu0 0
        %4804 = vmatmul.mubr.bf16.gmra.mrb[0].mxu0 %v4689
        %v4805 = vpop.f32.mrb[0].mxu0
        %v4806 = vadd.f32 %v4573, %v4805
        %v4807 = vpop.f32.mrb[0].mxu0
        %v4808 = vpop.f32.mrb[0].mxu0
        %v4809 = vadd.f32 %v4576, %v4808
        %v4810 = vpop.f32.mrb[0].mxu0
        %4811 = vmatprep.mubr.bf16.mxu0 0
        %4812 = vmatmul.mubr.bf16.gmra.mrb[0].mxu0 %v4692
        %v4813 = vpop.f32.mrb[0].mxu0
        %v4814 = vadd.f32 %v4581, %v4813
        %v4815 = vpop.f32.mrb[0].mxu0
        %v4816 = vpop.f32.mrb[0].mxu0
        %v4817 = vadd.f32 %v4584, %v4816
        %v4818 = vpop.f32.mrb[0].mxu0
        %4819 = vmatprep.mubr.bf16.mxu0 0
        %4820 = vmatmul.mubr.bf16.gmra.mrb[0].mxu0 %v4695
        %v4821 = vpop.f32.mrb[0].mxu0
        %v4822 = vadd.f32 %v4589, %v4821
        %v4823 = vpop.f32.mrb[0].mxu0
        %v4824 = vpop.f32.mrb[0].mxu0
        %v4825 = vadd.f32 %v4592, %v4824
        %v4826 = vpop.f32.mrb[0].mxu0
        %4827 = vmatprep.mubr.bf16.mxu0 0
        %4828 = vmatmul.mubr.bf16.gmra.mrb[0].mxu0 %v4698
        %v4829 = vpop.f32.mrb[0].mxu0
        %v4830 = vadd.f32 %v4597, %v4829
        %v4831 = vpop.f32.mrb[0].mxu0
        %v4832 = vpop.f32.mrb[0].mxu0
        %v4833 = vadd.f32 %v4600, %v4832
        %v4834 = vpop.f32.mrb[0].mxu0
        %4835 = vmatprep.mubr.bf16.mxu0 0
        %4836 = vmatmul.mubr.bf16.gmra.mrb[0].mxu0 %v4701
        %v4837 = vpop.f32.mrb[0].mxu0
        %v4838 = vadd.f32 %v4605, %v4837
        %v4839 = vpop.f32.mrb[0].mxu0
        %v4840 = vpop.f32.mrb[0].mxu0
        %v4841 = vadd.f32 %v4608, %v4840
        %v4842 = vpop.f32.mrb[0].mxu0
        %4843 = vmatprep.mubr.bf16.mxu0 0
        %4844 = vmatmul.mubr.bf16.gmra.mrb[0].mxu0 %v4704
        %v4845 = vpop.f32.mrb[0].mxu0
        %v4846 = vadd.f32 %v4613, %v4845
        %v4847 = vpop.f32.mrb[0].mxu0
        %v4848 = vpop.f32.mrb[0].mxu0
        %v4849 = vadd.f32 %v4616, %v4848
        %v4850 = vpop.f32.mrb[0].mxu0
        %4851 = vmatprep.mubr.bf16.mxu0 0
        %4852 = vmatmul.mubr.bf16.gmra.mrb[0].mxu0 %v4707
        %v4853 = vpop.f32.mrb[0].mxu0
        %v4854 = vadd.f32 %v4621, %v4853
        %v4855 = vpop.f32.mrb[0].mxu0
        %v4856 = vpop.f32.mrb[0].mxu0
        %v4857 = vadd.f32 %v4624, %v4856
        %v4858 = vpop.f32.mrb[0].mxu0
        %4859 = vmatprep.mubr.bf16.mxu0 0
        %4860 = vmatmul.mubr.bf16.gmra.mrb[0].mxu0 %v4710
        %v4861 = vpop.f32.mrb[0].mxu0
        %v4862 = vadd.f32 %v4629, %v4861
        %v4863 = vpop.f32.mrb[0].mxu0
        %v4864 = vpop.f32.mrb[0].mxu0
        %v4865 = vadd.f32 %v4632, %v4864
        %v4866 = vpop.f32.mrb[0].mxu0
        %4867 = vmatprep.mubr.bf16.mxu0 0
        %4868 = vmatmul.mubr.bf16.gmra.mrb[0].mxu0 %v4713
        %v4869 = vpop.f32.mrb[0].mxu0
        %v4870 = vadd.f32 %v4637, %v4869
        %v4871 = vpop.f32.mrb[0].mxu0
        %v4872 = vpop.f32.mrb[0].mxu0
        %v4873 = vadd.f32 %v4640, %v4872
        %v4874 = vpop.f32.mrb[0].mxu0
        %4875 = vdwg.mxu0
        %v4884 = vunpack.c.l.b16 %v4402
        %v4885 = vunpack.c.l.b16 %v4403
        %v4886 = vunpack.c.l.b16 %v4404
        %v4887 = vunpack.c.l.b16 %v4405
        %v4888 = vunpack.c.l.b16 %v4406
        %v4889 = vunpack.c.l.b16 %v4407
        %v4890 = vunpack.c.l.b16 %v4408
        %v4891 = vunpack.c.l.b16 %v4409
        %v4892 = vpack.c.b16 %v4885, %v4884
        %v4893 = vpack.c.b16 %v4887, %v4886
        %v4894 = vpack.c.b16 %v4889, %v4888
        %v4895 = vpack.c.b16 %v4891, %v4890
        %v4901 = vsel %vm358, %v4287, 0
        %v4904 = vsel %vm358, %v4288, 0
        %v4907 = vsel %vm358, %v4289, 0
        %v4910 = vsel %vm358, %v4290, 0
        %v4913 = vsel %vm358, %v4291, 0
        %v4916 = vsel %vm358, %v4292, 0
        %v4919 = vsel %vm358, %v4293, 0
        %v4922 = vsel %vm358, %v4294, 0
        %v4925 = vsel %vm358, %v4295, 0
        %v4928 = vsel %vm358, %v4296, 0
        %v4931 = vsel %vm358, %v4297, 0
        %v4934 = vsel %vm358, %v4298, 0
        %v4937 = vsel %vm358, %v4299, 0
        %v4940 = vsel %vm358, %v4300, 0
        %v4943 = vsel %vm358, %v4301, 0
        %v4946 = vsel %vm358, %v4302, 0
        %4948 = vmatprep.subr.bf16.mxu0 0
        %4949 = vmatpush1.bf16.msra.mxu0 %v4892
        %4950 = vmatprep.subr.bf16.mxu0 0
        %4951 = vmatpush1.bf16.msra.mxu0 %v4893
        %4952 = vmatprep.subr.bf16.mxu0 0
        %4953 = vmatpush1.bf16.msra.mxu0 %v4894
        %4954 = vmatprep.subr.bf16.mxu0 0
        %4955 = vmatpush1.bf16.msra.mxu0 %v4895
        %4956 = vmatprep.subr.bf16.mxu0 0
        %4957 = vmatpush1.bf16.msra.mxu0 0
        %4958 = vmatprep.subr.bf16.mxu0 0
        %4959 = vmatpush1.bf16.msra.mxu0 0
        %4960 = vmatprep.subr.bf16.mxu0 0
        %4961 = vmatpush1.bf16.msra.mxu0 0
        %4962 = vmatprep.subr.bf16.mxu0 0
        %4963 = vmatpush1.bf16.msra.mxu0 0
        %4964 = vmatprep.subr.bf16.mxu0 0
        %4965 = vmatpush1.bf16.msra.mxu0 0
        %4966 = vmatprep.subr.bf16.mxu0 0
        %4967 = vmatpush1.bf16.msra.mxu0 0
        %4968 = vmatprep.subr.bf16.mxu0 0
        %4969 = vmatpush1.bf16.msra.mxu0 0
        %4970 = vmatprep.subr.bf16.mxu0 0
        %4971 = vmatpush1.bf16.msra.mxu0 0
        %4972 = vmatprep.subr.bf16.mxu0 0
        %4973 = vmatpush1.bf16.msra.mxu0 0
        %4974 = vmatprep.subr.bf16.mxu0 0
        %4975 = vmatpush1.bf16.msra.mxu0 0
        %4976 = vmatprep.subr.bf16.mxu0 0
        %4977 = vmatpush1.bf16.msra.mxu0 0
        %4978 = vmatprep.subr.bf16.mxu0 0
        %4979 = vmatpush1.bf16.msra.mxu0 0
        %4980 = vmatprep.mubr.bf16.mxu0 0
        %4981 = vmatmul.mubr.bf16.gmra.mrb[0].mxu0 %v4901
        %v4982 = vpop.f32.mrb[0].mxu0
        %v4983 = vadd.f32 0.0, %v4982
        %v4984 = vpop.f32.mrb[0].mxu0
        %v4985 = vpop.f32.mrb[0].mxu0
        %v4986 = vadd.f32 0.0, %v4985
        %v4987 = vpop.f32.mrb[0].mxu0
        %4988 = vmatprep.mubr.bf16.mxu0 0
        %4989 = vmatmul.mubr.bf16.gmra.mrb[0].mxu0 %v4904
        %v4990 = vpop.f32.mrb[0].mxu0
        %v4991 = vadd.f32 0.0, %v4990
        %v4992 = vpop.f32.mrb[0].mxu0
        %v4993 = vpop.f32.mrb[0].mxu0
        %v4994 = vadd.f32 0.0, %v4993
        %v4995 = vpop.f32.mrb[0].mxu0
        %4996 = vmatprep.mubr.bf16.mxu0 0
        %4997 = vmatmul.mubr.bf16.gmra.mrb[0].mxu0 %v4907
        %v4998 = vpop.f32.mrb[0].mxu0
        %v4999 = vadd.f32 0.0, %v4998
        %v5000 = vpop.f32.mrb[0].mxu0
        %v5001 = vpop.f32.mrb[0].mxu0
        %v5002 = vadd.f32 0.0, %v5001
        %v5003 = vpop.f32.mrb[0].mxu0
        %5004 = vmatprep.mubr.bf16.mxu0 0
        %5005 = vmatmul.mubr.bf16.gmra.mrb[0].mxu0 %v4910
        %v5006 = vpop.f32.mrb[0].mxu0
        %v5007 = vadd.f32 0.0, %v5006
        %v5008 = vpop.f32.mrb[0].mxu0
        %v5009 = vpop.f32.mrb[0].mxu0
        %v5010 = vadd.f32 0.0, %v5009
        %v5011 = vpop.f32.mrb[0].mxu0
        %5012 = vmatprep.mubr.bf16.mxu0 0
        %5013 = vmatmul.mubr.bf16.gmra.mrb[0].mxu0 %v4913
        %v5014 = vpop.f32.mrb[0].mxu0
        %v5015 = vadd.f32 0.0, %v5014
        %v5016 = vpop.f32.mrb[0].mxu0
        %v5017 = vpop.f32.mrb[0].mxu0
        %v5018 = vadd.f32 0.0, %v5017
        %v5019 = vpop.f32.mrb[0].mxu0
        %5020 = vmatprep.mubr.bf16.mxu0 0
        %5021 = vmatmul.mubr.bf16.gmra.mrb[0].mxu0 %v4916
        %v5022 = vpop.f32.mrb[0].mxu0
        %v5023 = vadd.f32 0.0, %v5022
        %v5024 = vpop.f32.mrb[0].mxu0
        %v5025 = vpop.f32.mrb[0].mxu0
        %v5026 = vadd.f32 0.0, %v5025
        %v5027 = vpop.f32.mrb[0].mxu0
        %5028 = vmatprep.mubr.bf16.mxu0 0
        %5029 = vmatmul.mubr.bf16.gmra.mrb[0].mxu0 %v4919
        %v5030 = vpop.f32.mrb[0].mxu0
        %v5031 = vadd.f32 0.0, %v5030
        %v5032 = vpop.f32.mrb[0].mxu0
        %v5033 = vpop.f32.mrb[0].mxu0
        %v5034 = vadd.f32 0.0, %v5033
        %v5035 = vpop.f32.mrb[0].mxu0
        %5036 = vmatprep.mubr.bf16.mxu0 0
        %5037 = vmatmul.mubr.bf16.gmra.mrb[0].mxu0 %v4922
        %v5038 = vpop.f32.mrb[0].mxu0
        %v5039 = vadd.f32 0.0, %v5038
        %v5040 = vpop.f32.mrb[0].mxu0
        %v5041 = vpop.f32.mrb[0].mxu0
        %v5042 = vadd.f32 0.0, %v5041
        %v5043 = vpop.f32.mrb[0].mxu0
        %5044 = vmatprep.mubr.bf16.mxu0 0
        %5045 = vmatmul.mubr.bf16.gmra.mrb[0].mxu0 %v4925
        %v5046 = vpop.f32.mrb[0].mxu0
        %v5047 = vadd.f32 0.0, %v5046
        %v5048 = vpop.f32.mrb[0].mxu0
        %v5049 = vpop.f32.mrb[0].mxu0
        %v5050 = vadd.f32 0.0, %v5049
        %v5051 = vpop.f32.mrb[0].mxu0
        %5052 = vmatprep.mubr.bf16.mxu0 0
        %5053 = vmatmul.mubr.bf16.gmra.mrb[0].mxu0 %v4928
        %v5054 = vpop.f32.mrb[0].mxu0
        %v5055 = vadd.f32 0.0, %v5054
        %v5056 = vpop.f32.mrb[0].mxu0
        %v5057 = vpop.f32.mrb[0].mxu0
        %v5058 = vadd.f32 0.0, %v5057
        %v5059 = vpop.f32.mrb[0].mxu0
        %5060 = vmatprep.mubr.bf16.mxu0 0
        %5061 = vmatmul.mubr.bf16.gmra.mrb[0].mxu0 %v4931
        %v5062 = vpop.f32.mrb[0].mxu0
        %v5063 = vadd.f32 0.0, %v5062
        %v5064 = vpop.f32.mrb[0].mxu0
        %v5065 = vpop.f32.mrb[0].mxu0
        %v5066 = vadd.f32 0.0, %v5065
        %v5067 = vpop.f32.mrb[0].mxu0
        %5068 = vmatprep.mubr.bf16.mxu0 0
        %5069 = vmatmul.mubr.bf16.gmra.mrb[0].mxu0 %v4934
        %v5070 = vpop.f32.mrb[0].mxu0
        %v5071 = vadd.f32 0.0, %v5070
        %v5072 = vpop.f32.mrb[0].mxu0
        %v5073 = vpop.f32.mrb[0].mxu0
        %v5074 = vadd.f32 0.0, %v5073
        %v5075 = vpop.f32.mrb[0].mxu0
        %5076 = vmatprep.mubr.bf16.mxu0 0
        %5077 = vmatmul.mubr.bf16.gmra.mrb[0].mxu0 %v4937
        %v5078 = vpop.f32.mrb[0].mxu0
        %v5079 = vadd.f32 0.0, %v5078
        %v5080 = vpop.f32.mrb[0].mxu0
        %v5081 = vpop.f32.mrb[0].mxu0
        %v5082 = vadd.f32 0.0, %v5081
        %v5083 = vpop.f32.mrb[0].mxu0
        %5084 = vmatprep.mubr.bf16.mxu0 0
        %5085 = vmatmul.mubr.bf16.gmra.mrb[0].mxu0 %v4940
        %v5086 = vpop.f32.mrb[0].mxu0
        %v5087 = vadd.f32 0.0, %v5086
        %v5088 = vpop.f32.mrb[0].mxu0
        %v5089 = vpop.f32.mrb[0].mxu0
        %v5090 = vadd.f32 0.0, %v5089
        %v5091 = vpop.f32.mrb[0].mxu0
        %5092 = vmatprep.mubr.bf16.mxu0 0
        %5093 = vmatmul.mubr.bf16.gmra.mrb[0].mxu0 %v4943
        %v5094 = vpop.f32.mrb[0].mxu0
        %v5095 = vadd.f32 0.0, %v5094
        %v5096 = vpop.f32.mrb[0].mxu0
        %v5097 = vpop.f32.mrb[0].mxu0
        %v5098 = vadd.f32 0.0, %v5097
        %v5099 = vpop.f32.mrb[0].mxu0
        %5100 = vmatprep.mubr.bf16.mxu0 0
        %5101 = vmatmul.mubr.bf16.gmra.mrb[0].mxu0 %v4946
        %v5102 = vpop.f32.mrb[0].mxu0
        %v5103 = vadd.f32 0.0, %v5102
        %v5104 = vpop.f32.mrb[0].mxu0
        %v5105 = vpop.f32.mrb[0].mxu0
        %v5106 = vadd.f32 0.0, %v5105
        %v5107 = vpop.f32.mrb[0].mxu0
        %5108 = vdwg.mxu0
        %v5109 = vadd.f32 %v4750, %v4983
        %v5110 = vadd.f32 %v4753, %v4986
        %v5111 = vadd.f32 %v4758, %v4991
        %v5112 = vadd.f32 %v4761, %v4994
        %v5113 = vadd.f32 %v4766, %v4999
        %v5114 = vadd.f32 %v4769, %v5002
        %v5115 = vadd.f32 %v4774, %v5007
        %v5116 = vadd.f32 %v4777, %v5010
        %v5117 = vadd.f32 %v4782, %v5015
        %v5118 = vadd.f32 %v4785, %v5018
        %v5119 = vadd.f32 %v4790, %v5023
        %v5120 = vadd.f32 %v4793, %v5026
        %v5121 = vadd.f32 %v4798, %v5031
        %v5122 = vadd.f32 %v4801, %v5034
        %v5123 = vadd.f32 %v4806, %v5039
        %v5124 = vadd.f32 %v4809, %v5042
        %v5125 = vadd.f32 %v4814, %v5047
        %v5126 = vadd.f32 %v4817, %v5050
        %v5127 = vadd.f32 %v4822, %v5055
        %v5128 = vadd.f32 %v4825, %v5058
        %v5129 = vadd.f32 %v4830, %v5063
        %v5130 = vadd.f32 %v4833, %v5066
        %v5131 = vadd.f32 %v4838, %v5071
        %v5132 = vadd.f32 %v4841, %v5074
        %v5133 = vadd.f32 %v4846, %v5079
        %v5134 = vadd.f32 %v4849, %v5082
        %v5135 = vadd.f32 %v4854, %v5087
        %v5136 = vadd.f32 %v4857, %v5090
        %v5137 = vadd.f32 %v4862, %v5095
        %v5138 = vadd.f32 %v4865, %v5098
        %v5139 = vadd.f32 %v4870, %v5103
        %v5140 = vadd.f32 %v4873, %v5106
        %5141 = vmatprep.subr.bf16.mxu0 0
        %5142 = vmatpush1.bf16.msra.mxu0 %v4426
        %5143 = vmatprep.subr.bf16.mxu0 0
        %5144 = vmatpush1.bf16.msra.mxu0 %v4427
        %5145 = vmatprep.subr.bf16.mxu0 0
        %5146 = vmatpush1.bf16.msra.mxu0 %v4428
        %5147 = vmatprep.subr.bf16.mxu0 0
        %5148 = vmatpush1.bf16.msra.mxu0 %v4429
        %5149 = vmatprep.subr.bf16.mxu0 0
        %5150 = vmatpush1.bf16.msra.mxu0 0
        %5151 = vmatprep.subr.bf16.mxu0 0
        %5152 = vmatpush1.bf16.msra.mxu0 0
        %5153 = vmatprep.subr.bf16.mxu0 0
        %5154 = vmatpush1.bf16.msra.mxu0 0
        %5155 = vmatprep.subr.bf16.mxu0 0
        %5156 = vmatpush1.bf16.msra.mxu0 0
        %5157 = vmatprep.subr.bf16.mxu0 0
        %5158 = vmatpush1.bf16.msra.mxu0 0
        %5159 = vmatprep.subr.bf16.mxu0 0
        %5160 = vmatpush1.bf16.msra.mxu0 0
        %5161 = vmatprep.subr.bf16.mxu0 0
        %5162 = vmatpush1.bf16.msra.mxu0 0
        %5163 = vmatprep.subr.bf16.mxu0 0
        %5164 = vmatpush1.bf16.msra.mxu0 0
        %5165 = vmatprep.subr.bf16.mxu0 0
        %5166 = vmatpush1.bf16.msra.mxu0 0
        %5167 = vmatprep.subr.bf16.mxu0 0
        %5168 = vmatpush1.bf16.msra.mxu0 0
        %5169 = vmatprep.subr.bf16.mxu0 0
        %5170 = vmatpush1.bf16.msra.mxu0 0
        %5171 = vmatprep.subr.bf16.mxu0 0
        %5172 = vmatpush1.bf16.msra.mxu0 0
        %5173 = vmatprep.mubr.bf16.mxu0 0
        %5174 = vmatmul.mubr.bf16.gmra.mrb[0].mxu0 %v4901
        %v5175 = vpop.f32.mrb[0].mxu0
        %v5176 = vadd.f32 0.0, %v5175
        %v5177 = vpop.f32.mrb[0].mxu0
        %v5178 = vpop.f32.mrb[0].mxu0
        %v5179 = vadd.f32 0.0, %v5178
        %v5180 = vpop.f32.mrb[0].mxu0
        %5181 = vmatprep.mubr.bf16.mxu0 0
        %5182 = vmatmul.mubr.bf16.gmra.mrb[0].mxu0 %v4904
        %v5183 = vpop.f32.mrb[0].mxu0
        %v5184 = vadd.f32 0.0, %v5183
        %v5185 = vpop.f32.mrb[0].mxu0
        %v5186 = vpop.f32.mrb[0].mxu0
        %v5187 = vadd.f32 0.0, %v5186
        %v5188 = vpop.f32.mrb[0].mxu0
        %5189 = vmatprep.mubr.bf16.mxu0 0
        %5190 = vmatmul.mubr.bf16.gmra.mrb[0].mxu0 %v4907
        %v5191 = vpop.f32.mrb[0].mxu0
        %v5192 = vadd.f32 0.0, %v5191
        %v5193 = vpop.f32.mrb[0].mxu0
        %v5194 = vpop.f32.mrb[0].mxu0
        %v5195 = vadd.f32 0.0, %v5194
        %v5196 = vpop.f32.mrb[0].mxu0
        %5197 = vmatprep.mubr.bf16.mxu0 0
        %5198 = vmatmul.mubr.bf16.gmra.mrb[0].mxu0 %v4910
        %v5199 = vpop.f32.mrb[0].mxu0
        %v5200 = vadd.f32 0.0, %v5199
        %v5201 = vpop.f32.mrb[0].mxu0
        %v5202 = vpop.f32.mrb[0].mxu0
        %v5203 = vadd.f32 0.0, %v5202
        %v5204 = vpop.f32.mrb[0].mxu0
        %5205 = vmatprep.mubr.bf16.mxu0 0
        %5206 = vmatmul.mubr.bf16.gmra.mrb[0].mxu0 %v4913
        %v5207 = vpop.f32.mrb[0].mxu0
        %v5208 = vadd.f32 0.0, %v5207
        %v5209 = vpop.f32.mrb[0].mxu0
        %v5210 = vpop.f32.mrb[0].mxu0
        %v5211 = vadd.f32 0.0, %v5210
        %v5212 = vpop.f32.mrb[0].mxu0
        %5213 = vmatprep.mubr.bf16.mxu0 0
        %5214 = vmatmul.mubr.bf16.gmra.mrb[0].mxu0 %v4916
        %v5215 = vpop.f32.mrb[0].mxu0
        %v5216 = vadd.f32 0.0, %v5215
        %v5217 = vpop.f32.mrb[0].mxu0
        %v5218 = vpop.f32.mrb[0].mxu0
        %v5219 = vadd.f32 0.0, %v5218
        %v5220 = vpop.f32.mrb[0].mxu0
        %5221 = vmatprep.mubr.bf16.mxu0 0
        %5222 = vmatmul.mubr.bf16.gmra.mrb[0].mxu0 %v4919
        %v5223 = vpop.f32.mrb[0].mxu0
        %v5224 = vadd.f32 0.0, %v5223
        %v5225 = vpop.f32.mrb[0].mxu0
        %v5226 = vpop.f32.mrb[0].mxu0
        %v5227 = vadd.f32 0.0, %v5226
        %v5228 = vpop.f32.mrb[0].mxu0
        %5229 = vmatprep.mubr.bf16.mxu0 0
        %5230 = vmatmul.mubr.bf16.gmra.mrb[0].mxu0 %v4922
        %v5231 = vpop.f32.mrb[0].mxu0
        %v5232 = vadd.f32 0.0, %v5231
        %v5233 = vpop.f32.mrb[0].mxu0
        %v5234 = vpop.f32.mrb[0].mxu0
        %v5235 = vadd.f32 0.0, %v5234
        %v5236 = vpop.f32.mrb[0].mxu0
        %5237 = vmatprep.mubr.bf16.mxu0 0
        %5238 = vmatmul.mubr.bf16.gmra.mrb[0].mxu0 %v4925
        %v5239 = vpop.f32.mrb[0].mxu0
        %v5240 = vadd.f32 0.0, %v5239
        %v5241 = vpop.f32.mrb[0].mxu0
        %v5242 = vpop.f32.mrb[0].mxu0
        %v5243 = vadd.f32 0.0, %v5242
        %v5244 = vpop.f32.mrb[0].mxu0
        %5245 = vmatprep.mubr.bf16.mxu0 0
        %5246 = vmatmul.mubr.bf16.gmra.mrb[0].mxu0 %v4928
        %v5247 = vpop.f32.mrb[0].mxu0
        %v5248 = vadd.f32 0.0, %v5247
        %v5249 = vpop.f32.mrb[0].mxu0
        %v5250 = vpop.f32.mrb[0].mxu0
        %v5251 = vadd.f32 0.0, %v5250
        %v5252 = vpop.f32.mrb[0].mxu0
        %5253 = vmatprep.mubr.bf16.mxu0 0
        %5254 = vmatmul.mubr.bf16.gmra.mrb[0].mxu0 %v4931
        %v5255 = vpop.f32.mrb[0].mxu0
        %v5256 = vadd.f32 0.0, %v5255
        %v5257 = vpop.f32.mrb[0].mxu0
        %v5258 = vpop.f32.mrb[0].mxu0
        %v5259 = vadd.f32 0.0, %v5258
        %v5260 = vpop.f32.mrb[0].mxu0
        %5261 = vmatprep.mubr.bf16.mxu0 0
        %5262 = vmatmul.mubr.bf16.gmra.mrb[0].mxu0 %v4934
        %v5263 = vpop.f32.mrb[0].mxu0
        %v5264 = vadd.f32 0.0, %v5263
        %v5265 = vpop.f32.mrb[0].mxu0
        %v5266 = vpop.f32.mrb[0].mxu0
        %v5267 = vadd.f32 0.0, %v5266
        %v5268 = vpop.f32.mrb[0].mxu0
        %5269 = vmatprep.mubr.bf16.mxu0 0
        %5270 = vmatmul.mubr.bf16.gmra.mrb[0].mxu0 %v4937
        %v5271 = vpop.f32.mrb[0].mxu0
        %v5272 = vadd.f32 0.0, %v5271
        %v5273 = vpop.f32.mrb[0].mxu0
        %v5274 = vpop.f32.mrb[0].mxu0
        %v5275 = vadd.f32 0.0, %v5274
        %v5276 = vpop.f32.mrb[0].mxu0
        %5277 = vmatprep.mubr.bf16.mxu0 0
        %5278 = vmatmul.mubr.bf16.gmra.mrb[0].mxu0 %v4940
        %v5279 = vpop.f32.mrb[0].mxu0
        %v5280 = vadd.f32 0.0, %v5279
        %v5281 = vpop.f32.mrb[0].mxu0
        %v5282 = vpop.f32.mrb[0].mxu0
        %v5283 = vadd.f32 0.0, %v5282
        %v5284 = vpop.f32.mrb[0].mxu0
        %5285 = vmatprep.mubr.bf16.mxu0 0
        %5286 = vmatmul.mubr.bf16.gmra.mrb[0].mxu0 %v4943
        %v5287 = vpop.f32.mrb[0].mxu0
        %v5288 = vadd.f32 0.0, %v5287
        %v5289 = vpop.f32.mrb[0].mxu0
        %v5290 = vpop.f32.mrb[0].mxu0
        %v5291 = vadd.f32 0.0, %v5290
        %v5292 = vpop.f32.mrb[0].mxu0
        %5293 = vmatprep.mubr.bf16.mxu0 0
        %5294 = vmatmul.mubr.bf16.gmra.mrb[0].mxu0 %v4946
        %v5295 = vpop.f32.mrb[0].mxu0
        %v5296 = vadd.f32 0.0, %v5295
        %v5297 = vpop.f32.mrb[0].mxu0
        %v5298 = vpop.f32.mrb[0].mxu0
        %v5299 = vadd.f32 0.0, %v5298
        %v5300 = vpop.f32.mrb[0].mxu0
        %5301 = vdwg.mxu0
        %5302 = vmatprep.subr.bf16.mxu0 0
        %5303 = vmatpush1.bf16.msra.mxu0 %v4659
        %5304 = vmatprep.subr.bf16.mxu0 0
        %5305 = vmatpush1.bf16.msra.mxu0 %v4660
        %5306 = vmatprep.subr.bf16.mxu0 0
        %5307 = vmatpush1.bf16.msra.mxu0 %v4661
        %5308 = vmatprep.subr.bf16.mxu0 0
        %5309 = vmatpush1.bf16.msra.mxu0 %v4662
        %5310 = vmatprep.subr.bf16.mxu0 0
        %5311 = vmatpush1.bf16.msra.mxu0 0
        %5312 = vmatprep.subr.bf16.mxu0 0
        %5313 = vmatpush1.bf16.msra.mxu0 0
        %5314 = vmatprep.subr.bf16.mxu0 0
        %5315 = vmatpush1.bf16.msra.mxu0 0
        %5316 = vmatprep.subr.bf16.mxu0 0
        %5317 = vmatpush1.bf16.msra.mxu0 0
        %5318 = vmatprep.subr.bf16.mxu0 0
        %5319 = vmatpush1.bf16.msra.mxu0 0
        %5320 = vmatprep.subr.bf16.mxu0 0
        %5321 = vmatpush1.bf16.msra.mxu0 0
        %5322 = vmatprep.subr.bf16.mxu0 0
        %5323 = vmatpush1.bf16.msra.mxu0 0
        %5324 = vmatprep.subr.bf16.mxu0 0
        %5325 = vmatpush1.bf16.msra.mxu0 0
        %5326 = vmatprep.subr.bf16.mxu0 0
        %5327 = vmatpush1.bf16.msra.mxu0 0
        %5328 = vmatprep.subr.bf16.mxu0 0
        %5329 = vmatpush1.bf16.msra.mxu0 0
        %5330 = vmatprep.subr.bf16.mxu0 0
        %5331 = vmatpush1.bf16.msra.mxu0 0
        %5332 = vmatprep.subr.bf16.mxu0 0
        %5333 = vmatpush1.bf16.msra.mxu0 0
        %5334 = vmatprep.mubr.bf16.mxu0 0
        %5335 = vmatmul.mubr.bf16.gmra.mrb[0].mxu0 %v4435
        %v5336 = vpop.f32.mrb[0].mxu0
        %v5337 = vadd.f32 %v5176, %v5336
        %v5338 = vpop.f32.mrb[0].mxu0
        %v5339 = vpop.f32.mrb[0].mxu0
        %v5340 = vadd.f32 %v5179, %v5339
        %v5341 = vpop.f32.mrb[0].mxu0
        %5342 = vmatprep.mubr.bf16.mxu0 0
        %5343 = vmatmul.mubr.bf16.gmra.mrb[0].mxu0 %v4438
        %v5344 = vpop.f32.mrb[0].mxu0
        %v5345 = vadd.f32 %v5184, %v5344
        %v5346 = vpop.f32.mrb[0].mxu0
        %v5347 = vpop.f32.mrb[0].mxu0
        %v5348 = vadd.f32 %v5187, %v5347
        %v5349 = vpop.f32.mrb[0].mxu0
        %5350 = vmatprep.mubr.bf16.mxu0 0
        %5351 = vmatmul.mubr.bf16.gmra.mrb[0].mxu0 %v4441
        %v5352 = vpop.f32.mrb[0].mxu0
        %v5353 = vadd.f32 %v5192, %v5352
        %v5354 = vpop.f32.mrb[0].mxu0
        %v5355 = vpop.f32.mrb[0].mxu0
        %v5356 = vadd.f32 %v5195, %v5355
        %v5357 = vpop.f32.mrb[0].mxu0
        %5358 = vmatprep.mubr.bf16.mxu0 0
        %5359 = vmatmul.mubr.bf16.gmra.mrb[0].mxu0 %v4444
        %v5360 = vpop.f32.mrb[0].mxu0
        %v5361 = vadd.f32 %v5200, %v5360
        %v5362 = vpop.f32.mrb[0].mxu0
        %v5363 = vpop.f32.mrb[0].mxu0
        %v5364 = vadd.f32 %v5203, %v5363
        %v5365 = vpop.f32.mrb[0].mxu0
        %5366 = vmatprep.mubr.bf16.mxu0 0
        %5367 = vmatmul.mubr.bf16.gmra.mrb[0].mxu0 %v4447
        %v5368 = vpop.f32.mrb[0].mxu0
        %v5369 = vadd.f32 %v5208, %v5368
        %v5370 = vpop.f32.mrb[0].mxu0
        %v5371 = vpop.f32.mrb[0].mxu0
        %v5372 = vadd.f32 %v5211, %v5371
        %v5373 = vpop.f32.mrb[0].mxu0
        %5374 = vmatprep.mubr.bf16.mxu0 0
        %5375 = vmatmul.mubr.bf16.gmra.mrb[0].mxu0 %v4450
        %v5376 = vpop.f32.mrb[0].mxu0
        %v5377 = vadd.f32 %v5216, %v5376
        %v5378 = vpop.f32.mrb[0].mxu0
        %v5379 = vpop.f32.mrb[0].mxu0
        %v5380 = vadd.f32 %v5219, %v5379
        %v5381 = vpop.f32.mrb[0].mxu0
        %5382 = vmatprep.mubr.bf16.mxu0 0
        %5383 = vmatmul.mubr.bf16.gmra.mrb[0].mxu0 %v4453
        %v5384 = vpop.f32.mrb[0].mxu0
        %v5385 = vadd.f32 %v5224, %v5384
        %v5386 = vpop.f32.mrb[0].mxu0
        %v5387 = vpop.f32.mrb[0].mxu0
        %v5388 = vadd.f32 %v5227, %v5387
        %v5389 = vpop.f32.mrb[0].mxu0
        %5390 = vmatprep.mubr.bf16.mxu0 0
        %5391 = vmatmul.mubr.bf16.gmra.mrb[0].mxu0 %v4456
        %v5392 = vpop.f32.mrb[0].mxu0
        %v5393 = vadd.f32 %v5232, %v5392
        %v5394 = vpop.f32.mrb[0].mxu0
        %v5395 = vpop.f32.mrb[0].mxu0
        %v5396 = vadd.f32 %v5235, %v5395
        %v5397 = vpop.f32.mrb[0].mxu0
        %5398 = vmatprep.mubr.bf16.mxu0 0
        %5399 = vmatmul.mubr.bf16.gmra.mrb[0].mxu0 %v4459
        %v5400 = vpop.f32.mrb[0].mxu0
        %v5401 = vadd.f32 %v5240, %v5400
        %v5402 = vpop.f32.mrb[0].mxu0
        %v5403 = vpop.f32.mrb[0].mxu0
        %v5404 = vadd.f32 %v5243, %v5403
        %v5405 = vpop.f32.mrb[0].mxu0
        %5406 = vmatprep.mubr.bf16.mxu0 0
        %5407 = vmatmul.mubr.bf16.gmra.mrb[0].mxu0 %v4462
        %v5408 = vpop.f32.mrb[0].mxu0
        %v5409 = vadd.f32 %v5248, %v5408
        %v5410 = vpop.f32.mrb[0].mxu0
        %v5411 = vpop.f32.mrb[0].mxu0
        %v5412 = vadd.f32 %v5251, %v5411
        %v5413 = vpop.f32.mrb[0].mxu0
        %5414 = vmatprep.mubr.bf16.mxu0 0
        %5415 = vmatmul.mubr.bf16.gmra.mrb[0].mxu0 %v4465
        %v5416 = vpop.f32.mrb[0].mxu0
        %v5417 = vadd.f32 %v5256, %v5416
        %v5418 = vpop.f32.mrb[0].mxu0
        %v5419 = vpop.f32.mrb[0].mxu0
        %v5420 = vadd.f32 %v5259, %v5419
        %v5421 = vpop.f32.mrb[0].mxu0
        %5422 = vmatprep.mubr.bf16.mxu0 0
        %5423 = vmatmul.mubr.bf16.gmra.mrb[0].mxu0 %v4468
        %v5424 = vpop.f32.mrb[0].mxu0
        %v5425 = vadd.f32 %v5264, %v5424
        %v5426 = vpop.f32.mrb[0].mxu0
        %v5427 = vpop.f32.mrb[0].mxu0
        %v5428 = vadd.f32 %v5267, %v5427
        %v5429 = vpop.f32.mrb[0].mxu0
        %5430 = vmatprep.mubr.bf16.mxu0 0
        %5431 = vmatmul.mubr.bf16.gmra.mrb[0].mxu0 %v4471
        %v5432 = vpop.f32.mrb[0].mxu0
        %v5433 = vadd.f32 %v5272, %v5432
        %v5434 = vpop.f32.mrb[0].mxu0
        %v5435 = vpop.f32.mrb[0].mxu0
        %v5436 = vadd.f32 %v5275, %v5435
        %v5437 = vpop.f32.mrb[0].mxu0
        %5438 = vmatprep.mubr.bf16.mxu0 0
        %5439 = vmatmul.mubr.bf16.gmra.mrb[0].mxu0 %v4474
        %v5440 = vpop.f32.mrb[0].mxu0
        %v5441 = vadd.f32 %v5280, %v5440
        %v5442 = vpop.f32.mrb[0].mxu0
        %v5443 = vpop.f32.mrb[0].mxu0
        %v5444 = vadd.f32 %v5283, %v5443
        %v5445 = vpop.f32.mrb[0].mxu0
        %5446 = vmatprep.mubr.bf16.mxu0 0
        %5447 = vmatmul.mubr.bf16.gmra.mrb[0].mxu0 %v4477
        %v5448 = vpop.f32.mrb[0].mxu0
        %v5449 = vadd.f32 %v5288, %v5448
        %v5450 = vpop.f32.mrb[0].mxu0
        %v5451 = vpop.f32.mrb[0].mxu0
        %v5452 = vadd.f32 %v5291, %v5451
        %v5453 = vpop.f32.mrb[0].mxu0
        %5454 = vmatprep.mubr.bf16.mxu0 0
        %5455 = vmatmul.mubr.bf16.gmra.mrb[0].mxu0 %v4480
        %v5456 = vpop.f32.mrb[0].mxu0
        %v5457 = vadd.f32 %v5296, %v5456
        %v5458 = vpop.f32.mrb[0].mxu0
        %v5459 = vpop.f32.mrb[0].mxu0
        %v5460 = vadd.f32 %v5299, %v5459
        %v5461 = vpop.f32.mrb[0].mxu0
        %5462 = vdwg.mxu0
        %v5464 = vsel %vm358, %v4367, 0
        %v5467 = vsel %vm358, %v4368, 0
        %v5470 = vsel %vm358, %v4369, 0
        %v5473 = vsel %vm358, %v4370, 0
        %v5476 = vsel %vm358, %v4371, 0
        %v5479 = vsel %vm358, %v4372, 0
        %v5482 = vsel %vm358, %v4373, 0
        %v5485 = vsel %vm358, %v4374, 0
        %v5488 = vsel %vm358, %v4375, 0
        %v5491 = vsel %vm358, %v4376, 0
        %v5494 = vsel %vm358, %v4377, 0
        %v5497 = vsel %vm358, %v4378, 0
        %v5500 = vsel %vm358, %v4379, 0
        %v5503 = vsel %vm358, %v4380, 0
        %v5506 = vsel %vm358, %v4381, 0
        %v5509 = vsel %vm358, %v4382, 0
        %5511 = vmatprep.subr.bf16.mxu0 0
        %5512 = vmatpush1.bf16.msra.mxu0 %v4892
        %5513 = vmatprep.subr.bf16.mxu0 0
        %5514 = vmatpush1.bf16.msra.mxu0 %v4893
        %5515 = vmatprep.subr.bf16.mxu0 0
        %5516 = vmatpush1.bf16.msra.mxu0 %v4894
        %5517 = vmatprep.subr.bf16.mxu0 0
        %5518 = vmatpush1.bf16.msra.mxu0 %v4895
        %5519 = vmatprep.subr.bf16.mxu0 0
        %5520 = vmatpush1.bf16.msra.mxu0 0
        %5521 = vmatprep.subr.bf16.mxu0 0
        %5522 = vmatpush1.bf16.msra.mxu0 0
        %5523 = vmatprep.subr.bf16.mxu0 0
        %5524 = vmatpush1.bf16.msra.mxu0 0
        %5525 = vmatprep.subr.bf16.mxu0 0
        %5526 = vmatpush1.bf16.msra.mxu0 0
        %5527 = vmatprep.subr.bf16.mxu0 0
        %5528 = vmatpush1.bf16.msra.mxu0 0
        %5529 = vmatprep.subr.bf16.mxu0 0
        %5530 = vmatpush1.bf16.msra.mxu0 0
        %5531 = vmatprep.subr.bf16.mxu0 0
        %5532 = vmatpush1.bf16.msra.mxu0 0
        %5533 = vmatprep.subr.bf16.mxu0 0
        %5534 = vmatpush1.bf16.msra.mxu0 0
        %5535 = vmatprep.subr.bf16.mxu0 0
        %5536 = vmatpush1.bf16.msra.mxu0 0
        %5537 = vmatprep.subr.bf16.mxu0 0
        %5538 = vmatpush1.bf16.msra.mxu0 0
        %5539 = vmatprep.subr.bf16.mxu0 0
        %5540 = vmatpush1.bf16.msra.mxu0 0
        %5541 = vmatprep.subr.bf16.mxu0 0
        %5542 = vmatpush1.bf16.msra.mxu0 0
        %5543 = vmatprep.mubr.bf16.mxu0 0
        %5544 = vmatmul.mubr.bf16.gmra.mrb[0].mxu0 %v5464
        %v5545 = vpop.f32.mrb[0].mxu0
        %v5546 = vadd.f32 0.0, %v5545
        %v5547 = vpop.f32.mrb[0].mxu0
        %v5548 = vpop.f32.mrb[0].mxu0
        %v5549 = vadd.f32 0.0, %v5548
        %v5550 = vpop.f32.mrb[0].mxu0
        %5551 = vmatprep.mubr.bf16.mxu0 0
        %5552 = vmatmul.mubr.bf16.gmra.mrb[0].mxu0 %v5467
        %v5553 = vpop.f32.mrb[0].mxu0
        %v5554 = vadd.f32 0.0, %v5553
        %v5555 = vpop.f32.mrb[0].mxu0
        %v5556 = vpop.f32.mrb[0].mxu0
        %v5557 = vadd.f32 0.0, %v5556
        %v5558 = vpop.f32.mrb[0].mxu0
        %5559 = vmatprep.mubr.bf16.mxu0 0
        %5560 = vmatmul.mubr.bf16.gmra.mrb[0].mxu0 %v5470
        %v5561 = vpop.f32.mrb[0].mxu0
        %v5562 = vadd.f32 0.0, %v5561
        %v5563 = vpop.f32.mrb[0].mxu0
        %v5564 = vpop.f32.mrb[0].mxu0
        %v5565 = vadd.f32 0.0, %v5564
        %v5566 = vpop.f32.mrb[0].mxu0
        %5567 = vmatprep.mubr.bf16.mxu0 0
        %5568 = vmatmul.mubr.bf16.gmra.mrb[0].mxu0 %v5473
        %v5569 = vpop.f32.mrb[0].mxu0
        %v5570 = vadd.f32 0.0, %v5569
        %v5571 = vpop.f32.mrb[0].mxu0
        %v5572 = vpop.f32.mrb[0].mxu0
        %v5573 = vadd.f32 0.0, %v5572
        %v5574 = vpop.f32.mrb[0].mxu0
        %5575 = vmatprep.mubr.bf16.mxu0 0
        %5576 = vmatmul.mubr.bf16.gmra.mrb[0].mxu0 %v5476
        %v5577 = vpop.f32.mrb[0].mxu0
        %v5578 = vadd.f32 0.0, %v5577
        %v5579 = vpop.f32.mrb[0].mxu0
        %v5580 = vpop.f32.mrb[0].mxu0
        %v5581 = vadd.f32 0.0, %v5580
        %v5582 = vpop.f32.mrb[0].mxu0
        %5583 = vmatprep.mubr.bf16.mxu0 0
        %5584 = vmatmul.mubr.bf16.gmra.mrb[0].mxu0 %v5479
        %v5585 = vpop.f32.mrb[0].mxu0
        %v5586 = vadd.f32 0.0, %v5585
        %v5587 = vpop.f32.mrb[0].mxu0
        %v5588 = vpop.f32.mrb[0].mxu0
        %v5589 = vadd.f32 0.0, %v5588
        %v5590 = vpop.f32.mrb[0].mxu0
        %5591 = vmatprep.mubr.bf16.mxu0 0
        %5592 = vmatmul.mubr.bf16.gmra.mrb[0].mxu0 %v5482
        %v5593 = vpop.f32.mrb[0].mxu0
        %v5594 = vadd.f32 0.0, %v5593
        %v5595 = vpop.f32.mrb[0].mxu0
        %v5596 = vpop.f32.mrb[0].mxu0
        %v5597 = vadd.f32 0.0, %v5596
        %v5598 = vpop.f32.mrb[0].mxu0
        %5599 = vmatprep.mubr.bf16.mxu0 0
        %5600 = vmatmul.mubr.bf16.gmra.mrb[0].mxu0 %v5485
        %v5601 = vpop.f32.mrb[0].mxu0
        %v5602 = vadd.f32 0.0, %v5601
        %v5603 = vpop.f32.mrb[0].mxu0
        %v5604 = vpop.f32.mrb[0].mxu0
        %v5605 = vadd.f32 0.0, %v5604
        %v5606 = vpop.f32.mrb[0].mxu0
        %5607 = vmatprep.mubr.bf16.mxu0 0
        %5608 = vmatmul.mubr.bf16.gmra.mrb[0].mxu0 %v5488
        %v5609 = vpop.f32.mrb[0].mxu0
        %v5610 = vadd.f32 0.0, %v5609
        %v5611 = vpop.f32.mrb[0].mxu0
        %v5612 = vpop.f32.mrb[0].mxu0
        %v5613 = vadd.f32 0.0, %v5612
        %v5614 = vpop.f32.mrb[0].mxu0
        %5615 = vmatprep.mubr.bf16.mxu0 0
        %5616 = vmatmul.mubr.bf16.gmra.mrb[0].mxu0 %v5491
        %v5617 = vpop.f32.mrb[0].mxu0
        %v5618 = vadd.f32 0.0, %v5617
        %v5619 = vpop.f32.mrb[0].mxu0
        %v5620 = vpop.f32.mrb[0].mxu0
        %v5621 = vadd.f32 0.0, %v5620
        %v5622 = vpop.f32.mrb[0].mxu0
        %5623 = vmatprep.mubr.bf16.mxu0 0
        %5624 = vmatmul.mubr.bf16.gmra.mrb[0].mxu0 %v5494
        %v5625 = vpop.f32.mrb[0].mxu0
        %v5626 = vadd.f32 0.0, %v5625
        %v5627 = vpop.f32.mrb[0].mxu0
        %v5628 = vpop.f32.mrb[0].mxu0
        %v5629 = vadd.f32 0.0, %v5628
        %v5630 = vpop.f32.mrb[0].mxu0
        %5631 = vmatprep.mubr.bf16.mxu0 0
        %5632 = vmatmul.mubr.bf16.gmra.mrb[0].mxu0 %v5497
        %v5633 = vpop.f32.mrb[0].mxu0
        %v5634 = vadd.f32 0.0, %v5633
        %v5635 = vpop.f32.mrb[0].mxu0
        %v5636 = vpop.f32.mrb[0].mxu0
        %v5637 = vadd.f32 0.0, %v5636
        %v5638 = vpop.f32.mrb[0].mxu0
        %5639 = vmatprep.mubr.bf16.mxu0 0
        %5640 = vmatmul.mubr.bf16.gmra.mrb[0].mxu0 %v5500
        %v5641 = vpop.f32.mrb[0].mxu0
        %v5642 = vadd.f32 0.0, %v5641
        %v5643 = vpop.f32.mrb[0].mxu0
        %v5644 = vpop.f32.mrb[0].mxu0
        %v5645 = vadd.f32 0.0, %v5644
        %v5646 = vpop.f32.mrb[0].mxu0
        %5647 = vmatprep.mubr.bf16.mxu0 0
        %5648 = vmatmul.mubr.bf16.gmra.mrb[0].mxu0 %v5503
        %v5649 = vpop.f32.mrb[0].mxu0
        %v5650 = vadd.f32 0.0, %v5649
        %v5651 = vpop.f32.mrb[0].mxu0
        %v5652 = vpop.f32.mrb[0].mxu0
        %v5653 = vadd.f32 0.0, %v5652
        %v5654 = vpop.f32.mrb[0].mxu0
        %5655 = vmatprep.mubr.bf16.mxu0 0
        %5656 = vmatmul.mubr.bf16.gmra.mrb[0].mxu0 %v5506
        %v5657 = vpop.f32.mrb[0].mxu0
        %v5658 = vadd.f32 0.0, %v5657
        %v5659 = vpop.f32.mrb[0].mxu0
        %v5660 = vpop.f32.mrb[0].mxu0
        %v5661 = vadd.f32 0.0, %v5660
        %v5662 = vpop.f32.mrb[0].mxu0
        %5663 = vmatprep.mubr.bf16.mxu0 0
        %5664 = vmatmul.mubr.bf16.gmra.mrb[0].mxu0 %v5509
        %v5665 = vpop.f32.mrb[0].mxu0
        %v5666 = vadd.f32 0.0, %v5665
        %v5667 = vpop.f32.mrb[0].mxu0
        %v5668 = vpop.f32.mrb[0].mxu0
        %v5669 = vadd.f32 0.0, %v5668
        %v5670 = vpop.f32.mrb[0].mxu0
        %5671 = vdwg.mxu0
        %v5672 = vadd.f32 %v5337, %v5546
        %v5673 = vadd.f32 %v5340, %v5549
        %v5674 = vadd.f32 %v5345, %v5554
        %v5675 = vadd.f32 %v5348, %v5557
        %v5676 = vadd.f32 %v5353, %v5562
        %v5677 = vadd.f32 %v5356, %v5565
        %v5678 = vadd.f32 %v5361, %v5570
        %v5679 = vadd.f32 %v5364, %v5573
        %v5680 = vadd.f32 %v5369, %v5578
        %v5681 = vadd.f32 %v5372, %v5581
        %v5682 = vadd.f32 %v5377, %v5586
        %v5683 = vadd.f32 %v5380, %v5589
        %v5684 = vadd.f32 %v5385, %v5594
        %v5685 = vadd.f32 %v5388, %v5597
        %v5686 = vadd.f32 %v5393, %v5602
        %v5687 = vadd.f32 %v5396, %v5605
        %v5688 = vadd.f32 %v5401, %v5610
        %v5689 = vadd.f32 %v5404, %v5613
        %v5690 = vadd.f32 %v5409, %v5618
        %v5691 = vadd.f32 %v5412, %v5621
        %v5692 = vadd.f32 %v5417, %v5626
        %v5693 = vadd.f32 %v5420, %v5629
        %v5694 = vadd.f32 %v5425, %v5634
        %v5695 = vadd.f32 %v5428, %v5637
        %v5696 = vadd.f32 %v5433, %v5642
        %v5697 = vadd.f32 %v5436, %v5645
        %v5698 = vadd.f32 %v5441, %v5650
        %v5699 = vadd.f32 %v5444, %v5653
        %v5700 = vadd.f32 %v5449, %v5658
        %v5701 = vadd.f32 %v5452, %v5661
        %v5702 = vadd.f32 %v5457, %v5666
        %v5703 = vadd.f32 %v5460, %v5669
        %v5704 = vmax.f32 %v5109, %v5672
        %v5705 = vmax.f32 %v5110, %v5673
        %v5706 = vmax.f32 %v5111, %v5674
        %v5707 = vmax.f32 %v5112, %v5675
        %v5708 = vmax.f32 %v5113, %v5676
        %v5709 = vmax.f32 %v5114, %v5677
        %v5710 = vmax.f32 %v5115, %v5678
        %v5711 = vmax.f32 %v5116, %v5679
        %v5712 = vmax.f32 %v5117, %v5680
        %v5713 = vmax.f32 %v5118, %v5681
        %v5714 = vmax.f32 %v5119, %v5682
        %v5715 = vmax.f32 %v5120, %v5683
        %v5716 = vmax.f32 %v5121, %v5684
        %v5717 = vmax.f32 %v5122, %v5685
        %v5718 = vmax.f32 %v5123, %v5686
        %v5719 = vmax.f32 %v5124, %v5687
        %v5720 = vmax.f32 %v5125, %v5688
        %v5721 = vmax.f32 %v5126, %v5689
        %v5722 = vmax.f32 %v5127, %v5690
        %v5723 = vmax.f32 %v5128, %v5691
        %v5724 = vmax.f32 %v5129, %v5692
        %v5725 = vmax.f32 %v5130, %v5693
        %v5726 = vmax.f32 %v5131, %v5694
        %v5727 = vmax.f32 %v5132, %v5695
        %v5728 = vmax.f32 %v5133, %v5696
        %v5729 = vmax.f32 %v5134, %v5697
        %v5730 = vmax.f32 %v5135, %v5698
        %v5731 = vmax.f32 %v5136, %v5699
        %v5732 = vmax.f32 %v5137, %v5700
        %v5733 = vmax.f32 %v5138, %v5701
        %v5734 = vmax.f32 %v5139, %v5702
        %v5735 = vmax.f32 %v5140, %v5703
        %v5736 = vld [vmem:[%s2 + $0x1] sm:$0x1]
        %v5737 = vlaneseq
        %v5738 = vshrl.u32 %v5737, 7
        %v5739 = vsub.s32 0, %v5738
        %v5740 = vrot.slane %v5736, %v5739
        %v5741 = vmul.f32 %v5704, %v5740
        %v5742 = vmul.f32 %v5705, %v5740
        %v5743 = vmul.f32 %v5706, %v5740
        %v5744 = vmul.f32 %v5707, %v5740
        %v5745 = vmul.f32 %v5708, %v5740
        %v5746 = vmul.f32 %v5709, %v5740
        %v5747 = vmul.f32 %v5710, %v5740
        %v5748 = vmul.f32 %v5711, %v5740
        %v5749 = vmul.f32 %v5712, %v5740
        %v5750 = vmul.f32 %v5713, %v5740
        %v5751 = vmul.f32 %v5714, %v5740
        %v5752 = vmul.f32 %v5715, %v5740
        %v5753 = vmul.f32 %v5716, %v5740
        %v5754 = vmul.f32 %v5717, %v5740
        %v5755 = vmul.f32 %v5718, %v5740
        %v5756 = vmul.f32 %v5719, %v5740
        %v5757 = vmul.f32 %v5720, %v5740
        %v5758 = vmul.f32 %v5721, %v5740
        %v5759 = vmul.f32 %v5722, %v5740
        %v5760 = vmul.f32 %v5723, %v5740
        %v5761 = vmul.f32 %v5724, %v5740
        %v5762 = vmul.f32 %v5725, %v5740
        %v5763 = vmul.f32 %v5726, %v5740
        %v5764 = vmul.f32 %v5727, %v5740
        %v5765 = vmul.f32 %v5728, %v5740
        %v5766 = vmul.f32 %v5729, %v5740
        %v5767 = vmul.f32 %v5730, %v5740
        %v5768 = vmul.f32 %v5731, %v5740
        %v5769 = vmul.f32 %v5732, %v5740
        %v5770 = vmul.f32 %v5733, %v5740
        %v5771 = vmul.f32 %v5734, %v5740
        %v5772 = vmul.f32 %v5735, %v5740
        %v5773 = vld [vmem:[%s3 + $0x1] sm:$0x1]
        %v5774 = vlaneseq
        %v5775 = vshrl.u32 %v5774, 7
        %v5776 = vsub.s32 0, %v5775
        %v5777 = vrot.slane %v5773, %v5776
        %v5778 = vadd.f32 %v5741, %v5777
        %v5779 = vadd.f32 %v5742, %v5777
        %v5780 = vadd.f32 %v5743, %v5777
        %v5781 = vadd.f32 %v5744, %v5777
        %v5782 = vadd.f32 %v5745, %v5777
        %v5783 = vadd.f32 %v5746, %v5777
        %v5784 = vadd.f32 %v5747, %v5777
        %v5785 = vadd.f32 %v5748, %v5777
        %v5786 = vadd.f32 %v5749, %v5777
        %v5787 = vadd.f32 %v5750, %v5777
        %v5788 = vadd.f32 %v5751, %v5777
        %v5789 = vadd.f32 %v5752, %v5777
        %v5790 = vadd.f32 %v5753, %v5777
        %v5791 = vadd.f32 %v5754, %v5777
        %v5792 = vadd.f32 %v5755, %v5777
        %v5793 = vadd.f32 %v5756, %v5777
        %v5794 = vadd.f32 %v5757, %v5777
        %v5795 = vadd.f32 %v5758, %v5777
        %v5796 = vadd.f32 %v5759, %v5777
        %v5797 = vadd.f32 %v5760, %v5777
        %v5798 = vadd.f32 %v5761, %v5777
        %v5799 = vadd.f32 %v5762, %v5777
        %v5800 = vadd.f32 %v5763, %v5777
        %v5801 = vadd.f32 %v5764, %v5777
        %v5802 = vadd.f32 %v5765, %v5777
        %v5803 = vadd.f32 %v5766, %v5777
        %v5804 = vadd.f32 %v5767, %v5777
        %v5805 = vadd.f32 %v5768, %v5777
        %v5806 = vadd.f32 %v5769, %v5777
        %v5807 = vadd.f32 %v5770, %v5777
        %v5808 = vadd.f32 %v5771, %v5777
        %v5809 = vadd.f32 %v5772, %v5777
        %v5810 = vmax.f32 %v5778, 0.0
        %v5811 = vmax.f32 %v5779, 0.0
        %v5812 = vmax.f32 %v5780, 0.0
        %v5813 = vmax.f32 %v5781, 0.0
        %v5814 = vmax.f32 %v5782, 0.0
        %v5815 = vmax.f32 %v5783, 0.0
        %v5816 = vmax.f32 %v5784, 0.0
        %v5817 = vmax.f32 %v5785, 0.0
        %v5818 = vmax.f32 %v5786, 0.0
        %v5819 = vmax.f32 %v5787, 0.0
        %v5820 = vmax.f32 %v5788, 0.0
        %v5821 = vmax.f32 %v5789, 0.0
        %v5822 = vmax.f32 %v5790, 0.0
        %v5823 = vmax.f32 %v5791, 0.0
        %v5824 = vmax.f32 %v5792, 0.0
        %v5825 = vmax.f32 %v5793, 0.0
        %v5826 = vmax.f32 %v5794, 0.0
        %v5827 = vmax.f32 %v5795, 0.0
        %v5828 = vmax.f32 %v5796, 0.0
        %v5829 = vmax.f32 %v5797, 0.0
        %v5830 = vmax.f32 %v5798, 0.0
        %v5831 = vmax.f32 %v5799, 0.0
        %v5832 = vmax.f32 %v5800, 0.0
        %v5833 = vmax.f32 %v5801, 0.0
        %v5834 = vmax.f32 %v5802, 0.0
        %v5835 = vmax.f32 %v5803, 0.0
        %v5836 = vmax.f32 %v5804, 0.0
        %v5837 = vmax.f32 %v5805, 0.0
        %v5838 = vmax.f32 %v5806, 0.0
        %v5839 = vmax.f32 %v5807, 0.0
        %v5840 = vmax.f32 %v5808, 0.0
        %v5841 = vmax.f32 %v5809, 0.0
        %5842 = vst.msk [vmem:[#allocation2 + $0x8] sm:$0xff] %vm358, %v5810
        %5843 = vst.msk [vmem:[#allocation2 + $0x10] sm:$0xff] %vm358, %v5811
        %5844 = vst.msk [vmem:[#allocation2 + $0x18] sm:$0xff] %vm358, %v5812
        %5845 = vst.msk [vmem:[#allocation2 + $0x20] sm:$0xff] %vm358, %v5813
        %5846 = vst.msk [vmem:[#allocation2 + $0x28] sm:$0xff] %vm358, %v5814
        %5847 = vst.msk [vmem:[#allocation2 + $0x30] sm:$0xff] %vm358, %v5815
        %5848 = vst.msk [vmem:[#allocation2 + $0x38] sm:$0xff] %vm358, %v5816
        %5849 = vst.msk [vmem:[#allocation2 + $0x40] sm:$0xff] %vm358, %v5817
        %5850 = vst.msk [vmem:[#allocation2 + $0x48] sm:$0xff] %vm358, %v5818
        %5851 = vst.msk [vmem:[#allocation2 + $0x50] sm:$0xff] %vm358, %v5819
        %5852 = vst.msk [vmem:[#allocation2 + $0x58] sm:$0xff] %vm358, %v5820
        %5853 = vst.msk [vmem:[#allocation2 + $0x60] sm:$0xff] %vm358, %v5821
        %5854 = vst.msk [vmem:[#allocation2 + $0x68] sm:$0xff] %vm358, %v5822
        %5855 = vst.msk [vmem:[#allocation2 + $0x70] sm:$0xff] %vm358, %v5823
        %5856 = vst.msk [vmem:[#allocation2 + $0x78] sm:$0xff] %vm358, %v5824
        %5857 = vst.msk [vmem:[#allocation2 + $0x80] sm:$0xff] %vm358, %v5825
        %5858 = vst.msk [vmem:[#allocation2 + $0x88] sm:$0xff] %vm358, %v5826
        %5859 = vst.msk [vmem:[#allocation2 + $0x90] sm:$0xff] %vm358, %v5827
        %5860 = vst.msk [vmem:[#allocation2 + $0x98] sm:$0xff] %vm358, %v5828
        %5861 = vst.msk [vmem:[#allocation2 + $0xa0] sm:$0xff] %vm358, %v5829
        %5862 = vst.msk [vmem:[#allocation2 + $0xa8] sm:$0xff] %vm358, %v5830
        %5863 = vst.msk [vmem:[#allocation2 + $0xb0] sm:$0xff] %vm358, %v5831
        %5864 = vst.msk [vmem:[#allocation2 + $0xb8] sm:$0xff] %vm358, %v5832
        %5865 = vst.msk [vmem:[#allocation2 + $0xc0] sm:$0xff] %vm358, %v5833
        %5866 = vst.msk [vmem:[#allocation2 + $0xc8] sm:$0xff] %vm358, %v5834
        %5867 = vst.msk [vmem:[#allocation2 + $0xd0] sm:$0xff] %vm358, %v5835
        %5868 = vst.msk [vmem:[#allocation2 + $0xd8] sm:$0xff] %vm358, %v5836
        %5869 = vst.msk [vmem:[#allocation2 + $0xe0] sm:$0xff] %vm358, %v5837
        %5870 = vst.msk [vmem:[#allocation2 + $0xe8] sm:$0xff] %vm358, %v5838
        %5871 = vst.msk [vmem:[#allocation2 + $0xf0] sm:$0xff] %vm358, %v5839
        %5872 = vst.msk [vmem:[#allocation2 + $0xf8] sm:$0xff] %vm358, %v5840
        %5873 = vst.msk [vmem:[#allocation2 + $0x100] sm:$0xff] %vm358, %v5841
        %5874 = vst.msk [vmem:[#allocation2 + $0x108] sm:$0x1] %vm4061, 0.0
        %v5875 = vld [vmem:[%s747] ss:$2 sm:$0xff]
        %v5876 = vld [vmem:[%s749] ss:$2 sm:$0xff]
        %v5877 = vld [vmem:[%s751] ss:$2 sm:$0xff]
        %v5878 = vld [vmem:[%s753] ss:$2 sm:$0xff]
        %v5879 = vld [vmem:[%s755] ss:$2 sm:$0xff]
        %v5880 = vld [vmem:[%s757] ss:$2 sm:$0xff]
        %v5881 = vld [vmem:[%s759] ss:$2 sm:$0xff]
        %v5882 = vld [vmem:[%s761] ss:$2 sm:$0xff]
        %v5883 = vld [vmem:[%s763] ss:$2 sm:$0xff]
        %v5884 = vld [vmem:[%s765] ss:$2 sm:$0xff]
        %v5885 = vld [vmem:[%s767] ss:$2 sm:$0xff]
        %v5886 = vld [vmem:[%s769] ss:$2 sm:$0xff]
        %v5887 = vld [vmem:[%s771] ss:$2 sm:$0xff]
        %v5888 = vld [vmem:[%s773] ss:$2 sm:$0xff]
        %v5889 = vld [vmem:[%s775] ss:$2 sm:$0xff]
        %v5890 = vld [vmem:[%s777] ss:$2 sm:$0xff]
        %v5891 = vpack.c.bf16 %v5876, %v5875
        %v5892 = vpack.c.bf16 %v5878, %v5877
        %v5893 = vpack.c.bf16 %v5880, %v5879
        %v5894 = vpack.c.bf16 %v5882, %v5881
        %v5895 = vpack.c.bf16 %v5884, %v5883
        %v5896 = vpack.c.bf16 %v5886, %v5885
        %v5897 = vpack.c.bf16 %v5888, %v5887
        %v5898 = vpack.c.bf16 %v5890, %v5889
        %v5899 = vld [vmem:[%s907] ss:$2 sm:$0xff]
        %v5900 = vld [vmem:[%s909] ss:$2 sm:$0xff]
        %v5901 = vld [vmem:[%s911] ss:$2 sm:$0xff]
        %v5902 = vld [vmem:[%s913] ss:$2 sm:$0xff]
        %v5903 = vld [vmem:[%s915] ss:$2 sm:$0xff]
        %v5904 = vld [vmem:[%s917] ss:$2 sm:$0xff]
        %v5905 = vld [vmem:[%s919] ss:$2 sm:$0xff]
        %v5906 = vld [vmem:[%s921] ss:$2 sm:$0xff]
        %v5907 = vld [vmem:[%s923] ss:$2 sm:$0xff]
        %v5908 = vld [vmem:[%s925] ss:$2 sm:$0xff]
        %v5909 = vld [vmem:[%s927] ss:$2 sm:$0xff]
        %v5910 = vld [vmem:[%s929] ss:$2 sm:$0xff]
        %v5911 = vld [vmem:[%s931] ss:$2 sm:$0xff]
        %v5912 = vld [vmem:[%s933] ss:$2 sm:$0xff]
        %v5913 = vld [vmem:[%s935] ss:$2 sm:$0xff]
        %v5914 = vld [vmem:[%s937] ss:$2 sm:$0xff]
        %v5915 = vpack.c.bf16 %v5900, %v5899
        %v5916 = vpack.c.bf16 %v5902, %v5901
        %v5917 = vpack.c.bf16 %v5904, %v5903
        %v5918 = vpack.c.bf16 %v5906, %v5905
        %v5919 = vpack.c.bf16 %v5908, %v5907
        %v5920 = vpack.c.bf16 %v5910, %v5909
        %v5921 = vpack.c.bf16 %v5912, %v5911
        %v5922 = vpack.c.bf16 %v5914, %v5913
        %v5923 = vld [vmem:[%s1067] ss:$2 sm:$0xff]
        %v5924 = vld [vmem:[%s1069] ss:$2 sm:$0xff]
        %v5925 = vld [vmem:[%s1071] ss:$2 sm:$0xff]
        %v5926 = vld [vmem:[%s1073] ss:$2 sm:$0xff]
        %v5927 = vld [vmem:[%s1075] ss:$2 sm:$0xff]
        %v5928 = vld [vmem:[%s1077] ss:$2 sm:$0xff]
        %v5929 = vld [vmem:[%s1079] ss:$2 sm:$0xff]
        %v5930 = vld [vmem:[%s1081] ss:$2 sm:$0xff]
        %v5931 = vld [vmem:[%s1083] ss:$2 sm:$0xff]
        %v5932 = vld [vmem:[%s1085] ss:$2 sm:$0xff]
        %v5933 = vld [vmem:[%s1087] ss:$2 sm:$0xff]
        %v5934 = vld [vmem:[%s1089] ss:$2 sm:$0xff]
        %v5935 = vld [vmem:[%s1091] ss:$2 sm:$0xff]
        %v5936 = vld [vmem:[%s1093] ss:$2 sm:$0xff]
        %v5937 = vld [vmem:[%s1095] ss:$2 sm:$0xff]
        %v5938 = vld [vmem:[%s1097] ss:$2 sm:$0xff]
        %v5939 = vpack.c.bf16 %v5924, %v5923
        %v5940 = vpack.c.bf16 %v5926, %v5925
        %v5941 = vpack.c.bf16 %v5928, %v5927
        %v5942 = vpack.c.bf16 %v5930, %v5929
        %v5943 = vpack.c.bf16 %v5932, %v5931
        %v5944 = vpack.c.bf16 %v5934, %v5933
        %v5945 = vpack.c.bf16 %v5936, %v5935
        %v5946 = vpack.c.bf16 %v5938, %v5937
        %v5947 = vld [vmem:[%s1227] ss:$2 sm:$0xff]
        %v5948 = vld [vmem:[%s1229] ss:$2 sm:$0xff]
        %v5949 = vld [vmem:[%s1231] ss:$2 sm:$0xff]
        %v5950 = vld [vmem:[%s1233] ss:$2 sm:$0xff]
        %v5951 = vld [vmem:[%s1235] ss:$2 sm:$0xff]
        %v5952 = vld [vmem:[%s1237] ss:$2 sm:$0xff]
        %v5953 = vld [vmem:[%s1239] ss:$2 sm:$0xff]
        %v5954 = vld [vmem:[%s1241] ss:$2 sm:$0xff]
        %v5955 = vld [vmem:[%s1243] ss:$2 sm:$0xff]
        %v5956 = vld [vmem:[%s1245] ss:$2 sm:$0xff]
        %v5957 = vld [vmem:[%s1247] ss:$2 sm:$0xff]
        %v5958 = vld [vmem:[%s1249] ss:$2 sm:$0xff]
        %v5959 = vld [vmem:[%s1251] ss:$2 sm:$0xff]
        %v5960 = vld [vmem:[%s1253] ss:$2 sm:$0xff]
        %v5961 = vld [vmem:[%s1255] ss:$2 sm:$0xff]
        %v5962 = vld [vmem:[%s1257] ss:$2 sm:$0xff]
        %v5963 = vpack.c.bf16 %v5948, %v5947
        %v5964 = vpack.c.bf16 %v5950, %v5949
        %v5965 = vpack.c.bf16 %v5952, %v5951
        %v5966 = vpack.c.bf16 %v5954, %v5953
        %v5967 = vpack.c.bf16 %v5956, %v5955
        %v5968 = vpack.c.bf16 %v5958, %v5957
        %v5969 = vpack.c.bf16 %v5960, %v5959
        %v5970 = vpack.c.bf16 %v5962, %v5961
        %s5971 = scalar_lea.vmem %s1, 192
        %v5972 = vld [vmem:[%s5971] sm:$0xf]
        %v5973 = vld [vmem:[%s5971 + $0x4] sm:$0xf]
        %v5974 = vld [vmem:[%s5971 + $0x8] sm:$0xf]
        %v5975 = vld [vmem:[%s5971 + $0xc] sm:$0xf]
        %v5976 = vld [vmem:[%s5971 + $0x10] sm:$0xf]
        %v5977 = vld [vmem:[%s5971 + $0x14] sm:$0xf]
        %v5978 = vld [vmem:[%s5971 + $0x18] sm:$0xf]
        %v5979 = vld [vmem:[%s5971 + $0x1c] sm:$0xf]
        %s5980 = scalar_lea.vmem %s1, 224
        %v5981 = vld [vmem:[%s5980] sm:$0xf]
        %v5982 = vld [vmem:[%s5980 + $0x4] sm:$0xf]
        %v5983 = vld [vmem:[%s5980 + $0x8] sm:$0xf]
        %v5984 = vld [vmem:[%s5980 + $0xc] sm:$0xf]
        %v5985 = vld [vmem:[%s5980 + $0x10] sm:$0xf]
        %v5986 = vld [vmem:[%s5980 + $0x14] sm:$0xf]
        %v5987 = vld [vmem:[%s5980 + $0x18] sm:$0xf]
        %v5988 = vld [vmem:[%s5980 + $0x1c] sm:$0xf]
        %s5989 = scalar_lea.vmem %s1, 256
        %v5990 = vld [vmem:[%s5989] sm:$0xf]
        %v5991 = vld [vmem:[%s5989 + $0x4] sm:$0xf]
        %v5992 = vld [vmem:[%s5989 + $0x8] sm:$0xf]
        %v5993 = vld [vmem:[%s5989 + $0xc] sm:$0xf]
        %v5994 = vld [vmem:[%s5989 + $0x10] sm:$0xf]
        %v5995 = vld [vmem:[%s5989 + $0x14] sm:$0xf]
        %v5996 = vld [vmem:[%s5989 + $0x18] sm:$0xf]
        %v5997 = vld [vmem:[%s5989 + $0x1c] sm:$0xf]
        %v6006 = vunpack.c.l.b16 %v5981
        %v6007 = vunpack.c.l.b16 %v5982
        %v6008 = vunpack.c.l.b16 %v5983
        %v6009 = vunpack.c.l.b16 %v5984
        %v6010 = vunpack.c.l.b16 %v5985
        %v6011 = vunpack.c.l.b16 %v5986
        %v6012 = vunpack.c.l.b16 %v5987
        %v6013 = vunpack.c.l.b16 %v5988
        %v6014 = vpack.c.b16 %v6007, %v6006
        %v6015 = vpack.c.b16 %v6009, %v6008
        %v6016 = vpack.c.b16 %v6011, %v6010
        %v6017 = vpack.c.b16 %v6013, %v6012
        %v6023 = vsel %vm358, %v5915, 0
        %v6026 = vsel %vm358, %v5916, 0
        %v6029 = vsel %vm358, %v5917, 0
        %v6032 = vsel %vm358, %v5918, 0
        %v6035 = vsel %vm358, %v5919, 0
        %v6038 = vsel %vm358, %v5920, 0
        %v6041 = vsel %vm358, %v5921, 0
        %v6044 = vsel %vm358, %v5922, 0
        %6046 = vmatprep.subr.bf16.mxu0 0
        %6047 = vmatpush1.bf16.msra.mxu0 %v6014
        %6048 = vmatprep.subr.bf16.mxu0 0
        %6049 = vmatpush1.bf16.msra.mxu0 %v6015
        %6050 = vmatprep.subr.bf16.mxu0 0
        %6051 = vmatpush1.bf16.msra.mxu0 %v6016
        %6052 = vmatprep.subr.bf16.mxu0 0
        %6053 = vmatpush1.bf16.msra.mxu0 %v6017
        %6054 = vmatprep.subr.bf16.mxu0 0
        %6055 = vmatpush1.bf16.msra.mxu0 0
        %6056 = vmatprep.subr.bf16.mxu0 0
        %6057 = vmatpush1.bf16.msra.mxu0 0
        %6058 = vmatprep.subr.bf16.mxu0 0
        %6059 = vmatpush1.bf16.msra.mxu0 0
        %6060 = vmatprep.subr.bf16.mxu0 0
        %6061 = vmatpush1.bf16.msra.mxu0 0
        %6062 = vmatprep.subr.bf16.mxu0 0
        %6063 = vmatpush1.bf16.msra.mxu0 0
        %6064 = vmatprep.subr.bf16.mxu0 0
        %6065 = vmatpush1.bf16.msra.mxu0 0
        %6066 = vmatprep.subr.bf16.mxu0 0
        %6067 = vmatpush1.bf16.msra.mxu0 0
        %6068 = vmatprep.subr.bf16.mxu0 0
        %6069 = vmatpush1.bf16.msra.mxu0 0
        %6070 = vmatprep.subr.bf16.mxu0 0
        %6071 = vmatpush1.bf16.msra.mxu0 0
        %6072 = vmatprep.subr.bf16.mxu0 0
        %6073 = vmatpush1.bf16.msra.mxu0 0
        %6074 = vmatprep.subr.bf16.mxu0 0
        %6075 = vmatpush1.bf16.msra.mxu0 0
        %6076 = vmatprep.subr.bf16.mxu0 0
        %6077 = vmatpush1.bf16.msra.mxu0 0
        %6078 = vmatprep.mubr.bf16.mxu0 0
        %6079 = vmatmul.mubr.bf16.gmra.mrb[0].mxu0 %v6023
        %v6080 = vpop.f32.mrb[0].mxu0
        %v6081 = vadd.f32 0.0, %v6080
        %v6082 = vpop.f32.mrb[0].mxu0
        %v6083 = vpop.f32.mrb[0].mxu0
        %v6084 = vadd.f32 0.0, %v6083
        %v6085 = vpop.f32.mrb[0].mxu0
        %6086 = vmatprep.mubr.bf16.mxu0 0
        %6087 = vmatmul.mubr.bf16.gmra.mrb[0].mxu0 %v6026
        %v6088 = vpop.f32.mrb[0].mxu0
        %v6089 = vadd.f32 0.0, %v6088
        %v6090 = vpop.f32.mrb[0].mxu0
        %v6091 = vpop.f32.mrb[0].mxu0
        %v6092 = vadd.f32 0.0, %v6091
        %v6093 = vpop.f32.mrb[0].mxu0
        %6094 = vmatprep.mubr.bf16.mxu0 0
        %6095 = vmatmul.mubr.bf16.gmra.mrb[0].mxu0 %v6029
        %v6096 = vpop.f32.mrb[0].mxu0
        %v6097 = vadd.f32 0.0, %v6096
        %v6098 = vpop.f32.mrb[0].mxu0
        %v6099 = vpop.f32.mrb[0].mxu0
        %v6100 = vadd.f32 0.0, %v6099
        %v6101 = vpop.f32.mrb[0].mxu0
        %6102 = vmatprep.mubr.bf16.mxu0 0
        %6103 = vmatmul.mubr.bf16.gmra.mrb[0].mxu0 %v6032
        %v6104 = vpop.f32.mrb[0].mxu0
        %v6105 = vadd.f32 0.0, %v6104
        %v6106 = vpop.f32.mrb[0].mxu0
        %v6107 = vpop.f32.mrb[0].mxu0
        %v6108 = vadd.f32 0.0, %v6107
        %v6109 = vpop.f32.mrb[0].mxu0
        %6110 = vmatprep.mubr.bf16.mxu0 0
        %6111 = vmatmul.mubr.bf16.gmra.mrb[0].mxu0 %v6035
        %v6112 = vpop.f32.mrb[0].mxu0
        %v6113 = vadd.f32 0.0, %v6112
        %v6114 = vpop.f32.mrb[0].mxu0
        %v6115 = vpop.f32.mrb[0].mxu0
        %v6116 = vadd.f32 0.0, %v6115
        %v6117 = vpop.f32.mrb[0].mxu0
        %6118 = vmatprep.mubr.bf16.mxu0 0
        %6119 = vmatmul.mubr.bf16.gmra.mrb[0].mxu0 %v6038
        %v6120 = vpop.f32.mrb[0].mxu0
        %v6121 = vadd.f32 0.0, %v6120
        %v6122 = vpop.f32.mrb[0].mxu0
        %v6123 = vpop.f32.mrb[0].mxu0
        %v6124 = vadd.f32 0.0, %v6123
        %v6125 = vpop.f32.mrb[0].mxu0
        %6126 = vmatprep.mubr.bf16.mxu0 0
        %6127 = vmatmul.mubr.bf16.gmra.mrb[0].mxu0 %v6041
        %v6128 = vpop.f32.mrb[0].mxu0
        %v6129 = vadd.f32 0.0, %v6128
        %v6130 = vpop.f32.mrb[0].mxu0
        %v6131 = vpop.f32.mrb[0].mxu0
        %v6132 = vadd.f32 0.0, %v6131
        %v6133 = vpop.f32.mrb[0].mxu0
        %6134 = vmatprep.mubr.bf16.mxu0 0
        %6135 = vmatmul.mubr.bf16.gmra.mrb[0].mxu0 %v6044
        %v6136 = vpop.f32.mrb[0].mxu0
        %v6137 = vadd.f32 0.0, %v6136
        %v6138 = vpop.f32.mrb[0].mxu0
        %v6139 = vpop.f32.mrb[0].mxu0
        %v6140 = vadd.f32 0.0, %v6139
        %v6141 = vpop.f32.mrb[0].mxu0
        %6142 = vdwg.mxu0
        %v6151 = vunpack.c.l.b16 %v5972
        %v6152 = vunpack.c.l.b16 %v5973
        %v6153 = vunpack.c.l.b16 %v5974
        %v6154 = vunpack.c.l.b16 %v5975
        %v6155 = vunpack.c.l.b16 %v5976
        %v6156 = vunpack.c.l.b16 %v5977
        %v6157 = vunpack.c.l.b16 %v5978
        %v6158 = vunpack.c.l.b16 %v5979
        %v6159 = vpack.c.b16 %v6152, %v6151
        %v6160 = vpack.c.b16 %v6154, %v6153
        %v6161 = vpack.c.b16 %v6156, %v6155
        %v6162 = vpack.c.b16 %v6158, %v6157
        %v6168 = vsel %vm358, %v5891, 0
        %v6171 = vsel %vm358, %v5892, 0
        %v6174 = vsel %vm358, %v5893, 0
        %v6177 = vsel %vm358, %v5894, 0
        %v6180 = vsel %vm358, %v5895, 0
        %v6183 = vsel %vm358, %v5896, 0
        %v6186 = vsel %vm358, %v5897, 0
        %v6189 = vsel %vm358, %v5898, 0
        %6191 = vmatprep.subr.bf16.mxu0 0
        %6192 = vmatpush1.bf16.msra.mxu0 %v6159
        %6193 = vmatprep.subr.bf16.mxu0 0
        %6194 = vmatpush1.bf16.msra.mxu0 %v6160
        %6195 = vmatprep.subr.bf16.mxu0 0
        %6196 = vmatpush1.bf16.msra.mxu0 %v6161
        %6197 = vmatprep.subr.bf16.mxu0 0
        %6198 = vmatpush1.bf16.msra.mxu0 %v6162
        %6199 = vmatprep.subr.bf16.mxu0 0
        %6200 = vmatpush1.bf16.msra.mxu0 0
        %6201 = vmatprep.subr.bf16.mxu0 0
        %6202 = vmatpush1.bf16.msra.mxu0 0
        %6203 = vmatprep.subr.bf16.mxu0 0
        %6204 = vmatpush1.bf16.msra.mxu0 0
        %6205 = vmatprep.subr.bf16.mxu0 0
        %6206 = vmatpush1.bf16.msra.mxu0 0
        %6207 = vmatprep.subr.bf16.mxu0 0
        %6208 = vmatpush1.bf16.msra.mxu0 0
        %6209 = vmatprep.subr.bf16.mxu0 0
        %6210 = vmatpush1.bf16.msra.mxu0 0
        %6211 = vmatprep.subr.bf16.mxu0 0
        %6212 = vmatpush1.bf16.msra.mxu0 0
        %6213 = vmatprep.subr.bf16.mxu0 0
        %6214 = vmatpush1.bf16.msra.mxu0 0
        %6215 = vmatprep.subr.bf16.mxu0 0
        %6216 = vmatpush1.bf16.msra.mxu0 0
        %6217 = vmatprep.subr.bf16.mxu0 0
        %6218 = vmatpush1.bf16.msra.mxu0 0
        %6219 = vmatprep.subr.bf16.mxu0 0
        %6220 = vmatpush1.bf16.msra.mxu0 0
        %6221 = vmatprep.subr.bf16.mxu0 0
        %6222 = vmatpush1.bf16.msra.mxu0 0
        %6223 = vmatprep.mubr.bf16.mxu0 0
        %6224 = vmatmul.mubr.bf16.gmra.mrb[0].mxu0 %v6168
        %v6225 = vpop.f32.mrb[0].mxu0
        %v6226 = vadd.f32 %v6081, %v6225
        %v6227 = vpop.f32.mrb[0].mxu0
        %v6228 = vpop.f32.mrb[0].mxu0
        %v6229 = vadd.f32 %v6084, %v6228
        %v6230 = vpop.f32.mrb[0].mxu0
        %6231 = vmatprep.mubr.bf16.mxu0 0
        %6232 = vmatmul.mubr.bf16.gmra.mrb[0].mxu0 %v6171
        %v6233 = vpop.f32.mrb[0].mxu0
        %v6234 = vadd.f32 %v6089, %v6233
        %v6235 = vpop.f32.mrb[0].mxu0
        %v6236 = vpop.f32.mrb[0].mxu0
        %v6237 = vadd.f32 %v6092, %v6236
        %v6238 = vpop.f32.mrb[0].mxu0
        %6239 = vmatprep.mubr.bf16.mxu0 0
        %6240 = vmatmul.mubr.bf16.gmra.mrb[0].mxu0 %v6174
        %v6241 = vpop.f32.mrb[0].mxu0
        %v6242 = vadd.f32 %v6097, %v6241
        %v6243 = vpop.f32.mrb[0].mxu0
        %v6244 = vpop.f32.mrb[0].mxu0
        %v6245 = vadd.f32 %v6100, %v6244
        %v6246 = vpop.f32.mrb[0].mxu0
        %6247 = vmatprep.mubr.bf16.mxu0 0
        %6248 = vmatmul.mubr.bf16.gmra.mrb[0].mxu0 %v6177
        %v6249 = vpop.f32.mrb[0].mxu0
        %v6250 = vadd.f32 %v6105, %v6249
        %v6251 = vpop.f32.mrb[0].mxu0
        %v6252 = vpop.f32.mrb[0].mxu0
        %v6253 = vadd.f32 %v6108, %v6252
        %v6254 = vpop.f32.mrb[0].mxu0
        %6255 = vmatprep.mubr.bf16.mxu0 0
        %6256 = vmatmul.mubr.bf16.gmra.mrb[0].mxu0 %v6180
        %v6257 = vpop.f32.mrb[0].mxu0
        %v6258 = vadd.f32 %v6113, %v6257
        %v6259 = vpop.f32.mrb[0].mxu0
        %v6260 = vpop.f32.mrb[0].mxu0
        %v6261 = vadd.f32 %v6116, %v6260
        %v6262 = vpop.f32.mrb[0].mxu0
        %6263 = vmatprep.mubr.bf16.mxu0 0
        %6264 = vmatmul.mubr.bf16.gmra.mrb[0].mxu0 %v6183
        %v6265 = vpop.f32.mrb[0].mxu0
        %v6266 = vadd.f32 %v6121, %v6265
        %v6267 = vpop.f32.mrb[0].mxu0
        %v6268 = vpop.f32.mrb[0].mxu0
        %v6269 = vadd.f32 %v6124, %v6268
        %v6270 = vpop.f32.mrb[0].mxu0
        %6271 = vmatprep.mubr.bf16.mxu0 0
        %6272 = vmatmul.mubr.bf16.gmra.mrb[0].mxu0 %v6186
        %v6273 = vpop.f32.mrb[0].mxu0
        %v6274 = vadd.f32 %v6129, %v6273
        %v6275 = vpop.f32.mrb[0].mxu0
        %v6276 = vpop.f32.mrb[0].mxu0
        %v6277 = vadd.f32 %v6132, %v6276
        %v6278 = vpop.f32.mrb[0].mxu0
        %6279 = vmatprep.mubr.bf16.mxu0 0
        %6280 = vmatmul.mubr.bf16.gmra.mrb[0].mxu0 %v6189
        %v6281 = vpop.f32.mrb[0].mxu0
        %v6282 = vadd.f32 %v6137, %v6281
        %v6283 = vpop.f32.mrb[0].mxu0
        %v6284 = vpop.f32.mrb[0].mxu0
        %v6285 = vadd.f32 %v6140, %v6284
        %v6286 = vpop.f32.mrb[0].mxu0
        %6287 = vdwg.mxu0
        %v6296 = vunpack.c.l.b16 %v5990
        %v6297 = vunpack.c.l.b16 %v5991
        %v6298 = vunpack.c.l.b16 %v5992
        %v6299 = vunpack.c.l.b16 %v5993
        %v6300 = vunpack.c.l.b16 %v5994
        %v6301 = vunpack.c.l.b16 %v5995
        %v6302 = vunpack.c.l.b16 %v5996
        %v6303 = vunpack.c.l.b16 %v5997
        %v6304 = vpack.c.b16 %v6297, %v6296
        %v6305 = vpack.c.b16 %v6299, %v6298
        %v6306 = vpack.c.b16 %v6301, %v6300
        %v6307 = vpack.c.b16 %v6303, %v6302
        %v6313 = vsel %vm358, %v5939, 0
        %v6316 = vsel %vm358, %v5940, 0
        %v6319 = vsel %vm358, %v5941, 0
        %v6322 = vsel %vm358, %v5942, 0
        %v6325 = vsel %vm358, %v5943, 0
        %v6328 = vsel %vm358, %v5944, 0
        %v6331 = vsel %vm358, %v5945, 0
        %v6334 = vsel %vm358, %v5946, 0
        %6336 = vmatprep.subr.bf16.mxu0 0
        %6337 = vmatpush1.bf16.msra.mxu0 %v6304
        %6338 = vmatprep.subr.bf16.mxu0 0
        %6339 = vmatpush1.bf16.msra.mxu0 %v6305
        %6340 = vmatprep.subr.bf16.mxu0 0
        %6341 = vmatpush1.bf16.msra.mxu0 %v6306
        %6342 = vmatprep.subr.bf16.mxu0 0
        %6343 = vmatpush1.bf16.msra.mxu0 %v6307
        %6344 = vmatprep.subr.bf16.mxu0 0
        %6345 = vmatpush1.bf16.msra.mxu0 0
        %6346 = vmatprep.subr.bf16.mxu0 0
        %6347 = vmatpush1.bf16.msra.mxu0 0
        %6348 = vmatprep.subr.bf16.mxu0 0
        %6349 = vmatpush1.bf16.msra.mxu0 0
        %6350 = vmatprep.subr.bf16.mxu0 0
        %6351 = vmatpush1.bf16.msra.mxu0 0
        %6352 = vmatprep.subr.bf16.mxu0 0
        %6353 = vmatpush1.bf16.msra.mxu0 0
        %6354 = vmatprep.subr.bf16.mxu0 0
        %6355 = vmatpush1.bf16.msra.mxu0 0
        %6356 = vmatprep.subr.bf16.mxu0 0
        %6357 = vmatpush1.bf16.msra.mxu0 0
        %6358 = vmatprep.subr.bf16.mxu0 0
        %6359 = vmatpush1.bf16.msra.mxu0 0
        %6360 = vmatprep.subr.bf16.mxu0 0
        %6361 = vmatpush1.bf16.msra.mxu0 0
        %6362 = vmatprep.subr.bf16.mxu0 0
        %6363 = vmatpush1.bf16.msra.mxu0 0
        %6364 = vmatprep.subr.bf16.mxu0 0
        %6365 = vmatpush1.bf16.msra.mxu0 0
        %6366 = vmatprep.subr.bf16.mxu0 0
        %6367 = vmatpush1.bf16.msra.mxu0 0
        %6368 = vmatprep.mubr.bf16.mxu0 0
        %6369 = vmatmul.mubr.bf16.gmra.mrb[0].mxu0 %v6313
        %v6370 = vpop.f32.mrb[0].mxu0
        %v6371 = vadd.f32 0.0, %v6370
        %v6372 = vpop.f32.mrb[0].mxu0
        %v6373 = vpop.f32.mrb[0].mxu0
        %v6374 = vadd.f32 0.0, %v6373
        %v6375 = vpop.f32.mrb[0].mxu0
        %6376 = vmatprep.mubr.bf16.mxu0 0
        %6377 = vmatmul.mubr.bf16.gmra.mrb[0].mxu0 %v6316
        %v6378 = vpop.f32.mrb[0].mxu0
        %v6379 = vadd.f32 0.0, %v6378
        %v6380 = vpop.f32.mrb[0].mxu0
        %v6381 = vpop.f32.mrb[0].mxu0
        %v6382 = vadd.f32 0.0, %v6381
        %v6383 = vpop.f32.mrb[0].mxu0
        %6384 = vmatprep.mubr.bf16.mxu0 0
        %6385 = vmatmul.mubr.bf16.gmra.mrb[0].mxu0 %v6319
        %v6386 = vpop.f32.mrb[0].mxu0
        %v6387 = vadd.f32 0.0, %v6386
        %v6388 = vpop.f32.mrb[0].mxu0
        %v6389 = vpop.f32.mrb[0].mxu0
        %v6390 = vadd.f32 0.0, %v6389
        %v6391 = vpop.f32.mrb[0].mxu0
        %6392 = vmatprep.mubr.bf16.mxu0 0
        %6393 = vmatmul.mubr.bf16.gmra.mrb[0].mxu0 %v6322
        %v6394 = vpop.f32.mrb[0].mxu0
        %v6395 = vadd.f32 0.0, %v6394
        %v6396 = vpop.f32.mrb[0].mxu0
        %v6397 = vpop.f32.mrb[0].mxu0
        %v6398 = vadd.f32 0.0, %v6397
        %v6399 = vpop.f32.mrb[0].mxu0
        %6400 = vmatprep.mubr.bf16.mxu0 0
        %6401 = vmatmul.mubr.bf16.gmra.mrb[0].mxu0 %v6325
        %v6402 = vpop.f32.mrb[0].mxu0
        %v6403 = vadd.f32 0.0, %v6402
        %v6404 = vpop.f32.mrb[0].mxu0
        %v6405 = vpop.f32.mrb[0].mxu0
        %v6406 = vadd.f32 0.0, %v6405
        %v6407 = vpop.f32.mrb[0].mxu0
        %6408 = vmatprep.mubr.bf16.mxu0 0
        %6409 = vmatmul.mubr.bf16.gmra.mrb[0].mxu0 %v6328
        %v6410 = vpop.f32.mrb[0].mxu0
        %v6411 = vadd.f32 0.0, %v6410
        %v6412 = vpop.f32.mrb[0].mxu0
        %v6413 = vpop.f32.mrb[0].mxu0
        %v6414 = vadd.f32 0.0, %v6413
        %v6415 = vpop.f32.mrb[0].mxu0
        %6416 = vmatprep.mubr.bf16.mxu0 0
        %6417 = vmatmul.mubr.bf16.gmra.mrb[0].mxu0 %v6331
        %v6418 = vpop.f32.mrb[0].mxu0
        %v6419 = vadd.f32 0.0, %v6418
        %v6420 = vpop.f32.mrb[0].mxu0
        %v6421 = vpop.f32.mrb[0].mxu0
        %v6422 = vadd.f32 0.0, %v6421
        %v6423 = vpop.f32.mrb[0].mxu0
        %6424 = vmatprep.mubr.bf16.mxu0 0
        %6425 = vmatmul.mubr.bf16.gmra.mrb[0].mxu0 %v6334
        %v6426 = vpop.f32.mrb[0].mxu0
        %v6427 = vadd.f32 0.0, %v6426
        %v6428 = vpop.f32.mrb[0].mxu0
        %v6429 = vpop.f32.mrb[0].mxu0
        %v6430 = vadd.f32 0.0, %v6429
        %v6431 = vpop.f32.mrb[0].mxu0
        %6432 = vdwg.mxu0
        %v6433 = vadd.f32 %v6226, %v6371
        %v6434 = vadd.f32 %v6229, %v6374
        %v6435 = vadd.f32 %v6234, %v6379
        %v6436 = vadd.f32 %v6237, %v6382
        %v6437 = vadd.f32 %v6242, %v6387
        %v6438 = vadd.f32 %v6245, %v6390
        %v6439 = vadd.f32 %v6250, %v6395
        %v6440 = vadd.f32 %v6253, %v6398
        %v6441 = vadd.f32 %v6258, %v6403
        %v6442 = vadd.f32 %v6261, %v6406
        %v6443 = vadd.f32 %v6266, %v6411
        %v6444 = vadd.f32 %v6269, %v6414
        %v6445 = vadd.f32 %v6274, %v6419
        %v6446 = vadd.f32 %v6277, %v6422
        %v6447 = vadd.f32 %v6282, %v6427
        %v6448 = vadd.f32 %v6285, %v6430
        %6449 = vmatprep.subr.bf16.mxu0 0
        %6450 = vmatpush1.bf16.msra.mxu0 %v6014
        %6451 = vmatprep.subr.bf16.mxu0 0
        %6452 = vmatpush1.bf16.msra.mxu0 %v6015
        %6453 = vmatprep.subr.bf16.mxu0 0
        %6454 = vmatpush1.bf16.msra.mxu0 %v6016
        %6455 = vmatprep.subr.bf16.mxu0 0
        %6456 = vmatpush1.bf16.msra.mxu0 %v6017
        %6457 = vmatprep.subr.bf16.mxu0 0
        %6458 = vmatpush1.bf16.msra.mxu0 0
        %6459 = vmatprep.subr.bf16.mxu0 0
        %6460 = vmatpush1.bf16.msra.mxu0 0
        %6461 = vmatprep.subr.bf16.mxu0 0
        %6462 = vmatpush1.bf16.msra.mxu0 0
        %6463 = vmatprep.subr.bf16.mxu0 0
        %6464 = vmatpush1.bf16.msra.mxu0 0
        %6465 = vmatprep.subr.bf16.mxu0 0
        %6466 = vmatpush1.bf16.msra.mxu0 0
        %6467 = vmatprep.subr.bf16.mxu0 0
        %6468 = vmatpush1.bf16.msra.mxu0 0
        %6469 = vmatprep.subr.bf16.mxu0 0
        %6470 = vmatpush1.bf16.msra.mxu0 0
        %6471 = vmatprep.subr.bf16.mxu0 0
        %6472 = vmatpush1.bf16.msra.mxu0 0
        %6473 = vmatprep.subr.bf16.mxu0 0
        %6474 = vmatpush1.bf16.msra.mxu0 0
        %6475 = vmatprep.subr.bf16.mxu0 0
        %6476 = vmatpush1.bf16.msra.mxu0 0
        %6477 = vmatprep.subr.bf16.mxu0 0
        %6478 = vmatpush1.bf16.msra.mxu0 0
        %6479 = vmatprep.subr.bf16.mxu0 0
        %6480 = vmatpush1.bf16.msra.mxu0 0
        %6481 = vmatprep.mubr.bf16.mxu0 0
        %6482 = vmatmul.mubr.bf16.gmra.mrb[0].mxu0 %v6313
        %v6483 = vpop.f32.mrb[0].mxu0
        %v6484 = vadd.f32 0.0, %v6483
        %v6485 = vpop.f32.mrb[0].mxu0
        %v6486 = vpop.f32.mrb[0].mxu0
        %v6487 = vadd.f32 0.0, %v6486
        %v6488 = vpop.f32.mrb[0].mxu0
        %6489 = vmatprep.mubr.bf16.mxu0 0
        %6490 = vmatmul.mubr.bf16.gmra.mrb[0].mxu0 %v6316
        %v6491 = vpop.f32.mrb[0].mxu0
        %v6492 = vadd.f32 0.0, %v6491
        %v6493 = vpop.f32.mrb[0].mxu0
        %v6494 = vpop.f32.mrb[0].mxu0
        %v6495 = vadd.f32 0.0, %v6494
        %v6496 = vpop.f32.mrb[0].mxu0
        %6497 = vmatprep.mubr.bf16.mxu0 0
        %6498 = vmatmul.mubr.bf16.gmra.mrb[0].mxu0 %v6319
        %v6499 = vpop.f32.mrb[0].mxu0
        %v6500 = vadd.f32 0.0, %v6499
        %v6501 = vpop.f32.mrb[0].mxu0
        %v6502 = vpop.f32.mrb[0].mxu0
        %v6503 = vadd.f32 0.0, %v6502
        %v6504 = vpop.f32.mrb[0].mxu0
        %6505 = vmatprep.mubr.bf16.mxu0 0
        %6506 = vmatmul.mubr.bf16.gmra.mrb[0].mxu0 %v6322
        %v6507 = vpop.f32.mrb[0].mxu0
        %v6508 = vadd.f32 0.0, %v6507
        %v6509 = vpop.f32.mrb[0].mxu0
        %v6510 = vpop.f32.mrb[0].mxu0
        %v6511 = vadd.f32 0.0, %v6510
        %v6512 = vpop.f32.mrb[0].mxu0
        %6513 = vmatprep.mubr.bf16.mxu0 0
        %6514 = vmatmul.mubr.bf16.gmra.mrb[0].mxu0 %v6325
        %v6515 = vpop.f32.mrb[0].mxu0
        %v6516 = vadd.f32 0.0, %v6515
        %v6517 = vpop.f32.mrb[0].mxu0
        %v6518 = vpop.f32.mrb[0].mxu0
        %v6519 = vadd.f32 0.0, %v6518
        %v6520 = vpop.f32.mrb[0].mxu0
        %6521 = vmatprep.mubr.bf16.mxu0 0
        %6522 = vmatmul.mubr.bf16.gmra.mrb[0].mxu0 %v6328
        %v6523 = vpop.f32.mrb[0].mxu0
        %v6524 = vadd.f32 0.0, %v6523
        %v6525 = vpop.f32.mrb[0].mxu0
        %v6526 = vpop.f32.mrb[0].mxu0
        %v6527 = vadd.f32 0.0, %v6526
        %v6528 = vpop.f32.mrb[0].mxu0
        %6529 = vmatprep.mubr.bf16.mxu0 0
        %6530 = vmatmul.mubr.bf16.gmra.mrb[0].mxu0 %v6331
        %v6531 = vpop.f32.mrb[0].mxu0
        %v6532 = vadd.f32 0.0, %v6531
        %v6533 = vpop.f32.mrb[0].mxu0
        %v6534 = vpop.f32.mrb[0].mxu0
        %v6535 = vadd.f32 0.0, %v6534
        %v6536 = vpop.f32.mrb[0].mxu0
        %6537 = vmatprep.mubr.bf16.mxu0 0
        %6538 = vmatmul.mubr.bf16.gmra.mrb[0].mxu0 %v6334
        %v6539 = vpop.f32.mrb[0].mxu0
        %v6540 = vadd.f32 0.0, %v6539
        %v6541 = vpop.f32.mrb[0].mxu0
        %v6542 = vpop.f32.mrb[0].mxu0
        %v6543 = vadd.f32 0.0, %v6542
        %v6544 = vpop.f32.mrb[0].mxu0
        %6545 = vdwg.mxu0
        %6546 = vmatprep.subr.bf16.mxu0 0
        %6547 = vmatpush1.bf16.msra.mxu0 %v6159
        %6548 = vmatprep.subr.bf16.mxu0 0
        %6549 = vmatpush1.bf16.msra.mxu0 %v6160
        %6550 = vmatprep.subr.bf16.mxu0 0
        %6551 = vmatpush1.bf16.msra.mxu0 %v6161
        %6552 = vmatprep.subr.bf16.mxu0 0
        %6553 = vmatpush1.bf16.msra.mxu0 %v6162
        %6554 = vmatprep.subr.bf16.mxu0 0
        %6555 = vmatpush1.bf16.msra.mxu0 0
        %6556 = vmatprep.subr.bf16.mxu0 0
        %6557 = vmatpush1.bf16.msra.mxu0 0
        %6558 = vmatprep.subr.bf16.mxu0 0
        %6559 = vmatpush1.bf16.msra.mxu0 0
        %6560 = vmatprep.subr.bf16.mxu0 0
        %6561 = vmatpush1.bf16.msra.mxu0 0
        %6562 = vmatprep.subr.bf16.mxu0 0
        %6563 = vmatpush1.bf16.msra.mxu0 0
        %6564 = vmatprep.subr.bf16.mxu0 0
        %6565 = vmatpush1.bf16.msra.mxu0 0
        %6566 = vmatprep.subr.bf16.mxu0 0
        %6567 = vmatpush1.bf16.msra.mxu0 0
        %6568 = vmatprep.subr.bf16.mxu0 0
        %6569 = vmatpush1.bf16.msra.mxu0 0
        %6570 = vmatprep.subr.bf16.mxu0 0
        %6571 = vmatpush1.bf16.msra.mxu0 0
        %6572 = vmatprep.subr.bf16.mxu0 0
        %6573 = vmatpush1.bf16.msra.mxu0 0
        %6574 = vmatprep.subr.bf16.mxu0 0
        %6575 = vmatpush1.bf16.msra.mxu0 0
        %6576 = vmatprep.subr.bf16.mxu0 0
        %6577 = vmatpush1.bf16.msra.mxu0 0
        %6578 = vmatprep.mubr.bf16.mxu0 0
        %6579 = vmatmul.mubr.bf16.gmra.mrb[0].mxu0 %v6023
        %v6580 = vpop.f32.mrb[0].mxu0
        %v6581 = vadd.f32 %v6484, %v6580
        %v6582 = vpop.f32.mrb[0].mxu0
        %v6583 = vpop.f32.mrb[0].mxu0
        %v6584 = vadd.f32 %v6487, %v6583
        %v6585 = vpop.f32.mrb[0].mxu0
        %6586 = vmatprep.mubr.bf16.mxu0 0
        %6587 = vmatmul.mubr.bf16.gmra.mrb[0].mxu0 %v6026
        %v6588 = vpop.f32.mrb[0].mxu0
        %v6589 = vadd.f32 %v6492, %v6588
        %v6590 = vpop.f32.mrb[0].mxu0
        %v6591 = vpop.f32.mrb[0].mxu0
        %v6592 = vadd.f32 %v6495, %v6591
        %v6593 = vpop.f32.mrb[0].mxu0
        %6594 = vmatprep.mubr.bf16.mxu0 0
        %6595 = vmatmul.mubr.bf16.gmra.mrb[0].mxu0 %v6029
        %v6596 = vpop.f32.mrb[0].mxu0
        %v6597 = vadd.f32 %v6500, %v6596
        %v6598 = vpop.f32.mrb[0].mxu0
        %v6599 = vpop.f32.mrb[0].mxu0
        %v6600 = vadd.f32 %v6503, %v6599
        %v6601 = vpop.f32.mrb[0].mxu0
        %6602 = vmatprep.mubr.bf16.mxu0 0
        %6603 = vmatmul.mubr.bf16.gmra.mrb[0].mxu0 %v6032
        %v6604 = vpop.f32.mrb[0].mxu0
        %v6605 = vadd.f32 %v6508, %v6604
        %v6606 = vpop.f32.mrb[0].mxu0
        %v6607 = vpop.f32.mrb[0].mxu0
        %v6608 = vadd.f32 %v6511, %v6607
        %v6609 = vpop.f32.mrb[0].mxu0
        %6610 = vmatprep.mubr.bf16.mxu0 0
        %6611 = vmatmul.mubr.bf16.gmra.mrb[0].mxu0 %v6035
        %v6612 = vpop.f32.mrb[0].mxu0
        %v6613 = vadd.f32 %v6516, %v6612
        %v6614 = vpop.f32.mrb[0].mxu0
        %v6615 = vpop.f32.mrb[0].mxu0
        %v6616 = vadd.f32 %v6519, %v6615
        %v6617 = vpop.f32.mrb[0].mxu0
        %6618 = vmatprep.mubr.bf16.mxu0 0
        %6619 = vmatmul.mubr.bf16.gmra.mrb[0].mxu0 %v6038
        %v6620 = vpop.f32.mrb[0].mxu0
        %v6621 = vadd.f32 %v6524, %v6620
        %v6622 = vpop.f32.mrb[0].mxu0
        %v6623 = vpop.f32.mrb[0].mxu0
        %v6624 = vadd.f32 %v6527, %v6623
        %v6625 = vpop.f32.mrb[0].mxu0
        %6626 = vmatprep.mubr.bf16.mxu0 0
        %6627 = vmatmul.mubr.bf16.gmra.mrb[0].mxu0 %v6041
        %v6628 = vpop.f32.mrb[0].mxu0
        %v6629 = vadd.f32 %v6532, %v6628
        %v6630 = vpop.f32.mrb[0].mxu0
        %v6631 = vpop.f32.mrb[0].mxu0
        %v6632 = vadd.f32 %v6535, %v6631
        %v6633 = vpop.f32.mrb[0].mxu0
        %6634 = vmatprep.mubr.bf16.mxu0 0
        %6635 = vmatmul.mubr.bf16.gmra.mrb[0].mxu0 %v6044
        %v6636 = vpop.f32.mrb[0].mxu0
        %v6637 = vadd.f32 %v6540, %v6636
        %v6638 = vpop.f32.mrb[0].mxu0
        %v6639 = vpop.f32.mrb[0].mxu0
        %v6640 = vadd.f32 %v6543, %v6639
        %v6641 = vpop.f32.mrb[0].mxu0
        %6642 = vdwg.mxu0
        %v6644 = vsel %vm358, %v5963, 0
        %v6647 = vsel %vm358, %v5964, 0
        %v6650 = vsel %vm358, %v5965, 0
        %v6653 = vsel %vm358, %v5966, 0
        %v6656 = vsel %vm358, %v5967, 0
        %v6659 = vsel %vm358, %v5968, 0
        %v6662 = vsel %vm358, %v5969, 0
        %v6665 = vsel %vm358, %v5970, 0
        %6667 = vmatprep.subr.bf16.mxu0 0
        %6668 = vmatpush1.bf16.msra.mxu0 %v6304
        %6669 = vmatprep.subr.bf16.mxu0 0
        %6670 = vmatpush1.bf16.msra.mxu0 %v6305
        %6671 = vmatprep.subr.bf16.mxu0 0
        %6672 = vmatpush1.bf16.msra.mxu0 %v6306
        %6673 = vmatprep.subr.bf16.mxu0 0
        %6674 = vmatpush1.bf16.msra.mxu0 %v6307
        %6675 = vmatprep.subr.bf16.mxu0 0
        %6676 = vmatpush1.bf16.msra.mxu0 0
        %6677 = vmatprep.subr.bf16.mxu0 0
        %6678 = vmatpush1.bf16.msra.mxu0 0
        %6679 = vmatprep.subr.bf16.mxu0 0
        %6680 = vmatpush1.bf16.msra.mxu0 0
        %6681 = vmatprep.subr.bf16.mxu0 0
        %6682 = vmatpush1.bf16.msra.mxu0 0
        %6683 = vmatprep.subr.bf16.mxu0 0
        %6684 = vmatpush1.bf16.msra.mxu0 0
        %6685 = vmatprep.subr.bf16.mxu0 0
        %6686 = vmatpush1.bf16.msra.mxu0 0
        %6687 = vmatprep.subr.bf16.mxu0 0
        %6688 = vmatpush1.bf16.msra.mxu0 0
        %6689 = vmatprep.subr.bf16.mxu0 0
        %6690 = vmatpush1.bf16.msra.mxu0 0
        %6691 = vmatprep.subr.bf16.mxu0 0
        %6692 = vmatpush1.bf16.msra.mxu0 0
        %6693 = vmatprep.subr.bf16.mxu0 0
        %6694 = vmatpush1.bf16.msra.mxu0 0
        %6695 = vmatprep.subr.bf16.mxu0 0
        %6696 = vmatpush1.bf16.msra.mxu0 0
        %6697 = vmatprep.subr.bf16.mxu0 0
        %6698 = vmatpush1.bf16.msra.mxu0 0
        %6699 = vmatprep.mubr.bf16.mxu0 0
        %6700 = vmatmul.mubr.bf16.gmra.mrb[0].mxu0 %v6644
        %v6701 = vpop.f32.mrb[0].mxu0
        %v6702 = vadd.f32 0.0, %v6701
        %v6703 = vpop.f32.mrb[0].mxu0
        %v6704 = vpop.f32.mrb[0].mxu0
        %v6705 = vadd.f32 0.0, %v6704
        %v6706 = vpop.f32.mrb[0].mxu0
        %6707 = vmatprep.mubr.bf16.mxu0 0
        %6708 = vmatmul.mubr.bf16.gmra.mrb[0].mxu0 %v6647
        %v6709 = vpop.f32.mrb[0].mxu0
        %v6710 = vadd.f32 0.0, %v6709
        %v6711 = vpop.f32.mrb[0].mxu0
        %v6712 = vpop.f32.mrb[0].mxu0
        %v6713 = vadd.f32 0.0, %v6712
        %v6714 = vpop.f32.mrb[0].mxu0
        %6715 = vmatprep.mubr.bf16.mxu0 0
        %6716 = vmatmul.mubr.bf16.gmra.mrb[0].mxu0 %v6650
        %v6717 = vpop.f32.mrb[0].mxu0
        %v6718 = vadd.f32 0.0, %v6717
        %v6719 = vpop.f32.mrb[0].mxu0
        %v6720 = vpop.f32.mrb[0].mxu0
        %v6721 = vadd.f32 0.0, %v6720
        %v6722 = vpop.f32.mrb[0].mxu0
        %6723 = vmatprep.mubr.bf16.mxu0 0
        %6724 = vmatmul.mubr.bf16.gmra.mrb[0].mxu0 %v6653
        %v6725 = vpop.f32.mrb[0].mxu0
        %v6726 = vadd.f32 0.0, %v6725
        %v6727 = vpop.f32.mrb[0].mxu0
        %v6728 = vpop.f32.mrb[0].mxu0
        %v6729 = vadd.f32 0.0, %v6728
        %v6730 = vpop.f32.mrb[0].mxu0
        %6731 = vmatprep.mubr.bf16.mxu0 0
        %6732 = vmatmul.mubr.bf16.gmra.mrb[0].mxu0 %v6656
        %v6733 = vpop.f32.mrb[0].mxu0
        %v6734 = vadd.f32 0.0, %v6733
        %v6735 = vpop.f32.mrb[0].mxu0
        %v6736 = vpop.f32.mrb[0].mxu0
        %v6737 = vadd.f32 0.0, %v6736
        %v6738 = vpop.f32.mrb[0].mxu0
        %6739 = vmatprep.mubr.bf16.mxu0 0
        %6740 = vmatmul.mubr.bf16.gmra.mrb[0].mxu0 %v6659
        %v6741 = vpop.f32.mrb[0].mxu0
        %v6742 = vadd.f32 0.0, %v6741
        %v6743 = vpop.f32.mrb[0].mxu0
        %v6744 = vpop.f32.mrb[0].mxu0
        %v6745 = vadd.f32 0.0, %v6744
        %v6746 = vpop.f32.mrb[0].mxu0
        %6747 = vmatprep.mubr.bf16.mxu0 0
        %6748 = vmatmul.mubr.bf16.gmra.mrb[0].mxu0 %v6662
        %v6749 = vpop.f32.mrb[0].mxu0
        %v6750 = vadd.f32 0.0, %v6749
        %v6751 = vpop.f32.mrb[0].mxu0
        %v6752 = vpop.f32.mrb[0].mxu0
        %v6753 = vadd.f32 0.0, %v6752
        %v6754 = vpop.f32.mrb[0].mxu0
        %6755 = vmatprep.mubr.bf16.mxu0 0
        %6756 = vmatmul.mubr.bf16.gmra.mrb[0].mxu0 %v6665
        %v6757 = vpop.f32.mrb[0].mxu0
        %v6758 = vadd.f32 0.0, %v6757
        %v6759 = vpop.f32.mrb[0].mxu0
        %v6760 = vpop.f32.mrb[0].mxu0
        %v6761 = vadd.f32 0.0, %v6760
        %v6762 = vpop.f32.mrb[0].mxu0
        %6763 = vdwg.mxu0
        %v6764 = vadd.f32 %v6581, %v6702
        %v6765 = vadd.f32 %v6584, %v6705
        %v6766 = vadd.f32 %v6589, %v6710
        %v6767 = vadd.f32 %v6592, %v6713
        %v6768 = vadd.f32 %v6597, %v6718
        %v6769 = vadd.f32 %v6600, %v6721
        %v6770 = vadd.f32 %v6605, %v6726
        %v6771 = vadd.f32 %v6608, %v6729
        %v6772 = vadd.f32 %v6613, %v6734
        %v6773 = vadd.f32 %v6616, %v6737
        %v6774 = vadd.f32 %v6621, %v6742
        %v6775 = vadd.f32 %v6624, %v6745
        %v6776 = vadd.f32 %v6629, %v6750
        %v6777 = vadd.f32 %v6632, %v6753
        %v6778 = vadd.f32 %v6637, %v6758
        %v6779 = vadd.f32 %v6640, %v6761
        %v6780 = vmax.f32 %v6433, %v6764
        %v6781 = vmax.f32 %v6434, %v6765
        %v6782 = vmax.f32 %v6435, %v6766
        %v6783 = vmax.f32 %v6436, %v6767
        %v6784 = vmax.f32 %v6437, %v6768
        %v6785 = vmax.f32 %v6438, %v6769
        %v6786 = vmax.f32 %v6439, %v6770
        %v6787 = vmax.f32 %v6440, %v6771
        %v6788 = vmax.f32 %v6441, %v6772
        %v6789 = vmax.f32 %v6442, %v6773
        %v6790 = vmax.f32 %v6443, %v6774
        %v6791 = vmax.f32 %v6444, %v6775
        %v6792 = vmax.f32 %v6445, %v6776
        %v6793 = vmax.f32 %v6446, %v6777
        %v6794 = vmax.f32 %v6447, %v6778
        %v6795 = vmax.f32 %v6448, %v6779
        %v6796 = vld [vmem:[%s2 + $0x2] sm:$0x1]
        %v6797 = vlaneseq
        %v6798 = vshrl.u32 %v6797, 7
        %v6799 = vsub.s32 0, %v6798
        %v6800 = vrot.slane %v6796, %v6799
        %v6801 = vmul.f32 %v6780, %v6800
        %v6802 = vmul.f32 %v6781, %v6800
        %v6803 = vmul.f32 %v6782, %v6800
        %v6804 = vmul.f32 %v6783, %v6800
        %v6805 = vmul.f32 %v6784, %v6800
        %v6806 = vmul.f32 %v6785, %v6800
        %v6807 = vmul.f32 %v6786, %v6800
        %v6808 = vmul.f32 %v6787, %v6800
        %v6809 = vmul.f32 %v6788, %v6800
        %v6810 = vmul.f32 %v6789, %v6800
        %v6811 = vmul.f32 %v6790, %v6800
        %v6812 = vmul.f32 %v6791, %v6800
        %v6813 = vmul.f32 %v6792, %v6800
        %v6814 = vmul.f32 %v6793, %v6800
        %v6815 = vmul.f32 %v6794, %v6800
        %v6816 = vmul.f32 %v6795, %v6800
        %v6817 = vld [vmem:[%s3 + $0x2] sm:$0x1]
        %v6818 = vlaneseq
        %v6819 = vshrl.u32 %v6818, 7
        %v6820 = vsub.s32 0, %v6819
        %v6821 = vrot.slane %v6817, %v6820
        %v6822 = vadd.f32 %v6801, %v6821
        %v6823 = vadd.f32 %v6802, %v6821
        %v6824 = vadd.f32 %v6803, %v6821
        %v6825 = vadd.f32 %v6804, %v6821
        %v6826 = vadd.f32 %v6805, %v6821
        %v6827 = vadd.f32 %v6806, %v6821
        %v6828 = vadd.f32 %v6807, %v6821
        %v6829 = vadd.f32 %v6808, %v6821
        %v6830 = vadd.f32 %v6809, %v6821
        %v6831 = vadd.f32 %v6810, %v6821
        %v6832 = vadd.f32 %v6811, %v6821
        %v6833 = vadd.f32 %v6812, %v6821
        %v6834 = vadd.f32 %v6813, %v6821
        %v6835 = vadd.f32 %v6814, %v6821
        %v6836 = vadd.f32 %v6815, %v6821
        %v6837 = vadd.f32 %v6816, %v6821
        %v6838 = vmax.f32 %v6822, 0.0
        %v6839 = vmax.f32 %v6823, 0.0
        %v6840 = vmax.f32 %v6824, 0.0
        %v6841 = vmax.f32 %v6825, 0.0
        %v6842 = vmax.f32 %v6826, 0.0
        %v6843 = vmax.f32 %v6827, 0.0
        %v6844 = vmax.f32 %v6828, 0.0
        %v6845 = vmax.f32 %v6829, 0.0
        %v6846 = vmax.f32 %v6830, 0.0
        %v6847 = vmax.f32 %v6831, 0.0
        %v6848 = vmax.f32 %v6832, 0.0
        %v6849 = vmax.f32 %v6833, 0.0
        %v6850 = vmax.f32 %v6834, 0.0
        %v6851 = vmax.f32 %v6835, 0.0
        %v6852 = vmax.f32 %v6836, 0.0
        %v6853 = vmax.f32 %v6837, 0.0
        %6854 = vst.msk [vmem:[#allocation3 + $0x8] sm:$0xff] %vm358, %v6838
        %6855 = vst.msk [vmem:[#allocation3 + $0x10] sm:$0xff] %vm358, %v6839
        %6856 = vst.msk [vmem:[#allocation3 + $0x18] sm:$0xff] %vm358, %v6840
        %6857 = vst.msk [vmem:[#allocation3 + $0x20] sm:$0xff] %vm358, %v6841
        %6858 = vst.msk [vmem:[#allocation3 + $0x28] sm:$0xff] %vm358, %v6842
        %6859 = vst.msk [vmem:[#allocation3 + $0x30] sm:$0xff] %vm358, %v6843
        %6860 = vst.msk [vmem:[#allocation3 + $0x38] sm:$0xff] %vm358, %v6844
        %6861 = vst.msk [vmem:[#allocation3 + $0x40] sm:$0xff] %vm358, %v6845
        %6862 = vst.msk [vmem:[#allocation3 + $0x48] sm:$0xff] %vm358, %v6846
        %6863 = vst.msk [vmem:[#allocation3 + $0x50] sm:$0xff] %vm358, %v6847
        %6864 = vst.msk [vmem:[#allocation3 + $0x58] sm:$0xff] %vm358, %v6848
        %6865 = vst.msk [vmem:[#allocation3 + $0x60] sm:$0xff] %vm358, %v6849
        %6866 = vst.msk [vmem:[#allocation3 + $0x68] sm:$0xff] %vm358, %v6850
        %6867 = vst.msk [vmem:[#allocation3 + $0x70] sm:$0xff] %vm358, %v6851
        %6868 = vst.msk [vmem:[#allocation3 + $0x78] sm:$0xff] %vm358, %v6852
        %6869 = vst.msk [vmem:[#allocation3 + $0x80] sm:$0xff] %vm358, %v6853
        %6870 = vst.msk [vmem:[#allocation3 + $0x88] sm:$0x1] %vm4061, 0.0
        %v6871 = vld [vmem:[%s4063] ss:$2 sm:$0xff]
        %v6872 = vld [vmem:[%s4065] ss:$2 sm:$0xff]
        %v6873 = vld [vmem:[%s4067] ss:$2 sm:$0xff]
        %v6874 = vld [vmem:[%s4069] ss:$2 sm:$0xff]
        %v6875 = vld [vmem:[%s4071] ss:$2 sm:$0xff]
        %v6876 = vld [vmem:[%s4073] ss:$2 sm:$0xff]
        %v6877 = vld [vmem:[%s4075] ss:$2 sm:$0xff]
        %v6878 = vld [vmem:[%s4077] ss:$2 sm:$0xff]
        %v6879 = vpack.c.bf16 %v6872, %v6871
        %v6880 = vpack.c.bf16 %v6874, %v6873
        %v6881 = vpack.c.bf16 %v6876, %v6875
        %v6882 = vpack.c.bf16 %v6878, %v6877
        %v6883 = vld [vmem:[%s4143] ss:$2 sm:$0xff]
        %v6884 = vld [vmem:[%s4145] ss:$2 sm:$0xff]
        %v6885 = vld [vmem:[%s4147] ss:$2 sm:$0xff]
        %v6886 = vld [vmem:[%s4149] ss:$2 sm:$0xff]
        %v6887 = vld [vmem:[%s4151] ss:$2 sm:$0xff]
        %v6888 = vld [vmem:[%s4153] ss:$2 sm:$0xff]
        %v6889 = vld [vmem:[%s4155] ss:$2 sm:$0xff]
        %v6890 = vld [vmem:[%s4157] ss:$2 sm:$0xff]
        %v6891 = vpack.c.bf16 %v6884, %v6883
        %v6892 = vpack.c.bf16 %v6886, %v6885
        %v6893 = vpack.c.bf16 %v6888, %v6887
        %v6894 = vpack.c.bf16 %v6890, %v6889
        %v6895 = vld [vmem:[%s4223] ss:$2 sm:$0xff]
        %v6896 = vld [vmem:[%s4225] ss:$2 sm:$0xff]
        %v6897 = vld [vmem:[%s4227] ss:$2 sm:$0xff]
        %v6898 = vld [vmem:[%s4229] ss:$2 sm:$0xff]
        %v6899 = vld [vmem:[%s4231] ss:$2 sm:$0xff]
        %v6900 = vld [vmem:[%s4233] ss:$2 sm:$0xff]
        %v6901 = vld [vmem:[%s4235] ss:$2 sm:$0xff]
        %v6902 = vld [vmem:[%s4237] ss:$2 sm:$0xff]
        %v6903 = vpack.c.bf16 %v6896, %v6895
        %v6904 = vpack.c.bf16 %v6898, %v6897
        %v6905 = vpack.c.bf16 %v6900, %v6899
        %v6906 = vpack.c.bf16 %v6902, %v6901
        %v6907 = vld [vmem:[%s4303] ss:$2 sm:$0xff]
        %v6908 = vld [vmem:[%s4305] ss:$2 sm:$0xff]
        %v6909 = vld [vmem:[%s4307] ss:$2 sm:$0xff]
        %v6910 = vld [vmem:[%s4309] ss:$2 sm:$0xff]
        %v6911 = vld [vmem:[%s4311] ss:$2 sm:$0xff]
        %v6912 = vld [vmem:[%s4313] ss:$2 sm:$0xff]
        %v6913 = vld [vmem:[%s4315] ss:$2 sm:$0xff]
        %v6914 = vld [vmem:[%s4317] ss:$2 sm:$0xff]
        %v6915 = vpack.c.bf16 %v6908, %v6907
        %v6916 = vpack.c.bf16 %v6910, %v6909
        %v6917 = vpack.c.bf16 %v6912, %v6911
        %v6918 = vpack.c.bf16 %v6914, %v6913
        %s6919 = scalar_lea.vmem %s1, 288
        %v6920 = vld [vmem:[%s6919] sm:$0xf]
        %v6921 = vld [vmem:[%s6919 + $0x4] sm:$0xf]
        %v6922 = vld [vmem:[%s6919 + $0x8] sm:$0xf]
        %v6923 = vld [vmem:[%s6919 + $0xc] sm:$0xf]
        %v6924 = vld [vmem:[%s6919 + $0x10] sm:$0xf]
        %v6925 = vld [vmem:[%s6919 + $0x14] sm:$0xf]
        %v6926 = vld [vmem:[%s6919 + $0x18] sm:$0xf]
        %v6927 = vld [vmem:[%s6919 + $0x1c] sm:$0xf]
        %s6928 = scalar_lea.vmem %s1, 320
        %v6929 = vld [vmem:[%s6928] sm:$0xf]
        %v6930 = vld [vmem:[%s6928 + $0x4] sm:$0xf]
        %v6931 = vld [vmem:[%s6928 + $0x8] sm:$0xf]
        %v6932 = vld [vmem:[%s6928 + $0xc] sm:$0xf]
        %v6933 = vld [vmem:[%s6928 + $0x10] sm:$0xf]
        %v6934 = vld [vmem:[%s6928 + $0x14] sm:$0xf]
        %v6935 = vld [vmem:[%s6928 + $0x18] sm:$0xf]
        %v6936 = vld [vmem:[%s6928 + $0x1c] sm:$0xf]
        %s6937 = scalar_lea.vmem %s1, 352
        %v6938 = vld [vmem:[%s6937] sm:$0xf]
        %v6939 = vld [vmem:[%s6937 + $0x4] sm:$0xf]
        %v6940 = vld [vmem:[%s6937 + $0x8] sm:$0xf]
        %v6941 = vld [vmem:[%s6937 + $0xc] sm:$0xf]
        %v6942 = vld [vmem:[%s6937 + $0x10] sm:$0xf]
        %v6943 = vld [vmem:[%s6937 + $0x14] sm:$0xf]
        %v6944 = vld [vmem:[%s6937 + $0x18] sm:$0xf]
        %v6945 = vld [vmem:[%s6937 + $0x1c] sm:$0xf]
        %v6954 = vunpack.c.l.b16 %v6929
        %v6955 = vunpack.c.l.b16 %v6930
        %v6956 = vunpack.c.l.b16 %v6931
        %v6957 = vunpack.c.l.b16 %v6932
        %v6958 = vunpack.c.l.b16 %v6933
        %v6959 = vunpack.c.l.b16 %v6934
        %v6960 = vunpack.c.l.b16 %v6935
        %v6961 = vunpack.c.l.b16 %v6936
        %v6962 = vpack.c.b16 %v6955, %v6954
        %v6963 = vpack.c.b16 %v6957, %v6956
        %v6964 = vpack.c.b16 %v6959, %v6958
        %v6965 = vpack.c.b16 %v6961, %v6960
        %v6971 = vsel %vm358, %v6891, 0
        %v6974 = vsel %vm358, %v6892, 0
        %v6977 = vsel %vm358, %v6893, 0
        %v6980 = vsel %vm358, %v6894, 0
        %6982 = vmatprep.subr.bf16.mxu0 0
        %6983 = vmatpush1.bf16.msra.mxu0 %v6962
        %6984 = vmatprep.subr.bf16.mxu0 0
        %6985 = vmatpush1.bf16.msra.mxu0 %v6963
        %6986 = vmatprep.subr.bf16.mxu0 0
        %6987 = vmatpush1.bf16.msra.mxu0 %v6964
        %6988 = vmatprep.subr.bf16.mxu0 0
        %6989 = vmatpush1.bf16.msra.mxu0 %v6965
        %6990 = vmatprep.subr.bf16.mxu0 0
        %6991 = vmatpush1.bf16.msra.mxu0 0
        %6992 = vmatprep.subr.bf16.mxu0 0
        %6993 = vmatpush1.bf16.msra.mxu0 0
        %6994 = vmatprep.subr.bf16.mxu0 0
        %6995 = vmatpush1.bf16.msra.mxu0 0
        %6996 = vmatprep.subr.bf16.mxu0 0
        %6997 = vmatpush1.bf16.msra.mxu0 0
        %6998 = vmatprep.subr.bf16.mxu0 0
        %6999 = vmatpush1.bf16.msra.mxu0 0
        %7000 = vmatprep.subr.bf16.mxu0 0
        %7001 = vmatpush1.bf16.msra.mxu0 0
        %7002 = vmatprep.subr.bf16.mxu0 0
        %7003 = vmatpush1.bf16.msra.mxu0 0
        %7004 = vmatprep.subr.bf16.mxu0 0
        %7005 = vmatpush1.bf16.msra.mxu0 0
        %7006 = vmatprep.subr.bf16.mxu0 0
        %7007 = vmatpush1.bf16.msra.mxu0 0
        %7008 = vmatprep.subr.bf16.mxu0 0
        %7009 = vmatpush1.bf16.msra.mxu0 0
        %7010 = vmatprep.subr.bf16.mxu0 0
        %7011 = vmatpush1.bf16.msra.mxu0 0
        %7012 = vmatprep.subr.bf16.mxu0 0
        %7013 = vmatpush1.bf16.msra.mxu0 0
        %7014 = vmatprep.mubr.bf16.mxu0 0
        %7015 = vmatmul.mubr.bf16.gmra.mrb[0].mxu0 %v6971
        %v7016 = vpop.f32.mrb[0].mxu0
        %v7017 = vadd.f32 0.0, %v7016
        %v7018 = vpop.f32.mrb[0].mxu0
        %v7019 = vpop.f32.mrb[0].mxu0
        %v7020 = vadd.f32 0.0, %v7019
        %v7021 = vpop.f32.mrb[0].mxu0
        %7022 = vmatprep.mubr.bf16.mxu0 0
        %7023 = vmatmul.mubr.bf16.gmra.mrb[0].mxu0 %v6974
        %v7024 = vpop.f32.mrb[0].mxu0
        %v7025 = vadd.f32 0.0, %v7024
        %v7026 = vpop.f32.mrb[0].mxu0
        %v7027 = vpop.f32.mrb[0].mxu0
        %v7028 = vadd.f32 0.0, %v7027
        %v7029 = vpop.f32.mrb[0].mxu0
        %7030 = vmatprep.mubr.bf16.mxu0 0
        %7031 = vmatmul.mubr.bf16.gmra.mrb[0].mxu0 %v6977
        %v7032 = vpop.f32.mrb[0].mxu0
        %v7033 = vadd.f32 0.0, %v7032
        %v7034 = vpop.f32.mrb[0].mxu0
        %v7035 = vpop.f32.mrb[0].mxu0
        %v7036 = vadd.f32 0.0, %v7035
        %v7037 = vpop.f32.mrb[0].mxu0
        %7038 = vmatprep.mubr.bf16.mxu0 0
        %7039 = vmatmul.mubr.bf16.gmra.mrb[0].mxu0 %v6980
        %v7040 = vpop.f32.mrb[0].mxu0
        %v7041 = vadd.f32 0.0, %v7040
        %v7042 = vpop.f32.mrb[0].mxu0
        %v7043 = vpop.f32.mrb[0].mxu0
        %v7044 = vadd.f32 0.0, %v7043
        %v7045 = vpop.f32.mrb[0].mxu0
        %7046 = vdwg.mxu0
        %v7055 = vunpack.c.l.b16 %v6920
        %v7056 = vunpack.c.l.b16 %v6921
        %v7057 = vunpack.c.l.b16 %v6922
        %v7058 = vunpack.c.l.b16 %v6923
        %v7059 = vunpack.c.l.b16 %v6924
        %v7060 = vunpack.c.l.b16 %v6925
        %v7061 = vunpack.c.l.b16 %v6926
        %v7062 = vunpack.c.l.b16 %v6927
        %v7063 = vpack.c.b16 %v7056, %v7055
        %v7064 = vpack.c.b16 %v7058, %v7057
        %v7065 = vpack.c.b16 %v7060, %v7059
        %v7066 = vpack.c.b16 %v7062, %v7061
        %v7072 = vsel %vm358, %v6879, 0
        %v7075 = vsel %vm358, %v6880, 0
        %v7078 = vsel %vm358, %v6881, 0
        %v7081 = vsel %vm358, %v6882, 0
        %7083 = vmatprep.subr.bf16.mxu0 0
        %7084 = vmatpush1.bf16.msra.mxu0 %v7063
        %7085 = vmatprep.subr.bf16.mxu0 0
        %7086 = vmatpush1.bf16.msra.mxu0 %v7064
        %7087 = vmatprep.subr.bf16.mxu0 0
        %7088 = vmatpush1.bf16.msra.mxu0 %v7065
        %7089 = vmatprep.subr.bf16.mxu0 0
        %7090 = vmatpush1.bf16.msra.mxu0 %v7066
        %7091 = vmatprep.subr.bf16.mxu0 0
        %7092 = vmatpush1.bf16.msra.mxu0 0
        %7093 = vmatprep.subr.bf16.mxu0 0
        %7094 = vmatpush1.bf16.msra.mxu0 0
        %7095 = vmatprep.subr.bf16.mxu0 0
        %7096 = vmatpush1.bf16.msra.mxu0 0
        %7097 = vmatprep.subr.bf16.mxu0 0
        %7098 = vmatpush1.bf16.msra.mxu0 0
        %7099 = vmatprep.subr.bf16.mxu0 0
        %7100 = vmatpush1.bf16.msra.mxu0 0
        %7101 = vmatprep.subr.bf16.mxu0 0
        %7102 = vmatpush1.bf16.msra.mxu0 0
        %7103 = vmatprep.subr.bf16.mxu0 0
        %7104 = vmatpush1.bf16.msra.mxu0 0
        %7105 = vmatprep.subr.bf16.mxu0 0
        %7106 = vmatpush1.bf16.msra.mxu0 0
        %7107 = vmatprep.subr.bf16.mxu0 0
        %7108 = vmatpush1.bf16.msra.mxu0 0
        %7109 = vmatprep.subr.bf16.mxu0 0
        %7110 = vmatpush1.bf16.msra.mxu0 0
        %7111 = vmatprep.subr.bf16.mxu0 0
        %7112 = vmatpush1.bf16.msra.mxu0 0
        %7113 = vmatprep.subr.bf16.mxu0 0
        %7114 = vmatpush1.bf16.msra.mxu0 0
        %7115 = vmatprep.mubr.bf16.mxu0 0
        %7116 = vmatmul.mubr.bf16.gmra.mrb[0].mxu0 %v7072
        %v7117 = vpop.f32.mrb[0].mxu0
        %v7118 = vadd.f32 %v7017, %v7117
        %v7119 = vpop.f32.mrb[0].mxu0
        %v7120 = vpop.f32.mrb[0].mxu0
        %v7121 = vadd.f32 %v7020, %v7120
        %v7122 = vpop.f32.mrb[0].mxu0
        %7123 = vmatprep.mubr.bf16.mxu0 0
        %7124 = vmatmul.mubr.bf16.gmra.mrb[0].mxu0 %v7075
        %v7125 = vpop.f32.mrb[0].mxu0
        %v7126 = vadd.f32 %v7025, %v7125
        %v7127 = vpop.f32.mrb[0].mxu0
        %v7128 = vpop.f32.mrb[0].mxu0
        %v7129 = vadd.f32 %v7028, %v7128
        %v7130 = vpop.f32.mrb[0].mxu0
        %7131 = vmatprep.mubr.bf16.mxu0 0
        %7132 = vmatmul.mubr.bf16.gmra.mrb[0].mxu0 %v7078
        %v7133 = vpop.f32.mrb[0].mxu0
        %v7134 = vadd.f32 %v7033, %v7133
        %v7135 = vpop.f32.mrb[0].mxu0
        %v7136 = vpop.f32.mrb[0].mxu0
        %v7137 = vadd.f32 %v7036, %v7136
        %v7138 = vpop.f32.mrb[0].mxu0
        %7139 = vmatprep.mubr.bf16.mxu0 0
        %7140 = vmatmul.mubr.bf16.gmra.mrb[0].mxu0 %v7081
        %v7141 = vpop.f32.mrb[0].mxu0
        %v7142 = vadd.f32 %v7041, %v7141
        %v7143 = vpop.f32.mrb[0].mxu0
        %v7144 = vpop.f32.mrb[0].mxu0
        %v7145 = vadd.f32 %v7044, %v7144
        %v7146 = vpop.f32.mrb[0].mxu0
        %7147 = vdwg.mxu0
        %v7156 = vunpack.c.l.b16 %v6938
        %v7157 = vunpack.c.l.b16 %v6939
        %v7158 = vunpack.c.l.b16 %v6940
        %v7159 = vunpack.c.l.b16 %v6941
        %v7160 = vunpack.c.l.b16 %v6942
        %v7161 = vunpack.c.l.b16 %v6943
        %v7162 = vunpack.c.l.b16 %v6944
        %v7163 = vunpack.c.l.b16 %v6945
        %v7164 = vpack.c.b16 %v7157, %v7156
        %v7165 = vpack.c.b16 %v7159, %v7158
        %v7166 = vpack.c.b16 %v7161, %v7160
        %v7167 = vpack.c.b16 %v7163, %v7162
        %v7173 = vsel %vm358, %v6903, 0
        %v7176 = vsel %vm358, %v6904, 0
        %v7179 = vsel %vm358, %v6905, 0
        %v7182 = vsel %vm358, %v6906, 0
        %7184 = vmatprep.subr.bf16.mxu0 0
        %7185 = vmatpush1.bf16.msra.mxu0 %v7164
        %7186 = vmatprep.subr.bf16.mxu0 0
        %7187 = vmatpush1.bf16.msra.mxu0 %v7165
        %7188 = vmatprep.subr.bf16.mxu0 0
        %7189 = vmatpush1.bf16.msra.mxu0 %v7166
        %7190 = vmatprep.subr.bf16.mxu0 0
        %7191 = vmatpush1.bf16.msra.mxu0 %v7167
        %7192 = vmatprep.subr.bf16.mxu0 0
        %7193 = vmatpush1.bf16.msra.mxu0 0
        %7194 = vmatprep.subr.bf16.mxu0 0
        %7195 = vmatpush1.bf16.msra.mxu0 0
        %7196 = vmatprep.subr.bf16.mxu0 0
        %7197 = vmatpush1.bf16.msra.mxu0 0
        %7198 = vmatprep.subr.bf16.mxu0 0
        %7199 = vmatpush1.bf16.msra.mxu0 0
        %7200 = vmatprep.subr.bf16.mxu0 0
        %7201 = vmatpush1.bf16.msra.mxu0 0
        %7202 = vmatprep.subr.bf16.mxu0 0
        %7203 = vmatpush1.bf16.msra.mxu0 0
        %7204 = vmatprep.subr.bf16.mxu0 0
        %7205 = vmatpush1.bf16.msra.mxu0 0
        %7206 = vmatprep.subr.bf16.mxu0 0
        %7207 = vmatpush1.bf16.msra.mxu0 0
        %7208 = vmatprep.subr.bf16.mxu0 0
        %7209 = vmatpush1.bf16.msra.mxu0 0
        %7210 = vmatprep.subr.bf16.mxu0 0
        %7211 = vmatpush1.bf16.msra.mxu0 0
        %7212 = vmatprep.subr.bf16.mxu0 0
        %7213 = vmatpush1.bf16.msra.mxu0 0
        %7214 = vmatprep.subr.bf16.mxu0 0
        %7215 = vmatpush1.bf16.msra.mxu0 0
        %7216 = vmatprep.mubr.bf16.mxu0 0
        %7217 = vmatmul.mubr.bf16.gmra.mrb[0].mxu0 %v7173
        %v7218 = vpop.f32.mrb[0].mxu0
        %v7219 = vadd.f32 0.0, %v7218
        %v7220 = vpop.f32.mrb[0].mxu0
        %v7221 = vpop.f32.mrb[0].mxu0
        %v7222 = vadd.f32 0.0, %v7221
        %v7223 = vpop.f32.mrb[0].mxu0
        %7224 = vmatprep.mubr.bf16.mxu0 0
        %7225 = vmatmul.mubr.bf16.gmra.mrb[0].mxu0 %v7176
        %v7226 = vpop.f32.mrb[0].mxu0
        %v7227 = vadd.f32 0.0, %v7226
        %v7228 = vpop.f32.mrb[0].mxu0
        %v7229 = vpop.f32.mrb[0].mxu0
        %v7230 = vadd.f32 0.0, %v7229
        %v7231 = vpop.f32.mrb[0].mxu0
        %7232 = vmatprep.mubr.bf16.mxu0 0
        %7233 = vmatmul.mubr.bf16.gmra.mrb[0].mxu0 %v7179
        %v7234 = vpop.f32.mrb[0].mxu0
        %v7235 = vadd.f32 0.0, %v7234
        %v7236 = vpop.f32.mrb[0].mxu0
        %v7237 = vpop.f32.mrb[0].mxu0
        %v7238 = vadd.f32 0.0, %v7237
        %v7239 = vpop.f32.mrb[0].mxu0
        %7240 = vmatprep.mubr.bf16.mxu0 0
        %7241 = vmatmul.mubr.bf16.gmra.mrb[0].mxu0 %v7182
        %v7242 = vpop.f32.mrb[0].mxu0
        %v7243 = vadd.f32 0.0, %v7242
        %v7244 = vpop.f32.mrb[0].mxu0
        %v7245 = vpop.f32.mrb[0].mxu0
        %v7246 = vadd.f32 0.0, %v7245
        %v7247 = vpop.f32.mrb[0].mxu0
        %7248 = vdwg.mxu0
        %v7249 = vadd.f32 %v7118, %v7219
        %v7250 = vadd.f32 %v7121, %v7222
        %v7251 = vadd.f32 %v7126, %v7227
        %v7252 = vadd.f32 %v7129, %v7230
        %v7253 = vadd.f32 %v7134, %v7235
        %v7254 = vadd.f32 %v7137, %v7238
        %v7255 = vadd.f32 %v7142, %v7243
        %v7256 = vadd.f32 %v7145, %v7246
        %7257 = vmatprep.subr.bf16.mxu0 0
        %7258 = vmatpush1.bf16.msra.mxu0 %v6962
        %7259 = vmatprep.subr.bf16.mxu0 0
        %7260 = vmatpush1.bf16.msra.mxu0 %v6963
        %7261 = vmatprep.subr.bf16.mxu0 0
        %7262 = vmatpush1.bf16.msra.mxu0 %v6964
        %7263 = vmatprep.subr.bf16.mxu0 0
        %7264 = vmatpush1.bf16.msra.mxu0 %v6965
        %7265 = vmatprep.subr.bf16.mxu0 0
        %7266 = vmatpush1.bf16.msra.mxu0 0
        %7267 = vmatprep.subr.bf16.mxu0 0
        %7268 = vmatpush1.bf16.msra.mxu0 0
        %7269 = vmatprep.subr.bf16.mxu0 0
        %7270 = vmatpush1.bf16.msra.mxu0 0
        %7271 = vmatprep.subr.bf16.mxu0 0
        %7272 = vmatpush1.bf16.msra.mxu0 0
        %7273 = vmatprep.subr.bf16.mxu0 0
        %7274 = vmatpush1.bf16.msra.mxu0 0
        %7275 = vmatprep.subr.bf16.mxu0 0
        %7276 = vmatpush1.bf16.msra.mxu0 0
        %7277 = vmatprep.subr.bf16.mxu0 0
        %7278 = vmatpush1.bf16.msra.mxu0 0
        %7279 = vmatprep.subr.bf16.mxu0 0
        %7280 = vmatpush1.bf16.msra.mxu0 0
        %7281 = vmatprep.subr.bf16.mxu0 0
        %7282 = vmatpush1.bf16.msra.mxu0 0
        %7283 = vmatprep.subr.bf16.mxu0 0
        %7284 = vmatpush1.bf16.msra.mxu0 0
        %7285 = vmatprep.subr.bf16.mxu0 0
        %7286 = vmatpush1.bf16.msra.mxu0 0
        %7287 = vmatprep.subr.bf16.mxu0 0
        %7288 = vmatpush1.bf16.msra.mxu0 0
        %7289 = vmatprep.mubr.bf16.mxu0 0
        %7290 = vmatmul.mubr.bf16.gmra.mrb[0].mxu0 %v7173
        %v7291 = vpop.f32.mrb[0].mxu0
        %v7292 = vadd.f32 0.0, %v7291
        %v7293 = vpop.f32.mrb[0].mxu0
        %v7294 = vpop.f32.mrb[0].mxu0
        %v7295 = vadd.f32 0.0, %v7294
        %v7296 = vpop.f32.mrb[0].mxu0
        %7297 = vmatprep.mubr.bf16.mxu0 0
        %7298 = vmatmul.mubr.bf16.gmra.mrb[0].mxu0 %v7176
        %v7299 = vpop.f32.mrb[0].mxu0
        %v7300 = vadd.f32 0.0, %v7299
        %v7301 = vpop.f32.mrb[0].mxu0
        %v7302 = vpop.f32.mrb[0].mxu0
        %v7303 = vadd.f32 0.0, %v7302
        %v7304 = vpop.f32.mrb[0].mxu0
        %7305 = vmatprep.mubr.bf16.mxu0 0
        %7306 = vmatmul.mubr.bf16.gmra.mrb[0].mxu0 %v7179
        %v7307 = vpop.f32.mrb[0].mxu0
        %v7308 = vadd.f32 0.0, %v7307
        %v7309 = vpop.f32.mrb[0].mxu0
        %v7310 = vpop.f32.mrb[0].mxu0
        %v7311 = vadd.f32 0.0, %v7310
        %v7312 = vpop.f32.mrb[0].mxu0
        %7313 = vmatprep.mubr.bf16.mxu0 0
        %7314 = vmatmul.mubr.bf16.gmra.mrb[0].mxu0 %v7182
        %v7315 = vpop.f32.mrb[0].mxu0
        %v7316 = vadd.f32 0.0, %v7315
        %v7317 = vpop.f32.mrb[0].mxu0
        %v7318 = vpop.f32.mrb[0].mxu0
        %v7319 = vadd.f32 0.0, %v7318
        %v7320 = vpop.f32.mrb[0].mxu0
        %7321 = vdwg.mxu0
        %7322 = vmatprep.subr.bf16.mxu0 0
        %7323 = vmatpush1.bf16.msra.mxu0 %v7063
        %7324 = vmatprep.subr.bf16.mxu0 0
        %7325 = vmatpush1.bf16.msra.mxu0 %v7064
        %7326 = vmatprep.subr.bf16.mxu0 0
        %7327 = vmatpush1.bf16.msra.mxu0 %v7065
        %7328 = vmatprep.subr.bf16.mxu0 0
        %7329 = vmatpush1.bf16.msra.mxu0 %v7066
        %7330 = vmatprep.subr.bf16.mxu0 0
        %7331 = vmatpush1.bf16.msra.mxu0 0
        %7332 = vmatprep.subr.bf16.mxu0 0
        %7333 = vmatpush1.bf16.msra.mxu0 0
        %7334 = vmatprep.subr.bf16.mxu0 0
        %7335 = vmatpush1.bf16.msra.mxu0 0
        %7336 = vmatprep.subr.bf16.mxu0 0
        %7337 = vmatpush1.bf16.msra.mxu0 0
        %7338 = vmatprep.subr.bf16.mxu0 0
        %7339 = vmatpush1.bf16.msra.mxu0 0
        %7340 = vmatprep.subr.bf16.mxu0 0
        %7341 = vmatpush1.bf16.msra.mxu0 0
        %7342 = vmatprep.subr.bf16.mxu0 0
        %7343 = vmatpush1.bf16.msra.mxu0 0
        %7344 = vmatprep.subr.bf16.mxu0 0
        %7345 = vmatpush1.bf16.msra.mxu0 0
        %7346 = vmatprep.subr.bf16.mxu0 0
        %7347 = vmatpush1.bf16.msra.mxu0 0
        %7348 = vmatprep.subr.bf16.mxu0 0
        %7349 = vmatpush1.bf16.msra.mxu0 0
        %7350 = vmatprep.subr.bf16.mxu0 0
        %7351 = vmatpush1.bf16.msra.mxu0 0
        %7352 = vmatprep.subr.bf16.mxu0 0
        %7353 = vmatpush1.bf16.msra.mxu0 0
        %7354 = vmatprep.mubr.bf16.mxu0 0
        %7355 = vmatmul.mubr.bf16.gmra.mrb[0].mxu0 %v6971
        %v7356 = vpop.f32.mrb[0].mxu0
        %v7357 = vadd.f32 %v7292, %v7356
        %v7358 = vpop.f32.mrb[0].mxu0
        %v7359 = vpop.f32.mrb[0].mxu0
        %v7360 = vadd.f32 %v7295, %v7359
        %v7361 = vpop.f32.mrb[0].mxu0
        %7362 = vmatprep.mubr.bf16.mxu0 0
        %7363 = vmatmul.mubr.bf16.gmra.mrb[0].mxu0 %v6974
        %v7364 = vpop.f32.mrb[0].mxu0
        %v7365 = vadd.f32 %v7300, %v7364
        %v7366 = vpop.f32.mrb[0].mxu0
        %v7367 = vpop.f32.mrb[0].mxu0
        %v7368 = vadd.f32 %v7303, %v7367
        %v7369 = vpop.f32.mrb[0].mxu0
        %7370 = vmatprep.mubr.bf16.mxu0 0
        %7371 = vmatmul.mubr.bf16.gmra.mrb[0].mxu0 %v6977
        %v7372 = vpop.f32.mrb[0].mxu0
        %v7373 = vadd.f32 %v7308, %v7372
        %v7374 = vpop.f32.mrb[0].mxu0
        %v7375 = vpop.f32.mrb[0].mxu0
        %v7376 = vadd.f32 %v7311, %v7375
        %v7377 = vpop.f32.mrb[0].mxu0
        %7378 = vmatprep.mubr.bf16.mxu0 0
        %7379 = vmatmul.mubr.bf16.gmra.mrb[0].mxu0 %v6980
        %v7380 = vpop.f32.mrb[0].mxu0
        %v7381 = vadd.f32 %v7316, %v7380
        %v7382 = vpop.f32.mrb[0].mxu0
        %v7383 = vpop.f32.mrb[0].mxu0
        %v7384 = vadd.f32 %v7319, %v7383
        %v7385 = vpop.f32.mrb[0].mxu0
        %7386 = vdwg.mxu0
        %v7388 = vsel %vm358, %v6915, 0
        %v7391 = vsel %vm358, %v6916, 0
        %v7394 = vsel %vm358, %v6917, 0
        %v7397 = vsel %vm358, %v6918, 0
        %7399 = vmatprep.subr.bf16.mxu0 0
        %7400 = vmatpush1.bf16.msra.mxu0 %v7164
        %7401 = vmatprep.subr.bf16.mxu0 0
        %7402 = vmatpush1.bf16.msra.mxu0 %v7165
        %7403 = vmatprep.subr.bf16.mxu0 0
        %7404 = vmatpush1.bf16.msra.mxu0 %v7166
        %7405 = vmatprep.subr.bf16.mxu0 0
        %7406 = vmatpush1.bf16.msra.mxu0 %v7167
        %7407 = vmatprep.subr.bf16.mxu0 0
        %7408 = vmatpush1.bf16.msra.mxu0 0
        %7409 = vmatprep.subr.bf16.mxu0 0
        %7410 = vmatpush1.bf16.msra.mxu0 0
        %7411 = vmatprep.subr.bf16.mxu0 0
        %7412 = vmatpush1.bf16.msra.mxu0 0
        %7413 = vmatprep.subr.bf16.mxu0 0
        %7414 = vmatpush1.bf16.msra.mxu0 0
        %7415 = vmatprep.subr.bf16.mxu0 0
        %7416 = vmatpush1.bf16.msra.mxu0 0
        %7417 = vmatprep.subr.bf16.mxu0 0
        %7418 = vmatpush1.bf16.msra.mxu0 0
        %7419 = vmatprep.subr.bf16.mxu0 0
        %7420 = vmatpush1.bf16.msra.mxu0 0
        %7421 = vmatprep.subr.bf16.mxu0 0
        %7422 = vmatpush1.bf16.msra.mxu0 0
        %7423 = vmatprep.subr.bf16.mxu0 0
        %7424 = vmatpush1.bf16.msra.mxu0 0
        %7425 = vmatprep.subr.bf16.mxu0 0
        %7426 = vmatpush1.bf16.msra.mxu0 0
        %7427 = vmatprep.subr.bf16.mxu0 0
        %7428 = vmatpush1.bf16.msra.mxu0 0
        %7429 = vmatprep.subr.bf16.mxu0 0
        %7430 = vmatpush1.bf16.msra.mxu0 0
        %7431 = vmatprep.mubr.bf16.mxu0 0
        %7432 = vmatmul.mubr.bf16.gmra.mrb[0].mxu0 %v7388
        %v7433 = vpop.f32.mrb[0].mxu0
        %v7434 = vadd.f32 0.0, %v7433
        %v7435 = vpop.f32.mrb[0].mxu0
        %v7436 = vpop.f32.mrb[0].mxu0
        %v7437 = vadd.f32 0.0, %v7436
        %v7438 = vpop.f32.mrb[0].mxu0
        %7439 = vmatprep.mubr.bf16.mxu0 0
        %7440 = vmatmul.mubr.bf16.gmra.mrb[0].mxu0 %v7391
        %v7441 = vpop.f32.mrb[0].mxu0
        %v7442 = vadd.f32 0.0, %v7441
        %v7443 = vpop.f32.mrb[0].mxu0
        %v7444 = vpop.f32.mrb[0].mxu0
        %v7445 = vadd.f32 0.0, %v7444
        %v7446 = vpop.f32.mrb[0].mxu0
        %7447 = vmatprep.mubr.bf16.mxu0 0
        %7448 = vmatmul.mubr.bf16.gmra.mrb[0].mxu0 %v7394
        %v7449 = vpop.f32.mrb[0].mxu0
        %v7450 = vadd.f32 0.0, %v7449
        %v7451 = vpop.f32.mrb[0].mxu0
        %v7452 = vpop.f32.mrb[0].mxu0
        %v7453 = vadd.f32 0.0, %v7452
        %v7454 = vpop.f32.mrb[0].mxu0
        %7455 = vmatprep.mubr.bf16.mxu0 0
        %7456 = vmatmul.mubr.bf16.gmra.mrb[0].mxu0 %v7397
        %v7457 = vpop.f32.mrb[0].mxu0
        %v7458 = vadd.f32 0.0, %v7457
        %v7459 = vpop.f32.mrb[0].mxu0
        %v7460 = vpop.f32.mrb[0].mxu0
        %v7461 = vadd.f32 0.0, %v7460
        %v7462 = vpop.f32.mrb[0].mxu0
        %7463 = vdwg.mxu0
        %v7464 = vadd.f32 %v7357, %v7434
        %v7465 = vadd.f32 %v7360, %v7437
        %v7466 = vadd.f32 %v7365, %v7442
        %v7467 = vadd.f32 %v7368, %v7445
        %v7468 = vadd.f32 %v7373, %v7450
        %v7469 = vadd.f32 %v7376, %v7453
        %v7470 = vadd.f32 %v7381, %v7458
        %v7471 = vadd.f32 %v7384, %v7461
        %v7472 = vmax.f32 %v7249, %v7464
        %v7473 = vmax.f32 %v7250, %v7465
        %v7474 = vmax.f32 %v7251, %v7466
        %v7475 = vmax.f32 %v7252, %v7467
        %v7476 = vmax.f32 %v7253, %v7468
        %v7477 = vmax.f32 %v7254, %v7469
        %v7478 = vmax.f32 %v7255, %v7470
        %v7479 = vmax.f32 %v7256, %v7471
        %v7480 = vld [vmem:[%s2 + $0x3] sm:$0x1]
        %v7481 = vlaneseq
        %v7482 = vshrl.u32 %v7481, 7
        %v7483 = vsub.s32 0, %v7482
        %v7484 = vrot.slane %v7480, %v7483
        %v7485 = vmul.f32 %v7472, %v7484
        %v7486 = vmul.f32 %v7473, %v7484
        %v7487 = vmul.f32 %v7474, %v7484
        %v7488 = vmul.f32 %v7475, %v7484
        %v7489 = vmul.f32 %v7476, %v7484
        %v7490 = vmul.f32 %v7477, %v7484
        %v7491 = vmul.f32 %v7478, %v7484
        %v7492 = vmul.f32 %v7479, %v7484
        %v7493 = vld [vmem:[%s3 + $0x3] sm:$0x1]
        %v7494 = vlaneseq
        %v7495 = vshrl.u32 %v7494, 7
        %v7496 = vsub.s32 0, %v7495
        %v7497 = vrot.slane %v7493, %v7496
        %v7498 = vadd.f32 %v7485, %v7497
        %v7499 = vadd.f32 %v7486, %v7497
        %v7500 = vadd.f32 %v7487, %v7497
        %v7501 = vadd.f32 %v7488, %v7497
        %v7502 = vadd.f32 %v7489, %v7497
        %v7503 = vadd.f32 %v7490, %v7497
        %v7504 = vadd.f32 %v7491, %v7497
        %v7505 = vadd.f32 %v7492, %v7497
        %v7506 = vmax.f32 %v7498, 0.0
        %v7507 = vmax.f32 %v7499, 0.0
        %v7508 = vmax.f32 %v7500, 0.0
        %v7509 = vmax.f32 %v7501, 0.0
        %v7510 = vmax.f32 %v7502, 0.0
        %v7511 = vmax.f32 %v7503, 0.0
        %v7512 = vmax.f32 %v7504, 0.0
        %v7513 = vmax.f32 %v7505, 0.0
        %7514 = vst.msk [vmem:[#allocation2 + $0x8] sm:$0xff] %vm358, %v7506
        %7515 = vst.msk [vmem:[#allocation2 + $0x10] sm:$0xff] %vm358, %v7507
        %7516 = vst.msk [vmem:[#allocation2 + $0x18] sm:$0xff] %vm358, %v7508
        %7517 = vst.msk [vmem:[#allocation2 + $0x20] sm:$0xff] %vm358, %v7509
        %7518 = vst.msk [vmem:[#allocation2 + $0x28] sm:$0xff] %vm358, %v7510
        %7519 = vst.msk [vmem:[#allocation2 + $0x30] sm:$0xff] %vm358, %v7511
        %7520 = vst.msk [vmem:[#allocation2 + $0x38] sm:$0xff] %vm358, %v7512
        %7521 = vst.msk [vmem:[#allocation2 + $0x40] sm:$0xff] %vm358, %v7513
        %7522 = vst.msk [vmem:[#allocation2 + $0x48] sm:$0x1] %vm4061, 0.0
        %v7523 = vld [vmem:[%s747] ss:$2 sm:$0xff]
        %v7524 = vld [vmem:[%s749] ss:$2 sm:$0xff]
        %v7525 = vld [vmem:[%s751] ss:$2 sm:$0xff]
        %v7526 = vld [vmem:[%s753] ss:$2 sm:$0xff]
        %v7527 = vpack.c.bf16 %v7524, %v7523
        %v7528 = vpack.c.bf16 %v7526, %v7525
        %v7529 = vld [vmem:[%s907] ss:$2 sm:$0xff]
        %v7530 = vld [vmem:[%s909] ss:$2 sm:$0xff]
        %v7531 = vld [vmem:[%s911] ss:$2 sm:$0xff]
        %v7532 = vld [vmem:[%s913] ss:$2 sm:$0xff]
        %v7533 = vpack.c.bf16 %v7530, %v7529
        %v7534 = vpack.c.bf16 %v7532, %v7531
        %v7535 = vld [vmem:[%s1067] ss:$2 sm:$0xff]
        %v7536 = vld [vmem:[%s1069] ss:$2 sm:$0xff]
        %v7537 = vld [vmem:[%s1071] ss:$2 sm:$0xff]
        %v7538 = vld [vmem:[%s1073] ss:$2 sm:$0xff]
        %v7539 = vpack.c.bf16 %v7536, %v7535
        %v7540 = vpack.c.bf16 %v7538, %v7537
        %v7541 = vld [vmem:[%s1227] ss:$2 sm:$0xff]
        %v7542 = vld [vmem:[%s1229] ss:$2 sm:$0xff]
        %v7543 = vld [vmem:[%s1231] ss:$2 sm:$0xff]
        %v7544 = vld [vmem:[%s1233] ss:$2 sm:$0xff]
        %v7545 = vpack.c.bf16 %v7542, %v7541
        %v7546 = vpack.c.bf16 %v7544, %v7543
        %s7547 = scalar_lea.vmem %s1, 384
        %v7548 = vld [vmem:[%s7547] sm:$0xf]
        %v7549 = vld [vmem:[%s7547 + $0x4] sm:$0xf]
        %v7550 = vld [vmem:[%s7547 + $0x8] sm:$0xf]
        %v7551 = vld [vmem:[%s7547 + $0xc] sm:$0xf]
        %v7552 = vld [vmem:[%s7547 + $0x10] sm:$0xf]
        %v7553 = vld [vmem:[%s7547 + $0x14] sm:$0xf]
        %v7554 = vld [vmem:[%s7547 + $0x18] sm:$0xf]
        %v7555 = vld [vmem:[%s7547 + $0x1c] sm:$0xf]
        %s7556 = scalar_lea.vmem %s1, 416
        %v7557 = vld [vmem:[%s7556] sm:$0xf]
        %v7558 = vld [vmem:[%s7556 + $0x4] sm:$0xf]
        %v7559 = vld [vmem:[%s7556 + $0x8] sm:$0xf]
        %v7560 = vld [vmem:[%s7556 + $0xc] sm:$0xf]
        %v7561 = vld [vmem:[%s7556 + $0x10] sm:$0xf]
        %v7562 = vld [vmem:[%s7556 + $0x14] sm:$0xf]
        %v7563 = vld [vmem:[%s7556 + $0x18] sm:$0xf]
        %v7564 = vld [vmem:[%s7556 + $0x1c] sm:$0xf]
        %s7565 = scalar_lea.vmem %s1, 448
        %v7566 = vld [vmem:[%s7565] sm:$0xf]
        %v7567 = vld [vmem:[%s7565 + $0x4] sm:$0xf]
        %v7568 = vld [vmem:[%s7565 + $0x8] sm:$0xf]
        %v7569 = vld [vmem:[%s7565 + $0xc] sm:$0xf]
        %v7570 = vld [vmem:[%s7565 + $0x10] sm:$0xf]
        %v7571 = vld [vmem:[%s7565 + $0x14] sm:$0xf]
        %v7572 = vld [vmem:[%s7565 + $0x18] sm:$0xf]
        %v7573 = vld [vmem:[%s7565 + $0x1c] sm:$0xf]
        %v7582 = vunpack.c.l.b16 %v7557
        %v7583 = vunpack.c.l.b16 %v7558
        %v7584 = vunpack.c.l.b16 %v7559
        %v7585 = vunpack.c.l.b16 %v7560
        %v7586 = vunpack.c.l.b16 %v7561
        %v7587 = vunpack.c.l.b16 %v7562
        %v7588 = vunpack.c.l.b16 %v7563
        %v7589 = vunpack.c.l.b16 %v7564
        %v7590 = vpack.c.b16 %v7583, %v7582
        %v7591 = vpack.c.b16 %v7585, %v7584
        %v7592 = vpack.c.b16 %v7587, %v7586
        %v7593 = vpack.c.b16 %v7589, %v7588
        %v7599 = vsel %vm358, %v7533, 0
        %v7602 = vsel %vm358, %v7534, 0
        %7604 = vmatprep.subr.bf16.mxu0 0
        %7605 = vmatpush1.bf16.msra.mxu0 %v7590
        %7606 = vmatprep.subr.bf16.mxu0 0
        %7607 = vmatpush1.bf16.msra.mxu0 %v7591
        %7608 = vmatprep.subr.bf16.mxu0 0
        %7609 = vmatpush1.bf16.msra.mxu0 %v7592
        %7610 = vmatprep.subr.bf16.mxu0 0
        %7611 = vmatpush1.bf16.msra.mxu0 %v7593
        %7612 = vmatprep.subr.bf16.mxu0 0
        %7613 = vmatpush1.bf16.msra.mxu0 0
        %7614 = vmatprep.subr.bf16.mxu0 0
        %7615 = vmatpush1.bf16.msra.mxu0 0
        %7616 = vmatprep.subr.bf16.mxu0 0
        %7617 = vmatpush1.bf16.msra.mxu0 0
        %7618 = vmatprep.subr.bf16.mxu0 0
        %7619 = vmatpush1.bf16.msra.mxu0 0
        %7620 = vmatprep.subr.bf16.mxu0 0
        %7621 = vmatpush1.bf16.msra.mxu0 0
        %7622 = vmatprep.subr.bf16.mxu0 0
        %7623 = vmatpush1.bf16.msra.mxu0 0
        %7624 = vmatprep.subr.bf16.mxu0 0
        %7625 = vmatpush1.bf16.msra.mxu0 0
        %7626 = vmatprep.subr.bf16.mxu0 0
        %7627 = vmatpush1.bf16.msra.mxu0 0
        %7628 = vmatprep.subr.bf16.mxu0 0
        %7629 = vmatpush1.bf16.msra.mxu0 0
        %7630 = vmatprep.subr.bf16.mxu0 0
        %7631 = vmatpush1.bf16.msra.mxu0 0
        %7632 = vmatprep.subr.bf16.mxu0 0
        %7633 = vmatpush1.bf16.msra.mxu0 0
        %7634 = vmatprep.subr.bf16.mxu0 0
        %7635 = vmatpush1.bf16.msra.mxu0 0
        %7636 = vmatprep.mubr.bf16.mxu0 0
        %7637 = vmatmul.mubr.bf16.gmra.mrb[0].mxu0 %v7599
        %v7638 = vpop.f32.mrb[0].mxu0
        %v7639 = vadd.f32 0.0, %v7638
        %v7640 = vpop.f32.mrb[0].mxu0
        %v7641 = vpop.f32.mrb[0].mxu0
        %v7642 = vadd.f32 0.0, %v7641
        %v7643 = vpop.f32.mrb[0].mxu0
        %7644 = vmatprep.mubr.bf16.mxu0 0
        %7645 = vmatmul.mubr.bf16.gmra.mrb[0].mxu0 %v7602
        %v7646 = vpop.f32.mrb[0].mxu0
        %v7647 = vadd.f32 0.0, %v7646
        %v7648 = vpop.f32.mrb[0].mxu0
        %v7649 = vpop.f32.mrb[0].mxu0
        %v7650 = vadd.f32 0.0, %v7649
        %v7651 = vpop.f32.mrb[0].mxu0
        %7652 = vdwg.mxu0
        %v7661 = vunpack.c.l.b16 %v7548
        %v7662 = vunpack.c.l.b16 %v7549
        %v7663 = vunpack.c.l.b16 %v7550
        %v7664 = vunpack.c.l.b16 %v7551
        %v7665 = vunpack.c.l.b16 %v7552
        %v7666 = vunpack.c.l.b16 %v7553
        %v7667 = vunpack.c.l.b16 %v7554
        %v7668 = vunpack.c.l.b16 %v7555
        %v7669 = vpack.c.b16 %v7662, %v7661
        %v7670 = vpack.c.b16 %v7664, %v7663
        %v7671 = vpack.c.b16 %v7666, %v7665
        %v7672 = vpack.c.b16 %v7668, %v7667
        %v7678 = vsel %vm358, %v7527, 0
        %v7681 = vsel %vm358, %v7528, 0
        %7683 = vmatprep.subr.bf16.mxu0 0
        %7684 = vmatpush1.bf16.msra.mxu0 %v7669
        %7685 = vmatprep.subr.bf16.mxu0 0
        %7686 = vmatpush1.bf16.msra.mxu0 %v7670
        %7687 = vmatprep.subr.bf16.mxu0 0
        %7688 = vmatpush1.bf16.msra.mxu0 %v7671
        %7689 = vmatprep.subr.bf16.mxu0 0
        %7690 = vmatpush1.bf16.msra.mxu0 %v7672
        %7691 = vmatprep.subr.bf16.mxu0 0
        %7692 = vmatpush1.bf16.msra.mxu0 0
        %7693 = vmatprep.subr.bf16.mxu0 0
        %7694 = vmatpush1.bf16.msra.mxu0 0
        %7695 = vmatprep.subr.bf16.mxu0 0
        %7696 = vmatpush1.bf16.msra.mxu0 0
        %7697 = vmatprep.subr.bf16.mxu0 0
        %7698 = vmatpush1.bf16.msra.mxu0 0
        %7699 = vmatprep.subr.bf16.mxu0 0
        %7700 = vmatpush1.bf16.msra.mxu0 0
        %7701 = vmatprep.subr.bf16.mxu0 0
        %7702 = vmatpush1.bf16.msra.mxu0 0
        %7703 = vmatprep.subr.bf16.mxu0 0
        %7704 = vmatpush1.bf16.msra.mxu0 0
        %7705 = vmatprep.subr.bf16.mxu0 0
        %7706 = vmatpush1.bf16.msra.mxu0 0
        %7707 = vmatprep.subr.bf16.mxu0 0
        %7708 = vmatpush1.bf16.msra.mxu0 0
        %7709 = vmatprep.subr.bf16.mxu0 0
        %7710 = vmatpush1.bf16.msra.mxu0 0
        %7711 = vmatprep.subr.bf16.mxu0 0
        %7712 = vmatpush1.bf16.msra.mxu0 0
        %7713 = vmatprep.subr.bf16.mxu0 0
        %7714 = vmatpush1.bf16.msra.mxu0 0
        %7715 = vmatprep.mubr.bf16.mxu0 0
        %7716 = vmatmul.mubr.bf16.gmra.mrb[0].mxu0 %v7678
        %v7717 = vpop.f32.mrb[0].mxu0
        %v7718 = vadd.f32 %v7639, %v7717
        %v7719 = vpop.f32.mrb[0].mxu0
        %v7720 = vpop.f32.mrb[0].mxu0
        %v7721 = vadd.f32 %v7642, %v7720
        %v7722 = vpop.f32.mrb[0].mxu0
        %7723 = vmatprep.mubr.bf16.mxu0 0
        %7724 = vmatmul.mubr.bf16.gmra.mrb[0].mxu0 %v7681
        %v7725 = vpop.f32.mrb[0].mxu0
        %v7726 = vadd.f32 %v7647, %v7725
        %v7727 = vpop.f32.mrb[0].mxu0
        %v7728 = vpop.f32.mrb[0].mxu0
        %v7729 = vadd.f32 %v7650, %v7728
        %v7730 = vpop.f32.mrb[0].mxu0
        %7731 = vdwg.mxu0
        %v7740 = vunpack.c.l.b16 %v7566
        %v7741 = vunpack.c.l.b16 %v7567
        %v7742 = vunpack.c.l.b16 %v7568
        %v7743 = vunpack.c.l.b16 %v7569
        %v7744 = vunpack.c.l.b16 %v7570
        %v7745 = vunpack.c.l.b16 %v7571
        %v7746 = vunpack.c.l.b16 %v7572
        %v7747 = vunpack.c.l.b16 %v7573
        %v7748 = vpack.c.b16 %v7741, %v7740
        %v7749 = vpack.c.b16 %v7743, %v7742
        %v7750 = vpack.c.b16 %v7745, %v7744
        %v7751 = vpack.c.b16 %v7747, %v7746
        %v7757 = vsel %vm358, %v7539, 0
        %v7760 = vsel %vm358, %v7540, 0
        %7762 = vmatprep.subr.bf16.mxu0 0
        %7763 = vmatpush1.bf16.msra.mxu0 %v7748
        %7764 = vmatprep.subr.bf16.mxu0 0
        %7765 = vmatpush1.bf16.msra.mxu0 %v7749
        %7766 = vmatprep.subr.bf16.mxu0 0
        %7767 = vmatpush1.bf16.msra.mxu0 %v7750
        %7768 = vmatprep.subr.bf16.mxu0 0
        %7769 = vmatpush1.bf16.msra.mxu0 %v7751
        %7770 = vmatprep.subr.bf16.mxu0 0
        %7771 = vmatpush1.bf16.msra.mxu0 0
        %7772 = vmatprep.subr.bf16.mxu0 0
        %7773 = vmatpush1.bf16.msra.mxu0 0
        %7774 = vmatprep.subr.bf16.mxu0 0
        %7775 = vmatpush1.bf16.msra.mxu0 0
        %7776 = vmatprep.subr.bf16.mxu0 0
        %7777 = vmatpush1.bf16.msra.mxu0 0
        %7778 = vmatprep.subr.bf16.mxu0 0
        %7779 = vmatpush1.bf16.msra.mxu0 0
        %7780 = vmatprep.subr.bf16.mxu0 0
        %7781 = vmatpush1.bf16.msra.mxu0 0
        %7782 = vmatprep.subr.bf16.mxu0 0
        %7783 = vmatpush1.bf16.msra.mxu0 0
        %7784 = vmatprep.subr.bf16.mxu0 0
        %7785 = vmatpush1.bf16.msra.mxu0 0
        %7786 = vmatprep.subr.bf16.mxu0 0
        %7787 = vmatpush1.bf16.msra.mxu0 0
        %7788 = vmatprep.subr.bf16.mxu0 0
        %7789 = vmatpush1.bf16.msra.mxu0 0
        %7790 = vmatprep.subr.bf16.mxu0 0
        %7791 = vmatpush1.bf16.msra.mxu0 0
        %7792 = vmatprep.subr.bf16.mxu0 0
        %7793 = vmatpush1.bf16.msra.mxu0 0
        %7794 = vmatprep.mubr.bf16.mxu0 0
        %7795 = vmatmul.mubr.bf16.gmra.mrb[0].mxu0 %v7757
        %v7796 = vpop.f32.mrb[0].mxu0
        %v7797 = vadd.f32 0.0, %v7796
        %v7798 = vpop.f32.mrb[0].mxu0
        %v7799 = vpop.f32.mrb[0].mxu0
        %v7800 = vadd.f32 0.0, %v7799
        %v7801 = vpop.f32.mrb[0].mxu0
        %7802 = vmatprep.mubr.bf16.mxu0 0
        %7803 = vmatmul.mubr.bf16.gmra.mrb[0].mxu0 %v7760
        %v7804 = vpop.f32.mrb[0].mxu0
        %v7805 = vadd.f32 0.0, %v7804
        %v7806 = vpop.f32.mrb[0].mxu0
        %v7807 = vpop.f32.mrb[0].mxu0
        %v7808 = vadd.f32 0.0, %v7807
        %v7809 = vpop.f32.mrb[0].mxu0
        %7810 = vdwg.mxu0
        %v7811 = vadd.f32 %v7718, %v7797
        %v7812 = vadd.f32 %v7721, %v7800
        %v7813 = vadd.f32 %v7726, %v7805
        %v7814 = vadd.f32 %v7729, %v7808
        %7815 = vmatprep.subr.bf16.mxu0 0
        %7816 = vmatpush1.bf16.msra.mxu0 %v7590
        %7817 = vmatprep.subr.bf16.mxu0 0
        %7818 = vmatpush1.bf16.msra.mxu0 %v7591
        %7819 = vmatprep.subr.bf16.mxu0 0
        %7820 = vmatpush1.bf16.msra.mxu0 %v7592
        %7821 = vmatprep.subr.bf16.mxu0 0
        %7822 = vmatpush1.bf16.msra.mxu0 %v7593
        %7823 = vmatprep.subr.bf16.mxu0 0
        %7824 = vmatpush1.bf16.msra.mxu0 0
        %7825 = vmatprep.subr.bf16.mxu0 0
        %7826 = vmatpush1.bf16.msra.mxu0 0
        %7827 = vmatprep.subr.bf16.mxu0 0
        %7828 = vmatpush1.bf16.msra.mxu0 0
        %7829 = vmatprep.subr.bf16.mxu0 0
        %7830 = vmatpush1.bf16.msra.mxu0 0
        %7831 = vmatprep.subr.bf16.mxu0 0
        %7832 = vmatpush1.bf16.msra.mxu0 0
        %7833 = vmatprep.subr.bf16.mxu0 0
        %7834 = vmatpush1.bf16.msra.mxu0 0
        %7835 = vmatprep.subr.bf16.mxu0 0
        %7836 = vmatpush1.bf16.msra.mxu0 0
        %7837 = vmatprep.subr.bf16.mxu0 0
        %7838 = vmatpush1.bf16.msra.mxu0 0
        %7839 = vmatprep.subr.bf16.mxu0 0
        %7840 = vmatpush1.bf16.msra.mxu0 0
        %7841 = vmatprep.subr.bf16.mxu0 0
        %7842 = vmatpush1.bf16.msra.mxu0 0
        %7843 = vmatprep.subr.bf16.mxu0 0
        %7844 = vmatpush1.bf16.msra.mxu0 0
        %7845 = vmatprep.subr.bf16.mxu0 0
        %7846 = vmatpush1.bf16.msra.mxu0 0
        %7847 = vmatprep.mubr.bf16.mxu0 0
        %7848 = vmatmul.mubr.bf16.gmra.mrb[0].mxu0 %v7757
        %v7849 = vpop.f32.mrb[0].mxu0
        %v7850 = vadd.f32 0.0, %v7849
        %v7851 = vpop.f32.mrb[0].mxu0
        %v7852 = vpop.f32.mrb[0].mxu0
        %v7853 = vadd.f32 0.0, %v7852
        %v7854 = vpop.f32.mrb[0].mxu0
        %7855 = vmatprep.mubr.bf16.mxu0 0
        %7856 = vmatmul.mubr.bf16.gmra.mrb[0].mxu0 %v7760
        %v7857 = vpop.f32.mrb[0].mxu0
        %v7858 = vadd.f32 0.0, %v7857
        %v7859 = vpop.f32.mrb[0].mxu0
        %v7860 = vpop.f32.mrb[0].mxu0
        %v7861 = vadd.f32 0.0, %v7860
        %v7862 = vpop.f32.mrb[0].mxu0
        %7863 = vdwg.mxu0
        %7864 = vmatprep.subr.bf16.mxu0 0
        %7865 = vmatpush1.bf16.msra.mxu0 %v7669
        %7866 = vmatprep.subr.bf16.mxu0 0
        %7867 = vmatpush1.bf16.msra.mxu0 %v7670
        %7868 = vmatprep.subr.bf16.mxu0 0
        %7869 = vmatpush1.bf16.msra.mxu0 %v7671
        %7870 = vmatprep.subr.bf16.mxu0 0
        %7871 = vmatpush1.bf16.msra.mxu0 %v7672
        %7872 = vmatprep.subr.bf16.mxu0 0
        %7873 = vmatpush1.bf16.msra.mxu0 0
        %7874 = vmatprep.subr.bf16.mxu0 0
        %7875 = vmatpush1.bf16.msra.mxu0 0
        %7876 = vmatprep.subr.bf16.mxu0 0
        %7877 = vmatpush1.bf16.msra.mxu0 0
        %7878 = vmatprep.subr.bf16.mxu0 0
        %7879 = vmatpush1.bf16.msra.mxu0 0
        %7880 = vmatprep.subr.bf16.mxu0 0
        %7881 = vmatpush1.bf16.msra.mxu0 0
        %7882 = vmatprep.subr.bf16.mxu0 0
        %7883 = vmatpush1.bf16.msra.mxu0 0
        %7884 = vmatprep.subr.bf16.mxu0 0
        %7885 = vmatpush1.bf16.msra.mxu0 0
        %7886 = vmatprep.subr.bf16.mxu0 0
        %7887 = vmatpush1.bf16.msra.mxu0 0
        %7888 = vmatprep.subr.bf16.mxu0 0
        %7889 = vmatpush1.bf16.msra.mxu0 0
        %7890 = vmatprep.subr.bf16.mxu0 0
        %7891 = vmatpush1.bf16.msra.mxu0 0
        %7892 = vmatprep.subr.bf16.mxu0 0
        %7893 = vmatpush1.bf16.msra.mxu0 0
        %7894 = vmatprep.subr.bf16.mxu0 0
        %7895 = vmatpush1.bf16.msra.mxu0 0
        %7896 = vmatprep.mubr.bf16.mxu0 0
        %7897 = vmatmul.mubr.bf16.gmra.mrb[0].mxu0 %v7599
        %v7898 = vpop.f32.mrb[0].mxu0
        %v7899 = vadd.f32 %v7850, %v7898
        %v7900 = vpop.f32.mrb[0].mxu0
        %v7901 = vpop.f32.mrb[0].mxu0
        %v7902 = vadd.f32 %v7853, %v7901
        %v7903 = vpop.f32.mrb[0].mxu0
        %7904 = vmatprep.mubr.bf16.mxu0 0
        %7905 = vmatmul.mubr.bf16.gmra.mrb[0].mxu0 %v7602
        %v7906 = vpop.f32.mrb[0].mxu0
        %v7907 = vadd.f32 %v7858, %v7906
        %v7908 = vpop.f32.mrb[0].mxu0
        %v7909 = vpop.f32.mrb[0].mxu0
        %v7910 = vadd.f32 %v7861, %v7909
        %v7911 = vpop.f32.mrb[0].mxu0
        %7912 = vdwg.mxu0
        %v7914 = vsel %vm358, %v7545, 0
        %v7917 = vsel %vm358, %v7546, 0
        %7919 = vmatprep.subr.bf16.mxu0 0
        %7920 = vmatpush1.bf16.msra.mxu0 %v7748
        %7921 = vmatprep.subr.bf16.mxu0 0
        %7922 = vmatpush1.bf16.msra.mxu0 %v7749
        %7923 = vmatprep.subr.bf16.mxu0 0
        %7924 = vmatpush1.bf16.msra.mxu0 %v7750
        %7925 = vmatprep.subr.bf16.mxu0 0
        %7926 = vmatpush1.bf16.msra.mxu0 %v7751
        %7927 = vmatprep.subr.bf16.mxu0 0
        %7928 = vmatpush1.bf16.msra.mxu0 0
        %7929 = vmatprep.subr.bf16.mxu0 0
        %7930 = vmatpush1.bf16.msra.mxu0 0
        %7931 = vmatprep.subr.bf16.mxu0 0
        %7932 = vmatpush1.bf16.msra.mxu0 0
        %7933 = vmatprep.subr.bf16.mxu0 0
        %7934 = vmatpush1.bf16.msra.mxu0 0
        %7935 = vmatprep.subr.bf16.mxu0 0
        %7936 = vmatpush1.bf16.msra.mxu0 0
        %7937 = vmatprep.subr.bf16.mxu0 0
        %7938 = vmatpush1.bf16.msra.mxu0 0
        %7939 = vmatprep.subr.bf16.mxu0 0
        %7940 = vmatpush1.bf16.msra.mxu0 0
        %7941 = vmatprep.subr.bf16.mxu0 0
        %7942 = vmatpush1.bf16.msra.mxu0 0
        %7943 = vmatprep.subr.bf16.mxu0 0
        %7944 = vmatpush1.bf16.msra.mxu0 0
        %7945 = vmatprep.subr.bf16.mxu0 0
        %7946 = vmatpush1.bf16.msra.mxu0 0
        %7947 = vmatprep.subr.bf16.mxu0 0
        %7948 = vmatpush1.bf16.msra.mxu0 0
        %7949 = vmatprep.subr.bf16.mxu0 0
        %7950 = vmatpush1.bf16.msra.mxu0 0
        %7951 = vmatprep.mubr.bf16.mxu0 0
        %7952 = vmatmul.mubr.bf16.gmra.mrb[0].mxu0 %v7914
        %v7953 = vpop.f32.mrb[0].mxu0
        %v7954 = vadd.f32 0.0, %v7953
        %v7955 = vpop.f32.mrb[0].mxu0
        %v7956 = vpop.f32.mrb[0].mxu0
        %v7957 = vadd.f32 0.0, %v7956
        %v7958 = vpop.f32.mrb[0].mxu0
        %7959 = vmatprep.mubr.bf16.mxu0 0
        %7960 = vmatmul.mubr.bf16.gmra.mrb[0].mxu0 %v7917
        %v7961 = vpop.f32.mrb[0].mxu0
        %v7962 = vadd.f32 0.0, %v7961
        %v7963 = vpop.f32.mrb[0].mxu0
        %v7964 = vpop.f32.mrb[0].mxu0
        %v7965 = vadd.f32 0.0, %v7964
        %v7966 = vpop.f32.mrb[0].mxu0
        %7967 = vdwg.mxu0
        %v7968 = vadd.f32 %v7899, %v7954
        %v7969 = vadd.f32 %v7902, %v7957
        %v7970 = vadd.f32 %v7907, %v7962
        %v7971 = vadd.f32 %v7910, %v7965
        %v7972 = vmax.f32 %v7811, %v7968
        %v7973 = vmax.f32 %v7812, %v7969
        %v7974 = vmax.f32 %v7813, %v7970
        %v7975 = vmax.f32 %v7814, %v7971
        %v7976 = vld [vmem:[%s2 + $0x4] sm:$0x1]
        %v7977 = vlaneseq
        %v7978 = vshrl.u32 %v7977, 7
        %v7979 = vsub.s32 0, %v7978
        %v7980 = vrot.slane %v7976, %v7979
        %v7981 = vmul.f32 %v7972, %v7980
        %v7982 = vmul.f32 %v7973, %v7980
        %v7983 = vmul.f32 %v7974, %v7980
        %v7984 = vmul.f32 %v7975, %v7980
        %v7985 = vld [vmem:[%s3 + $0x4] sm:$0x1]
        %v7986 = vlaneseq
        %v7987 = vshrl.u32 %v7986, 7
        %v7988 = vsub.s32 0, %v7987
        %v7989 = vrot.slane %v7985, %v7988
        %v7990 = vadd.f32 %v7981, %v7989
        %v7991 = vadd.f32 %v7982, %v7989
        %v7992 = vadd.f32 %v7983, %v7989
        %v7993 = vadd.f32 %v7984, %v7989
        %v7994 = vmax.f32 %v7990, 0.0
        %v7995 = vmax.f32 %v7991, 0.0
        %v7996 = vmax.f32 %v7992, 0.0
        %v7997 = vmax.f32 %v7993, 0.0
        %7998 = vst.msk [vmem:[#allocation3 + $0x8] sm:$0xff] %vm358, %v7994
        %7999 = vst.msk [vmem:[#allocation3 + $0x10] sm:$0xff] %vm358, %v7995
        %8000 = vst.msk [vmem:[#allocation3 + $0x18] sm:$0xff] %vm358, %v7996
        %8001 = vst.msk [vmem:[#allocation3 + $0x20] sm:$0xff] %vm358, %v7997
        %8002 = vst.msk [vmem:[#allocation3 + $0x28] sm:$0x1] %vm4061, 0.0
        %v8003 = vld [vmem:[%s4063] ss:$2 sm:$0xff]
        %v8004 = vld [vmem:[%s4065] ss:$2 sm:$0xff]
        %v8005 = vpack.c.bf16 %v8004, %v8003
        %v8006 = vld [vmem:[%s4143] ss:$2 sm:$0xff]
        %v8007 = vld [vmem:[%s4145] ss:$2 sm:$0xff]
        %v8008 = vpack.c.bf16 %v8007, %v8006
        %v8009 = vld [vmem:[%s4223] ss:$2 sm:$0xff]
        %v8010 = vld [vmem:[%s4225] ss:$2 sm:$0xff]
        %v8011 = vpack.c.bf16 %v8010, %v8009
        %v8012 = vld [vmem:[%s4303] ss:$2 sm:$0xff]
        %v8013 = vld [vmem:[%s4305] ss:$2 sm:$0xff]
        %v8014 = vpack.c.bf16 %v8013, %v8012
        %s8015 = scalar_lea.vmem %s1, 480
        %v8016 = vld [vmem:[%s8015] sm:$0xf]
        %v8017 = vld [vmem:[%s8015 + $0x4] sm:$0xf]
        %v8018 = vld [vmem:[%s8015 + $0x8] sm:$0xf]
        %v8019 = vld [vmem:[%s8015 + $0xc] sm:$0xf]
        %v8020 = vld [vmem:[%s8015 + $0x10] sm:$0xf]
        %v8021 = vld [vmem:[%s8015 + $0x14] sm:$0xf]
        %v8022 = vld [vmem:[%s8015 + $0x18] sm:$0xf]
        %v8023 = vld [vmem:[%s8015 + $0x1c] sm:$0xf]
        %s8024 = scalar_lea.vmem %s1, 512
        %v8025 = vld [vmem:[%s8024] sm:$0xf]
        %v8026 = vld [vmem:[%s8024 + $0x4] sm:$0xf]
        %v8027 = vld [vmem:[%s8024 + $0x8] sm:$0xf]
        %v8028 = vld [vmem:[%s8024 + $0xc] sm:$0xf]
        %v8029 = vld [vmem:[%s8024 + $0x10] sm:$0xf]
        %v8030 = vld [vmem:[%s8024 + $0x14] sm:$0xf]
        %v8031 = vld [vmem:[%s8024 + $0x18] sm:$0xf]
        %v8032 = vld [vmem:[%s8024 + $0x1c] sm:$0xf]
        %s8033 = scalar_lea.vmem %s1, 544
        %v8034 = vld [vmem:[%s8033] sm:$0xf]
        %v8035 = vld [vmem:[%s8033 + $0x4] sm:$0xf]
        %v8036 = vld [vmem:[%s8033 + $0x8] sm:$0xf]
        %v8037 = vld [vmem:[%s8033 + $0xc] sm:$0xf]
        %v8038 = vld [vmem:[%s8033 + $0x10] sm:$0xf]
        %v8039 = vld [vmem:[%s8033 + $0x14] sm:$0xf]
        %v8040 = vld [vmem:[%s8033 + $0x18] sm:$0xf]
        %v8041 = vld [vmem:[%s8033 + $0x1c] sm:$0xf]
        %v8050 = vunpack.c.l.b16 %v8025
        %v8051 = vunpack.c.l.b16 %v8026
        %v8052 = vunpack.c.l.b16 %v8027
        %v8053 = vunpack.c.l.b16 %v8028
        %v8054 = vunpack.c.l.b16 %v8029
        %v8055 = vunpack.c.l.b16 %v8030
        %v8056 = vunpack.c.l.b16 %v8031
        %v8057 = vunpack.c.l.b16 %v8032
        %v8058 = vpack.c.b16 %v8051, %v8050
        %v8059 = vpack.c.b16 %v8053, %v8052
        %v8060 = vpack.c.b16 %v8055, %v8054
        %v8061 = vpack.c.b16 %v8057, %v8056
        %v8067 = vsel %vm358, %v8008, 0
        %8069 = vmatprep.subr.bf16.mxu0 0
        %8070 = vmatpush1.bf16.msra.mxu0 %v8058
        %8071 = vmatprep.subr.bf16.mxu0 0
        %8072 = vmatpush1.bf16.msra.mxu0 %v8059
        %8073 = vmatprep.subr.bf16.mxu0 0
        %8074 = vmatpush1.bf16.msra.mxu0 %v8060
        %8075 = vmatprep.subr.bf16.mxu0 0
        %8076 = vmatpush1.bf16.msra.mxu0 %v8061
        %8077 = vmatprep.subr.bf16.mxu0 0
        %8078 = vmatpush1.bf16.msra.mxu0 0
        %8079 = vmatprep.subr.bf16.mxu0 0
        %8080 = vmatpush1.bf16.msra.mxu0 0
        %8081 = vmatprep.subr.bf16.mxu0 0
        %8082 = vmatpush1.bf16.msra.mxu0 0
        %8083 = vmatprep.subr.bf16.mxu0 0
        %8084 = vmatpush1.bf16.msra.mxu0 0
        %8085 = vmatprep.subr.bf16.mxu0 0
        %8086 = vmatpush1.bf16.msra.mxu0 0
        %8087 = vmatprep.subr.bf16.mxu0 0
        %8088 = vmatpush1.bf16.msra.mxu0 0
        %8089 = vmatprep.subr.bf16.mxu0 0
        %8090 = vmatpush1.bf16.msra.mxu0 0
        %8091 = vmatprep.subr.bf16.mxu0 0
        %8092 = vmatpush1.bf16.msra.mxu0 0
        %8093 = vmatprep.subr.bf16.mxu0 0
        %8094 = vmatpush1.bf16.msra.mxu0 0
        %8095 = vmatprep.subr.bf16.mxu0 0
        %8096 = vmatpush1.bf16.msra.mxu0 0
        %8097 = vmatprep.subr.bf16.mxu0 0
        %8098 = vmatpush1.bf16.msra.mxu0 0
        %8099 = vmatprep.subr.bf16.mxu0 0
        %8100 = vmatpush1.bf16.msra.mxu0 0
        %8101 = vmatprep.mubr.bf16.mxu0 0
        %8102 = vmatmul.mubr.bf16.gmra.mrb[0].mxu0 %v8067
        %v8103 = vpop.f32.mrb[0].mxu0
        %v8104 = vadd.f32 0.0, %v8103
        %v8105 = vpop.f32.mrb[0].mxu0
        %v8106 = vpop.f32.mrb[0].mxu0
        %v8107 = vadd.f32 0.0, %v8106
        %v8108 = vpop.f32.mrb[0].mxu0
        %8109 = vdwg.mxu0
        %v8118 = vunpack.c.l.b16 %v8016
        %v8119 = vunpack.c.l.b16 %v8017
        %v8120 = vunpack.c.l.b16 %v8018
        %v8121 = vunpack.c.l.b16 %v8019
        %v8122 = vunpack.c.l.b16 %v8020
        %v8123 = vunpack.c.l.b16 %v8021
        %v8124 = vunpack.c.l.b16 %v8022
        %v8125 = vunpack.c.l.b16 %v8023
        %v8126 = vpack.c.b16 %v8119, %v8118
        %v8127 = vpack.c.b16 %v8121, %v8120
        %v8128 = vpack.c.b16 %v8123, %v8122
        %v8129 = vpack.c.b16 %v8125, %v8124
        %v8135 = vsel %vm358, %v8005, 0
        %8137 = vmatprep.subr.bf16.mxu0 0
        %8138 = vmatpush1.bf16.msra.mxu0 %v8126
        %8139 = vmatprep.subr.bf16.mxu0 0
        %8140 = vmatpush1.bf16.msra.mxu0 %v8127
        %8141 = vmatprep.subr.bf16.mxu0 0
        %8142 = vmatpush1.bf16.msra.mxu0 %v8128
        %8143 = vmatprep.subr.bf16.mxu0 0
        %8144 = vmatpush1.bf16.msra.mxu0 %v8129
        %8145 = vmatprep.subr.bf16.mxu0 0
        %8146 = vmatpush1.bf16.msra.mxu0 0
        %8147 = vmatprep.subr.bf16.mxu0 0
        %8148 = vmatpush1.bf16.msra.mxu0 0
        %8149 = vmatprep.subr.bf16.mxu0 0
        %8150 = vmatpush1.bf16.msra.mxu0 0
        %8151 = vmatprep.subr.bf16.mxu0 0
        %8152 = vmatpush1.bf16.msra.mxu0 0
        %8153 = vmatprep.subr.bf16.mxu0 0
        %8154 = vmatpush1.bf16.msra.mxu0 0
        %8155 = vmatprep.subr.bf16.mxu0 0
        %8156 = vmatpush1.bf16.msra.mxu0 0
        %8157 = vmatprep.subr.bf16.mxu0 0
        %8158 = vmatpush1.bf16.msra.mxu0 0
        %8159 = vmatprep.subr.bf16.mxu0 0
        %8160 = vmatpush1.bf16.msra.mxu0 0
        %8161 = vmatprep.subr.bf16.mxu0 0
        %8162 = vmatpush1.bf16.msra.mxu0 0
        %8163 = vmatprep.subr.bf16.mxu0 0
        %8164 = vmatpush1.bf16.msra.mxu0 0
        %8165 = vmatprep.subr.bf16.mxu0 0
        %8166 = vmatpush1.bf16.msra.mxu0 0
        %8167 = vmatprep.subr.bf16.mxu0 0
        %8168 = vmatpush1.bf16.msra.mxu0 0
        %8169 = vmatprep.mubr.bf16.mxu0 0
        %8170 = vmatmul.mubr.bf16.gmra.mrb[0].mxu0 %v8135
        %v8171 = vpop.f32.mrb[0].mxu0
        %v8172 = vadd.f32 %v8104, %v8171
        %v8173 = vpop.f32.mrb[0].mxu0
        %v8174 = vpop.f32.mrb[0].mxu0
        %v8175 = vadd.f32 %v8107, %v8174
        %v8176 = vpop.f32.mrb[0].mxu0
        %8177 = vdwg.mxu0
        %v8186 = vunpack.c.l.b16 %v8034
        %v8187 = vunpack.c.l.b16 %v8035
        %v8188 = vunpack.c.l.b16 %v8036
        %v8189 = vunpack.c.l.b16 %v8037
        %v8190 = vunpack.c.l.b16 %v8038
        %v8191 = vunpack.c.l.b16 %v8039
        %v8192 = vunpack.c.l.b16 %v8040
        %v8193 = vunpack.c.l.b16 %v8041
        %v8194 = vpack.c.b16 %v8187, %v8186
        %v8195 = vpack.c.b16 %v8189, %v8188
        %v8196 = vpack.c.b16 %v8191, %v8190
        %v8197 = vpack.c.b16 %v8193, %v8192
        %v8203 = vsel %vm358, %v8011, 0
        %8205 = vmatprep.subr.bf16.mxu0 0
        %8206 = vmatpush1.bf16.msra.mxu0 %v8194
        %8207 = vmatprep.subr.bf16.mxu0 0
        %8208 = vmatpush1.bf16.msra.mxu0 %v8195
        %8209 = vmatprep.subr.bf16.mxu0 0
        %8210 = vmatpush1.bf16.msra.mxu0 %v8196
        %8211 = vmatprep.subr.bf16.mxu0 0
        %8212 = vmatpush1.bf16.msra.mxu0 %v8197
        %8213 = vmatprep.subr.bf16.mxu0 0
        %8214 = vmatpush1.bf16.msra.mxu0 0
        %8215 = vmatprep.subr.bf16.mxu0 0
        %8216 = vmatpush1.bf16.msra.mxu0 0
        %8217 = vmatprep.subr.bf16.mxu0 0
        %8218 = vmatpush1.bf16.msra.mxu0 0
        %8219 = vmatprep.subr.bf16.mxu0 0
        %8220 = vmatpush1.bf16.msra.mxu0 0
        %8221 = vmatprep.subr.bf16.mxu0 0
        %8222 = vmatpush1.bf16.msra.mxu0 0
        %8223 = vmatprep.subr.bf16.mxu0 0
        %8224 = vmatpush1.bf16.msra.mxu0 0
        %8225 = vmatprep.subr.bf16.mxu0 0
        %8226 = vmatpush1.bf16.msra.mxu0 0
        %8227 = vmatprep.subr.bf16.mxu0 0
        %8228 = vmatpush1.bf16.msra.mxu0 0
        %8229 = vmatprep.subr.bf16.mxu0 0
        %8230 = vmatpush1.bf16.msra.mxu0 0
        %8231 = vmatprep.subr.bf16.mxu0 0
        %8232 = vmatpush1.bf16.msra.mxu0 0
        %8233 = vmatprep.subr.bf16.mxu0 0
        %8234 = vmatpush1.bf16.msra.mxu0 0
        %8235 = vmatprep.subr.bf16.mxu0 0
        %8236 = vmatpush1.bf16.msra.mxu0 0
        %8237 = vmatprep.mubr.bf16.mxu0 0
        %8238 = vmatmul.mubr.bf16.gmra.mrb[0].mxu0 %v8203
        %v8239 = vpop.f32.mrb[0].mxu0
        %v8240 = vadd.f32 0.0, %v8239
        %v8241 = vpop.f32.mrb[0].mxu0
        %v8242 = vpop.f32.mrb[0].mxu0
        %v8243 = vadd.f32 0.0, %v8242
        %v8244 = vpop.f32.mrb[0].mxu0
        %8245 = vdwg.mxu0
        %v8246 = vadd.f32 %v8172, %v8240
        %v8247 = vadd.f32 %v8175, %v8243
        %8248 = vmatprep.subr.bf16.mxu0 0
        %8249 = vmatpush1.bf16.msra.mxu0 %v8058
        %8250 = vmatprep.subr.bf16.mxu0 0
        %8251 = vmatpush1.bf16.msra.mxu0 %v8059
        %8252 = vmatprep.subr.bf16.mxu0 0
        %8253 = vmatpush1.bf16.msra.mxu0 %v8060
        %8254 = vmatprep.subr.bf16.mxu0 0
        %8255 = vmatpush1.bf16.msra.mxu0 %v8061
        %8256 = vmatprep.subr.bf16.mxu0 0
        %8257 = vmatpush1.bf16.msra.mxu0 0
        %8258 = vmatprep.subr.bf16.mxu0 0
        %8259 = vmatpush1.bf16.msra.mxu0 0
        %8260 = vmatprep.subr.bf16.mxu0 0
        %8261 = vmatpush1.bf16.msra.mxu0 0
        %8262 = vmatprep.subr.bf16.mxu0 0
        %8263 = vmatpush1.bf16.msra.mxu0 0
        %8264 = vmatprep.subr.bf16.mxu0 0
        %8265 = vmatpush1.bf16.msra.mxu0 0
        %8266 = vmatprep.subr.bf16.mxu0 0
        %8267 = vmatpush1.bf16.msra.mxu0 0
        %8268 = vmatprep.subr.bf16.mxu0 0
        %8269 = vmatpush1.bf16.msra.mxu0 0
        %8270 = vmatprep.subr.bf16.mxu0 0
        %8271 = vmatpush1.bf16.msra.mxu0 0
        %8272 = vmatprep.subr.bf16.mxu0 0
        %8273 = vmatpush1.bf16.msra.mxu0 0
        %8274 = vmatprep.subr.bf16.mxu0 0
        %8275 = vmatpush1.bf16.msra.mxu0 0
        %8276 = vmatprep.subr.bf16.mxu0 0
        %8277 = vmatpush1.bf16.msra.mxu0 0
        %8278 = vmatprep.subr.bf16.mxu0 0
        %8279 = vmatpush1.bf16.msra.mxu0 0
        %8280 = vmatprep.mubr.bf16.mxu0 0
        %8281 = vmatmul.mubr.bf16.gmra.mrb[0].mxu0 %v8203
        %v8282 = vpop.f32.mrb[0].mxu0
        %v8283 = vadd.f32 0.0, %v8282
        %v8284 = vpop.f32.mrb[0].mxu0
        %v8285 = vpop.f32.mrb[0].mxu0
        %v8286 = vadd.f32 0.0, %v8285
        %v8287 = vpop.f32.mrb[0].mxu0
        %8288 = vdwg.mxu0
        %8289 = vmatprep.subr.bf16.mxu0 0
        %8290 = vmatpush1.bf16.msra.mxu0 %v8126
        %8291 = vmatprep.subr.bf16.mxu0 0
        %8292 = vmatpush1.bf16.msra.mxu0 %v8127
        %8293 = vmatprep.subr.bf16.mxu0 0
        %8294 = vmatpush1.bf16.msra.mxu0 %v8128
        %8295 = vmatprep.subr.bf16.mxu0 0
        %8296 = vmatpush1.bf16.msra.mxu0 %v8129
        %8297 = vmatprep.subr.bf16.mxu0 0
        %8298 = vmatpush1.bf16.msra.mxu0 0
        %8299 = vmatprep.subr.bf16.mxu0 0
        %8300 = vmatpush1.bf16.msra.mxu0 0
        %8301 = vmatprep.subr.bf16.mxu0 0
        %8302 = vmatpush1.bf16.msra.mxu0 0
        %8303 = vmatprep.subr.bf16.mxu0 0
        %8304 = vmatpush1.bf16.msra.mxu0 0
        %8305 = vmatprep.subr.bf16.mxu0 0
        %8306 = vmatpush1.bf16.msra.mxu0 0
        %8307 = vmatprep.subr.bf16.mxu0 0
        %8308 = vmatpush1.bf16.msra.mxu0 0
        %8309 = vmatprep.subr.bf16.mxu0 0
        %8310 = vmatpush1.bf16.msra.mxu0 0
        %8311 = vmatprep.subr.bf16.mxu0 0
        %8312 = vmatpush1.bf16.msra.mxu0 0
        %8313 = vmatprep.subr.bf16.mxu0 0
        %8314 = vmatpush1.bf16.msra.mxu0 0
        %8315 = vmatprep.subr.bf16.mxu0 0
        %8316 = vmatpush1.bf16.msra.mxu0 0
        %8317 = vmatprep.subr.bf16.mxu0 0
        %8318 = vmatpush1.bf16.msra.mxu0 0
        %8319 = vmatprep.subr.bf16.mxu0 0
        %8320 = vmatpush1.bf16.msra.mxu0 0
        %8321 = vmatprep.mubr.bf16.mxu0 0
        %8322 = vmatmul.mubr.bf16.gmra.mrb[0].mxu0 %v8067
        %v8323 = vpop.f32.mrb[0].mxu0
        %v8324 = vadd.f32 %v8283, %v8323
        %v8325 = vpop.f32.mrb[0].mxu0
        %v8326 = vpop.f32.mrb[0].mxu0
        %v8327 = vadd.f32 %v8286, %v8326
        %v8328 = vpop.f32.mrb[0].mxu0
        %8329 = vdwg.mxu0
        %v8331 = vsel %vm358, %v8014, 0
        %8333 = vmatprep.subr.bf16.mxu0 0
        %8334 = vmatpush1.bf16.msra.mxu0 %v8194
        %8335 = vmatprep.subr.bf16.mxu0 0
        %8336 = vmatpush1.bf16.msra.mxu0 %v8195
        %8337 = vmatprep.subr.bf16.mxu0 0
        %8338 = vmatpush1.bf16.msra.mxu0 %v8196
        %8339 = vmatprep.subr.bf16.mxu0 0
        %8340 = vmatpush1.bf16.msra.mxu0 %v8197
        %8341 = vmatprep.subr.bf16.mxu0 0
        %8342 = vmatpush1.bf16.msra.mxu0 0
        %8343 = vmatprep.subr.bf16.mxu0 0
        %8344 = vmatpush1.bf16.msra.mxu0 0
        %8345 = vmatprep.subr.bf16.mxu0 0
        %8346 = vmatpush1.bf16.msra.mxu0 0
        %8347 = vmatprep.subr.bf16.mxu0 0
        %8348 = vmatpush1.bf16.msra.mxu0 0
        %8349 = vmatprep.subr.bf16.mxu0 0
        %8350 = vmatpush1.bf16.msra.mxu0 0
        %8351 = vmatprep.subr.bf16.mxu0 0
        %8352 = vmatpush1.bf16.msra.mxu0 0
        %8353 = vmatprep.subr.bf16.mxu0 0
        %8354 = vmatpush1.bf16.msra.mxu0 0
        %8355 = vmatprep.subr.bf16.mxu0 0
        %8356 = vmatpush1.bf16.msra.mxu0 0
        %8357 = vmatprep.subr.bf16.mxu0 0
        %8358 = vmatpush1.bf16.msra.mxu0 0
        %8359 = vmatprep.subr.bf16.mxu0 0
        %8360 = vmatpush1.bf16.msra.mxu0 0
        %8361 = vmatprep.subr.bf16.mxu0 0
        %8362 = vmatpush1.bf16.msra.mxu0 0
        %8363 = vmatprep.subr.bf16.mxu0 0
        %8364 = vmatpush1.bf16.msra.mxu0 0
        %8365 = vmatprep.mubr.bf16.mxu0 0
        %8366 = vmatmul.mubr.bf16.gmra.mrb[0].mxu0 %v8331
        %v8367 = vpop.f32.mrb[0].mxu0
        %v8368 = vadd.f32 0.0, %v8367
        %v8369 = vpop.f32.mrb[0].mxu0
        %v8370 = vpop.f32.mrb[0].mxu0
        %v8371 = vadd.f32 0.0, %v8370
        %v8372 = vpop.f32.mrb[0].mxu0
        %8373 = vdwg.mxu0
        %v8374 = vadd.f32 %v8324, %v8368
        %v8375 = vadd.f32 %v8327, %v8371
        %v8376 = vmax.f32 %v8246, %v8374
        %v8377 = vmax.f32 %v8247, %v8375
        %v8378 = vld [vmem:[%s2 + $0x5] sm:$0x1]
        %v8379 = vlaneseq
        %v8380 = vshrl.u32 %v8379, 7
        %v8381 = vsub.s32 0, %v8380
        %v8382 = vrot.slane %v8378, %v8381
        %v8383 = vmul.f32 %v8376, %v8382
        %v8384 = vmul.f32 %v8377, %v8382
        %v8385 = vld [vmem:[%s3 + $0x5] sm:$0x1]
        %v8386 = vlaneseq
        %v8387 = vshrl.u32 %v8386, 7
        %v8388 = vsub.s32 0, %v8387
        %v8389 = vrot.slane %v8385, %v8388
        %v8390 = vadd.f32 %v8383, %v8389
        %v8391 = vadd.f32 %v8384, %v8389
        %v8392 = vmax.f32 %v8390, 0.0
        %v8393 = vmax.f32 %v8391, 0.0
        %8394 = vst.msk [vmem:[#allocation2 + $0x8] sm:$0xff] %vm358, %v8392
        %8395 = vst.msk [vmem:[#allocation2 + $0x10] sm:$0xff] %vm358, %v8393
        %8396 = vst.msk [vmem:[#allocation2 + $0x18] sm:$0x1] %vm4061, 0.0
        %v8397 = vld [vmem:[%s747] ss:$2 sm:$0xff]
        %v8398 = vpack.c.bf16 %v8397, %v8397
        %v8399 = vld [vmem:[%s907] ss:$2 sm:$0xff]
        %v8400 = vpack.c.bf16 %v8399, %v8399
        %v8401 = vld [vmem:[%s1067] ss:$2 sm:$0xff]
        %v8402 = vpack.c.bf16 %v8401, %v8401
        %v8403 = vld [vmem:[%s1227] ss:$2 sm:$0xff]
        %v8404 = vpack.c.bf16 %v8403, %v8403
        %s8405 = scalar_lea.vmem %s1, 576
        %v8406 = vld [vmem:[%s8405] sm:$0xf]
        %v8407 = vld [vmem:[%s8405 + $0x4] sm:$0xf]
        %v8408 = vld [vmem:[%s8405 + $0x8] sm:$0xf]
        %v8409 = vld [vmem:[%s8405 + $0xc] sm:$0xf]
        %v8410 = vld [vmem:[%s8405 + $0x10] sm:$0xf]
        %v8411 = vld [vmem:[%s8405 + $0x14] sm:$0xf]
        %v8412 = vld [vmem:[%s8405 + $0x18] sm:$0xf]
        %v8413 = vld [vmem:[%s8405 + $0x1c] sm:$0xf]
        %s8414 = scalar_lea.vmem %s1, 608
        %v8415 = vld [vmem:[%s8414] sm:$0xf]
        %v8416 = vld [vmem:[%s8414 + $0x4] sm:$0xf]
        %v8417 = vld [vmem:[%s8414 + $0x8] sm:$0xf]
        %v8418 = vld [vmem:[%s8414 + $0xc] sm:$0xf]
        %v8419 = vld [vmem:[%s8414 + $0x10] sm:$0xf]
        %v8420 = vld [vmem:[%s8414 + $0x14] sm:$0xf]
        %v8421 = vld [vmem:[%s8414 + $0x18] sm:$0xf]
        %v8422 = vld [vmem:[%s8414 + $0x1c] sm:$0xf]
        %s8423 = scalar_lea.vmem %s1, 640
        %v8424 = vld [vmem:[%s8423] sm:$0xf]
        %v8425 = vld [vmem:[%s8423 + $0x4] sm:$0xf]
        %v8426 = vld [vmem:[%s8423 + $0x8] sm:$0xf]
        %v8427 = vld [vmem:[%s8423 + $0xc] sm:$0xf]
        %v8428 = vld [vmem:[%s8423 + $0x10] sm:$0xf]
        %v8429 = vld [vmem:[%s8423 + $0x14] sm:$0xf]
        %v8430 = vld [vmem:[%s8423 + $0x18] sm:$0xf]
        %v8431 = vld [vmem:[%s8423 + $0x1c] sm:$0xf]
        %v8440 = vunpack.c.l.b16 %v8415
        %v8441 = vunpack.c.l.b16 %v8416
        %v8442 = vunpack.c.l.b16 %v8417
        %v8443 = vunpack.c.l.b16 %v8418
        %v8444 = vunpack.c.l.b16 %v8419
        %v8445 = vunpack.c.l.b16 %v8420
        %v8446 = vunpack.c.l.b16 %v8421
        %v8447 = vunpack.c.l.b16 %v8422
        %v8448 = vpack.c.b16 %v8441, %v8440
        %v8449 = vpack.c.b16 %v8443, %v8442
        %v8450 = vpack.c.b16 %v8445, %v8444
        %v8451 = vpack.c.b16 %v8447, %v8446
        %v8457 = vsel %vm358, %v8400, 0
        %8459 = vmatprep.subr.bf16.mxu0 0
        %8460 = vmatpush1.bf16.msra.mxu0 %v8448
        %8461 = vmatprep.subr.bf16.mxu0 0
        %8462 = vmatpush1.bf16.msra.mxu0 %v8449
        %8463 = vmatprep.subr.bf16.mxu0 0
        %8464 = vmatpush1.bf16.msra.mxu0 %v8450
        %8465 = vmatprep.subr.bf16.mxu0 0
        %8466 = vmatpush1.bf16.msra.mxu0 %v8451
        %8467 = vmatprep.subr.bf16.mxu0 0
        %8468 = vmatpush1.bf16.msra.mxu0 0
        %8469 = vmatprep.subr.bf16.mxu0 0
        %8470 = vmatpush1.bf16.msra.mxu0 0
        %8471 = vmatprep.subr.bf16.mxu0 0
        %8472 = vmatpush1.bf16.msra.mxu0 0
        %8473 = vmatprep.subr.bf16.mxu0 0
        %8474 = vmatpush1.bf16.msra.mxu0 0
        %8475 = vmatprep.subr.bf16.mxu0 0
        %8476 = vmatpush1.bf16.msra.mxu0 0
        %8477 = vmatprep.subr.bf16.mxu0 0
        %8478 = vmatpush1.bf16.msra.mxu0 0
        %8479 = vmatprep.subr.bf16.mxu0 0
        %8480 = vmatpush1.bf16.msra.mxu0 0
        %8481 = vmatprep.subr.bf16.mxu0 0
        %8482 = vmatpush1.bf16.msra.mxu0 0
        %8483 = vmatprep.subr.bf16.mxu0 0
        %8484 = vmatpush1.bf16.msra.mxu0 0
        %8485 = vmatprep.subr.bf16.mxu0 0
        %8486 = vmatpush1.bf16.msra.mxu0 0
        %8487 = vmatprep.subr.bf16.mxu0 0
        %8488 = vmatpush1.bf16.msra.mxu0 0
        %8489 = vmatprep.subr.bf16.mxu0 0
        %8490 = vmatpush1.bf16.msra.mxu0 0
        %8491 = vmatprep.mubr.bf16.mxu0 0
        %8492 = vmatmul.mubr.bf16.gmra.mrb[0].mxu0 %v8457
        %v8493 = vpop.f32.mrb[0].mxu0
        %v8494 = vadd.f32 0.0, %v8493
        %v8495 = vpop.f32.mrb[0].mxu0
        %v8496 = vpop.f32.mrb[0].mxu0
        %v8497 = vpop.f32.mrb[0].mxu0
        %8498 = vdwg.mxu0
        %v8507 = vunpack.c.l.b16 %v8406
        %v8508 = vunpack.c.l.b16 %v8407
        %v8509 = vunpack.c.l.b16 %v8408
        %v8510 = vunpack.c.l.b16 %v8409
        %v8511 = vunpack.c.l.b16 %v8410
        %v8512 = vunpack.c.l.b16 %v8411
        %v8513 = vunpack.c.l.b16 %v8412
        %v8514 = vunpack.c.l.b16 %v8413
        %v8515 = vpack.c.b16 %v8508, %v8507
        %v8516 = vpack.c.b16 %v8510, %v8509
        %v8517 = vpack.c.b16 %v8512, %v8511
        %v8518 = vpack.c.b16 %v8514, %v8513
        %v8524 = vsel %vm358, %v8398, 0
        %8526 = vmatprep.subr.bf16.mxu0 0
        %8527 = vmatpush1.bf16.msra.mxu0 %v8515
        %8528 = vmatprep.subr.bf16.mxu0 0
        %8529 = vmatpush1.bf16.msra.mxu0 %v8516
        %8530 = vmatprep.subr.bf16.mxu0 0
        %8531 = vmatpush1.bf16.msra.mxu0 %v8517
        %8532 = vmatprep.subr.bf16.mxu0 0
        %8533 = vmatpush1.bf16.msra.mxu0 %v8518
        %8534 = vmatprep.subr.bf16.mxu0 0
        %8535 = vmatpush1.bf16.msra.mxu0 0
        %8536 = vmatprep.subr.bf16.mxu0 0
        %8537 = vmatpush1.bf16.msra.mxu0 0
        %8538 = vmatprep.subr.bf16.mxu0 0
        %8539 = vmatpush1.bf16.msra.mxu0 0
        %8540 = vmatprep.subr.bf16.mxu0 0
        %8541 = vmatpush1.bf16.msra.mxu0 0
        %8542 = vmatprep.subr.bf16.mxu0 0
        %8543 = vmatpush1.bf16.msra.mxu0 0
        %8544 = vmatprep.subr.bf16.mxu0 0
        %8545 = vmatpush1.bf16.msra.mxu0 0
        %8546 = vmatprep.subr.bf16.mxu0 0
        %8547 = vmatpush1.bf16.msra.mxu0 0
        %8548 = vmatprep.subr.bf16.mxu0 0
        %8549 = vmatpush1.bf16.msra.mxu0 0
        %8550 = vmatprep.subr.bf16.mxu0 0
        %8551 = vmatpush1.bf16.msra.mxu0 0
        %8552 = vmatprep.subr.bf16.mxu0 0
        %8553 = vmatpush1.bf16.msra.mxu0 0
        %8554 = vmatprep.subr.bf16.mxu0 0
        %8555 = vmatpush1.bf16.msra.mxu0 0
        %8556 = vmatprep.subr.bf16.mxu0 0
        %8557 = vmatpush1.bf16.msra.mxu0 0
        %8558 = vmatprep.mubr.bf16.mxu0 0
        %8559 = vmatmul.mubr.bf16.gmra.mrb[0].mxu0 %v8524
        %v8560 = vpop.f32.mrb[0].mxu0
        %v8561 = vadd.f32 %v8494, %v8560
        %v8562 = vpop.f32.mrb[0].mxu0
        %v8563 = vpop.f32.mrb[0].mxu0
        %v8564 = vpop.f32.mrb[0].mxu0
        %8565 = vdwg.mxu0
        %v8574 = vunpack.c.l.b16 %v8424
        %v8575 = vunpack.c.l.b16 %v8425
        %v8576 = vunpack.c.l.b16 %v8426
        %v8577 = vunpack.c.l.b16 %v8427
        %v8578 = vunpack.c.l.b16 %v8428
        %v8579 = vunpack.c.l.b16 %v8429
        %v8580 = vunpack.c.l.b16 %v8430
        %v8581 = vunpack.c.l.b16 %v8431
        %v8582 = vpack.c.b16 %v8575, %v8574
        %v8583 = vpack.c.b16 %v8577, %v8576
        %v8584 = vpack.c.b16 %v8579, %v8578
        %v8585 = vpack.c.b16 %v8581, %v8580
        %v8591 = vsel %vm358, %v8402, 0
        %8593 = vmatprep.subr.bf16.mxu0 0
        %8594 = vmatpush1.bf16.msra.mxu0 %v8582
        %8595 = vmatprep.subr.bf16.mxu0 0
        %8596 = vmatpush1.bf16.msra.mxu0 %v8583
        %8597 = vmatprep.subr.bf16.mxu0 0
        %8598 = vmatpush1.bf16.msra.mxu0 %v8584
        %8599 = vmatprep.subr.bf16.mxu0 0
        %8600 = vmatpush1.bf16.msra.mxu0 %v8585
        %8601 = vmatprep.subr.bf16.mxu0 0
        %8602 = vmatpush1.bf16.msra.mxu0 0
        %8603 = vmatprep.subr.bf16.mxu0 0
        %8604 = vmatpush1.bf16.msra.mxu0 0
        %8605 = vmatprep.subr.bf16.mxu0 0
        %8606 = vmatpush1.bf16.msra.mxu0 0
        %8607 = vmatprep.subr.bf16.mxu0 0
        %8608 = vmatpush1.bf16.msra.mxu0 0
        %8609 = vmatprep.subr.bf16.mxu0 0
        %8610 = vmatpush1.bf16.msra.mxu0 0
        %8611 = vmatprep.subr.bf16.mxu0 0
        %8612 = vmatpush1.bf16.msra.mxu0 0
        %8613 = vmatprep.subr.bf16.mxu0 0
        %8614 = vmatpush1.bf16.msra.mxu0 0
        %8615 = vmatprep.subr.bf16.mxu0 0
        %8616 = vmatpush1.bf16.msra.mxu0 0
        %8617 = vmatprep.subr.bf16.mxu0 0
        %8618 = vmatpush1.bf16.msra.mxu0 0
        %8619 = vmatprep.subr.bf16.mxu0 0
        %8620 = vmatpush1.bf16.msra.mxu0 0
        %8621 = vmatprep.subr.bf16.mxu0 0
        %8622 = vmatpush1.bf16.msra.mxu0 0
        %8623 = vmatprep.subr.bf16.mxu0 0
        %8624 = vmatpush1.bf16.msra.mxu0 0
        %8625 = vmatprep.mubr.bf16.mxu0 0
        %8626 = vmatmul.mubr.bf16.gmra.mrb[0].mxu0 %v8591
        %v8627 = vpop.f32.mrb[0].mxu0
        %v8628 = vadd.f32 0.0, %v8627
        %v8629 = vpop.f32.mrb[0].mxu0
        %v8630 = vpop.f32.mrb[0].mxu0
        %v8631 = vpop.f32.mrb[0].mxu0
        %8632 = vdwg.mxu0
        %v8633 = vadd.f32 %v8561, %v8628
        %8634 = vmatprep.subr.bf16.mxu0 0
        %8635 = vmatpush1.bf16.msra.mxu0 %v8448
        %8636 = vmatprep.subr.bf16.mxu0 0
        %8637 = vmatpush1.bf16.msra.mxu0 %v8449
        %8638 = vmatprep.subr.bf16.mxu0 0
        %8639 = vmatpush1.bf16.msra.mxu0 %v8450
        %8640 = vmatprep.subr.bf16.mxu0 0
        %8641 = vmatpush1.bf16.msra.mxu0 %v8451
        %8642 = vmatprep.subr.bf16.mxu0 0
        %8643 = vmatpush1.bf16.msra.mxu0 0
        %8644 = vmatprep.subr.bf16.mxu0 0
        %8645 = vmatpush1.bf16.msra.mxu0 0
        %8646 = vmatprep.subr.bf16.mxu0 0
        %8647 = vmatpush1.bf16.msra.mxu0 0
        %8648 = vmatprep.subr.bf16.mxu0 0
        %8649 = vmatpush1.bf16.msra.mxu0 0
        %8650 = vmatprep.subr.bf16.mxu0 0
        %8651 = vmatpush1.bf16.msra.mxu0 0
        %8652 = vmatprep.subr.bf16.mxu0 0
        %8653 = vmatpush1.bf16.msra.mxu0 0
        %8654 = vmatprep.subr.bf16.mxu0 0
        %8655 = vmatpush1.bf16.msra.mxu0 0
        %8656 = vmatprep.subr.bf16.mxu0 0
        %8657 = vmatpush1.bf16.msra.mxu0 0
        %8658 = vmatprep.subr.bf16.mxu0 0
        %8659 = vmatpush1.bf16.msra.mxu0 0
        %8660 = vmatprep.subr.bf16.mxu0 0
        %8661 = vmatpush1.bf16.msra.mxu0 0
        %8662 = vmatprep.subr.bf16.mxu0 0
        %8663 = vmatpush1.bf16.msra.mxu0 0
        %8664 = vmatprep.subr.bf16.mxu0 0
        %8665 = vmatpush1.bf16.msra.mxu0 0
        %8666 = vmatprep.mubr.bf16.mxu0 0
        %8667 = vmatmul.mubr.bf16.gmra.mrb[0].mxu0 %v8591
        %v8668 = vpop.f32.mrb[0].mxu0
        %v8669 = vadd.f32 0.0, %v8668
        %v8670 = vpop.f32.mrb[0].mxu0
        %v8671 = vpop.f32.mrb[0].mxu0
        %v8672 = vpop.f32.mrb[0].mxu0
        %8673 = vdwg.mxu0
        %8674 = vmatprep.subr.bf16.mxu0 0
        %8675 = vmatpush1.bf16.msra.mxu0 %v8515
        %8676 = vmatprep.subr.bf16.mxu0 0
        %8677 = vmatpush1.bf16.msra.mxu0 %v8516
        %8678 = vmatprep.subr.bf16.mxu0 0
        %8679 = vmatpush1.bf16.msra.mxu0 %v8517
        %8680 = vmatprep.subr.bf16.mxu0 0
        %8681 = vmatpush1.bf16.msra.mxu0 %v8518
        %8682 = vmatprep.subr.bf16.mxu0 0
        %8683 = vmatpush1.bf16.msra.mxu0 0
        %8684 = vmatprep.subr.bf16.mxu0 0
        %8685 = vmatpush1.bf16.msra.mxu0 0
        %8686 = vmatprep.subr.bf16.mxu0 0
        %8687 = vmatpush1.bf16.msra.mxu0 0
        %8688 = vmatprep.subr.bf16.mxu0 0
        %8689 = vmatpush1.bf16.msra.mxu0 0
        %8690 = vmatprep.subr.bf16.mxu0 0
        %8691 = vmatpush1.bf16.msra.mxu0 0
        %8692 = vmatprep.subr.bf16.mxu0 0
        %8693 = vmatpush1.bf16.msra.mxu0 0
        %8694 = vmatprep.subr.bf16.mxu0 0
        %8695 = vmatpush1.bf16.msra.mxu0 0
        %8696 = vmatprep.subr.bf16.mxu0 0
        %8697 = vmatpush1.bf16.msra.mxu0 0
        %8698 = vmatprep.subr.bf16.mxu0 0
        %8699 = vmatpush1.bf16.msra.mxu0 0
        %8700 = vmatprep.subr.bf16.mxu0 0
        %8701 = vmatpush1.bf16.msra.mxu0 0
        %8702 = vmatprep.subr.bf16.mxu0 0
        %8703 = vmatpush1.bf16.msra.mxu0 0
        %8704 = vmatprep.subr.bf16.mxu0 0
        %8705 = vmatpush1.bf16.msra.mxu0 0
        %8706 = vmatprep.mubr.bf16.mxu0 0
        %8707 = vmatmul.mubr.bf16.gmra.mrb[0].mxu0 %v8457
        %v8708 = vpop.f32.mrb[0].mxu0
        %v8709 = vadd.f32 %v8669, %v8708
        %v8710 = vpop.f32.mrb[0].mxu0
        %v8711 = vpop.f32.mrb[0].mxu0
        %v8712 = vpop.f32.mrb[0].mxu0
        %8713 = vdwg.mxu0
        %v8715 = vsel %vm358, %v8404, 0
        %8717 = vmatprep.subr.bf16.mxu0 0
        %8718 = vmatpush1.bf16.msra.mxu0 %v8582
        %8719 = vmatprep.subr.bf16.mxu0 0
        %8720 = vmatpush1.bf16.msra.mxu0 %v8583
        %8721 = vmatprep.subr.bf16.mxu0 0
        %8722 = vmatpush1.bf16.msra.mxu0 %v8584
        %8723 = vmatprep.subr.bf16.mxu0 0
        %8724 = vmatpush1.bf16.msra.mxu0 %v8585
        %8725 = vmatprep.subr.bf16.mxu0 0
        %8726 = vmatpush1.bf16.msra.mxu0 0
        %8727 = vmatprep.subr.bf16.mxu0 0
        %8728 = vmatpush1.bf16.msra.mxu0 0
        %8729 = vmatprep.subr.bf16.mxu0 0
        %8730 = vmatpush1.bf16.msra.mxu0 0
        %8731 = vmatprep.subr.bf16.mxu0 0
        %8732 = vmatpush1.bf16.msra.mxu0 0
        %8733 = vmatprep.subr.bf16.mxu0 0
        %8734 = vmatpush1.bf16.msra.mxu0 0
        %8735 = vmatprep.subr.bf16.mxu0 0
        %8736 = vmatpush1.bf16.msra.mxu0 0
        %8737 = vmatprep.subr.bf16.mxu0 0
        %8738 = vmatpush1.bf16.msra.mxu0 0
        %8739 = vmatprep.subr.bf16.mxu0 0
        %8740 = vmatpush1.bf16.msra.mxu0 0
        %8741 = vmatprep.subr.bf16.mxu0 0
        %8742 = vmatpush1.bf16.msra.mxu0 0
        %8743 = vmatprep.subr.bf16.mxu0 0
        %8744 = vmatpush1.bf16.msra.mxu0 0
        %8745 = vmatprep.subr.bf16.mxu0 0
        %8746 = vmatpush1.bf16.msra.mxu0 0
        %8747 = vmatprep.subr.bf16.mxu0 0
        %8748 = vmatpush1.bf16.msra.mxu0 0
        %8749 = vmatprep.mubr.bf16.mxu0 0
        %8750 = vmatmul.mubr.bf16.gmra.mrb[0].mxu0 %v8715
        %v8751 = vpop.f32.mrb[0].mxu0
        %v8752 = vadd.f32 0.0, %v8751
        %v8753 = vpop.f32.mrb[0].mxu0
        %v8754 = vpop.f32.mrb[0].mxu0
        %v8755 = vpop.f32.mrb[0].mxu0
        %8756 = vdwg.mxu0
        %v8757 = vadd.f32 %v8709, %v8752
        %v8758 = vmax.f32 %v8633, %v8757
        %v8759 = vld [vmem:[%s2 + $0x6] sm:$0x1]
        %v8760 = vlaneseq
        %v8761 = vshrl.u32 %v8760, 7
        %v8762 = vsub.s32 0, %v8761
        %v8763 = vrot.slane %v8759, %v8762
        %v8764 = vmul.f32 %v8758, %v8763
        %v8765 = vld [vmem:[%s3 + $0x6] sm:$0x1]
        %v8766 = vlaneseq
        %v8767 = vshrl.u32 %v8766, 7
        %v8768 = vsub.s32 0, %v8767
        %v8769 = vrot.slane %v8765, %v8768
        %v8770 = vadd.f32 %v8764, %v8769
        %v8771 = vmax.f32 %v8770, 0.0
        %8772 = vst.msk [vmem:[#allocation3 + $0x8] sm:$0xff] %vm358, %v8771
        %8773 = vst.msk [vmem:[#allocation3 + $0x10] sm:$0x1] %vm4061, 0.0
        %v8774 = vld [vmem:[#allocation3 + $0x8] sm:$0xff]
        %v8775 = vld [vmem:[%s5] sm:$0x1]
        %v8776 = vpack.c.bf16 %v8774, %v8774
        %v8777 = vld [vmem:[%s4] sm:$0xf]
        %v8778 = vld [vmem:[%s4 + $0x4] sm:$0xf]
        %v8779 = vld [vmem:[%s4 + $0x8] sm:$0xf]
        %v8780 = vld [vmem:[%s4 + $0xc] sm:$0xf]
        %v8781 = vld [vmem:[%s4 + $0x10] sm:$0xf]
        %v8782 = vld [vmem:[%s4 + $0x14] sm:$0xf]
        %v8783 = vld [vmem:[%s4 + $0x18] sm:$0xf]
        %v8784 = vld [vmem:[%s4 + $0x1c] sm:$0xf]
        %v8793 = vunpack.c.l.b16 %v8777
        %v8794 = vunpack.c.l.b16 %v8778
        %v8795 = vunpack.c.l.b16 %v8779
        %v8796 = vunpack.c.l.b16 %v8780
        %v8797 = vunpack.c.l.b16 %v8781
        %v8798 = vunpack.c.l.b16 %v8782
        %v8799 = vunpack.c.l.b16 %v8783
        %v8800 = vunpack.c.l.b16 %v8784
        %v8801 = vpack.c.b16 %v8794, %v8793
        %v8802 = vpack.c.b16 %v8796, %v8795
        %v8803 = vpack.c.b16 %v8798, %v8797
        %v8804 = vpack.c.b16 %v8800, %v8799
        %v8810 = vsel %vm358, %v8776, 0
        %8812 = vmatprep.subr.bf16.mxu0 0
        %8813 = vmatpush1.bf16.msra.mxu0 %v8801
        %8814 = vmatprep.subr.bf16.mxu0 0
        %8815 = vmatpush1.bf16.msra.mxu0 %v8802
        %8816 = vmatprep.subr.bf16.mxu0 0
        %8817 = vmatpush1.bf16.msra.mxu0 %v8803
        %8818 = vmatprep.subr.bf16.mxu0 0
        %8819 = vmatpush1.bf16.msra.mxu0 %v8804
        %8820 = vmatprep.subr.bf16.mxu0 0
        %8821 = vmatpush1.bf16.msra.mxu0 0
        %8822 = vmatprep.subr.bf16.mxu0 0
        %8823 = vmatpush1.bf16.msra.mxu0 0
        %8824 = vmatprep.subr.bf16.mxu0 0
        %8825 = vmatpush1.bf16.msra.mxu0 0
        %8826 = vmatprep.subr.bf16.mxu0 0
        %8827 = vmatpush1.bf16.msra.mxu0 0
        %8828 = vmatprep.subr.bf16.mxu0 0
        %8829 = vmatpush1.bf16.msra.mxu0 0
        %8830 = vmatprep.subr.bf16.mxu0 0
        %8831 = vmatpush1.bf16.msra.mxu0 0
        %8832 = vmatprep.subr.bf16.mxu0 0
        %8833 = vmatpush1.bf16.msra.mxu0 0
        %8834 = vmatprep.subr.bf16.mxu0 0
        %8835 = vmatpush1.bf16.msra.mxu0 0
        %8836 = vmatprep.subr.bf16.mxu0 0
        %8837 = vmatpush1.bf16.msra.mxu0 0
        %8838 = vmatprep.subr.bf16.mxu0 0
        %8839 = vmatpush1.bf16.msra.mxu0 0
        %8840 = vmatprep.subr.bf16.mxu0 0
        %8841 = vmatpush1.bf16.msra.mxu0 0
        %8842 = vmatprep.subr.bf16.mxu0 0
        %8843 = vmatpush1.bf16.msra.mxu0 0
        %8844 = vmatprep.mubr.bf16.mxu0 0
        %8845 = vmatmul.mubr.bf16.gmra.mrb[0].mxu0 %v8810
        %v8846 = vpop.f32.mrb[0].mxu0
        %v8847 = vadd.f32 0.0, %v8846
        %v8848 = vpop.f32.mrb[0].mxu0
        %v8849 = vpop.f32.mrb[0].mxu0
        %v8850 = vpop.f32.mrb[0].mxu0
        %8851 = vdwg.mxu0
        %v8852 = vadd.f32 %v8775, %v8847
        %s8853 = scalar_lea.vmem %s4, 32
        %v8854 = vld [vmem:[%s8853] sm:$0xf]
        %v8855 = vld [vmem:[%s8853 + $0x4] sm:$0xf]
        %v8856 = vld [vmem:[%s8853 + $0x8] sm:$0xf]
        %v8857 = vld [vmem:[%s8853 + $0xc] sm:$0xf]
        %v8858 = vld [vmem:[%s8853 + $0x10] sm:$0xf]
        %v8859 = vld [vmem:[%s8853 + $0x14] sm:$0xf]
        %v8860 = vld [vmem:[%s8853 + $0x18] sm:$0xf]
        %v8861 = vld [vmem:[%s8853 + $0x1c] sm:$0xf]
        %v8862 = vshrl.u32 %v8776, 16
        %v8872 = vunpack.c.l.b16 %v8854
        %v8873 = vunpack.c.l.b16 %v8855
        %v8874 = vunpack.c.l.b16 %v8856
        %v8875 = vunpack.c.l.b16 %v8857
        %v8876 = vunpack.c.l.b16 %v8858
        %v8877 = vunpack.c.l.b16 %v8859
        %v8878 = vunpack.c.l.b16 %v8860
        %v8879 = vunpack.c.l.b16 %v8861
        %v8880 = vpack.c.b16 %v8873, %v8872
        %v8881 = vpack.c.b16 %v8875, %v8874
        %v8882 = vpack.c.b16 %v8877, %v8876
        %v8883 = vpack.c.b16 %v8879, %v8878
        %v8889 = vsel %vm358, %v8862, 0
        %8891 = vmatprep.subr.bf16.mxu0 0
        %8892 = vmatpush1.bf16.msra.mxu0 %v8880
        %8893 = vmatprep.subr.bf16.mxu0 0
        %8894 = vmatpush1.bf16.msra.mxu0 %v8881
        %8895 = vmatprep.subr.bf16.mxu0 0
        %8896 = vmatpush1.bf16.msra.mxu0 %v8882
        %8897 = vmatprep.subr.bf16.mxu0 0
        %8898 = vmatpush1.bf16.msra.mxu0 %v8883
        %8899 = vmatprep.subr.bf16.mxu0 0
        %8900 = vmatpush1.bf16.msra.mxu0 0
        %8901 = vmatprep.subr.bf16.mxu0 0
        %8902 = vmatpush1.bf16.msra.mxu0 0
        %8903 = vmatprep.subr.bf16.mxu0 0
        %8904 = vmatpush1.bf16.msra.mxu0 0
        %8905 = vmatprep.subr.bf16.mxu0 0
        %8906 = vmatpush1.bf16.msra.mxu0 0
        %8907 = vmatprep.subr.bf16.mxu0 0
        %8908 = vmatpush1.bf16.msra.mxu0 0
        %8909 = vmatprep.subr.bf16.mxu0 0
        %8910 = vmatpush1.bf16.msra.mxu0 0
        %8911 = vmatprep.subr.bf16.mxu0 0
        %8912 = vmatpush1.bf16.msra.mxu0 0
        %8913 = vmatprep.subr.bf16.mxu0 0
        %8914 = vmatpush1.bf16.msra.mxu0 0
        %8915 = vmatprep.subr.bf16.mxu0 0
        %8916 = vmatpush1.bf16.msra.mxu0 0
        %8917 = vmatprep.subr.bf16.mxu0 0
        %8918 = vmatpush1.bf16.msra.mxu0 0
        %8919 = vmatprep.subr.bf16.mxu0 0
        %8920 = vmatpush1.bf16.msra.mxu0 0
        %8921 = vmatprep.subr.bf16.mxu0 0
        %8922 = vmatpush1.bf16.msra.mxu0 0
        %8923 = vmatprep.mubr.bf16.mxu0 0
        %8924 = vmatmul.mubr.bf16.gmra.mrb[0].mxu0 %v8889
        %v8925 = vpop.f32.mrb[0].mxu0
        %v8926 = vadd.f32 0.0, %v8925
        %v8927 = vpop.f32.mrb[0].mxu0
        %v8928 = vpop.f32.mrb[0].mxu0
        %v8929 = vpop.f32.mrb[0].mxu0
        %8930 = vdwg.mxu0
        %v8931 = vadd.f32 %v8852, %v8926
        %s8932 = scalar_lea.vmem %s4, 64
        %v8933 = vld [vmem:[%s8932] sm:$0xf]
        %v8934 = vld [vmem:[%s8932 + $0x4] sm:$0xf]
        %v8935 = vld [vmem:[%s8932 + $0x8] sm:$0xf]
        %v8936 = vld [vmem:[%s8932 + $0xc] sm:$0xf]
        %v8937 = vld [vmem:[%s8932 + $0x10] sm:$0xf]
        %v8938 = vld [vmem:[%s8932 + $0x14] sm:$0xf]
        %v8939 = vld [vmem:[%s8932 + $0x18] sm:$0xf]
        %v8940 = vld [vmem:[%s8932 + $0x1c] sm:$0xf]
        %v8942 = vrot.slane %v8776, 1
        %v8951 = vunpack.c.l.b16 %v8933
        %v8952 = vunpack.c.l.b16 %v8934
        %v8953 = vunpack.c.l.b16 %v8935
        %v8954 = vunpack.c.l.b16 %v8936
        %v8955 = vunpack.c.l.b16 %v8937
        %v8956 = vunpack.c.l.b16 %v8938
        %v8957 = vunpack.c.l.b16 %v8939
        %v8958 = vunpack.c.l.b16 %v8940
        %v8959 = vpack.c.b16 %v8952, %v8951
        %v8960 = vpack.c.b16 %v8954, %v8953
        %v8961 = vpack.c.b16 %v8956, %v8955
        %v8962 = vpack.c.b16 %v8958, %v8957
        %v8968 = vsel %vm358, %v8942, 0
        %8970 = vmatprep.subr.bf16.mxu0 0
        %8971 = vmatpush1.bf16.msra.mxu0 %v8959
        %8972 = vmatprep.subr.bf16.mxu0 0
        %8973 = vmatpush1.bf16.msra.mxu0 %v8960
        %8974 = vmatprep.subr.bf16.mxu0 0
        %8975 = vmatpush1.bf16.msra.mxu0 %v8961
        %8976 = vmatprep.subr.bf16.mxu0 0
        %8977 = vmatpush1.bf16.msra.mxu0 %v8962
        %8978 = vmatprep.subr.bf16.mxu0 0
        %8979 = vmatpush1.bf16.msra.mxu0 0
        %8980 = vmatprep.subr.bf16.mxu0 0
        %8981 = vmatpush1.bf16.msra.mxu0 0
        %8982 = vmatprep.subr.bf16.mxu0 0
        %8983 = vmatpush1.bf16.msra.mxu0 0
        %8984 = vmatprep.subr.bf16.mxu0 0
        %8985 = vmatpush1.bf16.msra.mxu0 0
        %8986 = vmatprep.subr.bf16.mxu0 0
        %8987 = vmatpush1.bf16.msra.mxu0 0
        %8988 = vmatprep.subr.bf16.mxu0 0
        %8989 = vmatpush1.bf16.msra.mxu0 0
        %8990 = vmatprep.subr.bf16.mxu0 0
        %8991 = vmatpush1.bf16.msra.mxu0 0
        %8992 = vmatprep.subr.bf16.mxu0 0
        %8993 = vmatpush1.bf16.msra.mxu0 0
        %8994 = vmatprep.subr.bf16.mxu0 0
        %8995 = vmatpush1.bf16.msra.mxu0 0
        %8996 = vmatprep.subr.bf16.mxu0 0
        %8997 = vmatpush1.bf16.msra.mxu0 0
        %8998 = vmatprep.subr.bf16.mxu0 0
        %8999 = vmatpush1.bf16.msra.mxu0 0
        %9000 = vmatprep.subr.bf16.mxu0 0
        %9001 = vmatpush1.bf16.msra.mxu0 0
        %9002 = vmatprep.mubr.bf16.mxu0 0
        %9003 = vmatmul.mubr.bf16.gmra.mrb[0].mxu0 %v8968
        %v9004 = vpop.f32.mrb[0].mxu0
        %v9005 = vadd.f32 0.0, %v9004
        %v9006 = vpop.f32.mrb[0].mxu0
        %v9007 = vpop.f32.mrb[0].mxu0
        %v9008 = vpop.f32.mrb[0].mxu0
        %9009 = vdwg.mxu0
        %v9010 = vadd.f32 %v8931, %v9005
        %s9011 = scalar_lea.vmem %s4, 96
        %v9012 = vld [vmem:[%s9011] sm:$0xf]
        %v9013 = vld [vmem:[%s9011 + $0x4] sm:$0xf]
        %v9014 = vld [vmem:[%s9011 + $0x8] sm:$0xf]
        %v9015 = vld [vmem:[%s9011 + $0xc] sm:$0xf]
        %v9016 = vld [vmem:[%s9011 + $0x10] sm:$0xf]
        %v9017 = vld [vmem:[%s9011 + $0x14] sm:$0xf]
        %v9018 = vld [vmem:[%s9011 + $0x18] sm:$0xf]
        %v9019 = vld [vmem:[%s9011 + $0x1c] sm:$0xf]
        %v9020 = vrot.slane %v8862, 1
        %v9029 = vunpack.c.l.b16 %v9012
        %v9030 = vunpack.c.l.b16 %v9013
        %v9031 = vunpack.c.l.b16 %v9014
        %v9032 = vunpack.c.l.b16 %v9015
        %v9033 = vunpack.c.l.b16 %v9016
        %v9034 = vunpack.c.l.b16 %v9017
        %v9035 = vunpack.c.l.b16 %v9018
        %v9036 = vunpack.c.l.b16 %v9019
        %v9037 = vpack.c.b16 %v9030, %v9029
        %v9038 = vpack.c.b16 %v9032, %v9031
        %v9039 = vpack.c.b16 %v9034, %v9033
        %v9040 = vpack.c.b16 %v9036, %v9035
        %v9046 = vsel %vm358, %v9020, 0
        %9048 = vmatprep.subr.bf16.mxu0 0
        %9049 = vmatpush1.bf16.msra.mxu0 %v9037
        %9050 = vmatprep.subr.bf16.mxu0 0
        %9051 = vmatpush1.bf16.msra.mxu0 %v9038
        %9052 = vmatprep.subr.bf16.mxu0 0
        %9053 = vmatpush1.bf16.msra.mxu0 %v9039
        %9054 = vmatprep.subr.bf16.mxu0 0
        %9055 = vmatpush1.bf16.msra.mxu0 %v9040
        %9056 = vmatprep.subr.bf16.mxu0 0
        %9057 = vmatpush1.bf16.msra.mxu0 0
        %9058 = vmatprep.subr.bf16.mxu0 0
        %9059 = vmatpush1.bf16.msra.mxu0 0
        %9060 = vmatprep.subr.bf16.mxu0 0
        %9061 = vmatpush1.bf16.msra.mxu0 0
        %9062 = vmatprep.subr.bf16.mxu0 0
        %9063 = vmatpush1.bf16.msra.mxu0 0
        %9064 = vmatprep.subr.bf16.mxu0 0
        %9065 = vmatpush1.bf16.msra.mxu0 0
        %9066 = vmatprep.subr.bf16.mxu0 0
        %9067 = vmatpush1.bf16.msra.mxu0 0
        %9068 = vmatprep.subr.bf16.mxu0 0
        %9069 = vmatpush1.bf16.msra.mxu0 0
        %9070 = vmatprep.subr.bf16.mxu0 0
        %9071 = vmatpush1.bf16.msra.mxu0 0
        %9072 = vmatprep.subr.bf16.mxu0 0
        %9073 = vmatpush1.bf16.msra.mxu0 0
        %9074 = vmatprep.subr.bf16.mxu0 0
        %9075 = vmatpush1.bf16.msra.mxu0 0
        %9076 = vmatprep.subr.bf16.mxu0 0
        %9077 = vmatpush1.bf16.msra.mxu0 0
        %9078 = vmatprep.subr.bf16.mxu0 0
        %9079 = vmatpush1.bf16.msra.mxu0 0
        %9080 = vmatprep.mubr.bf16.mxu0 0
        %9081 = vmatmul.mubr.bf16.gmra.mrb[0].mxu0 %v9046
        %v9082 = vpop.f32.mrb[0].mxu0
        %v9083 = vadd.f32 0.0, %v9082
        %v9084 = vpop.f32.mrb[0].mxu0
        %v9085 = vpop.f32.mrb[0].mxu0
        %v9086 = vpop.f32.mrb[0].mxu0
        %9087 = vdwg.mxu0
        %v9088 = vadd.f32 %v9010, %v9083
        %s9089 = scalar_lea.vmem %s4, 128
        %v9090 = vld [vmem:[%s9089] sm:$0xf]
        %v9091 = vld [vmem:[%s9089 + $0x4] sm:$0xf]
        %v9092 = vld [vmem:[%s9089 + $0x8] sm:$0xf]
        %v9093 = vld [vmem:[%s9089 + $0xc] sm:$0xf]
        %v9094 = vld [vmem:[%s9089 + $0x10] sm:$0xf]
        %v9095 = vld [vmem:[%s9089 + $0x14] sm:$0xf]
        %v9096 = vld [vmem:[%s9089 + $0x18] sm:$0xf]
        %v9097 = vld [vmem:[%s9089 + $0x1c] sm:$0xf]
        %v9098 = vrot.slane %v8776, 2
        %v9107 = vunpack.c.l.b16 %v9090
        %v9108 = vunpack.c.l.b16 %v9091
        %v9109 = vunpack.c.l.b16 %v9092
        %v9110 = vunpack.c.l.b16 %v9093
        %v9111 = vunpack.c.l.b16 %v9094
        %v9112 = vunpack.c.l.b16 %v9095
        %v9113 = vunpack.c.l.b16 %v9096
        %v9114 = vunpack.c.l.b16 %v9097
        %v9115 = vpack.c.b16 %v9108, %v9107
        %v9116 = vpack.c.b16 %v9110, %v9109
        %v9117 = vpack.c.b16 %v9112, %v9111
        %v9118 = vpack.c.b16 %v9114, %v9113
        %v9124 = vsel %vm358, %v9098, 0
        %9126 = vmatprep.subr.bf16.mxu0 0
        %9127 = vmatpush1.bf16.msra.mxu0 %v9115
        %9128 = vmatprep.subr.bf16.mxu0 0
        %9129 = vmatpush1.bf16.msra.mxu0 %v9116
        %9130 = vmatprep.subr.bf16.mxu0 0
        %9131 = vmatpush1.bf16.msra.mxu0 %v9117
        %9132 = vmatprep.subr.bf16.mxu0 0
        %9133 = vmatpush1.bf16.msra.mxu0 %v9118
        %9134 = vmatprep.subr.bf16.mxu0 0
        %9135 = vmatpush1.bf16.msra.mxu0 0
        %9136 = vmatprep.subr.bf16.mxu0 0
        %9137 = vmatpush1.bf16.msra.mxu0 0
        %9138 = vmatprep.subr.bf16.mxu0 0
        %9139 = vmatpush1.bf16.msra.mxu0 0
        %9140 = vmatprep.subr.bf16.mxu0 0
        %9141 = vmatpush1.bf16.msra.mxu0 0
        %9142 = vmatprep.subr.bf16.mxu0 0
        %9143 = vmatpush1.bf16.msra.mxu0 0
        %9144 = vmatprep.subr.bf16.mxu0 0
        %9145 = vmatpush1.bf16.msra.mxu0 0
        %9146 = vmatprep.subr.bf16.mxu0 0
        %9147 = vmatpush1.bf16.msra.mxu0 0
        %9148 = vmatprep.subr.bf16.mxu0 0
        %9149 = vmatpush1.bf16.msra.mxu0 0
        %9150 = vmatprep.subr.bf16.mxu0 0
        %9151 = vmatpush1.bf16.msra.mxu0 0
        %9152 = vmatprep.subr.bf16.mxu0 0
        %9153 = vmatpush1.bf16.msra.mxu0 0
        %9154 = vmatprep.subr.bf16.mxu0 0
        %9155 = vmatpush1.bf16.msra.mxu0 0
        %9156 = vmatprep.subr.bf16.mxu0 0
        %9157 = vmatpush1.bf16.msra.mxu0 0
        %9158 = vmatprep.mubr.bf16.mxu0 0
        %9159 = vmatmul.mubr.bf16.gmra.mrb[0].mxu0 %v9124
        %v9160 = vpop.f32.mrb[0].mxu0
        %v9161 = vadd.f32 0.0, %v9160
        %v9162 = vpop.f32.mrb[0].mxu0
        %v9163 = vpop.f32.mrb[0].mxu0
        %v9164 = vpop.f32.mrb[0].mxu0
        %9165 = vdwg.mxu0
        %v9166 = vadd.f32 %v9088, %v9161
        %s9167 = scalar_lea.vmem %s4, 160
        %v9168 = vld [vmem:[%s9167] sm:$0xf]
        %v9169 = vld [vmem:[%s9167 + $0x4] sm:$0xf]
        %v9170 = vld [vmem:[%s9167 + $0x8] sm:$0xf]
        %v9171 = vld [vmem:[%s9167 + $0xc] sm:$0xf]
        %v9172 = vld [vmem:[%s9167 + $0x10] sm:$0xf]
        %v9173 = vld [vmem:[%s9167 + $0x14] sm:$0xf]
        %v9174 = vld [vmem:[%s9167 + $0x18] sm:$0xf]
        %v9175 = vld [vmem:[%s9167 + $0x1c] sm:$0xf]
        %v9176 = vrot.slane %v8862, 2
        %v9185 = vunpack.c.l.b16 %v9168
        %v9186 = vunpack.c.l.b16 %v9169
        %v9187 = vunpack.c.l.b16 %v9170
        %v9188 = vunpack.c.l.b16 %v9171
        %v9189 = vunpack.c.l.b16 %v9172
        %v9190 = vunpack.c.l.b16 %v9173
        %v9191 = vunpack.c.l.b16 %v9174
        %v9192 = vunpack.c.l.b16 %v9175
        %v9193 = vpack.c.b16 %v9186, %v9185
        %v9194 = vpack.c.b16 %v9188, %v9187
        %v9195 = vpack.c.b16 %v9190, %v9189
        %v9196 = vpack.c.b16 %v9192, %v9191
        %v9202 = vsel %vm358, %v9176, 0
        %9204 = vmatprep.subr.bf16.mxu0 0
        %9205 = vmatpush1.bf16.msra.mxu0 %v9193
        %9206 = vmatprep.subr.bf16.mxu0 0
        %9207 = vmatpush1.bf16.msra.mxu0 %v9194
        %9208 = vmatprep.subr.bf16.mxu0 0
        %9209 = vmatpush1.bf16.msra.mxu0 %v9195
        %9210 = vmatprep.subr.bf16.mxu0 0
        %9211 = vmatpush1.bf16.msra.mxu0 %v9196
        %9212 = vmatprep.subr.bf16.mxu0 0
        %9213 = vmatpush1.bf16.msra.mxu0 0
        %9214 = vmatprep.subr.bf16.mxu0 0
        %9215 = vmatpush1.bf16.msra.mxu0 0
        %9216 = vmatprep.subr.bf16.mxu0 0
        %9217 = vmatpush1.bf16.msra.mxu0 0
        %9218 = vmatprep.subr.bf16.mxu0 0
        %9219 = vmatpush1.bf16.msra.mxu0 0
        %9220 = vmatprep.subr.bf16.mxu0 0
        %9221 = vmatpush1.bf16.msra.mxu0 0
        %9222 = vmatprep.subr.bf16.mxu0 0
        %9223 = vmatpush1.bf16.msra.mxu0 0
        %9224 = vmatprep.subr.bf16.mxu0 0
        %9225 = vmatpush1.bf16.msra.mxu0 0
        %9226 = vmatprep.subr.bf16.mxu0 0
        %9227 = vmatpush1.bf16.msra.mxu0 0
        %9228 = vmatprep.subr.bf16.mxu0 0
        %9229 = vmatpush1.bf16.msra.mxu0 0
        %9230 = vmatprep.subr.bf16.mxu0 0
        %9231 = vmatpush1.bf16.msra.mxu0 0
        %9232 = vmatprep.subr.bf16.mxu0 0
        %9233 = vmatpush1.bf16.msra.mxu0 0
        %9234 = vmatprep.subr.bf16.mxu0 0
        %9235 = vmatpush1.bf16.msra.mxu0 0
        %9236 = vmatprep.mubr.bf16.mxu0 0
        %9237 = vmatmul.mubr.bf16.gmra.mrb[0].mxu0 %v9202
        %v9238 = vpop.f32.mrb[0].mxu0
        %v9239 = vadd.f32 0.0, %v9238
        %v9240 = vpop.f32.mrb[0].mxu0
        %v9241 = vpop.f32.mrb[0].mxu0
        %v9242 = vpop.f32.mrb[0].mxu0
        %9243 = vdwg.mxu0
        %v9244 = vadd.f32 %v9166, %v9239
        %s9245 = scalar_lea.vmem %s4, 192
        %v9246 = vld [vmem:[%s9245] sm:$0xf]
        %v9247 = vld [vmem:[%s9245 + $0x4] sm:$0xf]
        %v9248 = vld [vmem:[%s9245 + $0x8] sm:$0xf]
        %v9249 = vld [vmem:[%s9245 + $0xc] sm:$0xf]
        %v9250 = vld [vmem:[%s9245 + $0x10] sm:$0xf]
        %v9251 = vld [vmem:[%s9245 + $0x14] sm:$0xf]
        %v9252 = vld [vmem:[%s9245 + $0x18] sm:$0xf]
        %v9253 = vld [vmem:[%s9245 + $0x1c] sm:$0xf]
        %v9254 = vrot.slane %v8776, 3
        %v9263 = vunpack.c.l.b16 %v9246
        %v9264 = vunpack.c.l.b16 %v9247
        %v9265 = vunpack.c.l.b16 %v9248
        %v9266 = vunpack.c.l.b16 %v9249
        %v9267 = vunpack.c.l.b16 %v9250
        %v9268 = vunpack.c.l.b16 %v9251
        %v9269 = vunpack.c.l.b16 %v9252
        %v9270 = vunpack.c.l.b16 %v9253
        %v9271 = vpack.c.b16 %v9264, %v9263
        %v9272 = vpack.c.b16 %v9266, %v9265
        %v9273 = vpack.c.b16 %v9268, %v9267
        %v9274 = vpack.c.b16 %v9270, %v9269
        %v9280 = vsel %vm358, %v9254, 0
        %9282 = vmatprep.subr.bf16.mxu0 0
        %9283 = vmatpush1.bf16.msra.mxu0 %v9271
        %9284 = vmatprep.subr.bf16.mxu0 0
        %9285 = vmatpush1.bf16.msra.mxu0 %v9272
        %9286 = vmatprep.subr.bf16.mxu0 0
        %9287 = vmatpush1.bf16.msra.mxu0 %v9273
        %9288 = vmatprep.subr.bf16.mxu0 0
        %9289 = vmatpush1.bf16.msra.mxu0 %v9274
        %9290 = vmatprep.subr.bf16.mxu0 0
        %9291 = vmatpush1.bf16.msra.mxu0 0
        %9292 = vmatprep.subr.bf16.mxu0 0
        %9293 = vmatpush1.bf16.msra.mxu0 0
        %9294 = vmatprep.subr.bf16.mxu0 0
        %9295 = vmatpush1.bf16.msra.mxu0 0
        %9296 = vmatprep.subr.bf16.mxu0 0
        %9297 = vmatpush1.bf16.msra.mxu0 0
        %9298 = vmatprep.subr.bf16.mxu0 0
        %9299 = vmatpush1.bf16.msra.mxu0 0
        %9300 = vmatprep.subr.bf16.mxu0 0
        %9301 = vmatpush1.bf16.msra.mxu0 0
        %9302 = vmatprep.subr.bf16.mxu0 0
        %9303 = vmatpush1.bf16.msra.mxu0 0
        %9304 = vmatprep.subr.bf16.mxu0 0
        %9305 = vmatpush1.bf16.msra.mxu0 0
        %9306 = vmatprep.subr.bf16.mxu0 0
        %9307 = vmatpush1.bf16.msra.mxu0 0
        %9308 = vmatprep.subr.bf16.mxu0 0
        %9309 = vmatpush1.bf16.msra.mxu0 0
        %9310 = vmatprep.subr.bf16.mxu0 0
        %9311 = vmatpush1.bf16.msra.mxu0 0
        %9312 = vmatprep.subr.bf16.mxu0 0
        %9313 = vmatpush1.bf16.msra.mxu0 0
        %9314 = vmatprep.mubr.bf16.mxu0 0
        %9315 = vmatmul.mubr.bf16.gmra.mrb[0].mxu0 %v9280
        %v9316 = vpop.f32.mrb[0].mxu0
        %v9317 = vadd.f32 0.0, %v9316
        %v9318 = vpop.f32.mrb[0].mxu0
        %v9319 = vpop.f32.mrb[0].mxu0
        %v9320 = vpop.f32.mrb[0].mxu0
        %9321 = vdwg.mxu0
        %v9322 = vadd.f32 %v9244, %v9317
        %s9323 = scalar_lea.vmem %s4, 224
        %v9324 = vld [vmem:[%s9323] sm:$0xf]
        %v9325 = vld [vmem:[%s9323 + $0x4] sm:$0xf]
        %v9326 = vld [vmem:[%s9323 + $0x8] sm:$0xf]
        %v9327 = vld [vmem:[%s9323 + $0xc] sm:$0xf]
        %v9328 = vld [vmem:[%s9323 + $0x10] sm:$0xf]
        %v9329 = vld [vmem:[%s9323 + $0x14] sm:$0xf]
        %v9330 = vld [vmem:[%s9323 + $0x18] sm:$0xf]
        %v9331 = vld [vmem:[%s9323 + $0x1c] sm:$0xf]
        %v9332 = vrot.slane %v8862, 3
        %v9341 = vunpack.c.l.b16 %v9324
        %v9342 = vunpack.c.l.b16 %v9325
        %v9343 = vunpack.c.l.b16 %v9326
        %v9344 = vunpack.c.l.b16 %v9327
        %v9345 = vunpack.c.l.b16 %v9328
        %v9346 = vunpack.c.l.b16 %v9329
        %v9347 = vunpack.c.l.b16 %v9330
        %v9348 = vunpack.c.l.b16 %v9331
        %v9349 = vpack.c.b16 %v9342, %v9341
        %v9350 = vpack.c.b16 %v9344, %v9343
        %v9351 = vpack.c.b16 %v9346, %v9345
        %v9352 = vpack.c.b16 %v9348, %v9347
        %v9358 = vsel %vm358, %v9332, 0
        %9360 = vmatprep.subr.bf16.mxu0 0
        %9361 = vmatpush1.bf16.msra.mxu0 %v9349
        %9362 = vmatprep.subr.bf16.mxu0 0
        %9363 = vmatpush1.bf16.msra.mxu0 %v9350
        %9364 = vmatprep.subr.bf16.mxu0 0
        %9365 = vmatpush1.bf16.msra.mxu0 %v9351
        %9366 = vmatprep.subr.bf16.mxu0 0
        %9367 = vmatpush1.bf16.msra.mxu0 %v9352
        %9368 = vmatprep.subr.bf16.mxu0 0
        %9369 = vmatpush1.bf16.msra.mxu0 0
        %9370 = vmatprep.subr.bf16.mxu0 0
        %9371 = vmatpush1.bf16.msra.mxu0 0
        %9372 = vmatprep.subr.bf16.mxu0 0
        %9373 = vmatpush1.bf16.msra.mxu0 0
        %9374 = vmatprep.subr.bf16.mxu0 0
        %9375 = vmatpush1.bf16.msra.mxu0 0
        %9376 = vmatprep.subr.bf16.mxu0 0
        %9377 = vmatpush1.bf16.msra.mxu0 0
        %9378 = vmatprep.subr.bf16.mxu0 0
        %9379 = vmatpush1.bf16.msra.mxu0 0
        %9380 = vmatprep.subr.bf16.mxu0 0
        %9381 = vmatpush1.bf16.msra.mxu0 0
        %9382 = vmatprep.subr.bf16.mxu0 0
        %9383 = vmatpush1.bf16.msra.mxu0 0
        %9384 = vmatprep.subr.bf16.mxu0 0
        %9385 = vmatpush1.bf16.msra.mxu0 0
        %9386 = vmatprep.subr.bf16.mxu0 0
        %9387 = vmatpush1.bf16.msra.mxu0 0
        %9388 = vmatprep.subr.bf16.mxu0 0
        %9389 = vmatpush1.bf16.msra.mxu0 0
        %9390 = vmatprep.subr.bf16.mxu0 0
        %9391 = vmatpush1.bf16.msra.mxu0 0
        %9392 = vmatprep.mubr.bf16.mxu0 0
        %9393 = vmatmul.mubr.bf16.gmra.mrb[0].mxu0 %v9358
        %v9394 = vpop.f32.mrb[0].mxu0
        %v9395 = vadd.f32 0.0, %v9394
        %v9396 = vpop.f32.mrb[0].mxu0
        %v9397 = vpop.f32.mrb[0].mxu0
        %v9398 = vpop.f32.mrb[0].mxu0
        %9399 = vdwg.mxu0
        %v9400 = vadd.f32 %v9322, %v9395
        %v9401 = vmax.f32 %v9400, 0.0
        %v9402 = vpack.c.bf16 %v9401, %v9401
        %v9403 = vld [vmem:[%s6] sm:$0xf]
        %v9404 = vld [vmem:[%s6 + $0x4] sm:$0xf]
        %v9405 = vld [vmem:[%s6 + $0x8] sm:$0xf]
        %v9406 = vld [vmem:[%s6 + $0xc] sm:$0xf]
        %v9407 = vld [vmem:[%s6 + $0x10] sm:$0xf]
        %v9408 = vld [vmem:[%s6 + $0x14] sm:$0xf]
        %v9409 = vld [vmem:[%s6 + $0x18] sm:$0xf]
        %v9410 = vld [vmem:[%s6 + $0x1c] sm:$0xf]
        %v9411 = vld [vmem:[%s6 + $0x20] sm:$0xf]
        %v9412 = vld [vmem:[%s6 + $0x24] sm:$0xf]
        %v9413 = vld [vmem:[%s6 + $0x28] sm:$0xf]
        %v9414 = vld [vmem:[%s6 + $0x2c] sm:$0xf]
        %v9415 = vld [vmem:[%s6 + $0x30] sm:$0xf]
        %v9416 = vld [vmem:[%s6 + $0x34] sm:$0xf]
        %v9417 = vld [vmem:[%s6 + $0x38] sm:$0xf]
        %v9418 = vld [vmem:[%s6 + $0x3c] sm:$0xf]
        %v9419 = vld [vmem:[%s7] sm:$0x1]
        %v9436 = vunpack.c.l.b16 %v9403
        %v9437 = vunpack.c.l.b16 %v9404
        %v9438 = vunpack.c.l.b16 %v9405
        %v9439 = vunpack.c.l.b16 %v9406
        %v9440 = vunpack.c.l.b16 %v9407
        %v9441 = vunpack.c.l.b16 %v9408
        %v9442 = vunpack.c.l.b16 %v9409
        %v9443 = vunpack.c.l.b16 %v9410
        %v9444 = vunpack.c.l.b16 %v9411
        %v9445 = vunpack.c.l.b16 %v9412
        %v9446 = vunpack.c.l.b16 %v9413
        %v9447 = vunpack.c.l.b16 %v9414
        %v9448 = vunpack.c.l.b16 %v9415
        %v9449 = vunpack.c.l.b16 %v9416
        %v9450 = vunpack.c.l.b16 %v9417
        %v9451 = vunpack.c.l.b16 %v9418
        %v9452 = vpack.c.b16 %v9437, %v9436
        %v9453 = vpack.c.b16 %v9439, %v9438
        %v9454 = vpack.c.b16 %v9441, %v9440
        %v9455 = vpack.c.b16 %v9443, %v9442
        %v9456 = vpack.c.b16 %v9445, %v9444
        %v9457 = vpack.c.b16 %v9447, %v9446
        %v9458 = vpack.c.b16 %v9449, %v9448
        %v9459 = vpack.c.b16 %v9451, %v9450
        %9468 = vmatprep.subr.bf16.mxu0 0
        %9469 = vmatpush1.bf16.msra.mxu0 %v9452
        %9470 = vmatprep.subr.bf16.mxu0 0
        %9471 = vmatpush1.bf16.msra.mxu0 %v9453
        %9472 = vmatprep.subr.bf16.mxu0 0
        %9473 = vmatpush1.bf16.msra.mxu0 %v9454
        %9474 = vmatprep.subr.bf16.mxu0 0
        %9475 = vmatpush1.bf16.msra.mxu0 %v9455
        %9476 = vmatprep.subr.bf16.mxu0 0
        %9477 = vmatpush1.bf16.msra.mxu0 %v9456
        %9478 = vmatprep.subr.bf16.mxu0 0
        %9479 = vmatpush1.bf16.msra.mxu0 %v9457
        %9480 = vmatprep.subr.bf16.mxu0 0
        %9481 = vmatpush1.bf16.msra.mxu0 %v9458
        %9482 = vmatprep.subr.bf16.mxu0 0
        %9483 = vmatpush1.bf16.msra.mxu0 %v9459
        %9484 = vmatprep.subr.bf16.mxu0 0
        %9485 = vmatpush1.bf16.msra.mxu0 0
        %9486 = vmatprep.subr.bf16.mxu0 0
        %9487 = vmatpush1.bf16.msra.mxu0 0
        %9488 = vmatprep.subr.bf16.mxu0 0
        %9489 = vmatpush1.bf16.msra.mxu0 0
        %9490 = vmatprep.subr.bf16.mxu0 0
        %9491 = vmatpush1.bf16.msra.mxu0 0
        %9492 = vmatprep.subr.bf16.mxu0 0
        %9493 = vmatpush1.bf16.msra.mxu0 0
        %9494 = vmatprep.subr.bf16.mxu0 0
        %9495 = vmatpush1.bf16.msra.mxu0 0
        %9496 = vmatprep.subr.bf16.mxu0 0
        %9497 = vmatpush1.bf16.msra.mxu0 0
        %9498 = vmatprep.subr.bf16.mxu0 0
        %9499 = vmatpush1.bf16.msra.mxu0 0
        %9500 = vmatprep.mubr.bf16.mxu0 0
        %9501 = vmatmul.mubr.bf16.gmra.mrb[0].mxu0 %v9402
        %v9502 = vpop.f32.mrb[0].mxu0
        %v9503 = vadd.f32 %v9419, %v9502
        %v9504 = vpop.f32.mrb[0].mxu0
        %v9505 = vpop.f32.mrb[0].mxu0
        %v9506 = vpop.f32.mrb[0].mxu0
        %9507 = vdwg.mxu0
        %v9508 = vmax.f32 %v9503, 0.0
        %v9509 = vpack.c.bf16 %v9508, %v9508
        %v9510 = vld [vmem:[%s8] sm:$0xf]
        %v9511 = vld [vmem:[%s8 + $0x4] sm:$0xf]
        %v9512 = vld [vmem:[%s8 + $0x8] sm:$0xf]
        %v9513 = vld [vmem:[%s8 + $0xc] sm:$0xf]
        %v9514 = vld [vmem:[%s8 + $0x10] sm:$0xf]
        %v9515 = vld [vmem:[%s8 + $0x14] sm:$0xf]
        %v9516 = vld [vmem:[%s8 + $0x18] sm:$0xf]
        %v9517 = vld [vmem:[%s8 + $0x1c] sm:$0xf]
        %v9518 = vld [vmem:[%s8 + $0x20] sm:$0xf]
        %v9519 = vld [vmem:[%s8 + $0x24] sm:$0xf]
        %v9520 = vld [vmem:[%s8 + $0x28] sm:$0xf]
        %v9521 = vld [vmem:[%s8 + $0x2c] sm:$0xf]
        %v9522 = vld [vmem:[%s8 + $0x30] sm:$0xf]
        %v9523 = vld [vmem:[%s8 + $0x34] sm:$0xf]
        %v9524 = vld [vmem:[%s8 + $0x38] sm:$0xf]
        %v9525 = vld [vmem:[%s8 + $0x3c] sm:$0xf]
        %v9526 = vld [vmem:[%s9] sm:$0x1]
        %v9543 = vunpack.c.l.b16 %v9510
        %v9544 = vunpack.c.l.b16 %v9511
        %v9545 = vunpack.c.l.b16 %v9512
        %v9546 = vunpack.c.l.b16 %v9513
        %v9547 = vunpack.c.l.b16 %v9514
        %v9548 = vunpack.c.l.b16 %v9515
        %v9549 = vunpack.c.l.b16 %v9516
        %v9550 = vunpack.c.l.b16 %v9517
        %v9551 = vunpack.c.l.b16 %v9518
        %v9552 = vunpack.c.l.b16 %v9519
        %v9553 = vunpack.c.l.b16 %v9520
        %v9554 = vunpack.c.l.b16 %v9521
        %v9555 = vunpack.c.l.b16 %v9522
        %v9556 = vunpack.c.l.b16 %v9523
        %v9557 = vunpack.c.l.b16 %v9524
        %v9558 = vunpack.c.l.b16 %v9525
        %v9559 = vpack.c.b16 %v9544, %v9543
        %v9560 = vpack.c.b16 %v9546, %v9545
        %v9561 = vpack.c.b16 %v9548, %v9547
        %v9562 = vpack.c.b16 %v9550, %v9549
        %v9563 = vpack.c.b16 %v9552, %v9551
        %v9564 = vpack.c.b16 %v9554, %v9553
        %v9565 = vpack.c.b16 %v9556, %v9555
        %v9566 = vpack.c.b16 %v9558, %v9557
        %9575 = vmatprep.subr.bf16.mxu0 0
        %9576 = vmatpush1.bf16.msra.mxu0 %v9559
        %9577 = vmatprep.subr.bf16.mxu0 0
        %9578 = vmatpush1.bf16.msra.mxu0 %v9560
        %9579 = vmatprep.subr.bf16.mxu0 0
        %9580 = vmatpush1.bf16.msra.mxu0 %v9561
        %9581 = vmatprep.subr.bf16.mxu0 0
        %9582 = vmatpush1.bf16.msra.mxu0 %v9562
        %9583 = vmatprep.subr.bf16.mxu0 0
        %9584 = vmatpush1.bf16.msra.mxu0 %v9563
        %9585 = vmatprep.subr.bf16.mxu0 0
        %9586 = vmatpush1.bf16.msra.mxu0 %v9564
        %9587 = vmatprep.subr.bf16.mxu0 0
        %9588 = vmatpush1.bf16.msra.mxu0 %v9565
        %9589 = vmatprep.subr.bf16.mxu0 0
        %9590 = vmatpush1.bf16.msra.mxu0 %v9566
        %9591 = vmatprep.subr.bf16.mxu0 0
        %9592 = vmatpush1.bf16.msra.mxu0 0
        %9593 = vmatprep.subr.bf16.mxu0 0
        %9594 = vmatpush1.bf16.msra.mxu0 0
        %9595 = vmatprep.subr.bf16.mxu0 0
        %9596 = vmatpush1.bf16.msra.mxu0 0
        %9597 = vmatprep.subr.bf16.mxu0 0
        %9598 = vmatpush1.bf16.msra.mxu0 0
        %9599 = vmatprep.subr.bf16.mxu0 0
        %9600 = vmatpush1.bf16.msra.mxu0 0
        %9601 = vmatprep.subr.bf16.mxu0 0
        %9602 = vmatpush1.bf16.msra.mxu0 0
        %9603 = vmatprep.subr.bf16.mxu0 0
        %9604 = vmatpush1.bf16.msra.mxu0 0
        %9605 = vmatprep.subr.bf16.mxu0 0
        %9606 = vmatpush1.bf16.msra.mxu0 0
        %9607 = vmatprep.mubr.bf16.mxu0 0
        %9608 = vmatmul.mubr.bf16.gmra.mrb[0].mxu0 %v9509
        %v9609 = vpop.f32.mrb[0].mxu0
        %v9610 = vadd.f32 %v9526, %v9609
        %v9611 = vpop.f32.mrb[0].mxu0
        %v9612 = vpop.f32.mrb[0].mxu0
        %v9613 = vpop.f32.mrb[0].mxu0
        %9614 = vdwg.mxu0
        %vm9615 = vcmask 81920
        %v9616 = vsel %vm9615, %v9610, -inf
        %9617 = vmax.xlane.f32.xlu0 %v9616
        %v9618 = vpop.xlane.xlu0 %9617
        %v9619 = vsub.f32 %v9610, %v9618
        %v9620 = vmul.f32 %v9619, 1.442695
        %v9621 = vpow.pop %v9620
        %v9622 = vsel %vm9615, %v9621, 0.0
        %9623 = vadd.xlane.f32.xlu0 %v9622
        %v9624 = vpop.xlane.xlu0 %9623
        %v9625 = vrcp.pop %v9624
        %v9626 = vmul.f32 %v9621, %v9625
        %9627 = vst.msk [vmem:[%s351] sm:$0x1] %vm9615, %v9626
        %s9628 = sand.u32 %s247, 1
        %s9629 = scalar_lea.sflag [#allocation5], %s9628
        %s9630 = sand.u32 %s247, 1
        %s9631 = scalar_lea.vmem [#allocation4], %s9630
        // Predicated region
        $region61: #{_lambda_.1} parent=59 // pred_check
          %p9632 = pneg %p257
        $region62: #{_lambda_.1} parent=59 // pred_check_branch
          %9634 = sbr.rel (%p9632) target = $region64
        $region63: #{_lambda_.1} parent=59 // pred_region
          %s9636 = ssub.s32 16, 16
          %9637 = vsyncadd %s9629, %s9636
          %s9638 = smul.addr %s24, 16
          %s9639 = scalar_lea.hbm %s10, %s9638
          %s9641 = sshll.u32 %s9631, 4
          %s9642 = int_to_ptr.vmem [resolvable:$true] %s9641
          %9644 = dma.vmem_to_hbm [thread:$0]  %s9642, 16, %s9639, %s9629
        $region64: #{_lambda_.1} parent=59 // pred_fallthru
          _
      $region60: #{_lambda_.1} parent=5 // pred_fallthru
        _
      %p9645 = scmp.le.s32.totalorder 2, %s19
      // Predicated region
      $region65: #{_lambda_.1} parent=5 // pred_check
        %p9646 = pneg %p9645
      $region66: #{_lambda_.1} parent=5 // pred_check_branch
        %9648 = sbr.rel (%p9646) target = $region68
      $region67: #{_lambda_.1} parent=5 // pred_region
        %s9649 = ssub.s32 %s19, 2
        // Predicated region
        $region69: #{_lambda_.1} parent=67 // pred_check
          %p9650 = pneg %p263
        $region70: #{_lambda_.1} parent=67 // pred_check_branch
          %9652 = sbr.rel (%p9650) target = $region72
        $region71: #{_lambda_.1} parent=67 // pred_region
          %s9653 = sand.u32 %s248, 1
          %s9654 = scalar_lea.sflag [#allocation5], %s9653
          %s9655 = sand.u32 %s248, 1
          %s9656 = scalar_lea.vmem [#allocation4], %s9655
          %9657 = dma.done %s9654, 16
        $region72: #{_lambda_.1} parent=67 // pred_fallthru
          _
      $region68: #{_lambda_.1} parent=5 // pred_fallthru
        _
    $region6: #{_lambda_.1} parent=1 // loop_footer
      %s23 = sadd.s32 1, %s19
    $region7: #{_lambda_.1} parent=1 // loop_footer_branch
      %18 = sbr.rel target = $region3
    $region8: #{_lambda_.1} parent=1 // loop_exit
      _
    %9658 = vsyncpa [#allocation5], 1
    %s9659 = scalar_lea.sflag [#allocation5], 1
    %9660 = vsyncpa %s9659, 1

</llo_original>
